<compile_context>
chip_gen: v6e
topology: v6e:2x2x1
jax: 0.10.0
libtpu: 0.0.40
codegen_flags: <defaults>
</compile_context>

<pallas_src>
import jax
import jax.numpy as jnp
from jax import lax
from jax.experimental import pallas as pl
from jax.experimental.pallas import tpu as pltpu

MODEL_DIM = 64
NUM_LAYERS = 2
NUM_HEADS = 4
HEAD_DIM = MODEL_DIM // NUM_HEADS
FF_DIM = 4 * MODEL_DIM
LN_EPS = 1e-5          # nn.TransformerEncoderLayer default layer_norm_eps
ROW_TARGET = 2048      # rows (b_tile*S) per grid step; fat M fills the MXU on v5e/v6e/v7x


def _layer_norm(x, w, b, eps=LN_EPS):
    mu = jnp.mean(x, axis=-1, keepdims=True)
    xc = x - mu
    var = jnp.mean(xc * xc, axis=-1, keepdims=True)
    return xc * lax.rsqrt(var + eps) * w + b


def transformer_regressor_kernel(
    h0_ref,                                  # (BT, S, D) f32  embedded input tile (lane-dense)
    qkv_w_ref, qkv_b_ref,                    # (L, D, 3D) bf16, (L, 1, 3D) f32 (Q cols pre-scaled)
    out_w_ref, out_b_ref,                    # (L, D, D)  bf16, (L, 1, D)  f32
    lin1_w_ref, lin1_b_ref,                  # (L, D, FF) bf16, (L, 1, FF) f32
    lin2_w_ref, lin2_b_ref,                  # (L, FF, D) bf16, (L, 1, D)  f32
    ln1_w_ref, ln1_b_ref,                    # (L, 1, D) f32
    ln2_w_ref, ln2_b_ref,                    # (L, 1, D) f32
    fco_w_ref, fco_b_ref,                    # (1, D), (1, 1) f32
    o_ref,                                   # (1, 1, BT) f32  (lane-dense output row)
):
    D, H, Dh = MODEL_DIM, NUM_HEADS, HEAD_DIM
    BT, S, _ = h0_ref.shape
    R = BT * S
    bf16, f32 = jnp.bfloat16, jnp.float32

    # NOTE: padded batch rows are zero vectors; they flow through LayerNorm (variance ~0 so
    # rsqrt(eps) is large but finite) and are discarded by the wrapper -> benign, do not reuse
    # intermediate state from padded rows.
    h = h0_ref[...].reshape(R, D)                                           # (R, D) f32

    for l in range(NUM_LAYERS):
        h_b = h.astype(bf16)

        # ---- self attention (MultiheadAttention, nhead=4) ----
        # one fat (R,64)x(64,192) QKV matmul; 1/sqrt(Dh) is already folded into the Q columns.
        qkv = jnp.dot(h_b, qkv_w_ref[l],
                      preferred_element_type=f32) + qkv_b_ref[l]            # (R, 3D) f32
        q3 = qkv[:, 0:D].reshape(BT, S, D).astype(bf16)
        k3 = qkv[:, D:2 * D].reshape(BT, S, D).astype(bf16)
        v3 = qkv[:, 2 * D:3 * D].reshape(BT, S, D).astype(bf16)

        ctx_heads = []
        for hd in range(H):
            sl = slice(hd * Dh, (hd + 1) * Dh)
            qh, kh, vh = q3[..., sl], k3[..., sl], v3[..., sl]              # (BT, S, Dh)
            sc = jnp.einsum('bqd,bkd->bqk', qh, kh,
                            preferred_element_type=f32)                     # (BT, S, S)
            sc = sc - jnp.max(sc, axis=-1, keepdims=True)
            p = jnp.exp(sc)
            # approx reciprocal runs on the EUP slot; ~1e-3 rel. error vs exact softmax,
            # well inside the test tolerance (document if tolerances ever tighten).
            p = p * pl.reciprocal(jnp.sum(p, axis=-1, keepdims=True), approx=True)
            ctx_heads.append(
                jnp.einsum('bqk,bkd->bqd', p.astype(bf16), vh,
                           preferred_element_type=f32).astype(bf16))        # (BT, S, Dh)

        # concatenate heads once and run a single K=64 out_proj matmul (vs 4x K=16 before).
        ctx = jnp.concatenate(ctx_heads, axis=-1).reshape(R, D)             # (R, D) bf16
        attn = jnp.dot(ctx, out_w_ref[l],
                       preferred_element_type=f32) + out_b_ref[l]           # (R, D) f32

        # post-norm residual block 1
        h = _layer_norm(h + attn, ln1_w_ref[l], ln1_b_ref[l])

        # ---- feed-forward (linear -> relu -> linear) ----
        ff = jnp.dot(h.astype(bf16), lin1_w_ref[l],
                     preferred_element_type=f32) + lin1_b_ref[l]
        ff = jnp.maximum(ff, 0.0)
        ff = jnp.dot(ff.astype(bf16), lin2_w_ref[l],
                     preferred_element_type=f32) + lin2_b_ref[l]

        # post-norm residual block 2
        h = _layer_norm(h + ff, ln2_w_ref[l], ln2_b_ref[l])

    # mean over sequence, then fc_out (D -> 1); emit a lane-dense (1, BT) row.
    pooled = jnp.mean(h.reshape(BT, S, D), axis=1)                          # (BT, D) f32
    out_row = lax.dot_general(fco_w_ref[...], pooled, (((1,), (1,)), ((), ())),
                              preferred_element_type=f32) + fco_b_ref[...]  # (1, BT)
    o_ref[...] = out_row.reshape(1, 1, BT)


def _pick_b_tile(B, S):
    """Batch tile: ~ROW_TARGET rows per grid step, multiple of 8.  Prefer >=2 grid steps
    (v7x: one per TensorCore) as long as each tile keeps a lane-dense (>=128) output store;
    otherwise take one fat tile."""
    target = max(8, ((ROW_TARGET // max(S, 1)) // 8) * 8)
    half = (((B + 1) // 2) + 7) // 8 * 8
    if half >= 128:
        target = min(target, half)
    return min(target, ((B + 7) // 8) * 8)


def transformer_regressor(x, params):
    """x: (B, S) float32 -> (B, 1) float32. Eval-mode forward of TransformerRegressor."""
    (emb_w, emb_b, qkv_w, qkv_b, out_w, out_b,
     lin1_w, lin1_b, lin2_w, lin2_b,
     ln1_w, ln1_b, ln2_w, ln2_b, fco_w, fco_b) = params
    B, S = x.shape
    D, L, FF, H, Dh = MODEL_DIM, NUM_LAYERS, FF_DIM, NUM_HEADS, HEAD_DIM

    b_tile = _pick_b_tile(B, S)
    num_tiles = -(-B // b_tile)
    b_pad = num_tiles * b_tile

    # nn.Linear(1, D) embedding hoisted to XLA: the kernel gets a lane-dense (B, S, D) slab
    # instead of a (B, S, 1) tile (127/128 wasted VMEM lanes + in-kernel XLU broadcast).
    h0 = x.astype(jnp.float32)[:, :, None] * emb_w + emb_b                  # (B, S, D) f32
    if b_pad != B:
        h0 = jnp.pad(h0, ((0, b_pad - B), (0, 0), (0, 0)))                  # zero rows: discarded

    # fold the 1/sqrt(head_dim) attention scale into the Q columns of in_proj (exact for Dh=16).
    scale = 1.0 / (Dh ** 0.5)
    col_scale = jnp.concatenate([jnp.full((D,), scale, jnp.float32),
                                 jnp.ones((2 * D,), jnp.float32)])
    qkv_w_s = (qkv_w.astype(jnp.float32) * col_scale).astype(qkv_w.dtype)
    qkv_b_s = qkv_b * col_scale

    operands = (h0, qkv_w_s, qkv_b_s, out_w, out_b,
                lin1_w, lin1_b, lin2_w, lin2_b,
                ln1_w, ln1_b, ln2_w, ln2_b, fco_w, fco_b)

    def full_spec(shape):
        return pl.BlockSpec(shape, lambda t, _n=len(shape): (0,) * _n)

    in_specs = [pl.BlockSpec((b_tile, S, D), lambda t: (t, 0, 0))] + \
               [full_spec(op.shape) for op in operands[1:]]
    out_spec = pl.BlockSpec((1, 1, b_tile), lambda t: (t, 0, 0))

    # advisory cost estimate so XLA can schedule/overlap the custom call.
    R_tot = b_pad * S
    flops = (2 * R_tot * L * (D * 3 * D + D * D + 2 * D * FF)   # qkv + out_proj + ff1 + ff2
             + 4 * b_pad * L * H * S * S * Dh                   # attention scores + PV
             + 2 * b_pad * D)                                   # fc_out
    transcendentals = L * b_pad * H * S * S                     # softmax exps
    bytes_accessed = int(h0.size * 4
                         + sum(op.size * op.dtype.itemsize for op in operands[1:])
                         + b_pad * 4)

    out = pl.pallas_call(
        transformer_regressor_kernel,
        out_shape=jax.ShapeDtypeStruct((num_tiles, 1, b_tile), jnp.float32),
        grid=(num_tiles,),
        in_specs=in_specs,
        out_specs=out_spec,
        compiler_params=pltpu.CompilerParams(
            dimension_semantics=("parallel",)),                 # batch tiles -> both v7x TCs
        cost_estimate=pl.CostEstimate(flops=int(flops),
                                      transcendentals=int(transcendentals),
                                      bytes_accessed=bytes_accessed),
    )(*operands)
    return out.reshape(b_pad)[:B].reshape(B, 1)


def init_params(key):
    """Deterministic synthetic params. Linear weights stored (in, out); matmul weights bf16."""
    D, L, FF = MODEL_DIM, NUM_LAYERS, FF_DIM
    ks = jax.random.split(key, 12)

    def rn(k, shape, dtype=jnp.float32, s=0.05):
        return (s * jax.random.normal(k, shape)).astype(dtype)

    bf16 = jnp.bfloat16
    emb_w = rn(ks[0], (1, D))
    emb_b = rn(ks[1], (1, D))
    qkv_w = rn(ks[2], (L, D, 3 * D), bf16)
    qkv_b = rn(ks[3], (L, 1, 3 * D))
    out_w = rn(ks[4], (L, D, D), bf16)
    out_b = rn(ks[5], (L, 1, D))
    lin1_w = rn(ks[6], (L, D, FF), bf16)
    lin1_b = rn(ks[7], (L, 1, FF))
    lin2_w = rn(ks[8], (L, FF, D), bf16)
    lin2_b = rn(ks[9], (L, 1, D))
    ln1_w = jnp.ones((L, 1, D), jnp.float32)
    ln1_b = jnp.zeros((L, 1, D), jnp.float32)
    ln2_w = jnp.ones((L, 1, D), jnp.float32)
    ln2_b = jnp.zeros((L, 1, D), jnp.float32)
    fco_w = rn(ks[10], (1, D))
    fco_b = rn(ks[11], (1, 1))
    return (emb_w, emb_b, qkv_w, qkv_b, out_w, out_b,
            lin1_w, lin1_b, lin2_w, lin2_b,
            ln1_w, ln1_b, ln2_w, ln2_b, fco_w, fco_b)


def reference_forward(x, params):
    """Pure-JAX reference of the PyTorch forward (eval mode), mirroring the kernel's
    bf16-operand / f32-accumulation matmul precision."""
    (emb_w, emb_b, qkv_w, qkv_b, out_w, out_b,
     lin1_w, lin1_b, lin2_w, lin2_b,
     ln1_w, ln1_b, ln2_w, ln2_b, fco_w, fco_b) = params
    D, H, Dh = MODEL_DIM, NUM_HEADS, HEAD_DIM
    B, S = x.shape
    bf16, f32 = jnp.bfloat16, jnp.float32

    h = x[:, :, None] * emb_w[None] + emb_b[None]             # (B, S, D) f32
    for l in range(NUM_LAYERS):
        qkv = jnp.einsum('bsd,df->bsf', h.astype(bf16), qkv_w[l],
                         preferred_element_type=f32) + qkv_b[l]
        q = (qkv[..., :D] * (1.0 / Dh ** 0.5)).astype(bf16)
        k = qkv[..., D:2 * D].astype(bf16)
        v = qkv[..., 2 * D:].astype(bf16)
        qh = q.reshape(B, S, H, Dh).transpose(0, 2, 1, 3)
        kh = k.reshape(B, S, H, Dh).transpose(0, 2, 1, 3)
        vh = v.reshape(B, S, H, Dh).transpose(0, 2, 1, 3)
        sc = jnp.einsum('bhqd,bhkd->bhqk', qh, kh, preferred_element_type=f32)
        p = jax.nn.softmax(sc, axis=-1)
        a = jnp.einsum('bhqk,bhkd->bhqd', p.astype(bf16), vh,
                       preferred_element_type=f32)
        a = a.transpose(0, 2, 1, 3).reshape(B, S, D)
        a = jnp.einsum('bsd,df->bsf', a.astype(bf16), out_w[l],
                       preferred_element_type=f32) + out_b[l]
        h = _layer_norm(h + a, ln1_w[l], ln1_b[l])
        ff = jnp.maximum(jnp.einsum('bsd,df->bsf', h.astype(bf16), lin1_w[l],
                                    preferred_element_type=f32) + lin1_b[l], 0.0)
        ff = jnp.einsum('bsf,fd->bsd', ff.astype(bf16), lin2_w[l],
                        preferred_element_type=f32) + lin2_b[l]
        h = _layer_norm(h + ff, ln2_w[l], ln2_b[l])
    pooled = h.mean(axis=1)                                   # (B, D)
    return jnp.sum(pooled * fco_w, axis=-1, keepdims=True) + fco_b[0, 0]


if __name__ == "__main__":
    key = jax.random.PRNGKey(0)
    k_param, k_x = jax.random.split(key)
    B, S = 2, 8                                               # batch=2, seq=8
    x = jax.random.normal(k_x, (B, S), dtype=jnp.float32)
    params = init_params(k_param)

    y = jax.block_until_ready(transformer_regressor(x, params))
    y_ref = jax.block_until_ready(reference_forward(x, params))
    assert y.shape == (B, 1)
    if not jnp.allclose(y, y_ref, rtol=2e-2, atol=2e-3):
        raise AssertionError(f"mismatch: kernel={y} ref={y_ref}")
    print("KERNEL_OK")
</pallas_src>

<mosaic_0001>
module attributes {stable_mosaic.version = 11 : i64} {
  func.func @transformer_regressor_kernel(%arg0: i32, %arg1: memref<8x8x64xf32, #tpu.memory_space<vmem>>, %arg2: memref<2x64x192xbf16, #tpu.memory_space<vmem>>, %arg3: memref<2x1x192xf32, #tpu.memory_space<vmem>>, %arg4: memref<2x64x64xbf16, #tpu.memory_space<vmem>>, %arg5: memref<2x1x64xf32, #tpu.memory_space<vmem>>, %arg6: memref<2x64x256xbf16, #tpu.memory_space<vmem>>, %arg7: memref<2x1x256xf32, #tpu.memory_space<vmem>>, %arg8: memref<2x256x64xbf16, #tpu.memory_space<vmem>>, %arg9: memref<2x1x64xf32, #tpu.memory_space<vmem>>, %arg10: memref<2x1x64xf32, #tpu.memory_space<vmem>>, %arg11: memref<2x1x64xf32, #tpu.memory_space<vmem>>, %arg12: memref<2x1x64xf32, #tpu.memory_space<vmem>>, %arg13: memref<2x1x64xf32, #tpu.memory_space<vmem>>, %arg14: memref<1x64xf32, #tpu.memory_space<vmem>>, %arg15: memref<1x1xf32, #tpu.memory_space<vmem>>, %arg16: memref<1x1x8xf32, #tpu.memory_space<vmem>>) attributes {dimension_semantics = [#tpu.dimension_semantics<parallel>], iteration_bounds = array<i64: 1>, scalar_prefetch = 0 : i64, scratch_operands = 0 : i64, tpu.core_type = #tpu.core_type<tc>, window_params = [{transform_indices = @transform_0, window_bounds = array<i64: 8, 8, 64>}, {pipeline_mode = #tpu.pipeline_mode<synchronous>, transform_indices = @transform_1, window_bounds = array<i64: 2, 64, 192>}, {pipeline_mode = #tpu.pipeline_mode<synchronous>, transform_indices = @transform_2, window_bounds = array<i64: 2, 1, 192>}, {pipeline_mode = #tpu.pipeline_mode<synchronous>, transform_indices = @transform_3, window_bounds = array<i64: 2, 64, 64>}, {pipeline_mode = #tpu.pipeline_mode<synchronous>, transform_indices = @transform_4, window_bounds = array<i64: 2, 1, 64>}, {pipeline_mode = #tpu.pipeline_mode<synchronous>, transform_indices = @transform_5, window_bounds = array<i64: 2, 64, 256>}, {pipeline_mode = #tpu.pipeline_mode<synchronous>, transform_indices = @transform_6, window_bounds = array<i64: 2, 1, 256>}, {pipeline_mode = #tpu.pipeline_mode<synchronous>, transform_indices = @transform_7, window_bounds = array<i64: 2, 256, 64>}, {pipeline_mode = #tpu.pipeline_mode<synchronous>, transform_indices = @transform_8, window_bounds = array<i64: 2, 1, 64>}, {pipeline_mode = #tpu.pipeline_mode<synchronous>, transform_indices = @transform_9, window_bounds = array<i64: 2, 1, 64>}, {pipeline_mode = #tpu.pipeline_mode<synchronous>, transform_indices = @transform_10, window_bounds = array<i64: 2, 1, 64>}, {pipeline_mode = #tpu.pipeline_mode<synchronous>, transform_indices = @transform_11, window_bounds = array<i64: 2, 1, 64>}, {pipeline_mode = #tpu.pipeline_mode<synchronous>, transform_indices = @transform_12, window_bounds = array<i64: 2, 1, 64>}, {pipeline_mode = #tpu.pipeline_mode<synchronous>, transform_indices = @transform_13, window_bounds = array<i64: 1, 64>}, {pipeline_mode = #tpu.pipeline_mode<synchronous>, transform_indices = @transform_14, window_bounds = array<i64: 1, 1>}, {transform_indices = @transform_15, window_bounds = array<i64: 1, 1, 8>}]} {
    %c0 = arith.constant 0 : index
    %c0_0 = arith.constant 0 : index
    %c0_1 = arith.constant 0 : index
    %0 = vector.load %arg1[%c0, %c0_0, %c0_1] : memref<8x8x64xf32, #tpu.memory_space<vmem>>, vector<8x8x64xf32>
    %1 = vector.shape_cast %0 : vector<8x8x64xf32> to vector<64x64xf32>
    %2 = arith.truncf %1 : vector<64x64xf32> to vector<64x64xbf16>
    %c0_2 = arith.constant 0 : index
    %c0_3 = arith.constant 0 : index
    %c0_4 = arith.constant 0 : index
    %3 = vector.load %arg2[%c0_2, %c0_3, %c0_4] : memref<2x64x192xbf16, #tpu.memory_space<vmem>>, vector<1x64x192xbf16>
    %4 = vector.shape_cast %3 : vector<1x64x192xbf16> to vector<64x192xbf16>
    %cst = arith.constant dense<0.000000e+00> : vector<64x192xf32>
    %5 = tpu.matmul %2, %4, %cst {dimension_numbers = #tpu.dot_dimension_numbers<[1], [0], [0], [1], [0, 0, 1, 1], [], []>} : vector<64x64xbf16>, vector<64x192xbf16>, vector<64x192xf32> -> vector<64x192xf32>
    %c0_5 = arith.constant 0 : index
    %c0_6 = arith.constant 0 : index
    %c0_7 = arith.constant 0 : index
    %6 = vector.load %arg3[%c0_5, %c0_6, %c0_7] : memref<2x1x192xf32, #tpu.memory_space<vmem>>, vector<1x1x192xf32>
    %7 = vector.shape_cast %6 : vector<1x1x192xf32> to vector<1x192xf32>
    %8 = vector.broadcast %7 : vector<1x192xf32> to vector<64x192xf32>
    %9 = arith.addf %5, %8 : vector<64x192xf32>
    %10 = vector.extract_strided_slice %9 {offsets = [0, 0], sizes = [64, 64], strides = [1, 1]} : vector<64x192xf32> to vector<64x64xf32>
    %11 = vector.shape_cast %10 : vector<64x64xf32> to vector<8x8x64xf32>
    %12 = arith.truncf %11 : vector<8x8x64xf32> to vector<8x8x64xbf16>
    %13 = vector.extract_strided_slice %9 {offsets = [0, 64], sizes = [64, 64], strides = [1, 1]} : vector<64x192xf32> to vector<64x64xf32>
    %14 = vector.shape_cast %13 : vector<64x64xf32> to vector<8x8x64xf32>
    %15 = arith.truncf %14 : vector<8x8x64xf32> to vector<8x8x64xbf16>
    %16 = vector.extract_strided_slice %9 {offsets = [0, 128], sizes = [64, 64], strides = [1, 1]} : vector<64x192xf32> to vector<64x64xf32>
    %17 = vector.shape_cast %16 : vector<64x64xf32> to vector<8x8x64xf32>
    %18 = arith.truncf %17 : vector<8x8x64xf32> to vector<8x8x64xbf16>
    %19 = vector.extract_strided_slice %12 {offsets = [0, 0, 0], sizes = [8, 8, 16], strides = [1, 1, 1]} : vector<8x8x64xbf16> to vector<8x8x16xbf16>
    %20 = vector.extract_strided_slice %15 {offsets = [0, 0, 0], sizes = [8, 8, 16], strides = [1, 1, 1]} : vector<8x8x64xbf16> to vector<8x8x16xbf16>
    %21 = vector.extract_strided_slice %18 {offsets = [0, 0, 0], sizes = [8, 8, 16], strides = [1, 1, 1]} : vector<8x8x64xbf16> to vector<8x8x16xbf16>
    "tpu.trace_start"() <{level = 10 : i32, message = "bqd,bkd->bqk"}> : () -> ()
    %cst_8 = arith.constant dense<0.000000e+00> : vector<8x8x8xf32>
    %22 = tpu.matmul %19, %20, %cst_8 {dimension_numbers = #tpu.dot_dimension_numbers<[2], [2], [1], [1], [0, 0, 0, 1, 1, 1], [0], [0]>} : vector<8x8x16xbf16>, vector<8x8x16xbf16>, vector<8x8x8xf32> -> vector<8x8x8xf32>
    "tpu.trace_stop"() : () -> ()
    %cst_9 = arith.constant dense<0xFF800000> : vector<8x8xf32>
    %23 = vector.multi_reduction <maximumf>, %22, %cst_9 [2] : vector<8x8x8xf32> to vector<8x8xf32>
    %24 = vector.shape_cast %23 : vector<8x8xf32> to vector<8x8x1xf32>
    %25 = vector.broadcast %24 : vector<8x8x1xf32> to vector<8x8x8xf32>
    %26 = arith.subf %22, %25 : vector<8x8x8xf32>
    %27 = math.exp %26 : vector<8x8x8xf32>
    %cst_10 = arith.constant dense<0.000000e+00> : vector<8x8xf32>
    %28 = vector.multi_reduction <add>, %27, %cst_10 [2] : vector<8x8x8xf32> to vector<8x8xf32>
    %29 = vector.shape_cast %28 : vector<8x8xf32> to vector<8x8x1xf32>
    %30 = tpu.reciprocal %29 {approx = true} : vector<8x8x1xf32> -> vector<8x8x1xf32>
    %31 = vector.broadcast %30 : vector<8x8x1xf32> to vector<8x8x8xf32>
    %32 = arith.mulf %27, %31 : vector<8x8x8xf32>
    %33 = arith.truncf %32 : vector<8x8x8xf32> to vector<8x8x8xbf16>
    "tpu.trace_start"() <{level = 10 : i32, message = "bqk,bkd->bqd"}> : () -> ()
    %cst_11 = arith.constant dense<0.000000e+00> : vector<8x8x16xf32>
    %34 = tpu.matmul %33, %21, %cst_11 {dimension_numbers = #tpu.dot_dimension_numbers<[2], [1], [1], [2], [0, 0, 0, 1, 1, 2], [0], [0]>} : vector<8x8x8xbf16>, vector<8x8x16xbf16>, vector<8x8x16xf32> -> vector<8x8x16xf32>
    "tpu.trace_stop"() : () -> ()
    %35 = arith.truncf %34 : vector<8x8x16xf32> to vector<8x8x16xbf16>
    %36 = vector.extract_strided_slice %12 {offsets = [0, 0, 16], sizes = [8, 8, 16], strides = [1, 1, 1]} : vector<8x8x64xbf16> to vector<8x8x16xbf16>
    %37 = vector.extract_strided_slice %15 {offsets = [0, 0, 16], sizes = [8, 8, 16], strides = [1, 1, 1]} : vector<8x8x64xbf16> to vector<8x8x16xbf16>
    %38 = vector.extract_strided_slice %18 {offsets = [0, 0, 16], sizes = [8, 8, 16], strides = [1, 1, 1]} : vector<8x8x64xbf16> to vector<8x8x16xbf16>
    "tpu.trace_start"() <{level = 10 : i32, message = "bqd,bkd->bqk"}> : () -> ()
    %cst_12 = arith.constant dense<0.000000e+00> : vector<8x8x8xf32>
    %39 = tpu.matmul %36, %37, %cst_12 {dimension_numbers = #tpu.dot_dimension_numbers<[2], [2], [1], [1], [0, 0, 0, 1, 1, 1], [0], [0]>} : vector<8x8x16xbf16>, vector<8x8x16xbf16>, vector<8x8x8xf32> -> vector<8x8x8xf32>
    "tpu.trace_stop"() : () -> ()
    %cst_13 = arith.constant dense<0xFF800000> : vector<8x8xf32>
    %40 = vector.multi_reduction <maximumf>, %39, %cst_13 [2] : vector<8x8x8xf32> to vector<8x8xf32>
    %41 = vector.shape_cast %40 : vector<8x8xf32> to vector<8x8x1xf32>
    %42 = vector.broadcast %41 : vector<8x8x1xf32> to vector<8x8x8xf32>
    %43 = arith.subf %39, %42 : vector<8x8x8xf32>
    %44 = math.exp %43 : vector<8x8x8xf32>
    %cst_14 = arith.constant dense<0.000000e+00> : vector<8x8xf32>
    %45 = vector.multi_reduction <add>, %44, %cst_14 [2] : vector<8x8x8xf32> to vector<8x8xf32>
    %46 = vector.shape_cast %45 : vector<8x8xf32> to vector<8x8x1xf32>
    %47 = tpu.reciprocal %46 {approx = true} : vector<8x8x1xf32> -> vector<8x8x1xf32>
    %48 = vector.broadcast %47 : vector<8x8x1xf32> to vector<8x8x8xf32>
    %49 = arith.mulf %44, %48 : vector<8x8x8xf32>
    %50 = arith.truncf %49 : vector<8x8x8xf32> to vector<8x8x8xbf16>
    "tpu.trace_start"() <{level = 10 : i32, message = "bqk,bkd->bqd"}> : () -> ()
    %cst_15 = arith.constant dense<0.000000e+00> : vector<8x8x16xf32>
    %51 = tpu.matmul %50, %38, %cst_15 {dimension_numbers = #tpu.dot_dimension_numbers<[2], [1], [1], [2], [0, 0, 0, 1, 1, 2], [0], [0]>} : vector<8x8x8xbf16>, vector<8x8x16xbf16>, vector<8x8x16xf32> -> vector<8x8x16xf32>
    "tpu.trace_stop"() : () -> ()
    %52 = arith.truncf %51 : vector<8x8x16xf32> to vector<8x8x16xbf16>
    %53 = vector.extract_strided_slice %12 {offsets = [0, 0, 32], sizes = [8, 8, 16], strides = [1, 1, 1]} : vector<8x8x64xbf16> to vector<8x8x16xbf16>
    %54 = vector.extract_strided_slice %15 {offsets = [0, 0, 32], sizes = [8, 8, 16], strides = [1, 1, 1]} : vector<8x8x64xbf16> to vector<8x8x16xbf16>
    %55 = vector.extract_strided_slice %18 {offsets = [0, 0, 32], sizes = [8, 8, 16], strides = [1, 1, 1]} : vector<8x8x64xbf16> to vector<8x8x16xbf16>
    "tpu.trace_start"() <{level = 10 : i32, message = "bqd,bkd->bqk"}> : () -> ()
    %cst_16 = arith.constant dense<0.000000e+00> : vector<8x8x8xf32>
    %56 = tpu.matmul %53, %54, %cst_16 {dimension_numbers = #tpu.dot_dimension_numbers<[2], [2], [1], [1], [0, 0, 0, 1, 1, 1], [0], [0]>} : vector<8x8x16xbf16>, vector<8x8x16xbf16>, vector<8x8x8xf32> -> vector<8x8x8xf32>
    "tpu.trace_stop"() : () -> ()
    %cst_17 = arith.constant dense<0xFF800000> : vector<8x8xf32>
    %57 = vector.multi_reduction <maximumf>, %56, %cst_17 [2] : vector<8x8x8xf32> to vector<8x8xf32>
    %58 = vector.shape_cast %57 : vector<8x8xf32> to vector<8x8x1xf32>
    %59 = vector.broadcast %58 : vector<8x8x1xf32> to vector<8x8x8xf32>
    %60 = arith.subf %56, %59 : vector<8x8x8xf32>
    %61 = math.exp %60 : vector<8x8x8xf32>
    %cst_18 = arith.constant dense<0.000000e+00> : vector<8x8xf32>
    %62 = vector.multi_reduction <add>, %61, %cst_18 [2] : vector<8x8x8xf32> to vector<8x8xf32>
    %63 = vector.shape_cast %62 : vector<8x8xf32> to vector<8x8x1xf32>
    %64 = tpu.reciprocal %63 {approx = true} : vector<8x8x1xf32> -> vector<8x8x1xf32>
    %65 = vector.broadcast %64 : vector<8x8x1xf32> to vector<8x8x8xf32>
    %66 = arith.mulf %61, %65 : vector<8x8x8xf32>
    %67 = arith.truncf %66 : vector<8x8x8xf32> to vector<8x8x8xbf16>
    "tpu.trace_start"() <{level = 10 : i32, message = "bqk,bkd->bqd"}> : () -> ()
    %cst_19 = arith.constant dense<0.000000e+00> : vector<8x8x16xf32>
    %68 = tpu.matmul %67, %55, %cst_19 {dimension_numbers = #tpu.dot_dimension_numbers<[2], [1], [1], [2], [0, 0, 0, 1, 1, 2], [0], [0]>} : vector<8x8x8xbf16>, vector<8x8x16xbf16>, vector<8x8x16xf32> -> vector<8x8x16xf32>
    "tpu.trace_stop"() : () -> ()
    %69 = arith.truncf %68 : vector<8x8x16xf32> to vector<8x8x16xbf16>
    %70 = vector.extract_strided_slice %12 {offsets = [0, 0, 48], sizes = [8, 8, 16], strides = [1, 1, 1]} : vector<8x8x64xbf16> to vector<8x8x16xbf16>
    %71 = vector.extract_strided_slice %15 {offsets = [0, 0, 48], sizes = [8, 8, 16], strides = [1, 1, 1]} : vector<8x8x64xbf16> to vector<8x8x16xbf16>
    %72 = vector.extract_strided_slice %18 {offsets = [0, 0, 48], sizes = [8, 8, 16], strides = [1, 1, 1]} : vector<8x8x64xbf16> to vector<8x8x16xbf16>
    "tpu.trace_start"() <{level = 10 : i32, message = "bqd,bkd->bqk"}> : () -> ()
    %cst_20 = arith.constant dense<0.000000e+00> : vector<8x8x8xf32>
    %73 = tpu.matmul %70, %71, %cst_20 {dimension_numbers = #tpu.dot_dimension_numbers<[2], [2], [1], [1], [0, 0, 0, 1, 1, 1], [0], [0]>} : vector<8x8x16xbf16>, vector<8x8x16xbf16>, vector<8x8x8xf32> -> vector<8x8x8xf32>
    "tpu.trace_stop"() : () -> ()
    %cst_21 = arith.constant dense<0xFF800000> : vector<8x8xf32>
    %74 = vector.multi_reduction <maximumf>, %73, %cst_21 [2] : vector<8x8x8xf32> to vector<8x8xf32>
    %75 = vector.shape_cast %74 : vector<8x8xf32> to vector<8x8x1xf32>
    %76 = vector.broadcast %75 : vector<8x8x1xf32> to vector<8x8x8xf32>
    %77 = arith.subf %73, %76 : vector<8x8x8xf32>
    %78 = math.exp %77 : vector<8x8x8xf32>
    %cst_22 = arith.constant dense<0.000000e+00> : vector<8x8xf32>
    %79 = vector.multi_reduction <add>, %78, %cst_22 [2] : vector<8x8x8xf32> to vector<8x8xf32>
    %80 = vector.shape_cast %79 : vector<8x8xf32> to vector<8x8x1xf32>
    %81 = tpu.reciprocal %80 {approx = true} : vector<8x8x1xf32> -> vector<8x8x1xf32>
    %82 = vector.broadcast %81 : vector<8x8x1xf32> to vector<8x8x8xf32>
    %83 = arith.mulf %78, %82 : vector<8x8x8xf32>
    %84 = arith.truncf %83 : vector<8x8x8xf32> to vector<8x8x8xbf16>
    "tpu.trace_start"() <{level = 10 : i32, message = "bqk,bkd->bqd"}> : () -> ()
    %cst_23 = arith.constant dense<0.000000e+00> : vector<8x8x16xf32>
    %85 = tpu.matmul %84, %72, %cst_23 {dimension_numbers = #tpu.dot_dimension_numbers<[2], [1], [1], [2], [0, 0, 0, 1, 1, 2], [0], [0]>} : vector<8x8x8xbf16>, vector<8x8x16xbf16>, vector<8x8x16xf32> -> vector<8x8x16xf32>
    "tpu.trace_stop"() : () -> ()
    %86 = arith.truncf %85 : vector<8x8x16xf32> to vector<8x8x16xbf16>
    %87 = tpu.concatenate %35, %52, %69, %86 in 2 : vector<8x8x16xbf16>, vector<8x8x16xbf16>, vector<8x8x16xbf16>, vector<8x8x16xbf16> -> vector<8x8x64xbf16>
    %88 = vector.shape_cast %87 : vector<8x8x64xbf16> to vector<64x64xbf16>
    %c0_24 = arith.constant 0 : index
    %c0_25 = arith.constant 0 : index
    %c0_26 = arith.constant 0 : index
    %89 = vector.load %arg4[%c0_24, %c0_25, %c0_26] : memref<2x64x64xbf16, #tpu.memory_space<vmem>>, vector<1x64x64xbf16>
    %90 = vector.shape_cast %89 : vector<1x64x64xbf16> to vector<64x64xbf16>
    %cst_27 = arith.constant dense<0.000000e+00> : vector<64x64xf32>
    %91 = tpu.matmul %88, %90, %cst_27 {dimension_numbers = #tpu.dot_dimension_numbers<[1], [0], [0], [1], [0, 0, 1, 1], [], []>} : vector<64x64xbf16>, vector<64x64xbf16>, vector<64x64xf32> -> vector<64x64xf32>
    %c0_28 = arith.constant 0 : index
    %c0_29 = arith.constant 0 : index
    %c0_30 = arith.constant 0 : index
    %92 = vector.load %arg5[%c0_28, %c0_29, %c0_30] : memref<2x1x64xf32, #tpu.memory_space<vmem>>, vector<1x1x64xf32>
    %93 = vector.shape_cast %92 : vector<1x1x64xf32> to vector<1x64xf32>
    %94 = vector.broadcast %93 : vector<1x64xf32> to vector<64x64xf32>
    %95 = arith.addf %91, %94 : vector<64x64xf32>
    %96 = arith.addf %1, %95 : vector<64x64xf32>
    %c0_31 = arith.constant 0 : index
    %c0_32 = arith.constant 0 : index
    %c0_33 = arith.constant 0 : index
    %97 = vector.load %arg10[%c0_31, %c0_32, %c0_33] : memref<2x1x64xf32, #tpu.memory_space<vmem>>, vector<1x1x64xf32>
    %98 = vector.shape_cast %97 : vector<1x1x64xf32> to vector<1x64xf32>
    %c0_34 = arith.constant 0 : index
    %c0_35 = arith.constant 0 : index
    %c0_36 = arith.constant 0 : index
    %99 = vector.load %arg11[%c0_34, %c0_35, %c0_36] : memref<2x1x64xf32, #tpu.memory_space<vmem>>, vector<1x1x64xf32>
    %100 = vector.shape_cast %99 : vector<1x1x64xf32> to vector<1x64xf32>
    %cst_37 = arith.constant dense<0.000000e+00> : vector<64xf32>
    %101 = vector.multi_reduction <add>, %96, %cst_37 [1] : vector<64x64xf32> to vector<64xf32>
    %102 = vector.shape_cast %101 : vector<64xf32> to vector<64x1xf32>
    %cst_38 = arith.constant 6.400000e+01 : f32
    %103 = vector.broadcast %cst_38 : f32 to vector<64x1xf32>
    %104 = arith.divf %102, %103 : vector<64x1xf32>
    %105 = vector.broadcast %104 : vector<64x1xf32> to vector<64x64xf32>
    %106 = arith.subf %96, %105 : vector<64x64xf32>
    %107 = arith.mulf %106, %106 : vector<64x64xf32>
    %cst_39 = arith.constant dense<0.000000e+00> : vector<64xf32>
    %108 = vector.multi_reduction <add>, %107, %cst_39 [1] : vector<64x64xf32> to vector<64xf32>
    %109 = vector.shape_cast %108 : vector<64xf32> to vector<64x1xf32>
    %cst_40 = arith.constant 6.400000e+01 : f32
    %110 = vector.broadcast %cst_40 : f32 to vector<64x1xf32>
    %111 = arith.divf %109, %110 : vector<64x1xf32>
    %cst_41 = arith.constant 9.99999974E-6 : f32
    %112 = vector.broadcast %cst_41 : f32 to vector<64x1xf32>
    %113 = arith.addf %111, %112 : vector<64x1xf32>
    %114 = math.rsqrt %113 : vector<64x1xf32>
    %115 = vector.broadcast %114 : vector<64x1xf32> to vector<64x64xf32>
    %116 = arith.mulf %106, %115 : vector<64x64xf32>
    %117 = vector.broadcast %98 : vector<1x64xf32> to vector<64x64xf32>
    %118 = arith.mulf %116, %117 : vector<64x64xf32>
    %119 = vector.broadcast %100 : vector<1x64xf32> to vector<64x64xf32>
    %120 = arith.addf %118, %119 : vector<64x64xf32>
    %121 = arith.truncf %120 : vector<64x64xf32> to vector<64x64xbf16>
    %c0_42 = arith.constant 0 : index
    %c0_43 = arith.constant 0 : index
    %c0_44 = arith.constant 0 : index
    %122 = vector.load %arg6[%c0_42, %c0_43, %c0_44] : memref<2x64x256xbf16, #tpu.memory_space<vmem>>, vector<1x64x256xbf16>
    %123 = vector.shape_cast %122 : vector<1x64x256xbf16> to vector<64x256xbf16>
    %cst_45 = arith.constant dense<0.000000e+00> : vector<64x256xf32>
    %124 = tpu.matmul %121, %123, %cst_45 {dimension_numbers = #tpu.dot_dimension_numbers<[1], [0], [0], [1], [0, 0, 1, 1], [], []>} : vector<64x64xbf16>, vector<64x256xbf16>, vector<64x256xf32> -> vector<64x256xf32>
    %c0_46 = arith.constant 0 : index
    %c0_47 = arith.constant 0 : index
    %c0_48 = arith.constant 0 : index
    %125 = vector.load %arg7[%c0_46, %c0_47, %c0_48] : memref<2x1x256xf32, #tpu.memory_space<vmem>>, vector<1x1x256xf32>
    %126 = vector.shape_cast %125 : vector<1x1x256xf32> to vector<1x256xf32>
    %127 = vector.broadcast %126 : vector<1x256xf32> to vector<64x256xf32>
    %128 = arith.addf %124, %127 : vector<64x256xf32>
    %cst_49 = arith.constant 0.000000e+00 : f32
    %129 = vector.broadcast %cst_49 : f32 to vector<64x256xf32>
    %130 = arith.maximumf %128, %129 : vector<64x256xf32>
    %131 = arith.truncf %130 : vector<64x256xf32> to vector<64x256xbf16>
    %c0_50 = arith.constant 0 : index
    %c0_51 = arith.constant 0 : index
    %c0_52 = arith.constant 0 : index
    %132 = vector.load %arg8[%c0_50, %c0_51, %c0_52] : memref<2x256x64xbf16, #tpu.memory_space<vmem>>, vector<1x256x64xbf16>
    %133 = vector.shape_cast %132 : vector<1x256x64xbf16> to vector<256x64xbf16>
    %cst_53 = arith.constant dense<0.000000e+00> : vector<64x64xf32>
    %134 = tpu.matmul %131, %133, %cst_53 {dimension_numbers = #tpu.dot_dimension_numbers<[1], [0], [0], [1], [0, 0, 1, 1], [], []>} : vector<64x256xbf16>, vector<256x64xbf16>, vector<64x64xf32> -> vector<64x64xf32>
    %c0_54 = arith.constant 0 : index
    %c0_55 = arith.constant 0 : index
    %c0_56 = arith.constant 0 : index
    %135 = vector.load %arg9[%c0_54, %c0_55, %c0_56] : memref<2x1x64xf32, #tpu.memory_space<vmem>>, vector<1x1x64xf32>
    %136 = vector.shape_cast %135 : vector<1x1x64xf32> to vector<1x64xf32>
    %137 = vector.broadcast %136 : vector<1x64xf32> to vector<64x64xf32>
    %138 = arith.addf %134, %137 : vector<64x64xf32>
    %139 = arith.addf %120, %138 : vector<64x64xf32>
    %c0_57 = arith.constant 0 : index
    %c0_58 = arith.constant 0 : index
    %c0_59 = arith.constant 0 : index
    %140 = vector.load %arg12[%c0_57, %c0_58, %c0_59] : memref<2x1x64xf32, #tpu.memory_space<vmem>>, vector<1x1x64xf32>
    %141 = vector.shape_cast %140 : vector<1x1x64xf32> to vector<1x64xf32>
    %c0_60 = arith.constant 0 : index
    %c0_61 = arith.constant 0 : index
    %c0_62 = arith.constant 0 : index
    %142 = vector.load %arg13[%c0_60, %c0_61, %c0_62] : memref<2x1x64xf32, #tpu.memory_space<vmem>>, vector<1x1x64xf32>
    %143 = vector.shape_cast %142 : vector<1x1x64xf32> to vector<1x64xf32>
    %cst_63 = arith.constant dense<0.000000e+00> : vector<64xf32>
    %144 = vector.multi_reduction <add>, %139, %cst_63 [1] : vector<64x64xf32> to vector<64xf32>
    %145 = vector.shape_cast %144 : vector<64xf32> to vector<64x1xf32>
    %cst_64 = arith.constant 6.400000e+01 : f32
    %146 = vector.broadcast %cst_64 : f32 to vector<64x1xf32>
    %147 = arith.divf %145, %146 : vector<64x1xf32>
    %148 = vector.broadcast %147 : vector<64x1xf32> to vector<64x64xf32>
    %149 = arith.subf %139, %148 : vector<64x64xf32>
    %150 = arith.mulf %149, %149 : vector<64x64xf32>
    %cst_65 = arith.constant dense<0.000000e+00> : vector<64xf32>
    %151 = vector.multi_reduction <add>, %150, %cst_65 [1] : vector<64x64xf32> to vector<64xf32>
    %152 = vector.shape_cast %151 : vector<64xf32> to vector<64x1xf32>
    %cst_66 = arith.constant 6.400000e+01 : f32
    %153 = vector.broadcast %cst_66 : f32 to vector<64x1xf32>
    %154 = arith.divf %152, %153 : vector<64x1xf32>
    %cst_67 = arith.constant 9.99999974E-6 : f32
    %155 = vector.broadcast %cst_67 : f32 to vector<64x1xf32>
    %156 = arith.addf %154, %155 : vector<64x1xf32>
    %157 = math.rsqrt %156 : vector<64x1xf32>
    %158 = vector.broadcast %157 : vector<64x1xf32> to vector<64x64xf32>
    %159 = arith.mulf %149, %158 : vector<64x64xf32>
    %160 = vector.broadcast %141 : vector<1x64xf32> to vector<64x64xf32>
    %161 = arith.mulf %159, %160 : vector<64x64xf32>
    %162 = vector.broadcast %143 : vector<1x64xf32> to vector<64x64xf32>
    %163 = arith.addf %161, %162 : vector<64x64xf32>
    %164 = arith.truncf %163 : vector<64x64xf32> to vector<64x64xbf16>
    %c1 = arith.constant 1 : index
    %c0_68 = arith.constant 0 : index
    %c0_69 = arith.constant 0 : index
    %165 = vector.load %arg2[%c1, %c0_68, %c0_69] : memref<2x64x192xbf16, #tpu.memory_space<vmem>>, vector<1x64x192xbf16>
    %166 = vector.shape_cast %165 : vector<1x64x192xbf16> to vector<64x192xbf16>
    %cst_70 = arith.constant dense<0.000000e+00> : vector<64x192xf32>
    %167 = tpu.matmul %164, %166, %cst_70 {dimension_numbers = #tpu.dot_dimension_numbers<[1], [0], [0], [1], [0, 0, 1, 1], [], []>} : vector<64x64xbf16>, vector<64x192xbf16>, vector<64x192xf32> -> vector<64x192xf32>
    %c1_71 = arith.constant 1 : index
    %c0_72 = arith.constant 0 : index
    %c0_73 = arith.constant 0 : index
    %168 = vector.load %arg3[%c1_71, %c0_72, %c0_73] : memref<2x1x192xf32, #tpu.memory_space<vmem>>, vector<1x1x192xf32>
    %169 = vector.shape_cast %168 : vector<1x1x192xf32> to vector<1x192xf32>
    %170 = vector.broadcast %169 : vector<1x192xf32> to vector<64x192xf32>
    %171 = arith.addf %167, %170 : vector<64x192xf32>
    %172 = vector.extract_strided_slice %171 {offsets = [0, 0], sizes = [64, 64], strides = [1, 1]} : vector<64x192xf32> to vector<64x64xf32>
    %173 = vector.shape_cast %172 : vector<64x64xf32> to vector<8x8x64xf32>
    %174 = arith.truncf %173 : vector<8x8x64xf32> to vector<8x8x64xbf16>
    %175 = vector.extract_strided_slice %171 {offsets = [0, 64], sizes = [64, 64], strides = [1, 1]} : vector<64x192xf32> to vector<64x64xf32>
    %176 = vector.shape_cast %175 : vector<64x64xf32> to vector<8x8x64xf32>
    %177 = arith.truncf %176 : vector<8x8x64xf32> to vector<8x8x64xbf16>
    %178 = vector.extract_strided_slice %171 {offsets = [0, 128], sizes = [64, 64], strides = [1, 1]} : vector<64x192xf32> to vector<64x64xf32>
    %179 = vector.shape_cast %178 : vector<64x64xf32> to vector<8x8x64xf32>
    %180 = arith.truncf %179 : vector<8x8x64xf32> to vector<8x8x64xbf16>
    %181 = vector.extract_strided_slice %174 {offsets = [0, 0, 0], sizes = [8, 8, 16], strides = [1, 1, 1]} : vector<8x8x64xbf16> to vector<8x8x16xbf16>
    %182 = vector.extract_strided_slice %177 {offsets = [0, 0, 0], sizes = [8, 8, 16], strides = [1, 1, 1]} : vector<8x8x64xbf16> to vector<8x8x16xbf16>
    %183 = vector.extract_strided_slice %180 {offsets = [0, 0, 0], sizes = [8, 8, 16], strides = [1, 1, 1]} : vector<8x8x64xbf16> to vector<8x8x16xbf16>
    "tpu.trace_start"() <{level = 10 : i32, message = "bqd,bkd->bqk"}> : () -> ()
    %cst_74 = arith.constant dense<0.000000e+00> : vector<8x8x8xf32>
    %184 = tpu.matmul %181, %182, %cst_74 {dimension_numbers = #tpu.dot_dimension_numbers<[2], [2], [1], [1], [0, 0, 0, 1, 1, 1], [0], [0]>} : vector<8x8x16xbf16>, vector<8x8x16xbf16>, vector<8x8x8xf32> -> vector<8x8x8xf32>
    "tpu.trace_stop"() : () -> ()
    %cst_75 = arith.constant dense<0xFF800000> : vector<8x8xf32>
    %185 = vector.multi_reduction <maximumf>, %184, %cst_75 [2] : vector<8x8x8xf32> to vector<8x8xf32>
    %186 = vector.shape_cast %185 : vector<8x8xf32> to vector<8x8x1xf32>
    %187 = vector.broadcast %186 : vector<8x8x1xf32> to vector<8x8x8xf32>
    %188 = arith.subf %184, %187 : vector<8x8x8xf32>
    %189 = math.exp %188 : vector<8x8x8xf32>
    %cst_76 = arith.constant dense<0.000000e+00> : vector<8x8xf32>
    %190 = vector.multi_reduction <add>, %189, %cst_76 [2] : vector<8x8x8xf32> to vector<8x8xf32>
    %191 = vector.shape_cast %190 : vector<8x8xf32> to vector<8x8x1xf32>
    %192 = tpu.reciprocal %191 {approx = true} : vector<8x8x1xf32> -> vector<8x8x1xf32>
    %193 = vector.broadcast %192 : vector<8x8x1xf32> to vector<8x8x8xf32>
    %194 = arith.mulf %189, %193 : vector<8x8x8xf32>
    %195 = arith.truncf %194 : vector<8x8x8xf32> to vector<8x8x8xbf16>
    "tpu.trace_start"() <{level = 10 : i32, message = "bqk,bkd->bqd"}> : () -> ()
    %cst_77 = arith.constant dense<0.000000e+00> : vector<8x8x16xf32>
    %196 = tpu.matmul %195, %183, %cst_77 {dimension_numbers = #tpu.dot_dimension_numbers<[2], [1], [1], [2], [0, 0, 0, 1, 1, 2], [0], [0]>} : vector<8x8x8xbf16>, vector<8x8x16xbf16>, vector<8x8x16xf32> -> vector<8x8x16xf32>
    "tpu.trace_stop"() : () -> ()
    %197 = arith.truncf %196 : vector<8x8x16xf32> to vector<8x8x16xbf16>
    %198 = vector.extract_strided_slice %174 {offsets = [0, 0, 16], sizes = [8, 8, 16], strides = [1, 1, 1]} : vector<8x8x64xbf16> to vector<8x8x16xbf16>
    %199 = vector.extract_strided_slice %177 {offsets = [0, 0, 16], sizes = [8, 8, 16], strides = [1, 1, 1]} : vector<8x8x64xbf16> to vector<8x8x16xbf16>
    %200 = vector.extract_strided_slice %180 {offsets = [0, 0, 16], sizes = [8, 8, 16], strides = [1, 1, 1]} : vector<8x8x64xbf16> to vector<8x8x16xbf16>
    "tpu.trace_start"() <{level = 10 : i32, message = "bqd,bkd->bqk"}> : () -> ()
    %cst_78 = arith.constant dense<0.000000e+00> : vector<8x8x8xf32>
    %201 = tpu.matmul %198, %199, %cst_78 {dimension_numbers = #tpu.dot_dimension_numbers<[2], [2], [1], [1], [0, 0, 0, 1, 1, 1], [0], [0]>} : vector<8x8x16xbf16>, vector<8x8x16xbf16>, vector<8x8x8xf32> -> vector<8x8x8xf32>
    "tpu.trace_stop"() : () -> ()
    %cst_79 = arith.constant dense<0xFF800000> : vector<8x8xf32>
    %202 = vector.multi_reduction <maximumf>, %201, %cst_79 [2] : vector<8x8x8xf32> to vector<8x8xf32>
    %203 = vector.shape_cast %202 : vector<8x8xf32> to vector<8x8x1xf32>
    %204 = vector.broadcast %203 : vector<8x8x1xf32> to vector<8x8x8xf32>
    %205 = arith.subf %201, %204 : vector<8x8x8xf32>
    %206 = math.exp %205 : vector<8x8x8xf32>
    %cst_80 = arith.constant dense<0.000000e+00> : vector<8x8xf32>
    %207 = vector.multi_reduction <add>, %206, %cst_80 [2] : vector<8x8x8xf32> to vector<8x8xf32>
    %208 = vector.shape_cast %207 : vector<8x8xf32> to vector<8x8x1xf32>
    %209 = tpu.reciprocal %208 {approx = true} : vector<8x8x1xf32> -> vector<8x8x1xf32>
    %210 = vector.broadcast %209 : vector<8x8x1xf32> to vector<8x8x8xf32>
    %211 = arith.mulf %206, %210 : vector<8x8x8xf32>
    %212 = arith.truncf %211 : vector<8x8x8xf32> to vector<8x8x8xbf16>
    "tpu.trace_start"() <{level = 10 : i32, message = "bqk,bkd->bqd"}> : () -> ()
    %cst_81 = arith.constant dense<0.000000e+00> : vector<8x8x16xf32>
    %213 = tpu.matmul %212, %200, %cst_81 {dimension_numbers = #tpu.dot_dimension_numbers<[2], [1], [1], [2], [0, 0, 0, 1, 1, 2], [0], [0]>} : vector<8x8x8xbf16>, vector<8x8x16xbf16>, vector<8x8x16xf32> -> vector<8x8x16xf32>
    "tpu.trace_stop"() : () -> ()
    %214 = arith.truncf %213 : vector<8x8x16xf32> to vector<8x8x16xbf16>
    %215 = vector.extract_strided_slice %174 {offsets = [0, 0, 32], sizes = [8, 8, 16], strides = [1, 1, 1]} : vector<8x8x64xbf16> to vector<8x8x16xbf16>
    %216 = vector.extract_strided_slice %177 {offsets = [0, 0, 32], sizes = [8, 8, 16], strides = [1, 1, 1]} : vector<8x8x64xbf16> to vector<8x8x16xbf16>
    %217 = vector.extract_strided_slice %180 {offsets = [0, 0, 32], sizes = [8, 8, 16], strides = [1, 1, 1]} : vector<8x8x64xbf16> to vector<8x8x16xbf16>
    "tpu.trace_start"() <{level = 10 : i32, message = "bqd,bkd->bqk"}> : () -> ()
    %cst_82 = arith.constant dense<0.000000e+00> : vector<8x8x8xf32>
    %218 = tpu.matmul %215, %216, %cst_82 {dimension_numbers = #tpu.dot_dimension_numbers<[2], [2], [1], [1], [0, 0, 0, 1, 1, 1], [0], [0]>} : vector<8x8x16xbf16>, vector<8x8x16xbf16>, vector<8x8x8xf32> -> vector<8x8x8xf32>
    "tpu.trace_stop"() : () -> ()
    %cst_83 = arith.constant dense<0xFF800000> : vector<8x8xf32>
    %219 = vector.multi_reduction <maximumf>, %218, %cst_83 [2] : vector<8x8x8xf32> to vector<8x8xf32>
    %220 = vector.shape_cast %219 : vector<8x8xf32> to vector<8x8x1xf32>
    %221 = vector.broadcast %220 : vector<8x8x1xf32> to vector<8x8x8xf32>
    %222 = arith.subf %218, %221 : vector<8x8x8xf32>
    %223 = math.exp %222 : vector<8x8x8xf32>
    %cst_84 = arith.constant dense<0.000000e+00> : vector<8x8xf32>
    %224 = vector.multi_reduction <add>, %223, %cst_84 [2] : vector<8x8x8xf32> to vector<8x8xf32>
    %225 = vector.shape_cast %224 : vector<8x8xf32> to vector<8x8x1xf32>
    %226 = tpu.reciprocal %225 {approx = true} : vector<8x8x1xf32> -> vector<8x8x1xf32>
    %227 = vector.broadcast %226 : vector<8x8x1xf32> to vector<8x8x8xf32>
    %228 = arith.mulf %223, %227 : vector<8x8x8xf32>
    %229 = arith.truncf %228 : vector<8x8x8xf32> to vector<8x8x8xbf16>
    "tpu.trace_start"() <{level = 10 : i32, message = "bqk,bkd->bqd"}> : () -> ()
    %cst_85 = arith.constant dense<0.000000e+00> : vector<8x8x16xf32>
    %230 = tpu.matmul %229, %217, %cst_85 {dimension_numbers = #tpu.dot_dimension_numbers<[2], [1], [1], [2], [0, 0, 0, 1, 1, 2], [0], [0]>} : vector<8x8x8xbf16>, vector<8x8x16xbf16>, vector<8x8x16xf32> -> vector<8x8x16xf32>
    "tpu.trace_stop"() : () -> ()
    %231 = arith.truncf %230 : vector<8x8x16xf32> to vector<8x8x16xbf16>
    %232 = vector.extract_strided_slice %174 {offsets = [0, 0, 48], sizes = [8, 8, 16], strides = [1, 1, 1]} : vector<8x8x64xbf16> to vector<8x8x16xbf16>
    %233 = vector.extract_strided_slice %177 {offsets = [0, 0, 48], sizes = [8, 8, 16], strides = [1, 1, 1]} : vector<8x8x64xbf16> to vector<8x8x16xbf16>
    %234 = vector.extract_strided_slice %180 {offsets = [0, 0, 48], sizes = [8, 8, 16], strides = [1, 1, 1]} : vector<8x8x64xbf16> to vector<8x8x16xbf16>
    "tpu.trace_start"() <{level = 10 : i32, message = "bqd,bkd->bqk"}> : () -> ()
    %cst_86 = arith.constant dense<0.000000e+00> : vector<8x8x8xf32>
    %235 = tpu.matmul %232, %233, %cst_86 {dimension_numbers = #tpu.dot_dimension_numbers<[2], [2], [1], [1], [0, 0, 0, 1, 1, 1], [0], [0]>} : vector<8x8x16xbf16>, vector<8x8x16xbf16>, vector<8x8x8xf32> -> vector<8x8x8xf32>
    "tpu.trace_stop"() : () -> ()
    %cst_87 = arith.constant dense<0xFF800000> : vector<8x8xf32>
    %236 = vector.multi_reduction <maximumf>, %235, %cst_87 [2] : vector<8x8x8xf32> to vector<8x8xf32>
    %237 = vector.shape_cast %236 : vector<8x8xf32> to vector<8x8x1xf32>
    %238 = vector.broadcast %237 : vector<8x8x1xf32> to vector<8x8x8xf32>
    %239 = arith.subf %235, %238 : vector<8x8x8xf32>
    %240 = math.exp %239 : vector<8x8x8xf32>
    %cst_88 = arith.constant dense<0.000000e+00> : vector<8x8xf32>
    %241 = vector.multi_reduction <add>, %240, %cst_88 [2] : vector<8x8x8xf32> to vector<8x8xf32>
    %242 = vector.shape_cast %241 : vector<8x8xf32> to vector<8x8x1xf32>
    %243 = tpu.reciprocal %242 {approx = true} : vector<8x8x1xf32> -> vector<8x8x1xf32>
    %244 = vector.broadcast %243 : vector<8x8x1xf32> to vector<8x8x8xf32>
    %245 = arith.mulf %240, %244 : vector<8x8x8xf32>
    %246 = arith.truncf %245 : vector<8x8x8xf32> to vector<8x8x8xbf16>
    "tpu.trace_start"() <{level = 10 : i32, message = "bqk,bkd->bqd"}> : () -> ()
    %cst_89 = arith.constant dense<0.000000e+00> : vector<8x8x16xf32>
    %247 = tpu.matmul %246, %234, %cst_89 {dimension_numbers = #tpu.dot_dimension_numbers<[2], [1], [1], [2], [0, 0, 0, 1, 1, 2], [0], [0]>} : vector<8x8x8xbf16>, vector<8x8x16xbf16>, vector<8x8x16xf32> -> vector<8x8x16xf32>
    "tpu.trace_stop"() : () -> ()
    %248 = arith.truncf %247 : vector<8x8x16xf32> to vector<8x8x16xbf16>
    %249 = tpu.concatenate %197, %214, %231, %248 in 2 : vector<8x8x16xbf16>, vector<8x8x16xbf16>, vector<8x8x16xbf16>, vector<8x8x16xbf16> -> vector<8x8x64xbf16>
    %250 = vector.shape_cast %249 : vector<8x8x64xbf16> to vector<64x64xbf16>
    %c1_90 = arith.constant 1 : index
    %c0_91 = arith.constant 0 : index
    %c0_92 = arith.constant 0 : index
    %251 = vector.load %arg4[%c1_90, %c0_91, %c0_92] : memref<2x64x64xbf16, #tpu.memory_space<vmem>>, vector<1x64x64xbf16>
    %252 = vector.shape_cast %251 : vector<1x64x64xbf16> to vector<64x64xbf16>
    %cst_93 = arith.constant dense<0.000000e+00> : vector<64x64xf32>
    %253 = tpu.matmul %250, %252, %cst_93 {dimension_numbers = #tpu.dot_dimension_numbers<[1], [0], [0], [1], [0, 0, 1, 1], [], []>} : vector<64x64xbf16>, vector<64x64xbf16>, vector<64x64xf32> -> vector<64x64xf32>
    %c1_94 = arith.constant 1 : index
    %c0_95 = arith.constant 0 : index
    %c0_96 = arith.constant 0 : index
    %254 = vector.load %arg5[%c1_94, %c0_95, %c0_96] : memref<2x1x64xf32, #tpu.memory_space<vmem>>, vector<1x1x64xf32>
    %255 = vector.shape_cast %254 : vector<1x1x64xf32> to vector<1x64xf32>
    %256 = vector.broadcast %255 : vector<1x64xf32> to vector<64x64xf32>
    %257 = arith.addf %253, %256 : vector<64x64xf32>
    %258 = arith.addf %163, %257 : vector<64x64xf32>
    %c1_97 = arith.constant 1 : index
    %c0_98 = arith.constant 0 : index
    %c0_99 = arith.constant 0 : index
    %259 = vector.load %arg10[%c1_97, %c0_98, %c0_99] : memref<2x1x64xf32, #tpu.memory_space<vmem>>, vector<1x1x64xf32>
    %260 = vector.shape_cast %259 : vector<1x1x64xf32> to vector<1x64xf32>
    %c1_100 = arith.constant 1 : index
    %c0_101 = arith.constant 0 : index
    %c0_102 = arith.constant 0 : index
    %261 = vector.load %arg11[%c1_100, %c0_101, %c0_102] : memref<2x1x64xf32, #tpu.memory_space<vmem>>, vector<1x1x64xf32>
    %262 = vector.shape_cast %261 : vector<1x1x64xf32> to vector<1x64xf32>
    %cst_103 = arith.constant dense<0.000000e+00> : vector<64xf32>
    %263 = vector.multi_reduction <add>, %258, %cst_103 [1] : vector<64x64xf32> to vector<64xf32>
    %264 = vector.shape_cast %263 : vector<64xf32> to vector<64x1xf32>
    %cst_104 = arith.constant 6.400000e+01 : f32
    %265 = vector.broadcast %cst_104 : f32 to vector<64x1xf32>
    %266 = arith.divf %264, %265 : vector<64x1xf32>
    %267 = vector.broadcast %266 : vector<64x1xf32> to vector<64x64xf32>
    %268 = arith.subf %258, %267 : vector<64x64xf32>
    %269 = arith.mulf %268, %268 : vector<64x64xf32>
    %cst_105 = arith.constant dense<0.000000e+00> : vector<64xf32>
    %270 = vector.multi_reduction <add>, %269, %cst_105 [1] : vector<64x64xf32> to vector<64xf32>
    %271 = vector.shape_cast %270 : vector<64xf32> to vector<64x1xf32>
    %cst_106 = arith.constant 6.400000e+01 : f32
    %272 = vector.broadcast %cst_106 : f32 to vector<64x1xf32>
    %273 = arith.divf %271, %272 : vector<64x1xf32>
    %cst_107 = arith.constant 9.99999974E-6 : f32
    %274 = vector.broadcast %cst_107 : f32 to vector<64x1xf32>
    %275 = arith.addf %273, %274 : vector<64x1xf32>
    %276 = math.rsqrt %275 : vector<64x1xf32>
    %277 = vector.broadcast %276 : vector<64x1xf32> to vector<64x64xf32>
    %278 = arith.mulf %268, %277 : vector<64x64xf32>
    %279 = vector.broadcast %260 : vector<1x64xf32> to vector<64x64xf32>
    %280 = arith.mulf %278, %279 : vector<64x64xf32>
    %281 = vector.broadcast %262 : vector<1x64xf32> to vector<64x64xf32>
    %282 = arith.addf %280, %281 : vector<64x64xf32>
    %283 = arith.truncf %282 : vector<64x64xf32> to vector<64x64xbf16>
    %c1_108 = arith.constant 1 : index
    %c0_109 = arith.constant 0 : index
    %c0_110 = arith.constant 0 : index
    %284 = vector.load %arg6[%c1_108, %c0_109, %c0_110] : memref<2x64x256xbf16, #tpu.memory_space<vmem>>, vector<1x64x256xbf16>
    %285 = vector.shape_cast %284 : vector<1x64x256xbf16> to vector<64x256xbf16>
    %cst_111 = arith.constant dense<0.000000e+00> : vector<64x256xf32>
    %286 = tpu.matmul %283, %285, %cst_111 {dimension_numbers = #tpu.dot_dimension_numbers<[1], [0], [0], [1], [0, 0, 1, 1], [], []>} : vector<64x64xbf16>, vector<64x256xbf16>, vector<64x256xf32> -> vector<64x256xf32>
    %c1_112 = arith.constant 1 : index
    %c0_113 = arith.constant 0 : index
    %c0_114 = arith.constant 0 : index
    %287 = vector.load %arg7[%c1_112, %c0_113, %c0_114] : memref<2x1x256xf32, #tpu.memory_space<vmem>>, vector<1x1x256xf32>
    %288 = vector.shape_cast %287 : vector<1x1x256xf32> to vector<1x256xf32>
    %289 = vector.broadcast %288 : vector<1x256xf32> to vector<64x256xf32>
    %290 = arith.addf %286, %289 : vector<64x256xf32>
    %cst_115 = arith.constant 0.000000e+00 : f32
    %291 = vector.broadcast %cst_115 : f32 to vector<64x256xf32>
    %292 = arith.maximumf %290, %291 : vector<64x256xf32>
    %293 = arith.truncf %292 : vector<64x256xf32> to vector<64x256xbf16>
    %c1_116 = arith.constant 1 : index
    %c0_117 = arith.constant 0 : index
    %c0_118 = arith.constant 0 : index
    %294 = vector.load %arg8[%c1_116, %c0_117, %c0_118] : memref<2x256x64xbf16, #tpu.memory_space<vmem>>, vector<1x256x64xbf16>
    %295 = vector.shape_cast %294 : vector<1x256x64xbf16> to vector<256x64xbf16>
    %cst_119 = arith.constant dense<0.000000e+00> : vector<64x64xf32>
    %296 = tpu.matmul %293, %295, %cst_119 {dimension_numbers = #tpu.dot_dimension_numbers<[1], [0], [0], [1], [0, 0, 1, 1], [], []>} : vector<64x256xbf16>, vector<256x64xbf16>, vector<64x64xf32> -> vector<64x64xf32>
    %c1_120 = arith.constant 1 : index
    %c0_121 = arith.constant 0 : index
    %c0_122 = arith.constant 0 : index
    %297 = vector.load %arg9[%c1_120, %c0_121, %c0_122] : memref<2x1x64xf32, #tpu.memory_space<vmem>>, vector<1x1x64xf32>
    %298 = vector.shape_cast %297 : vector<1x1x64xf32> to vector<1x64xf32>
    %299 = vector.broadcast %298 : vector<1x64xf32> to vector<64x64xf32>
    %300 = arith.addf %296, %299 : vector<64x64xf32>
    %301 = arith.addf %282, %300 : vector<64x64xf32>
    %c1_123 = arith.constant 1 : index
    %c0_124 = arith.constant 0 : index
    %c0_125 = arith.constant 0 : index
    %302 = vector.load %arg12[%c1_123, %c0_124, %c0_125] : memref<2x1x64xf32, #tpu.memory_space<vmem>>, vector<1x1x64xf32>
    %303 = vector.shape_cast %302 : vector<1x1x64xf32> to vector<1x64xf32>
    %c1_126 = arith.constant 1 : index
    %c0_127 = arith.constant 0 : index
    %c0_128 = arith.constant 0 : index
    %304 = vector.load %arg13[%c1_126, %c0_127, %c0_128] : memref<2x1x64xf32, #tpu.memory_space<vmem>>, vector<1x1x64xf32>
    %305 = vector.shape_cast %304 : vector<1x1x64xf32> to vector<1x64xf32>
    %cst_129 = arith.constant dense<0.000000e+00> : vector<64xf32>
    %306 = vector.multi_reduction <add>, %301, %cst_129 [1] : vector<64x64xf32> to vector<64xf32>
    %307 = vector.shape_cast %306 : vector<64xf32> to vector<64x1xf32>
    %cst_130 = arith.constant 6.400000e+01 : f32
    %308 = vector.broadcast %cst_130 : f32 to vector<64x1xf32>
    %309 = arith.divf %307, %308 : vector<64x1xf32>
    %310 = vector.broadcast %309 : vector<64x1xf32> to vector<64x64xf32>
    %311 = arith.subf %301, %310 : vector<64x64xf32>
    %312 = arith.mulf %311, %311 : vector<64x64xf32>
    %cst_131 = arith.constant dense<0.000000e+00> : vector<64xf32>
    %313 = vector.multi_reduction <add>, %312, %cst_131 [1] : vector<64x64xf32> to vector<64xf32>
    %314 = vector.shape_cast %313 : vector<64xf32> to vector<64x1xf32>
    %cst_132 = arith.constant 6.400000e+01 : f32
    %315 = vector.broadcast %cst_132 : f32 to vector<64x1xf32>
    %316 = arith.divf %314, %315 : vector<64x1xf32>
    %cst_133 = arith.constant 9.99999974E-6 : f32
    %317 = vector.broadcast %cst_133 : f32 to vector<64x1xf32>
    %318 = arith.addf %316, %317 : vector<64x1xf32>
    %319 = math.rsqrt %318 : vector<64x1xf32>
    %320 = vector.broadcast %319 : vector<64x1xf32> to vector<64x64xf32>
    %321 = arith.mulf %311, %320 : vector<64x64xf32>
    %322 = vector.broadcast %303 : vector<1x64xf32> to vector<64x64xf32>
    %323 = arith.mulf %321, %322 : vector<64x64xf32>
    %324 = vector.broadcast %305 : vector<1x64xf32> to vector<64x64xf32>
    %325 = arith.addf %323, %324 : vector<64x64xf32>
    %326 = vector.shape_cast %325 : vector<64x64xf32> to vector<8x8x64xf32>
    %cst_134 = arith.constant dense<0.000000e+00> : vector<8x64xf32>
    %327 = vector.multi_reduction <add>, %326, %cst_134 [1] : vector<8x8x64xf32> to vector<8x64xf32>
    %cst_135 = arith.constant 8.000000e+00 : f32
    %328 = vector.broadcast %cst_135 : f32 to vector<8x64xf32>
    %329 = arith.divf %327, %328 : vector<8x64xf32>
    %c0_136 = arith.constant 0 : index
    %c0_137 = arith.constant 0 : index
    %330 = vector.load %arg14[%c0_136, %c0_137] : memref<1x64xf32, #tpu.memory_space<vmem>>, vector<1x64xf32>
    %cst_138 = arith.constant dense<0.000000e+00> : vector<1x8xf32>
    %331 = tpu.matmul %330, %329, %cst_138 {dimension_numbers = #tpu.dot_dimension_numbers<[1], [1], [0], [0], [0, 0, 1, 0], [], []>} : vector<1x64xf32>, vector<8x64xf32>, vector<1x8xf32> -> vector<1x8xf32>
    %c0_139 = arith.constant 0 : index
    %c0_140 = arith.constant 0 : index
    %332 = vector.load %arg15[%c0_139, %c0_140] : memref<1x1xf32, #tpu.memory_space<vmem>>, vector<1x1xf32>
    %333 = vector.broadcast %332 : vector<1x1xf32> to vector<1x8xf32>
    %334 = arith.addf %331, %333 : vector<1x8xf32>
    %335 = vector.shape_cast %334 : vector<1x8xf32> to vector<1x1x8xf32>
    %c0_141 = arith.constant 0 : index
    %c0_142 = arith.constant 0 : index
    %c0_143 = arith.constant 0 : index
    %336 = vector.load %arg16[%c0_141, %c0_142, %c0_143] : memref<1x1x8xf32, #tpu.memory_space<vmem>>, vector<1x1x8xf32>
    tpu.vector_store %arg16[%c0_141, %c0_142, %c0_143], %335 {strides = array<i32>} : memref<1x1x8xf32, #tpu.memory_space<vmem>>, vector<1x1x8xf32>,
    return
  }
  func.func @transform_0(%arg0: i32) -> (i32, i32, i32) {
    %c0_i32 = arith.constant 0 : i32
    %c0_i32_0 = arith.constant 0 : i32
    %c0_i32_1 = arith.constant 0 : i32
    return %arg0, %c0_i32, %c0_i32_0 : i32, i32, i32
  }
  func.func @transform_1(%arg0: i32) -> (i32, i32, i32) {
    %c0_i32 = arith.constant 0 : i32
    %c0_i32_0 = arith.constant 0 : i32
    %c0_i32_1 = arith.constant 0 : i32
    %c0_i32_2 = arith.constant 0 : i32
    return %c0_i32, %c0_i32_0, %c0_i32_1 : i32, i32, i32
  }
  func.func @transform_2(%arg0: i32) -> (i32, i32, i32) {
    %c0_i32 = arith.constant 0 : i32
    %c0_i32_0 = arith.constant 0 : i32
    %c0_i32_1 = arith.constant 0 : i32
    %c0_i32_2 = arith.constant 0 : i32
    return %c0_i32, %c0_i32_0, %c0_i32_1 : i32, i32, i32
  }
  func.func @transform_3(%arg0: i32) -> (i32, i32, i32) {
    %c0_i32 = arith.constant 0 : i32
    %c0_i32_0 = arith.constant 0 : i32
    %c0_i32_1 = arith.constant 0 : i32
    %c0_i32_2 = arith.constant 0 : i32
    return %c0_i32, %c0_i32_0, %c0_i32_1 : i32, i32, i32
  }
  func.func @transform_4(%arg0: i32) -> (i32, i32, i32) {
    %c0_i32 = arith.constant 0 : i32
    %c0_i32_0 = arith.constant 0 : i32
    %c0_i32_1 = arith.constant 0 : i32
    %c0_i32_2 = arith.constant 0 : i32
    return %c0_i32, %c0_i32_0, %c0_i32_1 : i32, i32, i32
  }
  func.func @transform_5(%arg0: i32) -> (i32, i32, i32) {
    %c0_i32 = arith.constant 0 : i32
    %c0_i32_0 = arith.constant 0 : i32
    %c0_i32_1 = arith.constant 0 : i32
    %c0_i32_2 = arith.constant 0 : i32
    return %c0_i32, %c0_i32_0, %c0_i32_1 : i32, i32, i32
  }
  func.func @transform_6(%arg0: i32) -> (i32, i32, i32) {
    %c0_i32 = arith.constant 0 : i32
    %c0_i32_0 = arith.constant 0 : i32
    %c0_i32_1 = arith.constant 0 : i32
    %c0_i32_2 = arith.constant 0 : i32
    return %c0_i32, %c0_i32_0, %c0_i32_1 : i32, i32, i32
  }
  func.func @transform_7(%arg0: i32) -> (i32, i32, i32) {
    %c0_i32 = arith.constant 0 : i32
    %c0_i32_0 = arith.constant 0 : i32
    %c0_i32_1 = arith.constant 0 : i32
    %c0_i32_2 = arith.constant 0 : i32
    return %c0_i32, %c0_i32_0, %c0_i32_1 : i32, i32, i32
  }
  func.func @transform_8(%arg0: i32) -> (i32, i32, i32) {
    %c0_i32 = arith.constant 0 : i32
    %c0_i32_0 = arith.constant 0 : i32
    %c0_i32_1 = arith.constant 0 : i32
    %c0_i32_2 = arith.constant 0 : i32
    return %c0_i32, %c0_i32_0, %c0_i32_1 : i32, i32, i32
  }
  func.func @transform_9(%arg0: i32) -> (i32, i32, i32) {
    %c0_i32 = arith.constant 0 : i32
    %c0_i32_0 = arith.constant 0 : i32
    %c0_i32_1 = arith.constant 0 : i32
    %c0_i32_2 = arith.constant 0 : i32
    return %c0_i32, %c0_i32_0, %c0_i32_1 : i32, i32, i32
  }
  func.func @transform_10(%arg0: i32) -> (i32, i32, i32) {
    %c0_i32 = arith.constant 0 : i32
    %c0_i32_0 = arith.constant 0 : i32
    %c0_i32_1 = arith.constant 0 : i32
    %c0_i32_2 = arith.constant 0 : i32
    return %c0_i32, %c0_i32_0, %c0_i32_1 : i32, i32, i32
  }
  func.func @transform_11(%arg0: i32) -> (i32, i32, i32) {
    %c0_i32 = arith.constant 0 : i32
    %c0_i32_0 = arith.constant 0 : i32
    %c0_i32_1 = arith.constant 0 : i32
    %c0_i32_2 = arith.constant 0 : i32
    return %c0_i32, %c0_i32_0, %c0_i32_1 : i32, i32, i32
  }
  func.func @transform_12(%arg0: i32) -> (i32, i32, i32) {
    %c0_i32 = arith.constant 0 : i32
    %c0_i32_0 = arith.constant 0 : i32
    %c0_i32_1 = arith.constant 0 : i32
    %c0_i32_2 = arith.constant 0 : i32
    return %c0_i32, %c0_i32_0, %c0_i32_1 : i32, i32, i32
  }
  func.func @transform_13(%arg0: i32) -> (i32, i32) {
    %c0_i32 = arith.constant 0 : i32
    %c0_i32_0 = arith.constant 0 : i32
    %c0_i32_1 = arith.constant 0 : i32
    return %c0_i32, %c0_i32_0 : i32, i32
  }
  func.func @transform_14(%arg0: i32) -> (i32, i32) {
    %c0_i32 = arith.constant 0 : i32
    %c0_i32_0 = arith.constant 0 : i32
    %c0_i32_1 = arith.constant 0 : i32
    return %c0_i32, %c0_i32_0 : i32, i32
  }
  func.func @transform_15(%arg0: i32) -> (i32, i32, i32) {
    %c0_i32 = arith.constant 0 : i32
    %c0_i32_0 = arith.constant 0 : i32
    %c0_i32_1 = arith.constant 0 : i32
    return %arg0, %c0_i32, %c0_i32_0 : i32, i32, i32
  }
}

</mosaic_0001>

<llo_original>
// kernel: tpu_custom_call.1
$region0: #{tpu_custom_call.1}
  #allocation0 [shape = 'u32[]', space=smem, size = 0x4, offset = 0x4, fixed_abs, tag = 'smem constant byte address 0x4 - core index']
  #allocation1 [shape = 'u32[144,128]{1,0:T(1,128)}', space=vmem, size = 0x12000, scoped, tag = 'internal scratch']
  #allocation2 [shape = 'f32[1,1]{1,0:T(1,128)S(1)}', space=vmem, size = 0x200, scoped, tag = 'scoped memory for tpu_custom_call.1']
  %s0 = inlined_call_operand.vmem [shape: f32[8,8,64], index: 0, kind: input, shape index: {}]
  %s1 = inlined_call_operand.vmem [shape: bf16[2,64,192], index: 1, kind: input, shape index: {}]
  %s2 = inlined_call_operand.vmem [shape: f32[2,1,192], index: 2, kind: input, shape index: {}]
  %s3 = inlined_call_operand.vmem [shape: bf16[2,64,64], index: 3, kind: input, shape index: {}]
  %s4 = inlined_call_operand.hbm [shape: f32[2,1,64], index: 4, kind: input, shape index: {}]
  %s5 = inlined_call_operand.vmem [shape: bf16[2,64,256], index: 5, kind: input, shape index: {}]
  %s6 = inlined_call_operand.vmem [shape: f32[2,1,256], index: 6, kind: input, shape index: {}]
  %s7 = inlined_call_operand.vmem [shape: bf16[2,256,64], index: 7, kind: input, shape index: {}]
  %s8 = inlined_call_operand.vmem [shape: f32[2,1,64], index: 8, kind: input, shape index: {}]
  %s9 = inlined_call_operand.vmem [shape: f32[2,1,64], index: 9, kind: input, shape index: {}]
  %s10 = inlined_call_operand.vmem [shape: f32[2,1,64], index: 10, kind: input, shape index: {}]
  %s11 = inlined_call_operand.vmem [shape: f32[2,1,64], index: 11, kind: input, shape index: {}]
  %s12 = inlined_call_operand.vmem [shape: f32[2,1,64], index: 12, kind: input, shape index: {}]
  %s13 = inlined_call_operand.vmem [shape: f32[1,64], index: 13, kind: input, shape index: {}]
  %s14 = inlined_call_operand.<no memory space> [shape: f32[1,1], index: 14, kind: input, shape index: {}]
  %s15 = inlined_call_operand.hbm [shape: f32[1,1,8], index: 15, kind: output, shape index: {}]
  %s16 = sld [smem:[#allocation0]]
  $region74: #{tpu_custom_call.1} parent=0
    _
  %s18 = ssub.s32 1, %s16
  %s19 = scalar_select 0, %s18, %s16
  %v20 = vstv %s14
  %21 = vst [vmem:[#allocation2] sm:$0x1] %v20
  $region1: #{tpu_custom_call.1} parent=0
    #allocation3 [shape = 'u8[1024]{0}', space=vmem, size = 0x400, scoped, tag = 'input window, operand 4, single buffered']
    #allocation4 [shape = 's32[1]{0}', space=sflag, size = 0x4, scoped, tag = 'scoped memory for tpu_custom_call.1']
    #allocation5 [shape = 's32[1]{0}', space=sflag, size = 0x4, scoped, tag = 'scoped memory for tpu_custom_call.1']
    #allocation6 [shape = 'u8[512]{0}', space=vmem, size = 0x400, scoped, tag = 'output window, operand 0, single buffered']
    %22 = vsyncpa [#allocation4], 0
    %23 = vsyncpa [#allocation5], 0
    // Predicated region
    $region2: #{tpu_custom_call.1} parent=1 // pred_check
      _
    $region3: #{tpu_custom_call.1} parent=1 // pred_check_branch
      %25 = sbr.rel (0) target = $region5
    $region4: #{tpu_custom_call.1} parent=1 // pred_region
      _
    $region5: #{tpu_custom_call.1} parent=1 // pred_fallthru
      _
    // Predicated region
    $region6: #{tpu_custom_call.1} parent=1 // pred_check
      _
    $region7: #{tpu_custom_call.1} parent=1 // pred_check_branch
      %27 = sbr.rel (0) target = $region9
    $region8: #{tpu_custom_call.1} parent=1 // pred_region
      _
    $region9: #{tpu_custom_call.1} parent=1 // pred_fallthru
      _
    // Predicated region
    $region10: #{tpu_custom_call.1} parent=1 // pred_check
      _
    $region11: #{tpu_custom_call.1} parent=1 // pred_check_branch
      %29 = sbr.rel (0) target = $region13
    $region12: #{tpu_custom_call.1} parent=1 // pred_region
      _
    $region13: #{tpu_custom_call.1} parent=1 // pred_fallthru
      _
    // Predicated region
    $region14: #{tpu_custom_call.1} parent=1 // pred_check
      _
    $region15: #{tpu_custom_call.1} parent=1 // pred_check_branch
      %31 = sbr.rel (0) target = $region17
    $region16: #{tpu_custom_call.1} parent=1 // pred_region
      _
    $region17: #{tpu_custom_call.1} parent=1 // pred_fallthru
      _
    // Predicated region
    $region18: #{tpu_custom_call.1} parent=1 // pred_check
      _
    $region19: #{tpu_custom_call.1} parent=1 // pred_check_branch
      %33 = sbr.rel (0) target = $region21
    $region20: #{tpu_custom_call.1} parent=1 // pred_region
      %s35 = ssub.s32 32, 32
      %36 = vsyncadd [#allocation4], %s35
      %s37 = sshll.u32 [#allocation3], 4
      %s38 = int_to_ptr.vmem [resolvable:$true] %s37
      %43 = dma.hbm_to_vmem [thread:$0]  %s4, 32, %s38, [#allocation4], 16, 16, 1
    $region21: #{tpu_custom_call.1} parent=1 // pred_fallthru
      _
    // Predicated region
    $region22: #{tpu_custom_call.1} parent=1 // pred_check
      _
    $region23: #{tpu_custom_call.1} parent=1 // pred_check_branch
      %45 = sbr.rel (0) target = $region25
    $region24: #{tpu_custom_call.1} parent=1 // pred_region
      _
    $region25: #{tpu_custom_call.1} parent=1 // pred_fallthru
      _
    // Predicated region
    $region26: #{tpu_custom_call.1} parent=1 // pred_check
      _
    $region27: #{tpu_custom_call.1} parent=1 // pred_check_branch
      %47 = sbr.rel (0) target = $region29
    $region28: #{tpu_custom_call.1} parent=1 // pred_region
      _
    $region29: #{tpu_custom_call.1} parent=1 // pred_fallthru
      _
    // Predicated region
    $region30: #{tpu_custom_call.1} parent=1 // pred_check
      _
    $region31: #{tpu_custom_call.1} parent=1 // pred_check_branch
      %49 = sbr.rel (0) target = $region33
    $region32: #{tpu_custom_call.1} parent=1 // pred_region
      _
    $region33: #{tpu_custom_call.1} parent=1 // pred_fallthru
      _
    // Predicated region
    $region34: #{tpu_custom_call.1} parent=1 // pred_check
      _
    $region35: #{tpu_custom_call.1} parent=1 // pred_check_branch
      %51 = sbr.rel (0) target = $region37
    $region36: #{tpu_custom_call.1} parent=1 // pred_region
      _
    $region37: #{tpu_custom_call.1} parent=1 // pred_fallthru
      _
    // Predicated region
    $region38: #{tpu_custom_call.1} parent=1 // pred_check
      _
    $region39: #{tpu_custom_call.1} parent=1 // pred_check_branch
      %53 = sbr.rel (0) target = $region41
    $region40: #{tpu_custom_call.1} parent=1 // pred_region
      _
    $region41: #{tpu_custom_call.1} parent=1 // pred_fallthru
      _
    // Predicated region
    $region42: #{tpu_custom_call.1} parent=1 // pred_check
      _
    $region43: #{tpu_custom_call.1} parent=1 // pred_check_branch
      %55 = sbr.rel (0) target = $region45
    $region44: #{tpu_custom_call.1} parent=1 // pred_region
      _
    $region45: #{tpu_custom_call.1} parent=1 // pred_fallthru
      _
    // Predicated region
    $region46: #{tpu_custom_call.1} parent=1 // pred_check
      _
    $region47: #{tpu_custom_call.1} parent=1 // pred_check_branch
      %57 = sbr.rel (0) target = $region49
    $region48: #{tpu_custom_call.1} parent=1 // pred_region
      _
    $region49: #{tpu_custom_call.1} parent=1 // pred_fallthru
      _
    // Predicated region
    $region50: #{tpu_custom_call.1} parent=1 // pred_check
      _
    $region51: #{tpu_custom_call.1} parent=1 // pred_check_branch
      %59 = sbr.rel (0) target = $region53
    $region52: #{tpu_custom_call.1} parent=1 // pred_region
      _
    $region53: #{tpu_custom_call.1} parent=1 // pred_fallthru
      _
    // Predicated region
    $region54: #{tpu_custom_call.1} parent=1 // pred_check
      _
    $region55: #{tpu_custom_call.1} parent=1 // pred_check_branch
      %61 = sbr.rel (0) target = $region57
    $region56: #{tpu_custom_call.1} parent=1 // pred_region
      _
    $region57: #{tpu_custom_call.1} parent=1 // pred_fallthru
      _
    // Predicated region
    $region58: #{tpu_custom_call.1} parent=1 // pred_check
      _
    $region59: #{tpu_custom_call.1} parent=1 // pred_check_branch
      %63 = sbr.rel (0) target = $region61
    $region60: #{tpu_custom_call.1} parent=1 // pred_region
      _
    $region61: #{tpu_custom_call.1} parent=1 // pred_fallthru
      _
    // Predicated region
    $region62: #{tpu_custom_call.1} parent=1 // pred_check
      _
    $region63: #{tpu_custom_call.1} parent=1 // pred_check_branch
      %65 = sbr.rel (0) target = $region65
    $region64: #{tpu_custom_call.1} parent=1 // pred_region
      %66 = dma.done [#allocation4], 32
    $region65: #{tpu_custom_call.1} parent=1 // pred_fallthru
      _
    %v68 = vld [vmem:[%s0] sm:$0xff]
    %v69 = vld [vmem:[%s0 + $0x8] sm:$0xff]
    %v70 = vld [vmem:[%s0 + $0x10] sm:$0xff]
    %v71 = vld [vmem:[%s0 + $0x18] sm:$0xff]
    %v72 = vld [vmem:[%s0 + $0x20] sm:$0xff]
    %v73 = vld [vmem:[%s0 + $0x28] sm:$0xff]
    %v74 = vld [vmem:[%s0 + $0x30] sm:$0xff]
    %v75 = vld [vmem:[%s0 + $0x38] sm:$0xff]
    %v76 = vpack.c.bf16 %v69, %v68
    %v77 = vpack.c.bf16 %v71, %v70
    %v78 = vpack.c.bf16 %v73, %v72
    %v79 = vpack.c.bf16 %v75, %v74
    %v80 = vld [vmem:[%s1] sm:$0xff]
    %v81 = vld [vmem:[%s1 + $0x8] sm:$0xff]
    %v82 = vld [vmem:[%s1 + $0x10] sm:$0xff]
    %v83 = vld [vmem:[%s1 + $0x18] sm:$0xff]
    %v84 = vld [vmem:[%s1 + $0x20] sm:$0xff]
    %v85 = vld [vmem:[%s1 + $0x28] sm:$0xff]
    %v86 = vld [vmem:[%s1 + $0x30] sm:$0xff]
    %v87 = vld [vmem:[%s1 + $0x38] sm:$0xff]
    %v88 = vld [vmem:[%s2] sm:$0x3]
    %v90 = vlaneseq
    %v91 = vshrl.u32 %v90, 7
    %v92 = vsub.s32 0, %v91
    %v93 = vrot.slane %v88, %v92
    %v94 = vlaneseq
    %v95 = vshrl.u32 %v94, 7
    %v96 = vsub.s32 1, %v95
    %v97 = vrot.slane %v88, %v96
    %v108 = vunpack.c.l.b16 %v80
    %v109 = vunpack.c.h.b16 %v80
    %v110 = vunpack.c.l.b16 %v81
    %v111 = vunpack.c.h.b16 %v81
    %v112 = vunpack.c.l.b16 %v82
    %v113 = vunpack.c.h.b16 %v82
    %v114 = vunpack.c.l.b16 %v83
    %v115 = vunpack.c.h.b16 %v83
    %v116 = vunpack.c.l.b16 %v84
    %v117 = vunpack.c.h.b16 %v84
    %v118 = vunpack.c.l.b16 %v85
    %v119 = vunpack.c.h.b16 %v85
    %v120 = vunpack.c.l.b16 %v86
    %v121 = vunpack.c.h.b16 %v86
    %v122 = vunpack.c.l.b16 %v87
    %v123 = vunpack.c.h.b16 %v87
    %v124 = vpack.c.b16 %v110, %v108
    %v125 = vpack.c.b16 %v111, %v109
    %v126 = vpack.c.b16 %v114, %v112
    %v127 = vpack.c.b16 %v115, %v113
    %v128 = vpack.c.b16 %v118, %v116
    %v129 = vpack.c.b16 %v119, %v117
    %v130 = vpack.c.b16 %v122, %v120
    %v131 = vpack.c.b16 %v123, %v121
    %vm140 = vcmask 523264
    %v142 = vsel %vm140, %v76, 0
    %v145 = vsel %vm140, %v77, 0
    %v148 = vsel %vm140, %v78, 0
    %v151 = vsel %vm140, %v79, 0
    %153 = vmatprep.subr.bf16.mxu0 0
    %154 = vmatpush1.bf16.msra.mxu0 0
    %155 = vmatprep.subr.bf16.mxu0 0
    %156 = vmatpush1.bf16.msra.mxu0 0
    %157 = vmatprep.subr.bf16.mxu0 0
    %158 = vmatpush1.bf16.msra.mxu0 0
    %159 = vmatprep.subr.bf16.mxu0 0
    %160 = vmatpush1.bf16.msra.mxu0 0
    %161 = vmatprep.subr.bf16.mxu0 %v131
    %162 = vmatpush1.bf16.msra.mxu0 %v130
    %163 = vmatprep.subr.bf16.mxu0 %v129
    %164 = vmatpush1.bf16.msra.mxu0 %v128
    %165 = vmatprep.subr.bf16.mxu0 %v127
    %166 = vmatpush1.bf16.msra.mxu0 %v126
    %167 = vmatprep.subr.bf16.mxu0 %v125
    %168 = vmatpush1.bf16.msra.mxu0 %v124
    %169 = vmatprep.subr.bf16.mxu0 0
    %170 = vmatpush2.bf16.msra.mxu0 0
    %171 = vmatprep.subr.bf16.mxu0 0
    %172 = vmatpush2.bf16.msra.mxu0 0
    %173 = vmatprep.subr.bf16.mxu0 0
    %174 = vmatpush2.bf16.msra.mxu0 0
    %175 = vmatprep.subr.bf16.mxu0 0
    %176 = vmatpush2.bf16.msra.mxu0 0
    %177 = vmatprep.subr.bf16.mxu0 0
    %178 = vmatpush2.bf16.msra.mxu0 0
    %179 = vmatprep.subr.bf16.mxu0 0
    %180 = vmatpush2.bf16.msra.mxu0 0
    %181 = vmatprep.subr.bf16.mxu0 0
    %182 = vmatpush2.bf16.msra.mxu0 0
    %183 = vmatprep.subr.bf16.mxu0 0
    %184 = vmatpush2.bf16.msra.mxu0 0
    %185 = vmatprep.mubr.bf16.mxu0 0
    %186 = vmatmul.mubr.bf16.gmra.mxu0 %v142
    %v187 = vpop.f32.mrf.mxu0
    %v188 = vadd.f32 %v93, %v187
    %v189 = vpop.f32.mrf.mxu0
    %v190 = vadd.f32 %v97, %v189
    %v191 = vpop.f32.mrf.mxu0
    %v192 = vadd.f32 %v93, %v191
    %v193 = vpop.f32.mrf.mxu0
    %v194 = vadd.f32 %v97, %v193
    %195 = vmatprep.mubr.bf16.mxu0 0
    %196 = vmatmul.mubr.bf16.gmra.mxu0 %v145
    %v197 = vpop.f32.mrf.mxu0
    %v198 = vadd.f32 %v93, %v197
    %v199 = vpop.f32.mrf.mxu0
    %v200 = vadd.f32 %v97, %v199
    %v201 = vpop.f32.mrf.mxu0
    %v202 = vadd.f32 %v93, %v201
    %v203 = vpop.f32.mrf.mxu0
    %v204 = vadd.f32 %v97, %v203
    %205 = vmatprep.mubr.bf16.mxu0 0
    %206 = vmatmul.mubr.bf16.gmra.mxu0 %v148
    %v207 = vpop.f32.mrf.mxu0
    %v208 = vadd.f32 %v93, %v207
    %v209 = vpop.f32.mrf.mxu0
    %v210 = vadd.f32 %v97, %v209
    %v211 = vpop.f32.mrf.mxu0
    %v212 = vadd.f32 %v93, %v211
    %v213 = vpop.f32.mrf.mxu0
    %v214 = vadd.f32 %v97, %v213
    %215 = vmatprep.mubr.bf16.mxu0 0
    %216 = vmatmul.mubr.bf16.gmra.mxu0 %v151
    %v217 = vpop.f32.mrf.mxu0
    %v218 = vadd.f32 %v93, %v217
    %v219 = vpop.f32.mrf.mxu0
    %v220 = vadd.f32 %v97, %v219
    %v221 = vpop.f32.mrf.mxu0
    %v222 = vadd.f32 %v93, %v221
    %v223 = vpop.f32.mrf.mxu0
    %v224 = vadd.f32 %v97, %v223
    %225 = vdwg.mxu0
    %v226 = vpack.c.bf16 %v188, %v188
    %v227 = vpack.c.bf16 %v192, %v192
    %v228 = vpack.c.bf16 %v198, %v198
    %v229 = vpack.c.bf16 %v202, %v202
    %v230 = vpack.c.bf16 %v208, %v208
    %v231 = vpack.c.bf16 %v212, %v212
    %v232 = vpack.c.bf16 %v218, %v218
    %v233 = vpack.c.bf16 %v222, %v222
    %v234 = vpack.c.bf16 %v190, %v190
    %v235 = vpack.c.bf16 %v194, %v194
    %v236 = vpack.c.bf16 %v200, %v200
    %v237 = vpack.c.bf16 %v204, %v204
    %v238 = vpack.c.bf16 %v210, %v210
    %v239 = vpack.c.bf16 %v214, %v214
    %v240 = vpack.c.bf16 %v220, %v220
    %v241 = vpack.c.bf16 %v224, %v224
    %243 = vrot.lane.b32.xlu0 %v226, 64
    %v244 = vpop.permute.xlu0 %243
    %vm245 = vcmask 130048
    %v247 = vsel %vm245, %v226, 0
    %v250 = vsel %vm245, %v244, 0
    %252 = vmatprep.subr.bf16.mxu0 0
    %253 = vmatpush1.bf16.xpose.msra.mxu0 0
    %254 = vmatprep.subr.bf16.mxu0 0
    %255 = vmatpush1.bf16.xpose.msra.mxu0 0
    %256 = vmatprep.subr.bf16.mxu0 0
    %257 = vmatpush1.bf16.xpose.msra.mxu0 0
    %258 = vmatprep.subr.bf16.mxu0 0
    %259 = vmatpush1.bf16.xpose.msra.mxu0 0
    %260 = vmatprep.subr.bf16.mxu0 0
    %261 = vmatpush1.bf16.xpose.msra.mxu0 0
    %262 = vmatprep.subr.bf16.mxu0 0
    %263 = vmatpush1.bf16.xpose.msra.mxu0 0
    %264 = vmatprep.subr.bf16.mxu0 0
    %265 = vmatpush1.bf16.xpose.msra.mxu0 0
    %266 = vmatprep.subr.bf16.mxu0 0
    %267 = vmatpush1.bf16.xpose.msra.mxu0 %v250
    %268 = vmatprep.subr.bf16.mxu0 0
    %269 = vmatpush2.bf16.xpose.msra.mxu0 0
    %270 = vmatprep.subr.bf16.mxu0 0
    %271 = vmatpush2.bf16.xpose.msra.mxu0 0
    %272 = vmatprep.subr.bf16.mxu0 0
    %273 = vmatpush2.bf16.xpose.msra.mxu0 0
    %274 = vmatprep.subr.bf16.mxu0 0
    %275 = vmatpush2.bf16.xpose.msra.mxu0 0
    %276 = vmatprep.subr.bf16.mxu0 0
    %277 = vmatpush2.bf16.xpose.msra.mxu0 0
    %278 = vmatprep.subr.bf16.mxu0 0
    %279 = vmatpush2.bf16.xpose.msra.mxu0 0
    %280 = vmatprep.subr.bf16.mxu0 0
    %281 = vmatpush2.bf16.xpose.msra.mxu0 0
    %282 = vmatprep.subr.bf16.mxu0 0
    %283 = vmatpush2.bf16.xpose.msra.mxu0 0
    %284 = vmatprep.mubr.bf16.mxu0 0
    %285 = vmatmul.mubr.bf16.gmra.mxu0 %v247
    %v286 = vpop.f32.mrf.mxu0
    %v287 = vadd.f32 0.0, %v286
    %v288 = vpop.f32.mrf.mxu0
    %v289 = vpop.f32.mrf.mxu0
    %v290 = vpop.f32.mrf.mxu0
    %291 = vdwg.mxu0
    %293 = vrot.lane.b32.xlu0 %v227, 64
    %v294 = vpop.permute.xlu0 %293
    %v296 = vsel %vm245, %v227, 0
    %v299 = vsel %vm245, %v294, 0
    %301 = vmatprep.subr.bf16.mxu0 0
    %302 = vmatpush1.bf16.xpose.msra.mxu0 0
    %303 = vmatprep.subr.bf16.mxu0 0
    %304 = vmatpush1.bf16.xpose.msra.mxu0 0
    %305 = vmatprep.subr.bf16.mxu0 0
    %306 = vmatpush1.bf16.xpose.msra.mxu0 0
    %307 = vmatprep.subr.bf16.mxu0 0
    %308 = vmatpush1.bf16.xpose.msra.mxu0 0
    %309 = vmatprep.subr.bf16.mxu0 0
    %310 = vmatpush1.bf16.xpose.msra.mxu0 0
    %311 = vmatprep.subr.bf16.mxu0 0
    %312 = vmatpush1.bf16.xpose.msra.mxu0 0
    %313 = vmatprep.subr.bf16.mxu0 0
    %314 = vmatpush1.bf16.xpose.msra.mxu0 0
    %315 = vmatprep.subr.bf16.mxu0 0
    %316 = vmatpush1.bf16.xpose.msra.mxu0 %v299
    %317 = vmatprep.subr.bf16.mxu0 0
    %318 = vmatpush2.bf16.xpose.msra.mxu0 0
    %319 = vmatprep.subr.bf16.mxu0 0
    %320 = vmatpush2.bf16.xpose.msra.mxu0 0
    %321 = vmatprep.subr.bf16.mxu0 0
    %322 = vmatpush2.bf16.xpose.msra.mxu0 0
    %323 = vmatprep.subr.bf16.mxu0 0
    %324 = vmatpush2.bf16.xpose.msra.mxu0 0
    %325 = vmatprep.subr.bf16.mxu0 0
    %326 = vmatpush2.bf16.xpose.msra.mxu0 0
    %327 = vmatprep.subr.bf16.mxu0 0
    %328 = vmatpush2.bf16.xpose.msra.mxu0 0
    %329 = vmatprep.subr.bf16.mxu0 0
    %330 = vmatpush2.bf16.xpose.msra.mxu0 0
    %331 = vmatprep.subr.bf16.mxu0 0
    %332 = vmatpush2.bf16.xpose.msra.mxu0 0
    %333 = vmatprep.mubr.bf16.mxu0 0
    %334 = vmatmul.mubr.bf16.gmra.mxu0 %v296
    %v335 = vpop.f32.mrf.mxu0
    %v336 = vadd.f32 0.0, %v335
    %v337 = vpop.f32.mrf.mxu0
    %v338 = vpop.f32.mrf.mxu0
    %v339 = vpop.f32.mrf.mxu0
    %340 = vdwg.mxu0
    %342 = vrot.lane.b32.xlu0 %v228, 64
    %v343 = vpop.permute.xlu0 %342
    %v345 = vsel %vm245, %v228, 0
    %v348 = vsel %vm245, %v343, 0
    %350 = vmatprep.subr.bf16.mxu0 0
    %351 = vmatpush1.bf16.xpose.msra.mxu0 0
    %352 = vmatprep.subr.bf16.mxu0 0
    %353 = vmatpush1.bf16.xpose.msra.mxu0 0
    %354 = vmatprep.subr.bf16.mxu0 0
    %355 = vmatpush1.bf16.xpose.msra.mxu0 0
    %356 = vmatprep.subr.bf16.mxu0 0
    %357 = vmatpush1.bf16.xpose.msra.mxu0 0
    %358 = vmatprep.subr.bf16.mxu0 0
    %359 = vmatpush1.bf16.xpose.msra.mxu0 0
    %360 = vmatprep.subr.bf16.mxu0 0
    %361 = vmatpush1.bf16.xpose.msra.mxu0 0
    %362 = vmatprep.subr.bf16.mxu0 0
    %363 = vmatpush1.bf16.xpose.msra.mxu0 0
    %364 = vmatprep.subr.bf16.mxu0 0
    %365 = vmatpush1.bf16.xpose.msra.mxu0 %v348
    %366 = vmatprep.subr.bf16.mxu0 0
    %367 = vmatpush2.bf16.xpose.msra.mxu0 0
    %368 = vmatprep.subr.bf16.mxu0 0
    %369 = vmatpush2.bf16.xpose.msra.mxu0 0
    %370 = vmatprep.subr.bf16.mxu0 0
    %371 = vmatpush2.bf16.xpose.msra.mxu0 0
    %372 = vmatprep.subr.bf16.mxu0 0
    %373 = vmatpush2.bf16.xpose.msra.mxu0 0
    %374 = vmatprep.subr.bf16.mxu0 0
    %375 = vmatpush2.bf16.xpose.msra.mxu0 0
    %376 = vmatprep.subr.bf16.mxu0 0
    %377 = vmatpush2.bf16.xpose.msra.mxu0 0
    %378 = vmatprep.subr.bf16.mxu0 0
    %379 = vmatpush2.bf16.xpose.msra.mxu0 0
    %380 = vmatprep.subr.bf16.mxu0 0
    %381 = vmatpush2.bf16.xpose.msra.mxu0 0
    %382 = vmatprep.mubr.bf16.mxu0 0
    %383 = vmatmul.mubr.bf16.gmra.mxu0 %v345
    %v384 = vpop.f32.mrf.mxu0
    %v385 = vadd.f32 0.0, %v384
    %v386 = vpop.f32.mrf.mxu0
    %v387 = vpop.f32.mrf.mxu0
    %v388 = vpop.f32.mrf.mxu0
    %389 = vdwg.mxu0
    %391 = vrot.lane.b32.xlu0 %v229, 64
    %v392 = vpop.permute.xlu0 %391
    %v394 = vsel %vm245, %v229, 0
    %v397 = vsel %vm245, %v392, 0
    %399 = vmatprep.subr.bf16.mxu0 0
    %400 = vmatpush1.bf16.xpose.msra.mxu0 0
    %401 = vmatprep.subr.bf16.mxu0 0
    %402 = vmatpush1.bf16.xpose.msra.mxu0 0
    %403 = vmatprep.subr.bf16.mxu0 0
    %404 = vmatpush1.bf16.xpose.msra.mxu0 0
    %405 = vmatprep.subr.bf16.mxu0 0
    %406 = vmatpush1.bf16.xpose.msra.mxu0 0
    %407 = vmatprep.subr.bf16.mxu0 0
    %408 = vmatpush1.bf16.xpose.msra.mxu0 0
    %409 = vmatprep.subr.bf16.mxu0 0
    %410 = vmatpush1.bf16.xpose.msra.mxu0 0
    %411 = vmatprep.subr.bf16.mxu0 0
    %412 = vmatpush1.bf16.xpose.msra.mxu0 0
    %413 = vmatprep.subr.bf16.mxu0 0
    %414 = vmatpush1.bf16.xpose.msra.mxu0 %v397
    %415 = vmatprep.subr.bf16.mxu0 0
    %416 = vmatpush2.bf16.xpose.msra.mxu0 0
    %417 = vmatprep.subr.bf16.mxu0 0
    %418 = vmatpush2.bf16.xpose.msra.mxu0 0
    %419 = vmatprep.subr.bf16.mxu0 0
    %420 = vmatpush2.bf16.xpose.msra.mxu0 0
    %421 = vmatprep.subr.bf16.mxu0 0
    %422 = vmatpush2.bf16.xpose.msra.mxu0 0
    %423 = vmatprep.subr.bf16.mxu0 0
    %424 = vmatpush2.bf16.xpose.msra.mxu0 0
    %425 = vmatprep.subr.bf16.mxu0 0
    %426 = vmatpush2.bf16.xpose.msra.mxu0 0
    %427 = vmatprep.subr.bf16.mxu0 0
    %428 = vmatpush2.bf16.xpose.msra.mxu0 0
    %429 = vmatprep.subr.bf16.mxu0 0
    %430 = vmatpush2.bf16.xpose.msra.mxu0 0
    %431 = vmatprep.mubr.bf16.mxu0 0
    %432 = vmatmul.mubr.bf16.gmra.mxu0 %v394
    %v433 = vpop.f32.mrf.mxu0
    %v434 = vadd.f32 0.0, %v433
    %v435 = vpop.f32.mrf.mxu0
    %v436 = vpop.f32.mrf.mxu0
    %v437 = vpop.f32.mrf.mxu0
    %438 = vdwg.mxu0
    %440 = vrot.lane.b32.xlu0 %v230, 64
    %v441 = vpop.permute.xlu0 %440
    %v443 = vsel %vm245, %v230, 0
    %v446 = vsel %vm245, %v441, 0
    %448 = vmatprep.subr.bf16.mxu0 0
    %449 = vmatpush1.bf16.xpose.msra.mxu0 0
    %450 = vmatprep.subr.bf16.mxu0 0
    %451 = vmatpush1.bf16.xpose.msra.mxu0 0
    %452 = vmatprep.subr.bf16.mxu0 0
    %453 = vmatpush1.bf16.xpose.msra.mxu0 0
    %454 = vmatprep.subr.bf16.mxu0 0
    %455 = vmatpush1.bf16.xpose.msra.mxu0 0
    %456 = vmatprep.subr.bf16.mxu0 0
    %457 = vmatpush1.bf16.xpose.msra.mxu0 0
    %458 = vmatprep.subr.bf16.mxu0 0
    %459 = vmatpush1.bf16.xpose.msra.mxu0 0
    %460 = vmatprep.subr.bf16.mxu0 0
    %461 = vmatpush1.bf16.xpose.msra.mxu0 0
    %462 = vmatprep.subr.bf16.mxu0 0
    %463 = vmatpush1.bf16.xpose.msra.mxu0 %v446
    %464 = vmatprep.subr.bf16.mxu0 0
    %465 = vmatpush2.bf16.xpose.msra.mxu0 0
    %466 = vmatprep.subr.bf16.mxu0 0
    %467 = vmatpush2.bf16.xpose.msra.mxu0 0
    %468 = vmatprep.subr.bf16.mxu0 0
    %469 = vmatpush2.bf16.xpose.msra.mxu0 0
    %470 = vmatprep.subr.bf16.mxu0 0
    %471 = vmatpush2.bf16.xpose.msra.mxu0 0
    %472 = vmatprep.subr.bf16.mxu0 0
    %473 = vmatpush2.bf16.xpose.msra.mxu0 0
    %474 = vmatprep.subr.bf16.mxu0 0
    %475 = vmatpush2.bf16.xpose.msra.mxu0 0
    %476 = vmatprep.subr.bf16.mxu0 0
    %477 = vmatpush2.bf16.xpose.msra.mxu0 0
    %478 = vmatprep.subr.bf16.mxu0 0
    %479 = vmatpush2.bf16.xpose.msra.mxu0 0
    %480 = vmatprep.mubr.bf16.mxu0 0
    %481 = vmatmul.mubr.bf16.gmra.mxu0 %v443
    %v482 = vpop.f32.mrf.mxu0
    %v483 = vadd.f32 0.0, %v482
    %v484 = vpop.f32.mrf.mxu0
    %v485 = vpop.f32.mrf.mxu0
    %v486 = vpop.f32.mrf.mxu0
    %487 = vdwg.mxu0
    %489 = vrot.lane.b32.xlu0 %v231, 64
    %v490 = vpop.permute.xlu0 %489
    %v492 = vsel %vm245, %v231, 0
    %v495 = vsel %vm245, %v490, 0
    %497 = vmatprep.subr.bf16.mxu0 0
    %498 = vmatpush1.bf16.xpose.msra.mxu0 0
    %499 = vmatprep.subr.bf16.mxu0 0
    %500 = vmatpush1.bf16.xpose.msra.mxu0 0
    %501 = vmatprep.subr.bf16.mxu0 0
    %502 = vmatpush1.bf16.xpose.msra.mxu0 0
    %503 = vmatprep.subr.bf16.mxu0 0
    %504 = vmatpush1.bf16.xpose.msra.mxu0 0
    %505 = vmatprep.subr.bf16.mxu0 0
    %506 = vmatpush1.bf16.xpose.msra.mxu0 0
    %507 = vmatprep.subr.bf16.mxu0 0
    %508 = vmatpush1.bf16.xpose.msra.mxu0 0
    %509 = vmatprep.subr.bf16.mxu0 0
    %510 = vmatpush1.bf16.xpose.msra.mxu0 0
    %511 = vmatprep.subr.bf16.mxu0 0
    %512 = vmatpush1.bf16.xpose.msra.mxu0 %v495
    %513 = vmatprep.subr.bf16.mxu0 0
    %514 = vmatpush2.bf16.xpose.msra.mxu0 0
    %515 = vmatprep.subr.bf16.mxu0 0
    %516 = vmatpush2.bf16.xpose.msra.mxu0 0
    %517 = vmatprep.subr.bf16.mxu0 0
    %518 = vmatpush2.bf16.xpose.msra.mxu0 0
    %519 = vmatprep.subr.bf16.mxu0 0
    %520 = vmatpush2.bf16.xpose.msra.mxu0 0
    %521 = vmatprep.subr.bf16.mxu0 0
    %522 = vmatpush2.bf16.xpose.msra.mxu0 0
    %523 = vmatprep.subr.bf16.mxu0 0
    %524 = vmatpush2.bf16.xpose.msra.mxu0 0
    %525 = vmatprep.subr.bf16.mxu0 0
    %526 = vmatpush2.bf16.xpose.msra.mxu0 0
    %527 = vmatprep.subr.bf16.mxu0 0
    %528 = vmatpush2.bf16.xpose.msra.mxu0 0
    %529 = vmatprep.mubr.bf16.mxu0 0
    %530 = vmatmul.mubr.bf16.gmra.mxu0 %v492
    %v531 = vpop.f32.mrf.mxu0
    %v532 = vadd.f32 0.0, %v531
    %v533 = vpop.f32.mrf.mxu0
    %v534 = vpop.f32.mrf.mxu0
    %v535 = vpop.f32.mrf.mxu0
    %536 = vdwg.mxu0
    %538 = vrot.lane.b32.xlu0 %v232, 64
    %v539 = vpop.permute.xlu0 %538
    %v541 = vsel %vm245, %v232, 0
    %v544 = vsel %vm245, %v539, 0
    %546 = vmatprep.subr.bf16.mxu0 0
    %547 = vmatpush1.bf16.xpose.msra.mxu0 0
    %548 = vmatprep.subr.bf16.mxu0 0
    %549 = vmatpush1.bf16.xpose.msra.mxu0 0
    %550 = vmatprep.subr.bf16.mxu0 0
    %551 = vmatpush1.bf16.xpose.msra.mxu0 0
    %552 = vmatprep.subr.bf16.mxu0 0
    %553 = vmatpush1.bf16.xpose.msra.mxu0 0
    %554 = vmatprep.subr.bf16.mxu0 0
    %555 = vmatpush1.bf16.xpose.msra.mxu0 0
    %556 = vmatprep.subr.bf16.mxu0 0
    %557 = vmatpush1.bf16.xpose.msra.mxu0 0
    %558 = vmatprep.subr.bf16.mxu0 0
    %559 = vmatpush1.bf16.xpose.msra.mxu0 0
    %560 = vmatprep.subr.bf16.mxu0 0
    %561 = vmatpush1.bf16.xpose.msra.mxu0 %v544
    %562 = vmatprep.subr.bf16.mxu0 0
    %563 = vmatpush2.bf16.xpose.msra.mxu0 0
    %564 = vmatprep.subr.bf16.mxu0 0
    %565 = vmatpush2.bf16.xpose.msra.mxu0 0
    %566 = vmatprep.subr.bf16.mxu0 0
    %567 = vmatpush2.bf16.xpose.msra.mxu0 0
    %568 = vmatprep.subr.bf16.mxu0 0
    %569 = vmatpush2.bf16.xpose.msra.mxu0 0
    %570 = vmatprep.subr.bf16.mxu0 0
    %571 = vmatpush2.bf16.xpose.msra.mxu0 0
    %572 = vmatprep.subr.bf16.mxu0 0
    %573 = vmatpush2.bf16.xpose.msra.mxu0 0
    %574 = vmatprep.subr.bf16.mxu0 0
    %575 = vmatpush2.bf16.xpose.msra.mxu0 0
    %576 = vmatprep.subr.bf16.mxu0 0
    %577 = vmatpush2.bf16.xpose.msra.mxu0 0
    %578 = vmatprep.mubr.bf16.mxu0 0
    %579 = vmatmul.mubr.bf16.gmra.mxu0 %v541
    %v580 = vpop.f32.mrf.mxu0
    %v581 = vadd.f32 0.0, %v580
    %v582 = vpop.f32.mrf.mxu0
    %v583 = vpop.f32.mrf.mxu0
    %v584 = vpop.f32.mrf.mxu0
    %585 = vdwg.mxu0
    %587 = vrot.lane.b32.xlu0 %v233, 64
    %v588 = vpop.permute.xlu0 %587
    %v590 = vsel %vm245, %v233, 0
    %v593 = vsel %vm245, %v588, 0
    %595 = vmatprep.subr.bf16.mxu0 0
    %596 = vmatpush1.bf16.xpose.msra.mxu0 0
    %597 = vmatprep.subr.bf16.mxu0 0
    %598 = vmatpush1.bf16.xpose.msra.mxu0 0
    %599 = vmatprep.subr.bf16.mxu0 0
    %600 = vmatpush1.bf16.xpose.msra.mxu0 0
    %601 = vmatprep.subr.bf16.mxu0 0
    %602 = vmatpush1.bf16.xpose.msra.mxu0 0
    %603 = vmatprep.subr.bf16.mxu0 0
    %604 = vmatpush1.bf16.xpose.msra.mxu0 0
    %605 = vmatprep.subr.bf16.mxu0 0
    %606 = vmatpush1.bf16.xpose.msra.mxu0 0
    %607 = vmatprep.subr.bf16.mxu0 0
    %608 = vmatpush1.bf16.xpose.msra.mxu0 0
    %609 = vmatprep.subr.bf16.mxu0 0
    %610 = vmatpush1.bf16.xpose.msra.mxu0 %v593
    %611 = vmatprep.subr.bf16.mxu0 0
    %612 = vmatpush2.bf16.xpose.msra.mxu0 0
    %613 = vmatprep.subr.bf16.mxu0 0
    %614 = vmatpush2.bf16.xpose.msra.mxu0 0
    %615 = vmatprep.subr.bf16.mxu0 0
    %616 = vmatpush2.bf16.xpose.msra.mxu0 0
    %617 = vmatprep.subr.bf16.mxu0 0
    %618 = vmatpush2.bf16.xpose.msra.mxu0 0
    %619 = vmatprep.subr.bf16.mxu0 0
    %620 = vmatpush2.bf16.xpose.msra.mxu0 0
    %621 = vmatprep.subr.bf16.mxu0 0
    %622 = vmatpush2.bf16.xpose.msra.mxu0 0
    %623 = vmatprep.subr.bf16.mxu0 0
    %624 = vmatpush2.bf16.xpose.msra.mxu0 0
    %625 = vmatprep.subr.bf16.mxu0 0
    %626 = vmatpush2.bf16.xpose.msra.mxu0 0
    %627 = vmatprep.mubr.bf16.mxu0 0
    %628 = vmatmul.mubr.bf16.gmra.mxu0 %v590
    %v629 = vpop.f32.mrf.mxu0
    %v630 = vadd.f32 0.0, %v629
    %v631 = vpop.f32.mrf.mxu0
    %v632 = vpop.f32.mrf.mxu0
    %v633 = vpop.f32.mrf.mxu0
    %634 = vdwg.mxu0
    %vm635 = vcmask 64512
    %v636 = vsel %vm635, %v287, -inf
    %637 = vmax.xlane.f32.xlu0 %v636
    %v638 = vpop.xlane.xlu0 %637
    %v639 = vsel %vm635, %v336, -inf
    %640 = vmax.xlane.f32.xlu0 %v639
    %v641 = vpop.xlane.xlu0 %640
    %v642 = vsel %vm635, %v385, -inf
    %643 = vmax.xlane.f32.xlu0 %v642
    %v644 = vpop.xlane.xlu0 %643
    %v645 = vsel %vm635, %v434, -inf
    %646 = vmax.xlane.f32.xlu0 %v645
    %v647 = vpop.xlane.xlu0 %646
    %v648 = vsel %vm635, %v483, -inf
    %649 = vmax.xlane.f32.xlu0 %v648
    %v650 = vpop.xlane.xlu0 %649
    %v651 = vsel %vm635, %v532, -inf
    %652 = vmax.xlane.f32.xlu0 %v651
    %v653 = vpop.xlane.xlu0 %652
    %v654 = vsel %vm635, %v581, -inf
    %655 = vmax.xlane.f32.xlu0 %v654
    %v656 = vpop.xlane.xlu0 %655
    %v657 = vsel %vm635, %v630, -inf
    %658 = vmax.xlane.f32.xlu0 %v657
    %v659 = vpop.xlane.xlu0 %658
    %v660 = vsub.f32 %v287, %v638
    %v661 = vsub.f32 %v336, %v641
    %v662 = vsub.f32 %v385, %v644
    %v663 = vsub.f32 %v434, %v647
    %v664 = vsub.f32 %v483, %v650
    %v665 = vsub.f32 %v532, %v653
    %v666 = vsub.f32 %v581, %v656
    %v667 = vsub.f32 %v630, %v659
    %v668 = vmul.f32 %v660, 1.442695
    %v669 = vpow.pop %v668
    %v670 = vmul.f32 %v661, 1.442695
    %v671 = vpow.pop %v670
    %v672 = vmul.f32 %v662, 1.442695
    %v673 = vpow.pop %v672
    %v674 = vmul.f32 %v663, 1.442695
    %v675 = vpow.pop %v674
    %v676 = vmul.f32 %v664, 1.442695
    %v677 = vpow.pop %v676
    %v678 = vmul.f32 %v665, 1.442695
    %v679 = vpow.pop %v678
    %v680 = vmul.f32 %v666, 1.442695
    %v681 = vpow.pop %v680
    %v682 = vmul.f32 %v667, 1.442695
    %v683 = vpow.pop %v682
    %v684 = vsel %vm635, %v669, 0.0
    %685 = vadd.xlane.f32.xlu0 %v684
    %v686 = vpop.xlane.xlu0 %685
    %v687 = vsel %vm635, %v671, 0.0
    %688 = vadd.xlane.f32.xlu0 %v687
    %v689 = vpop.xlane.xlu0 %688
    %v690 = vsel %vm635, %v673, 0.0
    %691 = vadd.xlane.f32.xlu0 %v690
    %v692 = vpop.xlane.xlu0 %691
    %v693 = vsel %vm635, %v675, 0.0
    %694 = vadd.xlane.f32.xlu0 %v693
    %v695 = vpop.xlane.xlu0 %694
    %v696 = vsel %vm635, %v677, 0.0
    %697 = vadd.xlane.f32.xlu0 %v696
    %v698 = vpop.xlane.xlu0 %697
    %v699 = vsel %vm635, %v679, 0.0
    %700 = vadd.xlane.f32.xlu0 %v699
    %v701 = vpop.xlane.xlu0 %700
    %v702 = vsel %vm635, %v681, 0.0
    %703 = vadd.xlane.f32.xlu0 %v702
    %v704 = vpop.xlane.xlu0 %703
    %v705 = vsel %vm635, %v683, 0.0
    %706 = vadd.xlane.f32.xlu0 %v705
    %v707 = vpop.xlane.xlu0 %706
    %v708 = vrcp.pop %v686
    %v709 = vrcp.pop %v689
    %v710 = vrcp.pop %v692
    %v711 = vrcp.pop %v695
    %v712 = vrcp.pop %v698
    %v713 = vrcp.pop %v701
    %v714 = vrcp.pop %v704
    %v715 = vrcp.pop %v707
    %v716 = vmul.f32 %v669, %v708
    %v717 = vmul.f32 %v671, %v709
    %v718 = vmul.f32 %v673, %v710
    %v719 = vmul.f32 %v675, %v711
    %v720 = vmul.f32 %v677, %v712
    %v721 = vmul.f32 %v679, %v713
    %v722 = vmul.f32 %v681, %v714
    %v723 = vmul.f32 %v683, %v715
    %v724 = vpack.c.bf16 %v716, %v716
    %v725 = vpack.c.bf16 %v717, %v717
    %v726 = vpack.c.bf16 %v718, %v718
    %v727 = vpack.c.bf16 %v719, %v719
    %v728 = vpack.c.bf16 %v720, %v720
    %v729 = vpack.c.bf16 %v721, %v721
    %v730 = vpack.c.bf16 %v722, %v722
    %v731 = vpack.c.bf16 %v723, %v723
    %v733 = vsel %vm635, %v724, 0
    %vm735 = vcmask 1043456
    %v737 = vsel %vm735, %v234, 0
    %739 = vmatprep.subr.bf16.mxu0 0
    %740 = vmatpush1.bf16.msra.mxu0 0
    %741 = vmatprep.subr.bf16.mxu0 0
    %742 = vmatpush1.bf16.msra.mxu0 0
    %743 = vmatprep.subr.bf16.mxu0 0
    %744 = vmatpush1.bf16.msra.mxu0 0
    %745 = vmatprep.subr.bf16.mxu0 0
    %746 = vmatpush1.bf16.msra.mxu0 0
    %747 = vmatprep.subr.bf16.mxu0 0
    %748 = vmatpush1.bf16.msra.mxu0 0
    %749 = vmatprep.subr.bf16.mxu0 0
    %750 = vmatpush1.bf16.msra.mxu0 0
    %751 = vmatprep.subr.bf16.mxu0 0
    %752 = vmatpush1.bf16.msra.mxu0 0
    %753 = vmatprep.subr.bf16.mxu0 0
    %754 = vmatpush1.bf16.msra.mxu0 %v737
    %755 = vmatprep.subr.bf16.mxu0 0
    %756 = vmatpush2.bf16.msra.mxu0 0
    %757 = vmatprep.subr.bf16.mxu0 0
    %758 = vmatpush2.bf16.msra.mxu0 0
    %759 = vmatprep.subr.bf16.mxu0 0
    %760 = vmatpush2.bf16.msra.mxu0 0
    %761 = vmatprep.subr.bf16.mxu0 0
    %762 = vmatpush2.bf16.msra.mxu0 0
    %763 = vmatprep.subr.bf16.mxu0 0
    %764 = vmatpush2.bf16.msra.mxu0 0
    %765 = vmatprep.subr.bf16.mxu0 0
    %766 = vmatpush2.bf16.msra.mxu0 0
    %767 = vmatprep.subr.bf16.mxu0 0
    %768 = vmatpush2.bf16.msra.mxu0 0
    %769 = vmatprep.subr.bf16.mxu0 0
    %770 = vmatpush2.bf16.msra.mxu0 0
    %771 = vmatprep.mubr.bf16.mxu0 0
    %772 = vmatmul.mubr.bf16.gmra.mxu0 %v733
    %v773 = vpop.f32.mrf.mxu0
    %v774 = vadd.f32 0.0, %v773
    %v775 = vpop.f32.mrf.mxu0
    %v776 = vpop.f32.mrf.mxu0
    %v777 = vpop.f32.mrf.mxu0
    %778 = vdwg.mxu0
    %v780 = vsel %vm635, %v725, 0
    %v783 = vsel %vm735, %v235, 0
    %785 = vmatprep.subr.bf16.mxu0 0
    %786 = vmatpush1.bf16.msra.mxu0 0
    %787 = vmatprep.subr.bf16.mxu0 0
    %788 = vmatpush1.bf16.msra.mxu0 0
    %789 = vmatprep.subr.bf16.mxu0 0
    %790 = vmatpush1.bf16.msra.mxu0 0
    %791 = vmatprep.subr.bf16.mxu0 0
    %792 = vmatpush1.bf16.msra.mxu0 0
    %793 = vmatprep.subr.bf16.mxu0 0
    %794 = vmatpush1.bf16.msra.mxu0 0
    %795 = vmatprep.subr.bf16.mxu0 0
    %796 = vmatpush1.bf16.msra.mxu0 0
    %797 = vmatprep.subr.bf16.mxu0 0
    %798 = vmatpush1.bf16.msra.mxu0 0
    %799 = vmatprep.subr.bf16.mxu0 0
    %800 = vmatpush1.bf16.msra.mxu0 %v783
    %801 = vmatprep.subr.bf16.mxu0 0
    %802 = vmatpush2.bf16.msra.mxu0 0
    %803 = vmatprep.subr.bf16.mxu0 0
    %804 = vmatpush2.bf16.msra.mxu0 0
    %805 = vmatprep.subr.bf16.mxu0 0
    %806 = vmatpush2.bf16.msra.mxu0 0
    %807 = vmatprep.subr.bf16.mxu0 0
    %808 = vmatpush2.bf16.msra.mxu0 0
    %809 = vmatprep.subr.bf16.mxu0 0
    %810 = vmatpush2.bf16.msra.mxu0 0
    %811 = vmatprep.subr.bf16.mxu0 0
    %812 = vmatpush2.bf16.msra.mxu0 0
    %813 = vmatprep.subr.bf16.mxu0 0
    %814 = vmatpush2.bf16.msra.mxu0 0
    %815 = vmatprep.subr.bf16.mxu0 0
    %816 = vmatpush2.bf16.msra.mxu0 0
    %817 = vmatprep.mubr.bf16.mxu0 0
    %818 = vmatmul.mubr.bf16.gmra.mxu0 %v780
    %v819 = vpop.f32.mrf.mxu0
    %v820 = vadd.f32 0.0, %v819
    %v821 = vpop.f32.mrf.mxu0
    %v822 = vpop.f32.mrf.mxu0
    %v823 = vpop.f32.mrf.mxu0
    %824 = vdwg.mxu0
    %v826 = vsel %vm635, %v726, 0
    %v829 = vsel %vm735, %v236, 0
    %831 = vmatprep.subr.bf16.mxu0 0
    %832 = vmatpush1.bf16.msra.mxu0 0
    %833 = vmatprep.subr.bf16.mxu0 0
    %834 = vmatpush1.bf16.msra.mxu0 0
    %835 = vmatprep.subr.bf16.mxu0 0
    %836 = vmatpush1.bf16.msra.mxu0 0
    %837 = vmatprep.subr.bf16.mxu0 0
    %838 = vmatpush1.bf16.msra.mxu0 0
    %839 = vmatprep.subr.bf16.mxu0 0
    %840 = vmatpush1.bf16.msra.mxu0 0
    %841 = vmatprep.subr.bf16.mxu0 0
    %842 = vmatpush1.bf16.msra.mxu0 0
    %843 = vmatprep.subr.bf16.mxu0 0
    %844 = vmatpush1.bf16.msra.mxu0 0
    %845 = vmatprep.subr.bf16.mxu0 0
    %846 = vmatpush1.bf16.msra.mxu0 %v829
    %847 = vmatprep.subr.bf16.mxu0 0
    %848 = vmatpush2.bf16.msra.mxu0 0
    %849 = vmatprep.subr.bf16.mxu0 0
    %850 = vmatpush2.bf16.msra.mxu0 0
    %851 = vmatprep.subr.bf16.mxu0 0
    %852 = vmatpush2.bf16.msra.mxu0 0
    %853 = vmatprep.subr.bf16.mxu0 0
    %854 = vmatpush2.bf16.msra.mxu0 0
    %855 = vmatprep.subr.bf16.mxu0 0
    %856 = vmatpush2.bf16.msra.mxu0 0
    %857 = vmatprep.subr.bf16.mxu0 0
    %858 = vmatpush2.bf16.msra.mxu0 0
    %859 = vmatprep.subr.bf16.mxu0 0
    %860 = vmatpush2.bf16.msra.mxu0 0
    %861 = vmatprep.subr.bf16.mxu0 0
    %862 = vmatpush2.bf16.msra.mxu0 0
    %863 = vmatprep.mubr.bf16.mxu0 0
    %864 = vmatmul.mubr.bf16.gmra.mxu0 %v826
    %v865 = vpop.f32.mrf.mxu0
    %v866 = vadd.f32 0.0, %v865
    %v867 = vpop.f32.mrf.mxu0
    %v868 = vpop.f32.mrf.mxu0
    %v869 = vpop.f32.mrf.mxu0
    %870 = vdwg.mxu0
    %v872 = vsel %vm635, %v727, 0
    %v875 = vsel %vm735, %v237, 0
    %877 = vmatprep.subr.bf16.mxu0 0
    %878 = vmatpush1.bf16.msra.mxu0 0
    %879 = vmatprep.subr.bf16.mxu0 0
    %880 = vmatpush1.bf16.msra.mxu0 0
    %881 = vmatprep.subr.bf16.mxu0 0
    %882 = vmatpush1.bf16.msra.mxu0 0
    %883 = vmatprep.subr.bf16.mxu0 0
    %884 = vmatpush1.bf16.msra.mxu0 0
    %885 = vmatprep.subr.bf16.mxu0 0
    %886 = vmatpush1.bf16.msra.mxu0 0
    %887 = vmatprep.subr.bf16.mxu0 0
    %888 = vmatpush1.bf16.msra.mxu0 0
    %889 = vmatprep.subr.bf16.mxu0 0
    %890 = vmatpush1.bf16.msra.mxu0 0
    %891 = vmatprep.subr.bf16.mxu0 0
    %892 = vmatpush1.bf16.msra.mxu0 %v875
    %893 = vmatprep.subr.bf16.mxu0 0
    %894 = vmatpush2.bf16.msra.mxu0 0
    %895 = vmatprep.subr.bf16.mxu0 0
    %896 = vmatpush2.bf16.msra.mxu0 0
    %897 = vmatprep.subr.bf16.mxu0 0
    %898 = vmatpush2.bf16.msra.mxu0 0
    %899 = vmatprep.subr.bf16.mxu0 0
    %900 = vmatpush2.bf16.msra.mxu0 0
    %901 = vmatprep.subr.bf16.mxu0 0
    %902 = vmatpush2.bf16.msra.mxu0 0
    %903 = vmatprep.subr.bf16.mxu0 0
    %904 = vmatpush2.bf16.msra.mxu0 0
    %905 = vmatprep.subr.bf16.mxu0 0
    %906 = vmatpush2.bf16.msra.mxu0 0
    %907 = vmatprep.subr.bf16.mxu0 0
    %908 = vmatpush2.bf16.msra.mxu0 0
    %909 = vmatprep.mubr.bf16.mxu0 0
    %910 = vmatmul.mubr.bf16.gmra.mxu0 %v872
    %v911 = vpop.f32.mrf.mxu0
    %v912 = vadd.f32 0.0, %v911
    %v913 = vpop.f32.mrf.mxu0
    %v914 = vpop.f32.mrf.mxu0
    %v915 = vpop.f32.mrf.mxu0
    %916 = vdwg.mxu0
    %v918 = vsel %vm635, %v728, 0
    %v921 = vsel %vm735, %v238, 0
    %923 = vmatprep.subr.bf16.mxu0 0
    %924 = vmatpush1.bf16.msra.mxu0 0
    %925 = vmatprep.subr.bf16.mxu0 0
    %926 = vmatpush1.bf16.msra.mxu0 0
    %927 = vmatprep.subr.bf16.mxu0 0
    %928 = vmatpush1.bf16.msra.mxu0 0
    %929 = vmatprep.subr.bf16.mxu0 0
    %930 = vmatpush1.bf16.msra.mxu0 0
    %931 = vmatprep.subr.bf16.mxu0 0
    %932 = vmatpush1.bf16.msra.mxu0 0
    %933 = vmatprep.subr.bf16.mxu0 0
    %934 = vmatpush1.bf16.msra.mxu0 0
    %935 = vmatprep.subr.bf16.mxu0 0
    %936 = vmatpush1.bf16.msra.mxu0 0
    %937 = vmatprep.subr.bf16.mxu0 0
    %938 = vmatpush1.bf16.msra.mxu0 %v921
    %939 = vmatprep.subr.bf16.mxu0 0
    %940 = vmatpush2.bf16.msra.mxu0 0
    %941 = vmatprep.subr.bf16.mxu0 0
    %942 = vmatpush2.bf16.msra.mxu0 0
    %943 = vmatprep.subr.bf16.mxu0 0
    %944 = vmatpush2.bf16.msra.mxu0 0
    %945 = vmatprep.subr.bf16.mxu0 0
    %946 = vmatpush2.bf16.msra.mxu0 0
    %947 = vmatprep.subr.bf16.mxu0 0
    %948 = vmatpush2.bf16.msra.mxu0 0
    %949 = vmatprep.subr.bf16.mxu0 0
    %950 = vmatpush2.bf16.msra.mxu0 0
    %951 = vmatprep.subr.bf16.mxu0 0
    %952 = vmatpush2.bf16.msra.mxu0 0
    %953 = vmatprep.subr.bf16.mxu0 0
    %954 = vmatpush2.bf16.msra.mxu0 0
    %955 = vmatprep.mubr.bf16.mxu0 0
    %956 = vmatmul.mubr.bf16.gmra.mxu0 %v918
    %v957 = vpop.f32.mrf.mxu0
    %v958 = vadd.f32 0.0, %v957
    %v959 = vpop.f32.mrf.mxu0
    %v960 = vpop.f32.mrf.mxu0
    %v961 = vpop.f32.mrf.mxu0
    %962 = vdwg.mxu0
    %v964 = vsel %vm635, %v729, 0
    %v967 = vsel %vm735, %v239, 0
    %969 = vmatprep.subr.bf16.mxu0 0
    %970 = vmatpush1.bf16.msra.mxu0 0
    %971 = vmatprep.subr.bf16.mxu0 0
    %972 = vmatpush1.bf16.msra.mxu0 0
    %973 = vmatprep.subr.bf16.mxu0 0
    %974 = vmatpush1.bf16.msra.mxu0 0
    %975 = vmatprep.subr.bf16.mxu0 0
    %976 = vmatpush1.bf16.msra.mxu0 0
    %977 = vmatprep.subr.bf16.mxu0 0
    %978 = vmatpush1.bf16.msra.mxu0 0
    %979 = vmatprep.subr.bf16.mxu0 0
    %980 = vmatpush1.bf16.msra.mxu0 0
    %981 = vmatprep.subr.bf16.mxu0 0
    %982 = vmatpush1.bf16.msra.mxu0 0
    %983 = vmatprep.subr.bf16.mxu0 0
    %984 = vmatpush1.bf16.msra.mxu0 %v967
    %985 = vmatprep.subr.bf16.mxu0 0
    %986 = vmatpush2.bf16.msra.mxu0 0
    %987 = vmatprep.subr.bf16.mxu0 0
    %988 = vmatpush2.bf16.msra.mxu0 0
    %989 = vmatprep.subr.bf16.mxu0 0
    %990 = vmatpush2.bf16.msra.mxu0 0
    %991 = vmatprep.subr.bf16.mxu0 0
    %992 = vmatpush2.bf16.msra.mxu0 0
    %993 = vmatprep.subr.bf16.mxu0 0
    %994 = vmatpush2.bf16.msra.mxu0 0
    %995 = vmatprep.subr.bf16.mxu0 0
    %996 = vmatpush2.bf16.msra.mxu0 0
    %997 = vmatprep.subr.bf16.mxu0 0
    %998 = vmatpush2.bf16.msra.mxu0 0
    %999 = vmatprep.subr.bf16.mxu0 0
    %1000 = vmatpush2.bf16.msra.mxu0 0
    %1001 = vmatprep.mubr.bf16.mxu0 0
    %1002 = vmatmul.mubr.bf16.gmra.mxu0 %v964
    %v1003 = vpop.f32.mrf.mxu0
    %v1004 = vadd.f32 0.0, %v1003
    %v1005 = vpop.f32.mrf.mxu0
    %v1006 = vpop.f32.mrf.mxu0
    %v1007 = vpop.f32.mrf.mxu0
    %1008 = vdwg.mxu0
    %v1010 = vsel %vm635, %v730, 0
    %v1013 = vsel %vm735, %v240, 0
    %1015 = vmatprep.subr.bf16.mxu0 0
    %1016 = vmatpush1.bf16.msra.mxu0 0
    %1017 = vmatprep.subr.bf16.mxu0 0
    %1018 = vmatpush1.bf16.msra.mxu0 0
    %1019 = vmatprep.subr.bf16.mxu0 0
    %1020 = vmatpush1.bf16.msra.mxu0 0
    %1021 = vmatprep.subr.bf16.mxu0 0
    %1022 = vmatpush1.bf16.msra.mxu0 0
    %1023 = vmatprep.subr.bf16.mxu0 0
    %1024 = vmatpush1.bf16.msra.mxu0 0
    %1025 = vmatprep.subr.bf16.mxu0 0
    %1026 = vmatpush1.bf16.msra.mxu0 0
    %1027 = vmatprep.subr.bf16.mxu0 0
    %1028 = vmatpush1.bf16.msra.mxu0 0
    %1029 = vmatprep.subr.bf16.mxu0 0
    %1030 = vmatpush1.bf16.msra.mxu0 %v1013
    %1031 = vmatprep.subr.bf16.mxu0 0
    %1032 = vmatpush2.bf16.msra.mxu0 0
    %1033 = vmatprep.subr.bf16.mxu0 0
    %1034 = vmatpush2.bf16.msra.mxu0 0
    %1035 = vmatprep.subr.bf16.mxu0 0
    %1036 = vmatpush2.bf16.msra.mxu0 0
    %1037 = vmatprep.subr.bf16.mxu0 0
    %1038 = vmatpush2.bf16.msra.mxu0 0
    %1039 = vmatprep.subr.bf16.mxu0 0
    %1040 = vmatpush2.bf16.msra.mxu0 0
    %1041 = vmatprep.subr.bf16.mxu0 0
    %1042 = vmatpush2.bf16.msra.mxu0 0
    %1043 = vmatprep.subr.bf16.mxu0 0
    %1044 = vmatpush2.bf16.msra.mxu0 0
    %1045 = vmatprep.subr.bf16.mxu0 0
    %1046 = vmatpush2.bf16.msra.mxu0 0
    %1047 = vmatprep.mubr.bf16.mxu0 0
    %1048 = vmatmul.mubr.bf16.gmra.mxu0 %v1010
    %v1049 = vpop.f32.mrf.mxu0
    %v1050 = vadd.f32 0.0, %v1049
    %v1051 = vpop.f32.mrf.mxu0
    %v1052 = vpop.f32.mrf.mxu0
    %v1053 = vpop.f32.mrf.mxu0
    %1054 = vdwg.mxu0
    %v1056 = vsel %vm635, %v731, 0
    %v1059 = vsel %vm735, %v241, 0
    %1061 = vmatprep.subr.bf16.mxu0 0
    %1062 = vmatpush1.bf16.msra.mxu0 0
    %1063 = vmatprep.subr.bf16.mxu0 0
    %1064 = vmatpush1.bf16.msra.mxu0 0
    %1065 = vmatprep.subr.bf16.mxu0 0
    %1066 = vmatpush1.bf16.msra.mxu0 0
    %1067 = vmatprep.subr.bf16.mxu0 0
    %1068 = vmatpush1.bf16.msra.mxu0 0
    %1069 = vmatprep.subr.bf16.mxu0 0
    %1070 = vmatpush1.bf16.msra.mxu0 0
    %1071 = vmatprep.subr.bf16.mxu0 0
    %1072 = vmatpush1.bf16.msra.mxu0 0
    %1073 = vmatprep.subr.bf16.mxu0 0
    %1074 = vmatpush1.bf16.msra.mxu0 0
    %1075 = vmatprep.subr.bf16.mxu0 0
    %1076 = vmatpush1.bf16.msra.mxu0 %v1059
    %1077 = vmatprep.subr.bf16.mxu0 0
    %1078 = vmatpush2.bf16.msra.mxu0 0
    %1079 = vmatprep.subr.bf16.mxu0 0
    %1080 = vmatpush2.bf16.msra.mxu0 0
    %1081 = vmatprep.subr.bf16.mxu0 0
    %1082 = vmatpush2.bf16.msra.mxu0 0
    %1083 = vmatprep.subr.bf16.mxu0 0
    %1084 = vmatpush2.bf16.msra.mxu0 0
    %1085 = vmatprep.subr.bf16.mxu0 0
    %1086 = vmatpush2.bf16.msra.mxu0 0
    %1087 = vmatprep.subr.bf16.mxu0 0
    %1088 = vmatpush2.bf16.msra.mxu0 0
    %1089 = vmatprep.subr.bf16.mxu0 0
    %1090 = vmatpush2.bf16.msra.mxu0 0
    %1091 = vmatprep.subr.bf16.mxu0 0
    %1092 = vmatpush2.bf16.msra.mxu0 0
    %1093 = vmatprep.mubr.bf16.mxu0 0
    %1094 = vmatmul.mubr.bf16.gmra.mxu0 %v1056
    %v1095 = vpop.f32.mrf.mxu0
    %v1096 = vadd.f32 0.0, %v1095
    %v1097 = vpop.f32.mrf.mxu0
    %v1098 = vpop.f32.mrf.mxu0
    %v1099 = vpop.f32.mrf.mxu0
    %1100 = vdwg.mxu0
    %v1101 = vpack.c.bf16 %v774, %v774
    %v1102 = vpack.c.bf16 %v820, %v820
    %v1103 = vpack.c.bf16 %v866, %v866
    %v1104 = vpack.c.bf16 %v912, %v912
    %v1105 = vpack.c.bf16 %v958, %v958
    %v1106 = vpack.c.bf16 %v1004, %v1004
    %v1107 = vpack.c.bf16 %v1050, %v1050
    %v1108 = vpack.c.bf16 %v1096, %v1096
    %1109 = vrot.lane.b32.xlu0 %v226, 112
    %v1110 = vpop.permute.xlu0 %1109
    %1111 = vrot.lane.b32.xlu0 %v226, 48
    %v1112 = vpop.permute.xlu0 %1111
    %v1114 = vsel %vm245, %v1110, 0
    %v1117 = vsel %vm245, %v1112, 0
    %1119 = vmatprep.subr.bf16.mxu0 0
    %1120 = vmatpush1.bf16.xpose.msra.mxu0 0
    %1121 = vmatprep.subr.bf16.mxu0 0
    %1122 = vmatpush1.bf16.xpose.msra.mxu0 0
    %1123 = vmatprep.subr.bf16.mxu0 0
    %1124 = vmatpush1.bf16.xpose.msra.mxu0 0
    %1125 = vmatprep.subr.bf16.mxu0 0
    %1126 = vmatpush1.bf16.xpose.msra.mxu0 0
    %1127 = vmatprep.subr.bf16.mxu0 0
    %1128 = vmatpush1.bf16.xpose.msra.mxu0 0
    %1129 = vmatprep.subr.bf16.mxu0 0
    %1130 = vmatpush1.bf16.xpose.msra.mxu0 0
    %1131 = vmatprep.subr.bf16.mxu0 0
    %1132 = vmatpush1.bf16.xpose.msra.mxu0 0
    %1133 = vmatprep.subr.bf16.mxu0 0
    %1134 = vmatpush1.bf16.xpose.msra.mxu0 %v1117
    %1135 = vmatprep.subr.bf16.mxu0 0
    %1136 = vmatpush2.bf16.xpose.msra.mxu0 0
    %1137 = vmatprep.subr.bf16.mxu0 0
    %1138 = vmatpush2.bf16.xpose.msra.mxu0 0
    %1139 = vmatprep.subr.bf16.mxu0 0
    %1140 = vmatpush2.bf16.xpose.msra.mxu0 0
    %1141 = vmatprep.subr.bf16.mxu0 0
    %1142 = vmatpush2.bf16.xpose.msra.mxu0 0
    %1143 = vmatprep.subr.bf16.mxu0 0
    %1144 = vmatpush2.bf16.xpose.msra.mxu0 0
    %1145 = vmatprep.subr.bf16.mxu0 0
    %1146 = vmatpush2.bf16.xpose.msra.mxu0 0
    %1147 = vmatprep.subr.bf16.mxu0 0
    %1148 = vmatpush2.bf16.xpose.msra.mxu0 0
    %1149 = vmatprep.subr.bf16.mxu0 0
    %1150 = vmatpush2.bf16.xpose.msra.mxu0 0
    %1151 = vmatprep.mubr.bf16.mxu0 0
    %1152 = vmatmul.mubr.bf16.gmra.mxu0 %v1114
    %v1153 = vpop.f32.mrf.mxu0
    %v1154 = vadd.f32 0.0, %v1153
    %v1155 = vpop.f32.mrf.mxu0
    %v1156 = vpop.f32.mrf.mxu0
    %v1157 = vpop.f32.mrf.mxu0
    %1158 = vdwg.mxu0
    %1159 = vrot.lane.b32.xlu0 %v227, 112
    %v1160 = vpop.permute.xlu0 %1159
    %1161 = vrot.lane.b32.xlu0 %v227, 48
    %v1162 = vpop.permute.xlu0 %1161
    %v1164 = vsel %vm245, %v1160, 0
    %v1167 = vsel %vm245, %v1162, 0
    %1169 = vmatprep.subr.bf16.mxu0 0
    %1170 = vmatpush1.bf16.xpose.msra.mxu0 0
    %1171 = vmatprep.subr.bf16.mxu0 0
    %1172 = vmatpush1.bf16.xpose.msra.mxu0 0
    %1173 = vmatprep.subr.bf16.mxu0 0
    %1174 = vmatpush1.bf16.xpose.msra.mxu0 0
    %1175 = vmatprep.subr.bf16.mxu0 0
    %1176 = vmatpush1.bf16.xpose.msra.mxu0 0
    %1177 = vmatprep.subr.bf16.mxu0 0
    %1178 = vmatpush1.bf16.xpose.msra.mxu0 0
    %1179 = vmatprep.subr.bf16.mxu0 0
    %1180 = vmatpush1.bf16.xpose.msra.mxu0 0
    %1181 = vmatprep.subr.bf16.mxu0 0
    %1182 = vmatpush1.bf16.xpose.msra.mxu0 0
    %1183 = vmatprep.subr.bf16.mxu0 0
    %1184 = vmatpush1.bf16.xpose.msra.mxu0 %v1167
    %1185 = vmatprep.subr.bf16.mxu0 0
    %1186 = vmatpush2.bf16.xpose.msra.mxu0 0
    %1187 = vmatprep.subr.bf16.mxu0 0
    %1188 = vmatpush2.bf16.xpose.msra.mxu0 0
    %1189 = vmatprep.subr.bf16.mxu0 0
    %1190 = vmatpush2.bf16.xpose.msra.mxu0 0
    %1191 = vmatprep.subr.bf16.mxu0 0
    %1192 = vmatpush2.bf16.xpose.msra.mxu0 0
    %1193 = vmatprep.subr.bf16.mxu0 0
    %1194 = vmatpush2.bf16.xpose.msra.mxu0 0
    %1195 = vmatprep.subr.bf16.mxu0 0
    %1196 = vmatpush2.bf16.xpose.msra.mxu0 0
    %1197 = vmatprep.subr.bf16.mxu0 0
    %1198 = vmatpush2.bf16.xpose.msra.mxu0 0
    %1199 = vmatprep.subr.bf16.mxu0 0
    %1200 = vmatpush2.bf16.xpose.msra.mxu0 0
    %1201 = vmatprep.mubr.bf16.mxu0 0
    %1202 = vmatmul.mubr.bf16.gmra.mxu0 %v1164
    %v1203 = vpop.f32.mrf.mxu0
    %v1204 = vadd.f32 0.0, %v1203
    %v1205 = vpop.f32.mrf.mxu0
    %v1206 = vpop.f32.mrf.mxu0
    %v1207 = vpop.f32.mrf.mxu0
    %1208 = vdwg.mxu0
    %1209 = vrot.lane.b32.xlu0 %v228, 112
    %v1210 = vpop.permute.xlu0 %1209
    %1211 = vrot.lane.b32.xlu0 %v228, 48
    %v1212 = vpop.permute.xlu0 %1211
    %v1214 = vsel %vm245, %v1210, 0
    %v1217 = vsel %vm245, %v1212, 0
    %1219 = vmatprep.subr.bf16.mxu0 0
    %1220 = vmatpush1.bf16.xpose.msra.mxu0 0
    %1221 = vmatprep.subr.bf16.mxu0 0
    %1222 = vmatpush1.bf16.xpose.msra.mxu0 0
    %1223 = vmatprep.subr.bf16.mxu0 0
    %1224 = vmatpush1.bf16.xpose.msra.mxu0 0
    %1225 = vmatprep.subr.bf16.mxu0 0
    %1226 = vmatpush1.bf16.xpose.msra.mxu0 0
    %1227 = vmatprep.subr.bf16.mxu0 0
    %1228 = vmatpush1.bf16.xpose.msra.mxu0 0
    %1229 = vmatprep.subr.bf16.mxu0 0
    %1230 = vmatpush1.bf16.xpose.msra.mxu0 0
    %1231 = vmatprep.subr.bf16.mxu0 0
    %1232 = vmatpush1.bf16.xpose.msra.mxu0 0
    %1233 = vmatprep.subr.bf16.mxu0 0
    %1234 = vmatpush1.bf16.xpose.msra.mxu0 %v1217
    %1235 = vmatprep.subr.bf16.mxu0 0
    %1236 = vmatpush2.bf16.xpose.msra.mxu0 0
    %1237 = vmatprep.subr.bf16.mxu0 0
    %1238 = vmatpush2.bf16.xpose.msra.mxu0 0
    %1239 = vmatprep.subr.bf16.mxu0 0
    %1240 = vmatpush2.bf16.xpose.msra.mxu0 0
    %1241 = vmatprep.subr.bf16.mxu0 0
    %1242 = vmatpush2.bf16.xpose.msra.mxu0 0
    %1243 = vmatprep.subr.bf16.mxu0 0
    %1244 = vmatpush2.bf16.xpose.msra.mxu0 0
    %1245 = vmatprep.subr.bf16.mxu0 0
    %1246 = vmatpush2.bf16.xpose.msra.mxu0 0
    %1247 = vmatprep.subr.bf16.mxu0 0
    %1248 = vmatpush2.bf16.xpose.msra.mxu0 0
    %1249 = vmatprep.subr.bf16.mxu0 0
    %1250 = vmatpush2.bf16.xpose.msra.mxu0 0
    %1251 = vmatprep.mubr.bf16.mxu0 0
    %1252 = vmatmul.mubr.bf16.gmra.mxu0 %v1214
    %v1253 = vpop.f32.mrf.mxu0
    %v1254 = vadd.f32 0.0, %v1253
    %v1255 = vpop.f32.mrf.mxu0
    %v1256 = vpop.f32.mrf.mxu0
    %v1257 = vpop.f32.mrf.mxu0
    %1258 = vdwg.mxu0
    %1259 = vrot.lane.b32.xlu0 %v229, 112
    %v1260 = vpop.permute.xlu0 %1259
    %1261 = vrot.lane.b32.xlu0 %v229, 48
    %v1262 = vpop.permute.xlu0 %1261
    %v1264 = vsel %vm245, %v1260, 0
    %v1267 = vsel %vm245, %v1262, 0
    %1269 = vmatprep.subr.bf16.mxu0 0
    %1270 = vmatpush1.bf16.xpose.msra.mxu0 0
    %1271 = vmatprep.subr.bf16.mxu0 0
    %1272 = vmatpush1.bf16.xpose.msra.mxu0 0
    %1273 = vmatprep.subr.bf16.mxu0 0
    %1274 = vmatpush1.bf16.xpose.msra.mxu0 0
    %1275 = vmatprep.subr.bf16.mxu0 0
    %1276 = vmatpush1.bf16.xpose.msra.mxu0 0
    %1277 = vmatprep.subr.bf16.mxu0 0
    %1278 = vmatpush1.bf16.xpose.msra.mxu0 0
    %1279 = vmatprep.subr.bf16.mxu0 0
    %1280 = vmatpush1.bf16.xpose.msra.mxu0 0
    %1281 = vmatprep.subr.bf16.mxu0 0
    %1282 = vmatpush1.bf16.xpose.msra.mxu0 0
    %1283 = vmatprep.subr.bf16.mxu0 0
    %1284 = vmatpush1.bf16.xpose.msra.mxu0 %v1267
    %1285 = vmatprep.subr.bf16.mxu0 0
    %1286 = vmatpush2.bf16.xpose.msra.mxu0 0
    %1287 = vmatprep.subr.bf16.mxu0 0
    %1288 = vmatpush2.bf16.xpose.msra.mxu0 0
    %1289 = vmatprep.subr.bf16.mxu0 0
    %1290 = vmatpush2.bf16.xpose.msra.mxu0 0
    %1291 = vmatprep.subr.bf16.mxu0 0
    %1292 = vmatpush2.bf16.xpose.msra.mxu0 0
    %1293 = vmatprep.subr.bf16.mxu0 0
    %1294 = vmatpush2.bf16.xpose.msra.mxu0 0
    %1295 = vmatprep.subr.bf16.mxu0 0
    %1296 = vmatpush2.bf16.xpose.msra.mxu0 0
    %1297 = vmatprep.subr.bf16.mxu0 0
    %1298 = vmatpush2.bf16.xpose.msra.mxu0 0
    %1299 = vmatprep.subr.bf16.mxu0 0
    %1300 = vmatpush2.bf16.xpose.msra.mxu0 0
    %1301 = vmatprep.mubr.bf16.mxu0 0
    %1302 = vmatmul.mubr.bf16.gmra.mxu0 %v1264
    %v1303 = vpop.f32.mrf.mxu0
    %v1304 = vadd.f32 0.0, %v1303
    %v1305 = vpop.f32.mrf.mxu0
    %v1306 = vpop.f32.mrf.mxu0
    %v1307 = vpop.f32.mrf.mxu0
    %1308 = vdwg.mxu0
    %1309 = vrot.lane.b32.xlu0 %v230, 112
    %v1310 = vpop.permute.xlu0 %1309
    %1311 = vrot.lane.b32.xlu0 %v230, 48
    %v1312 = vpop.permute.xlu0 %1311
    %v1314 = vsel %vm245, %v1310, 0
    %v1317 = vsel %vm245, %v1312, 0
    %1319 = vmatprep.subr.bf16.mxu0 0
    %1320 = vmatpush1.bf16.xpose.msra.mxu0 0
    %1321 = vmatprep.subr.bf16.mxu0 0
    %1322 = vmatpush1.bf16.xpose.msra.mxu0 0
    %1323 = vmatprep.subr.bf16.mxu0 0
    %1324 = vmatpush1.bf16.xpose.msra.mxu0 0
    %1325 = vmatprep.subr.bf16.mxu0 0
    %1326 = vmatpush1.bf16.xpose.msra.mxu0 0
    %1327 = vmatprep.subr.bf16.mxu0 0
    %1328 = vmatpush1.bf16.xpose.msra.mxu0 0
    %1329 = vmatprep.subr.bf16.mxu0 0
    %1330 = vmatpush1.bf16.xpose.msra.mxu0 0
    %1331 = vmatprep.subr.bf16.mxu0 0
    %1332 = vmatpush1.bf16.xpose.msra.mxu0 0
    %1333 = vmatprep.subr.bf16.mxu0 0
    %1334 = vmatpush1.bf16.xpose.msra.mxu0 %v1317
    %1335 = vmatprep.subr.bf16.mxu0 0
    %1336 = vmatpush2.bf16.xpose.msra.mxu0 0
    %1337 = vmatprep.subr.bf16.mxu0 0
    %1338 = vmatpush2.bf16.xpose.msra.mxu0 0
    %1339 = vmatprep.subr.bf16.mxu0 0
    %1340 = vmatpush2.bf16.xpose.msra.mxu0 0
    %1341 = vmatprep.subr.bf16.mxu0 0
    %1342 = vmatpush2.bf16.xpose.msra.mxu0 0
    %1343 = vmatprep.subr.bf16.mxu0 0
    %1344 = vmatpush2.bf16.xpose.msra.mxu0 0
    %1345 = vmatprep.subr.bf16.mxu0 0
    %1346 = vmatpush2.bf16.xpose.msra.mxu0 0
    %1347 = vmatprep.subr.bf16.mxu0 0
    %1348 = vmatpush2.bf16.xpose.msra.mxu0 0
    %1349 = vmatprep.subr.bf16.mxu0 0
    %1350 = vmatpush2.bf16.xpose.msra.mxu0 0
    %1351 = vmatprep.mubr.bf16.mxu0 0
    %1352 = vmatmul.mubr.bf16.gmra.mxu0 %v1314
    %v1353 = vpop.f32.mrf.mxu0
    %v1354 = vadd.f32 0.0, %v1353
    %v1355 = vpop.f32.mrf.mxu0
    %v1356 = vpop.f32.mrf.mxu0
    %v1357 = vpop.f32.mrf.mxu0
    %1358 = vdwg.mxu0
    %1359 = vrot.lane.b32.xlu0 %v231, 112
    %v1360 = vpop.permute.xlu0 %1359
    %1361 = vrot.lane.b32.xlu0 %v231, 48
    %v1362 = vpop.permute.xlu0 %1361
    %v1364 = vsel %vm245, %v1360, 0
    %v1367 = vsel %vm245, %v1362, 0
    %1369 = vmatprep.subr.bf16.mxu0 0
    %1370 = vmatpush1.bf16.xpose.msra.mxu0 0
    %1371 = vmatprep.subr.bf16.mxu0 0
    %1372 = vmatpush1.bf16.xpose.msra.mxu0 0
    %1373 = vmatprep.subr.bf16.mxu0 0
    %1374 = vmatpush1.bf16.xpose.msra.mxu0 0
    %1375 = vmatprep.subr.bf16.mxu0 0
    %1376 = vmatpush1.bf16.xpose.msra.mxu0 0
    %1377 = vmatprep.subr.bf16.mxu0 0
    %1378 = vmatpush1.bf16.xpose.msra.mxu0 0
    %1379 = vmatprep.subr.bf16.mxu0 0
    %1380 = vmatpush1.bf16.xpose.msra.mxu0 0
    %1381 = vmatprep.subr.bf16.mxu0 0
    %1382 = vmatpush1.bf16.xpose.msra.mxu0 0
    %1383 = vmatprep.subr.bf16.mxu0 0
    %1384 = vmatpush1.bf16.xpose.msra.mxu0 %v1367
    %1385 = vmatprep.subr.bf16.mxu0 0
    %1386 = vmatpush2.bf16.xpose.msra.mxu0 0
    %1387 = vmatprep.subr.bf16.mxu0 0
    %1388 = vmatpush2.bf16.xpose.msra.mxu0 0
    %1389 = vmatprep.subr.bf16.mxu0 0
    %1390 = vmatpush2.bf16.xpose.msra.mxu0 0
    %1391 = vmatprep.subr.bf16.mxu0 0
    %1392 = vmatpush2.bf16.xpose.msra.mxu0 0
    %1393 = vmatprep.subr.bf16.mxu0 0
    %1394 = vmatpush2.bf16.xpose.msra.mxu0 0
    %1395 = vmatprep.subr.bf16.mxu0 0
    %1396 = vmatpush2.bf16.xpose.msra.mxu0 0
    %1397 = vmatprep.subr.bf16.mxu0 0
    %1398 = vmatpush2.bf16.xpose.msra.mxu0 0
    %1399 = vmatprep.subr.bf16.mxu0 0
    %1400 = vmatpush2.bf16.xpose.msra.mxu0 0
    %1401 = vmatprep.mubr.bf16.mxu0 0
    %1402 = vmatmul.mubr.bf16.gmra.mxu0 %v1364
    %v1403 = vpop.f32.mrf.mxu0
    %v1404 = vadd.f32 0.0, %v1403
    %v1405 = vpop.f32.mrf.mxu0
    %v1406 = vpop.f32.mrf.mxu0
    %v1407 = vpop.f32.mrf.mxu0
    %1408 = vdwg.mxu0
    %1409 = vrot.lane.b32.xlu0 %v232, 112
    %v1410 = vpop.permute.xlu0 %1409
    %1411 = vrot.lane.b32.xlu0 %v232, 48
    %v1412 = vpop.permute.xlu0 %1411
    %v1414 = vsel %vm245, %v1410, 0
    %v1417 = vsel %vm245, %v1412, 0
    %1419 = vmatprep.subr.bf16.mxu0 0
    %1420 = vmatpush1.bf16.xpose.msra.mxu0 0
    %1421 = vmatprep.subr.bf16.mxu0 0
    %1422 = vmatpush1.bf16.xpose.msra.mxu0 0
    %1423 = vmatprep.subr.bf16.mxu0 0
    %1424 = vmatpush1.bf16.xpose.msra.mxu0 0
    %1425 = vmatprep.subr.bf16.mxu0 0
    %1426 = vmatpush1.bf16.xpose.msra.mxu0 0
    %1427 = vmatprep.subr.bf16.mxu0 0
    %1428 = vmatpush1.bf16.xpose.msra.mxu0 0
    %1429 = vmatprep.subr.bf16.mxu0 0
    %1430 = vmatpush1.bf16.xpose.msra.mxu0 0
    %1431 = vmatprep.subr.bf16.mxu0 0
    %1432 = vmatpush1.bf16.xpose.msra.mxu0 0
    %1433 = vmatprep.subr.bf16.mxu0 0
    %1434 = vmatpush1.bf16.xpose.msra.mxu0 %v1417
    %1435 = vmatprep.subr.bf16.mxu0 0
    %1436 = vmatpush2.bf16.xpose.msra.mxu0 0
    %1437 = vmatprep.subr.bf16.mxu0 0
    %1438 = vmatpush2.bf16.xpose.msra.mxu0 0
    %1439 = vmatprep.subr.bf16.mxu0 0
    %1440 = vmatpush2.bf16.xpose.msra.mxu0 0
    %1441 = vmatprep.subr.bf16.mxu0 0
    %1442 = vmatpush2.bf16.xpose.msra.mxu0 0
    %1443 = vmatprep.subr.bf16.mxu0 0
    %1444 = vmatpush2.bf16.xpose.msra.mxu0 0
    %1445 = vmatprep.subr.bf16.mxu0 0
    %1446 = vmatpush2.bf16.xpose.msra.mxu0 0
    %1447 = vmatprep.subr.bf16.mxu0 0
    %1448 = vmatpush2.bf16.xpose.msra.mxu0 0
    %1449 = vmatprep.subr.bf16.mxu0 0
    %1450 = vmatpush2.bf16.xpose.msra.mxu0 0
    %1451 = vmatprep.mubr.bf16.mxu0 0
    %1452 = vmatmul.mubr.bf16.gmra.mxu0 %v1414
    %v1453 = vpop.f32.mrf.mxu0
    %v1454 = vadd.f32 0.0, %v1453
    %v1455 = vpop.f32.mrf.mxu0
    %v1456 = vpop.f32.mrf.mxu0
    %v1457 = vpop.f32.mrf.mxu0
    %1458 = vdwg.mxu0
    %1459 = vrot.lane.b32.xlu0 %v233, 112
    %v1460 = vpop.permute.xlu0 %1459
    %1461 = vrot.lane.b32.xlu0 %v233, 48
    %v1462 = vpop.permute.xlu0 %1461
    %v1464 = vsel %vm245, %v1460, 0
    %v1467 = vsel %vm245, %v1462, 0
    %1469 = vmatprep.subr.bf16.mxu0 0
    %1470 = vmatpush1.bf16.xpose.msra.mxu0 0
    %1471 = vmatprep.subr.bf16.mxu0 0
    %1472 = vmatpush1.bf16.xpose.msra.mxu0 0
    %1473 = vmatprep.subr.bf16.mxu0 0
    %1474 = vmatpush1.bf16.xpose.msra.mxu0 0
    %1475 = vmatprep.subr.bf16.mxu0 0
    %1476 = vmatpush1.bf16.xpose.msra.mxu0 0
    %1477 = vmatprep.subr.bf16.mxu0 0
    %1478 = vmatpush1.bf16.xpose.msra.mxu0 0
    %1479 = vmatprep.subr.bf16.mxu0 0
    %1480 = vmatpush1.bf16.xpose.msra.mxu0 0
    %1481 = vmatprep.subr.bf16.mxu0 0
    %1482 = vmatpush1.bf16.xpose.msra.mxu0 0
    %1483 = vmatprep.subr.bf16.mxu0 0
    %1484 = vmatpush1.bf16.xpose.msra.mxu0 %v1467
    %1485 = vmatprep.subr.bf16.mxu0 0
    %1486 = vmatpush2.bf16.xpose.msra.mxu0 0
    %1487 = vmatprep.subr.bf16.mxu0 0
    %1488 = vmatpush2.bf16.xpose.msra.mxu0 0
    %1489 = vmatprep.subr.bf16.mxu0 0
    %1490 = vmatpush2.bf16.xpose.msra.mxu0 0
    %1491 = vmatprep.subr.bf16.mxu0 0
    %1492 = vmatpush2.bf16.xpose.msra.mxu0 0
    %1493 = vmatprep.subr.bf16.mxu0 0
    %1494 = vmatpush2.bf16.xpose.msra.mxu0 0
    %1495 = vmatprep.subr.bf16.mxu0 0
    %1496 = vmatpush2.bf16.xpose.msra.mxu0 0
    %1497 = vmatprep.subr.bf16.mxu0 0
    %1498 = vmatpush2.bf16.xpose.msra.mxu0 0
    %1499 = vmatprep.subr.bf16.mxu0 0
    %1500 = vmatpush2.bf16.xpose.msra.mxu0 0
    %1501 = vmatprep.mubr.bf16.mxu0 0
    %1502 = vmatmul.mubr.bf16.gmra.mxu0 %v1464
    %v1503 = vpop.f32.mrf.mxu0
    %v1504 = vadd.f32 0.0, %v1503
    %v1505 = vpop.f32.mrf.mxu0
    %v1506 = vpop.f32.mrf.mxu0
    %v1507 = vpop.f32.mrf.mxu0
    %1508 = vdwg.mxu0
    %v1509 = vsel %vm635, %v1154, -inf
    %1510 = vmax.xlane.f32.xlu0 %v1509
    %v1511 = vpop.xlane.xlu0 %1510
    %v1512 = vsel %vm635, %v1204, -inf
    %1513 = vmax.xlane.f32.xlu0 %v1512
    %v1514 = vpop.xlane.xlu0 %1513
    %v1515 = vsel %vm635, %v1254, -inf
    %1516 = vmax.xlane.f32.xlu0 %v1515
    %v1517 = vpop.xlane.xlu0 %1516
    %v1518 = vsel %vm635, %v1304, -inf
    %1519 = vmax.xlane.f32.xlu0 %v1518
    %v1520 = vpop.xlane.xlu0 %1519
    %v1521 = vsel %vm635, %v1354, -inf
    %1522 = vmax.xlane.f32.xlu0 %v1521
    %v1523 = vpop.xlane.xlu0 %1522
    %v1524 = vsel %vm635, %v1404, -inf
    %1525 = vmax.xlane.f32.xlu0 %v1524
    %v1526 = vpop.xlane.xlu0 %1525
    %v1527 = vsel %vm635, %v1454, -inf
    %1528 = vmax.xlane.f32.xlu0 %v1527
    %v1529 = vpop.xlane.xlu0 %1528
    %v1530 = vsel %vm635, %v1504, -inf
    %1531 = vmax.xlane.f32.xlu0 %v1530
    %v1532 = vpop.xlane.xlu0 %1531
    %v1533 = vsub.f32 %v1154, %v1511
    %v1534 = vsub.f32 %v1204, %v1514
    %v1535 = vsub.f32 %v1254, %v1517
    %v1536 = vsub.f32 %v1304, %v1520
    %v1537 = vsub.f32 %v1354, %v1523
    %v1538 = vsub.f32 %v1404, %v1526
    %v1539 = vsub.f32 %v1454, %v1529
    %v1540 = vsub.f32 %v1504, %v1532
    %v1541 = vmul.f32 %v1533, 1.442695
    %v1542 = vpow.pop %v1541
    %v1543 = vmul.f32 %v1534, 1.442695
    %v1544 = vpow.pop %v1543
    %v1545 = vmul.f32 %v1535, 1.442695
    %v1546 = vpow.pop %v1545
    %v1547 = vmul.f32 %v1536, 1.442695
    %v1548 = vpow.pop %v1547
    %v1549 = vmul.f32 %v1537, 1.442695
    %v1550 = vpow.pop %v1549
    %v1551 = vmul.f32 %v1538, 1.442695
    %v1552 = vpow.pop %v1551
    %v1553 = vmul.f32 %v1539, 1.442695
    %v1554 = vpow.pop %v1553
    %v1555 = vmul.f32 %v1540, 1.442695
    %v1556 = vpow.pop %v1555
    %v1557 = vsel %vm635, %v1542, 0.0
    %1558 = vadd.xlane.f32.xlu0 %v1557
    %v1559 = vpop.xlane.xlu0 %1558
    %v1560 = vsel %vm635, %v1544, 0.0
    %1561 = vadd.xlane.f32.xlu0 %v1560
    %v1562 = vpop.xlane.xlu0 %1561
    %v1563 = vsel %vm635, %v1546, 0.0
    %1564 = vadd.xlane.f32.xlu0 %v1563
    %v1565 = vpop.xlane.xlu0 %1564
    %v1566 = vsel %vm635, %v1548, 0.0
    %1567 = vadd.xlane.f32.xlu0 %v1566
    %v1568 = vpop.xlane.xlu0 %1567
    %v1569 = vsel %vm635, %v1550, 0.0
    %1570 = vadd.xlane.f32.xlu0 %v1569
    %v1571 = vpop.xlane.xlu0 %1570
    %v1572 = vsel %vm635, %v1552, 0.0
    %1573 = vadd.xlane.f32.xlu0 %v1572
    %v1574 = vpop.xlane.xlu0 %1573
    %v1575 = vsel %vm635, %v1554, 0.0
    %1576 = vadd.xlane.f32.xlu0 %v1575
    %v1577 = vpop.xlane.xlu0 %1576
    %v1578 = vsel %vm635, %v1556, 0.0
    %1579 = vadd.xlane.f32.xlu0 %v1578
    %v1580 = vpop.xlane.xlu0 %1579
    %v1581 = vrcp.pop %v1559
    %v1582 = vrcp.pop %v1562
    %v1583 = vrcp.pop %v1565
    %v1584 = vrcp.pop %v1568
    %v1585 = vrcp.pop %v1571
    %v1586 = vrcp.pop %v1574
    %v1587 = vrcp.pop %v1577
    %v1588 = vrcp.pop %v1580
    %v1589 = vmul.f32 %v1542, %v1581
    %v1590 = vmul.f32 %v1544, %v1582
    %v1591 = vmul.f32 %v1546, %v1583
    %v1592 = vmul.f32 %v1548, %v1584
    %v1593 = vmul.f32 %v1550, %v1585
    %v1594 = vmul.f32 %v1552, %v1586
    %v1595 = vmul.f32 %v1554, %v1587
    %v1596 = vmul.f32 %v1556, %v1588
    %v1597 = vpack.c.bf16 %v1589, %v1589
    %v1598 = vpack.c.bf16 %v1590, %v1590
    %v1599 = vpack.c.bf16 %v1591, %v1591
    %v1600 = vpack.c.bf16 %v1592, %v1592
    %v1601 = vpack.c.bf16 %v1593, %v1593
    %v1602 = vpack.c.bf16 %v1594, %v1594
    %v1603 = vpack.c.bf16 %v1595, %v1595
    %v1604 = vpack.c.bf16 %v1596, %v1596
    %1606 = vrot.lane.b32.xlu0 %v234, 112
    %v1607 = vpop.permute.xlu0 %1606
    %v1609 = vsel %vm635, %v1597, 0
    %v1612 = vsel %vm735, %v1607, 0
    %1614 = vmatprep.subr.bf16.mxu0 0
    %1615 = vmatpush1.bf16.msra.mxu0 0
    %1616 = vmatprep.subr.bf16.mxu0 0
    %1617 = vmatpush1.bf16.msra.mxu0 0
    %1618 = vmatprep.subr.bf16.mxu0 0
    %1619 = vmatpush1.bf16.msra.mxu0 0
    %1620 = vmatprep.subr.bf16.mxu0 0
    %1621 = vmatpush1.bf16.msra.mxu0 0
    %1622 = vmatprep.subr.bf16.mxu0 0
    %1623 = vmatpush1.bf16.msra.mxu0 0
    %1624 = vmatprep.subr.bf16.mxu0 0
    %1625 = vmatpush1.bf16.msra.mxu0 0
    %1626 = vmatprep.subr.bf16.mxu0 0
    %1627 = vmatpush1.bf16.msra.mxu0 0
    %1628 = vmatprep.subr.bf16.mxu0 0
    %1629 = vmatpush1.bf16.msra.mxu0 %v1612
    %1630 = vmatprep.subr.bf16.mxu0 0
    %1631 = vmatpush2.bf16.msra.mxu0 0
    %1632 = vmatprep.subr.bf16.mxu0 0
    %1633 = vmatpush2.bf16.msra.mxu0 0
    %1634 = vmatprep.subr.bf16.mxu0 0
    %1635 = vmatpush2.bf16.msra.mxu0 0
    %1636 = vmatprep.subr.bf16.mxu0 0
    %1637 = vmatpush2.bf16.msra.mxu0 0
    %1638 = vmatprep.subr.bf16.mxu0 0
    %1639 = vmatpush2.bf16.msra.mxu0 0
    %1640 = vmatprep.subr.bf16.mxu0 0
    %1641 = vmatpush2.bf16.msra.mxu0 0
    %1642 = vmatprep.subr.bf16.mxu0 0
    %1643 = vmatpush2.bf16.msra.mxu0 0
    %1644 = vmatprep.subr.bf16.mxu0 0
    %1645 = vmatpush2.bf16.msra.mxu0 0
    %1646 = vmatprep.mubr.bf16.mxu0 0
    %1647 = vmatmul.mubr.bf16.gmra.mxu0 %v1609
    %v1648 = vpop.f32.mrf.mxu0
    %v1649 = vadd.f32 0.0, %v1648
    %v1650 = vpop.f32.mrf.mxu0
    %v1651 = vpop.f32.mrf.mxu0
    %v1652 = vpop.f32.mrf.mxu0
    %1653 = vdwg.mxu0
    %1655 = vrot.lane.b32.xlu0 %v235, 112
    %v1656 = vpop.permute.xlu0 %1655
    %v1658 = vsel %vm635, %v1598, 0
    %v1661 = vsel %vm735, %v1656, 0
    %1663 = vmatprep.subr.bf16.mxu0 0
    %1664 = vmatpush1.bf16.msra.mxu0 0
    %1665 = vmatprep.subr.bf16.mxu0 0
    %1666 = vmatpush1.bf16.msra.mxu0 0
    %1667 = vmatprep.subr.bf16.mxu0 0
    %1668 = vmatpush1.bf16.msra.mxu0 0
    %1669 = vmatprep.subr.bf16.mxu0 0
    %1670 = vmatpush1.bf16.msra.mxu0 0
    %1671 = vmatprep.subr.bf16.mxu0 0
    %1672 = vmatpush1.bf16.msra.mxu0 0
    %1673 = vmatprep.subr.bf16.mxu0 0
    %1674 = vmatpush1.bf16.msra.mxu0 0
    %1675 = vmatprep.subr.bf16.mxu0 0
    %1676 = vmatpush1.bf16.msra.mxu0 0
    %1677 = vmatprep.subr.bf16.mxu0 0
    %1678 = vmatpush1.bf16.msra.mxu0 %v1661
    %1679 = vmatprep.subr.bf16.mxu0 0
    %1680 = vmatpush2.bf16.msra.mxu0 0
    %1681 = vmatprep.subr.bf16.mxu0 0
    %1682 = vmatpush2.bf16.msra.mxu0 0
    %1683 = vmatprep.subr.bf16.mxu0 0
    %1684 = vmatpush2.bf16.msra.mxu0 0
    %1685 = vmatprep.subr.bf16.mxu0 0
    %1686 = vmatpush2.bf16.msra.mxu0 0
    %1687 = vmatprep.subr.bf16.mxu0 0
    %1688 = vmatpush2.bf16.msra.mxu0 0
    %1689 = vmatprep.subr.bf16.mxu0 0
    %1690 = vmatpush2.bf16.msra.mxu0 0
    %1691 = vmatprep.subr.bf16.mxu0 0
    %1692 = vmatpush2.bf16.msra.mxu0 0
    %1693 = vmatprep.subr.bf16.mxu0 0
    %1694 = vmatpush2.bf16.msra.mxu0 0
    %1695 = vmatprep.mubr.bf16.mxu0 0
    %1696 = vmatmul.mubr.bf16.gmra.mxu0 %v1658
    %v1697 = vpop.f32.mrf.mxu0
    %v1698 = vadd.f32 0.0, %v1697
    %v1699 = vpop.f32.mrf.mxu0
    %v1700 = vpop.f32.mrf.mxu0
    %v1701 = vpop.f32.mrf.mxu0
    %1702 = vdwg.mxu0
    %1704 = vrot.lane.b32.xlu0 %v236, 112
    %v1705 = vpop.permute.xlu0 %1704
    %v1707 = vsel %vm635, %v1599, 0
    %v1710 = vsel %vm735, %v1705, 0
    %1712 = vmatprep.subr.bf16.mxu0 0
    %1713 = vmatpush1.bf16.msra.mxu0 0
    %1714 = vmatprep.subr.bf16.mxu0 0
    %1715 = vmatpush1.bf16.msra.mxu0 0
    %1716 = vmatprep.subr.bf16.mxu0 0
    %1717 = vmatpush1.bf16.msra.mxu0 0
    %1718 = vmatprep.subr.bf16.mxu0 0
    %1719 = vmatpush1.bf16.msra.mxu0 0
    %1720 = vmatprep.subr.bf16.mxu0 0
    %1721 = vmatpush1.bf16.msra.mxu0 0
    %1722 = vmatprep.subr.bf16.mxu0 0
    %1723 = vmatpush1.bf16.msra.mxu0 0
    %1724 = vmatprep.subr.bf16.mxu0 0
    %1725 = vmatpush1.bf16.msra.mxu0 0
    %1726 = vmatprep.subr.bf16.mxu0 0
    %1727 = vmatpush1.bf16.msra.mxu0 %v1710
    %1728 = vmatprep.subr.bf16.mxu0 0
    %1729 = vmatpush2.bf16.msra.mxu0 0
    %1730 = vmatprep.subr.bf16.mxu0 0
    %1731 = vmatpush2.bf16.msra.mxu0 0
    %1732 = vmatprep.subr.bf16.mxu0 0
    %1733 = vmatpush2.bf16.msra.mxu0 0
    %1734 = vmatprep.subr.bf16.mxu0 0
    %1735 = vmatpush2.bf16.msra.mxu0 0
    %1736 = vmatprep.subr.bf16.mxu0 0
    %1737 = vmatpush2.bf16.msra.mxu0 0
    %1738 = vmatprep.subr.bf16.mxu0 0
    %1739 = vmatpush2.bf16.msra.mxu0 0
    %1740 = vmatprep.subr.bf16.mxu0 0
    %1741 = vmatpush2.bf16.msra.mxu0 0
    %1742 = vmatprep.subr.bf16.mxu0 0
    %1743 = vmatpush2.bf16.msra.mxu0 0
    %1744 = vmatprep.mubr.bf16.mxu0 0
    %1745 = vmatmul.mubr.bf16.gmra.mxu0 %v1707
    %v1746 = vpop.f32.mrf.mxu0
    %v1747 = vadd.f32 0.0, %v1746
    %v1748 = vpop.f32.mrf.mxu0
    %v1749 = vpop.f32.mrf.mxu0
    %v1750 = vpop.f32.mrf.mxu0
    %1751 = vdwg.mxu0
    %1753 = vrot.lane.b32.xlu0 %v237, 112
    %v1754 = vpop.permute.xlu0 %1753
    %v1756 = vsel %vm635, %v1600, 0
    %v1759 = vsel %vm735, %v1754, 0
    %1761 = vmatprep.subr.bf16.mxu0 0
    %1762 = vmatpush1.bf16.msra.mxu0 0
    %1763 = vmatprep.subr.bf16.mxu0 0
    %1764 = vmatpush1.bf16.msra.mxu0 0
    %1765 = vmatprep.subr.bf16.mxu0 0
    %1766 = vmatpush1.bf16.msra.mxu0 0
    %1767 = vmatprep.subr.bf16.mxu0 0
    %1768 = vmatpush1.bf16.msra.mxu0 0
    %1769 = vmatprep.subr.bf16.mxu0 0
    %1770 = vmatpush1.bf16.msra.mxu0 0
    %1771 = vmatprep.subr.bf16.mxu0 0
    %1772 = vmatpush1.bf16.msra.mxu0 0
    %1773 = vmatprep.subr.bf16.mxu0 0
    %1774 = vmatpush1.bf16.msra.mxu0 0
    %1775 = vmatprep.subr.bf16.mxu0 0
    %1776 = vmatpush1.bf16.msra.mxu0 %v1759
    %1777 = vmatprep.subr.bf16.mxu0 0
    %1778 = vmatpush2.bf16.msra.mxu0 0
    %1779 = vmatprep.subr.bf16.mxu0 0
    %1780 = vmatpush2.bf16.msra.mxu0 0
    %1781 = vmatprep.subr.bf16.mxu0 0
    %1782 = vmatpush2.bf16.msra.mxu0 0
    %1783 = vmatprep.subr.bf16.mxu0 0
    %1784 = vmatpush2.bf16.msra.mxu0 0
    %1785 = vmatprep.subr.bf16.mxu0 0
    %1786 = vmatpush2.bf16.msra.mxu0 0
    %1787 = vmatprep.subr.bf16.mxu0 0
    %1788 = vmatpush2.bf16.msra.mxu0 0
    %1789 = vmatprep.subr.bf16.mxu0 0
    %1790 = vmatpush2.bf16.msra.mxu0 0
    %1791 = vmatprep.subr.bf16.mxu0 0
    %1792 = vmatpush2.bf16.msra.mxu0 0
    %1793 = vmatprep.mubr.bf16.mxu0 0
    %1794 = vmatmul.mubr.bf16.gmra.mxu0 %v1756
    %v1795 = vpop.f32.mrf.mxu0
    %v1796 = vadd.f32 0.0, %v1795
    %v1797 = vpop.f32.mrf.mxu0
    %v1798 = vpop.f32.mrf.mxu0
    %v1799 = vpop.f32.mrf.mxu0
    %1800 = vdwg.mxu0
    %1802 = vrot.lane.b32.xlu0 %v238, 112
    %v1803 = vpop.permute.xlu0 %1802
    %v1805 = vsel %vm635, %v1601, 0
    %v1808 = vsel %vm735, %v1803, 0
    %1810 = vmatprep.subr.bf16.mxu0 0
    %1811 = vmatpush1.bf16.msra.mxu0 0
    %1812 = vmatprep.subr.bf16.mxu0 0
    %1813 = vmatpush1.bf16.msra.mxu0 0
    %1814 = vmatprep.subr.bf16.mxu0 0
    %1815 = vmatpush1.bf16.msra.mxu0 0
    %1816 = vmatprep.subr.bf16.mxu0 0
    %1817 = vmatpush1.bf16.msra.mxu0 0
    %1818 = vmatprep.subr.bf16.mxu0 0
    %1819 = vmatpush1.bf16.msra.mxu0 0
    %1820 = vmatprep.subr.bf16.mxu0 0
    %1821 = vmatpush1.bf16.msra.mxu0 0
    %1822 = vmatprep.subr.bf16.mxu0 0
    %1823 = vmatpush1.bf16.msra.mxu0 0
    %1824 = vmatprep.subr.bf16.mxu0 0
    %1825 = vmatpush1.bf16.msra.mxu0 %v1808
    %1826 = vmatprep.subr.bf16.mxu0 0
    %1827 = vmatpush2.bf16.msra.mxu0 0
    %1828 = vmatprep.subr.bf16.mxu0 0
    %1829 = vmatpush2.bf16.msra.mxu0 0
    %1830 = vmatprep.subr.bf16.mxu0 0
    %1831 = vmatpush2.bf16.msra.mxu0 0
    %1832 = vmatprep.subr.bf16.mxu0 0
    %1833 = vmatpush2.bf16.msra.mxu0 0
    %1834 = vmatprep.subr.bf16.mxu0 0
    %1835 = vmatpush2.bf16.msra.mxu0 0
    %1836 = vmatprep.subr.bf16.mxu0 0
    %1837 = vmatpush2.bf16.msra.mxu0 0
    %1838 = vmatprep.subr.bf16.mxu0 0
    %1839 = vmatpush2.bf16.msra.mxu0 0
    %1840 = vmatprep.subr.bf16.mxu0 0
    %1841 = vmatpush2.bf16.msra.mxu0 0
    %1842 = vmatprep.mubr.bf16.mxu0 0
    %1843 = vmatmul.mubr.bf16.gmra.mxu0 %v1805
    %v1844 = vpop.f32.mrf.mxu0
    %v1845 = vadd.f32 0.0, %v1844
    %v1846 = vpop.f32.mrf.mxu0
    %v1847 = vpop.f32.mrf.mxu0
    %v1848 = vpop.f32.mrf.mxu0
    %1849 = vdwg.mxu0
    %1851 = vrot.lane.b32.xlu0 %v239, 112
    %v1852 = vpop.permute.xlu0 %1851
    %v1854 = vsel %vm635, %v1602, 0
    %v1857 = vsel %vm735, %v1852, 0
    %1859 = vmatprep.subr.bf16.mxu0 0
    %1860 = vmatpush1.bf16.msra.mxu0 0
    %1861 = vmatprep.subr.bf16.mxu0 0
    %1862 = vmatpush1.bf16.msra.mxu0 0
    %1863 = vmatprep.subr.bf16.mxu0 0
    %1864 = vmatpush1.bf16.msra.mxu0 0
    %1865 = vmatprep.subr.bf16.mxu0 0
    %1866 = vmatpush1.bf16.msra.mxu0 0
    %1867 = vmatprep.subr.bf16.mxu0 0
    %1868 = vmatpush1.bf16.msra.mxu0 0
    %1869 = vmatprep.subr.bf16.mxu0 0
    %1870 = vmatpush1.bf16.msra.mxu0 0
    %1871 = vmatprep.subr.bf16.mxu0 0
    %1872 = vmatpush1.bf16.msra.mxu0 0
    %1873 = vmatprep.subr.bf16.mxu0 0
    %1874 = vmatpush1.bf16.msra.mxu0 %v1857
    %1875 = vmatprep.subr.bf16.mxu0 0
    %1876 = vmatpush2.bf16.msra.mxu0 0
    %1877 = vmatprep.subr.bf16.mxu0 0
    %1878 = vmatpush2.bf16.msra.mxu0 0
    %1879 = vmatprep.subr.bf16.mxu0 0
    %1880 = vmatpush2.bf16.msra.mxu0 0
    %1881 = vmatprep.subr.bf16.mxu0 0
    %1882 = vmatpush2.bf16.msra.mxu0 0
    %1883 = vmatprep.subr.bf16.mxu0 0
    %1884 = vmatpush2.bf16.msra.mxu0 0
    %1885 = vmatprep.subr.bf16.mxu0 0
    %1886 = vmatpush2.bf16.msra.mxu0 0
    %1887 = vmatprep.subr.bf16.mxu0 0
    %1888 = vmatpush2.bf16.msra.mxu0 0
    %1889 = vmatprep.subr.bf16.mxu0 0
    %1890 = vmatpush2.bf16.msra.mxu0 0
    %1891 = vmatprep.mubr.bf16.mxu0 0
    %1892 = vmatmul.mubr.bf16.gmra.mxu0 %v1854
    %v1893 = vpop.f32.mrf.mxu0
    %v1894 = vadd.f32 0.0, %v1893
    %v1895 = vpop.f32.mrf.mxu0
    %v1896 = vpop.f32.mrf.mxu0
    %v1897 = vpop.f32.mrf.mxu0
    %1898 = vdwg.mxu0
    %1900 = vrot.lane.b32.xlu0 %v240, 112
    %v1901 = vpop.permute.xlu0 %1900
    %v1903 = vsel %vm635, %v1603, 0
    %v1906 = vsel %vm735, %v1901, 0
    %1908 = vmatprep.subr.bf16.mxu0 0
    %1909 = vmatpush1.bf16.msra.mxu0 0
    %1910 = vmatprep.subr.bf16.mxu0 0
    %1911 = vmatpush1.bf16.msra.mxu0 0
    %1912 = vmatprep.subr.bf16.mxu0 0
    %1913 = vmatpush1.bf16.msra.mxu0 0
    %1914 = vmatprep.subr.bf16.mxu0 0
    %1915 = vmatpush1.bf16.msra.mxu0 0
    %1916 = vmatprep.subr.bf16.mxu0 0
    %1917 = vmatpush1.bf16.msra.mxu0 0
    %1918 = vmatprep.subr.bf16.mxu0 0
    %1919 = vmatpush1.bf16.msra.mxu0 0
    %1920 = vmatprep.subr.bf16.mxu0 0
    %1921 = vmatpush1.bf16.msra.mxu0 0
    %1922 = vmatprep.subr.bf16.mxu0 0
    %1923 = vmatpush1.bf16.msra.mxu0 %v1906
    %1924 = vmatprep.subr.bf16.mxu0 0
    %1925 = vmatpush2.bf16.msra.mxu0 0
    %1926 = vmatprep.subr.bf16.mxu0 0
    %1927 = vmatpush2.bf16.msra.mxu0 0
    %1928 = vmatprep.subr.bf16.mxu0 0
    %1929 = vmatpush2.bf16.msra.mxu0 0
    %1930 = vmatprep.subr.bf16.mxu0 0
    %1931 = vmatpush2.bf16.msra.mxu0 0
    %1932 = vmatprep.subr.bf16.mxu0 0
    %1933 = vmatpush2.bf16.msra.mxu0 0
    %1934 = vmatprep.subr.bf16.mxu0 0
    %1935 = vmatpush2.bf16.msra.mxu0 0
    %1936 = vmatprep.subr.bf16.mxu0 0
    %1937 = vmatpush2.bf16.msra.mxu0 0
    %1938 = vmatprep.subr.bf16.mxu0 0
    %1939 = vmatpush2.bf16.msra.mxu0 0
    %1940 = vmatprep.mubr.bf16.mxu0 0
    %1941 = vmatmul.mubr.bf16.gmra.mxu0 %v1903
    %v1942 = vpop.f32.mrf.mxu0
    %v1943 = vadd.f32 0.0, %v1942
    %v1944 = vpop.f32.mrf.mxu0
    %v1945 = vpop.f32.mrf.mxu0
    %v1946 = vpop.f32.mrf.mxu0
    %1947 = vdwg.mxu0
    %1949 = vrot.lane.b32.xlu0 %v241, 112
    %v1950 = vpop.permute.xlu0 %1949
    %v1952 = vsel %vm635, %v1604, 0
    %v1955 = vsel %vm735, %v1950, 0
    %1957 = vmatprep.subr.bf16.mxu0 0
    %1958 = vmatpush1.bf16.msra.mxu0 0
    %1959 = vmatprep.subr.bf16.mxu0 0
    %1960 = vmatpush1.bf16.msra.mxu0 0
    %1961 = vmatprep.subr.bf16.mxu0 0
    %1962 = vmatpush1.bf16.msra.mxu0 0
    %1963 = vmatprep.subr.bf16.mxu0 0
    %1964 = vmatpush1.bf16.msra.mxu0 0
    %1965 = vmatprep.subr.bf16.mxu0 0
    %1966 = vmatpush1.bf16.msra.mxu0 0
    %1967 = vmatprep.subr.bf16.mxu0 0
    %1968 = vmatpush1.bf16.msra.mxu0 0
    %1969 = vmatprep.subr.bf16.mxu0 0
    %1970 = vmatpush1.bf16.msra.mxu0 0
    %1971 = vmatprep.subr.bf16.mxu0 0
    %1972 = vmatpush1.bf16.msra.mxu0 %v1955
    %1973 = vmatprep.subr.bf16.mxu0 0
    %1974 = vmatpush2.bf16.msra.mxu0 0
    %1975 = vmatprep.subr.bf16.mxu0 0
    %1976 = vmatpush2.bf16.msra.mxu0 0
    %1977 = vmatprep.subr.bf16.mxu0 0
    %1978 = vmatpush2.bf16.msra.mxu0 0
    %1979 = vmatprep.subr.bf16.mxu0 0
    %1980 = vmatpush2.bf16.msra.mxu0 0
    %1981 = vmatprep.subr.bf16.mxu0 0
    %1982 = vmatpush2.bf16.msra.mxu0 0
    %1983 = vmatprep.subr.bf16.mxu0 0
    %1984 = vmatpush2.bf16.msra.mxu0 0
    %1985 = vmatprep.subr.bf16.mxu0 0
    %1986 = vmatpush2.bf16.msra.mxu0 0
    %1987 = vmatprep.subr.bf16.mxu0 0
    %1988 = vmatpush2.bf16.msra.mxu0 0
    %1989 = vmatprep.mubr.bf16.mxu0 0
    %1990 = vmatmul.mubr.bf16.gmra.mxu0 %v1952
    %v1991 = vpop.f32.mrf.mxu0
    %v1992 = vadd.f32 0.0, %v1991
    %v1993 = vpop.f32.mrf.mxu0
    %v1994 = vpop.f32.mrf.mxu0
    %v1995 = vpop.f32.mrf.mxu0
    %1996 = vdwg.mxu0
    %v1997 = vpack.c.bf16 %v1649, %v1649
    %v1998 = vpack.c.bf16 %v1698, %v1698
    %v1999 = vpack.c.bf16 %v1747, %v1747
    %v2000 = vpack.c.bf16 %v1796, %v1796
    %v2001 = vpack.c.bf16 %v1845, %v1845
    %v2002 = vpack.c.bf16 %v1894, %v1894
    %v2003 = vpack.c.bf16 %v1943, %v1943
    %v2004 = vpack.c.bf16 %v1992, %v1992
    %2005 = vrot.lane.b32.xlu0 %v226, 96
    %v2006 = vpop.permute.xlu0 %2005
    %2007 = vrot.lane.b32.xlu0 %v226, 32
    %v2008 = vpop.permute.xlu0 %2007
    %v2010 = vsel %vm245, %v2006, 0
    %v2013 = vsel %vm245, %v2008, 0
    %2015 = vmatprep.subr.bf16.mxu0 0
    %2016 = vmatpush1.bf16.xpose.msra.mxu0 0
    %2017 = vmatprep.subr.bf16.mxu0 0
    %2018 = vmatpush1.bf16.xpose.msra.mxu0 0
    %2019 = vmatprep.subr.bf16.mxu0 0
    %2020 = vmatpush1.bf16.xpose.msra.mxu0 0
    %2021 = vmatprep.subr.bf16.mxu0 0
    %2022 = vmatpush1.bf16.xpose.msra.mxu0 0
    %2023 = vmatprep.subr.bf16.mxu0 0
    %2024 = vmatpush1.bf16.xpose.msra.mxu0 0
    %2025 = vmatprep.subr.bf16.mxu0 0
    %2026 = vmatpush1.bf16.xpose.msra.mxu0 0
    %2027 = vmatprep.subr.bf16.mxu0 0
    %2028 = vmatpush1.bf16.xpose.msra.mxu0 0
    %2029 = vmatprep.subr.bf16.mxu0 0
    %2030 = vmatpush1.bf16.xpose.msra.mxu0 %v2013
    %2031 = vmatprep.subr.bf16.mxu0 0
    %2032 = vmatpush2.bf16.xpose.msra.mxu0 0
    %2033 = vmatprep.subr.bf16.mxu0 0
    %2034 = vmatpush2.bf16.xpose.msra.mxu0 0
    %2035 = vmatprep.subr.bf16.mxu0 0
    %2036 = vmatpush2.bf16.xpose.msra.mxu0 0
    %2037 = vmatprep.subr.bf16.mxu0 0
    %2038 = vmatpush2.bf16.xpose.msra.mxu0 0
    %2039 = vmatprep.subr.bf16.mxu0 0
    %2040 = vmatpush2.bf16.xpose.msra.mxu0 0
    %2041 = vmatprep.subr.bf16.mxu0 0
    %2042 = vmatpush2.bf16.xpose.msra.mxu0 0
    %2043 = vmatprep.subr.bf16.mxu0 0
    %2044 = vmatpush2.bf16.xpose.msra.mxu0 0
    %2045 = vmatprep.subr.bf16.mxu0 0
    %2046 = vmatpush2.bf16.xpose.msra.mxu0 0
    %2047 = vmatprep.mubr.bf16.mxu0 0
    %2048 = vmatmul.mubr.bf16.gmra.mxu0 %v2010
    %v2049 = vpop.f32.mrf.mxu0
    %v2050 = vadd.f32 0.0, %v2049
    %v2051 = vpop.f32.mrf.mxu0
    %v2052 = vpop.f32.mrf.mxu0
    %v2053 = vpop.f32.mrf.mxu0
    %2054 = vdwg.mxu0
    %2055 = vrot.lane.b32.xlu0 %v227, 96
    %v2056 = vpop.permute.xlu0 %2055
    %2057 = vrot.lane.b32.xlu0 %v227, 32
    %v2058 = vpop.permute.xlu0 %2057
    %v2060 = vsel %vm245, %v2056, 0
    %v2063 = vsel %vm245, %v2058, 0
    %2065 = vmatprep.subr.bf16.mxu0 0
    %2066 = vmatpush1.bf16.xpose.msra.mxu0 0
    %2067 = vmatprep.subr.bf16.mxu0 0
    %2068 = vmatpush1.bf16.xpose.msra.mxu0 0
    %2069 = vmatprep.subr.bf16.mxu0 0
    %2070 = vmatpush1.bf16.xpose.msra.mxu0 0
    %2071 = vmatprep.subr.bf16.mxu0 0
    %2072 = vmatpush1.bf16.xpose.msra.mxu0 0
    %2073 = vmatprep.subr.bf16.mxu0 0
    %2074 = vmatpush1.bf16.xpose.msra.mxu0 0
    %2075 = vmatprep.subr.bf16.mxu0 0
    %2076 = vmatpush1.bf16.xpose.msra.mxu0 0
    %2077 = vmatprep.subr.bf16.mxu0 0
    %2078 = vmatpush1.bf16.xpose.msra.mxu0 0
    %2079 = vmatprep.subr.bf16.mxu0 0
    %2080 = vmatpush1.bf16.xpose.msra.mxu0 %v2063
    %2081 = vmatprep.subr.bf16.mxu0 0
    %2082 = vmatpush2.bf16.xpose.msra.mxu0 0
    %2083 = vmatprep.subr.bf16.mxu0 0
    %2084 = vmatpush2.bf16.xpose.msra.mxu0 0
    %2085 = vmatprep.subr.bf16.mxu0 0
    %2086 = vmatpush2.bf16.xpose.msra.mxu0 0
    %2087 = vmatprep.subr.bf16.mxu0 0
    %2088 = vmatpush2.bf16.xpose.msra.mxu0 0
    %2089 = vmatprep.subr.bf16.mxu0 0
    %2090 = vmatpush2.bf16.xpose.msra.mxu0 0
    %2091 = vmatprep.subr.bf16.mxu0 0
    %2092 = vmatpush2.bf16.xpose.msra.mxu0 0
    %2093 = vmatprep.subr.bf16.mxu0 0
    %2094 = vmatpush2.bf16.xpose.msra.mxu0 0
    %2095 = vmatprep.subr.bf16.mxu0 0
    %2096 = vmatpush2.bf16.xpose.msra.mxu0 0
    %2097 = vmatprep.mubr.bf16.mxu0 0
    %2098 = vmatmul.mubr.bf16.gmra.mxu0 %v2060
    %v2099 = vpop.f32.mrf.mxu0
    %v2100 = vadd.f32 0.0, %v2099
    %v2101 = vpop.f32.mrf.mxu0
    %v2102 = vpop.f32.mrf.mxu0
    %v2103 = vpop.f32.mrf.mxu0
    %2104 = vdwg.mxu0
    %2105 = vrot.lane.b32.xlu0 %v228, 96
    %v2106 = vpop.permute.xlu0 %2105
    %2107 = vrot.lane.b32.xlu0 %v228, 32
    %v2108 = vpop.permute.xlu0 %2107
    %v2110 = vsel %vm245, %v2106, 0
    %v2113 = vsel %vm245, %v2108, 0
    %2115 = vmatprep.subr.bf16.mxu0 0
    %2116 = vmatpush1.bf16.xpose.msra.mxu0 0
    %2117 = vmatprep.subr.bf16.mxu0 0
    %2118 = vmatpush1.bf16.xpose.msra.mxu0 0
    %2119 = vmatprep.subr.bf16.mxu0 0
    %2120 = vmatpush1.bf16.xpose.msra.mxu0 0
    %2121 = vmatprep.subr.bf16.mxu0 0
    %2122 = vmatpush1.bf16.xpose.msra.mxu0 0
    %2123 = vmatprep.subr.bf16.mxu0 0
    %2124 = vmatpush1.bf16.xpose.msra.mxu0 0
    %2125 = vmatprep.subr.bf16.mxu0 0
    %2126 = vmatpush1.bf16.xpose.msra.mxu0 0
    %2127 = vmatprep.subr.bf16.mxu0 0
    %2128 = vmatpush1.bf16.xpose.msra.mxu0 0
    %2129 = vmatprep.subr.bf16.mxu0 0
    %2130 = vmatpush1.bf16.xpose.msra.mxu0 %v2113
    %2131 = vmatprep.subr.bf16.mxu0 0
    %2132 = vmatpush2.bf16.xpose.msra.mxu0 0
    %2133 = vmatprep.subr.bf16.mxu0 0
    %2134 = vmatpush2.bf16.xpose.msra.mxu0 0
    %2135 = vmatprep.subr.bf16.mxu0 0
    %2136 = vmatpush2.bf16.xpose.msra.mxu0 0
    %2137 = vmatprep.subr.bf16.mxu0 0
    %2138 = vmatpush2.bf16.xpose.msra.mxu0 0
    %2139 = vmatprep.subr.bf16.mxu0 0
    %2140 = vmatpush2.bf16.xpose.msra.mxu0 0
    %2141 = vmatprep.subr.bf16.mxu0 0
    %2142 = vmatpush2.bf16.xpose.msra.mxu0 0
    %2143 = vmatprep.subr.bf16.mxu0 0
    %2144 = vmatpush2.bf16.xpose.msra.mxu0 0
    %2145 = vmatprep.subr.bf16.mxu0 0
    %2146 = vmatpush2.bf16.xpose.msra.mxu0 0
    %2147 = vmatprep.mubr.bf16.mxu0 0
    %2148 = vmatmul.mubr.bf16.gmra.mxu0 %v2110
    %v2149 = vpop.f32.mrf.mxu0
    %v2150 = vadd.f32 0.0, %v2149
    %v2151 = vpop.f32.mrf.mxu0
    %v2152 = vpop.f32.mrf.mxu0
    %v2153 = vpop.f32.mrf.mxu0
    %2154 = vdwg.mxu0
    %2155 = vrot.lane.b32.xlu0 %v229, 96
    %v2156 = vpop.permute.xlu0 %2155
    %2157 = vrot.lane.b32.xlu0 %v229, 32
    %v2158 = vpop.permute.xlu0 %2157
    %v2160 = vsel %vm245, %v2156, 0
    %v2163 = vsel %vm245, %v2158, 0
    %2165 = vmatprep.subr.bf16.mxu0 0
    %2166 = vmatpush1.bf16.xpose.msra.mxu0 0
    %2167 = vmatprep.subr.bf16.mxu0 0
    %2168 = vmatpush1.bf16.xpose.msra.mxu0 0
    %2169 = vmatprep.subr.bf16.mxu0 0
    %2170 = vmatpush1.bf16.xpose.msra.mxu0 0
    %2171 = vmatprep.subr.bf16.mxu0 0
    %2172 = vmatpush1.bf16.xpose.msra.mxu0 0
    %2173 = vmatprep.subr.bf16.mxu0 0
    %2174 = vmatpush1.bf16.xpose.msra.mxu0 0
    %2175 = vmatprep.subr.bf16.mxu0 0
    %2176 = vmatpush1.bf16.xpose.msra.mxu0 0
    %2177 = vmatprep.subr.bf16.mxu0 0
    %2178 = vmatpush1.bf16.xpose.msra.mxu0 0
    %2179 = vmatprep.subr.bf16.mxu0 0
    %2180 = vmatpush1.bf16.xpose.msra.mxu0 %v2163
    %2181 = vmatprep.subr.bf16.mxu0 0
    %2182 = vmatpush2.bf16.xpose.msra.mxu0 0
    %2183 = vmatprep.subr.bf16.mxu0 0
    %2184 = vmatpush2.bf16.xpose.msra.mxu0 0
    %2185 = vmatprep.subr.bf16.mxu0 0
    %2186 = vmatpush2.bf16.xpose.msra.mxu0 0
    %2187 = vmatprep.subr.bf16.mxu0 0
    %2188 = vmatpush2.bf16.xpose.msra.mxu0 0
    %2189 = vmatprep.subr.bf16.mxu0 0
    %2190 = vmatpush2.bf16.xpose.msra.mxu0 0
    %2191 = vmatprep.subr.bf16.mxu0 0
    %2192 = vmatpush2.bf16.xpose.msra.mxu0 0
    %2193 = vmatprep.subr.bf16.mxu0 0
    %2194 = vmatpush2.bf16.xpose.msra.mxu0 0
    %2195 = vmatprep.subr.bf16.mxu0 0
    %2196 = vmatpush2.bf16.xpose.msra.mxu0 0
    %2197 = vmatprep.mubr.bf16.mxu0 0
    %2198 = vmatmul.mubr.bf16.gmra.mxu0 %v2160
    %v2199 = vpop.f32.mrf.mxu0
    %v2200 = vadd.f32 0.0, %v2199
    %v2201 = vpop.f32.mrf.mxu0
    %v2202 = vpop.f32.mrf.mxu0
    %v2203 = vpop.f32.mrf.mxu0
    %2204 = vdwg.mxu0
    %2205 = vrot.lane.b32.xlu0 %v230, 96
    %v2206 = vpop.permute.xlu0 %2205
    %2207 = vrot.lane.b32.xlu0 %v230, 32
    %v2208 = vpop.permute.xlu0 %2207
    %v2210 = vsel %vm245, %v2206, 0
    %v2213 = vsel %vm245, %v2208, 0
    %2215 = vmatprep.subr.bf16.mxu0 0
    %2216 = vmatpush1.bf16.xpose.msra.mxu0 0
    %2217 = vmatprep.subr.bf16.mxu0 0
    %2218 = vmatpush1.bf16.xpose.msra.mxu0 0
    %2219 = vmatprep.subr.bf16.mxu0 0
    %2220 = vmatpush1.bf16.xpose.msra.mxu0 0
    %2221 = vmatprep.subr.bf16.mxu0 0
    %2222 = vmatpush1.bf16.xpose.msra.mxu0 0
    %2223 = vmatprep.subr.bf16.mxu0 0
    %2224 = vmatpush1.bf16.xpose.msra.mxu0 0
    %2225 = vmatprep.subr.bf16.mxu0 0
    %2226 = vmatpush1.bf16.xpose.msra.mxu0 0
    %2227 = vmatprep.subr.bf16.mxu0 0
    %2228 = vmatpush1.bf16.xpose.msra.mxu0 0
    %2229 = vmatprep.subr.bf16.mxu0 0
    %2230 = vmatpush1.bf16.xpose.msra.mxu0 %v2213
    %2231 = vmatprep.subr.bf16.mxu0 0
    %2232 = vmatpush2.bf16.xpose.msra.mxu0 0
    %2233 = vmatprep.subr.bf16.mxu0 0
    %2234 = vmatpush2.bf16.xpose.msra.mxu0 0
    %2235 = vmatprep.subr.bf16.mxu0 0
    %2236 = vmatpush2.bf16.xpose.msra.mxu0 0
    %2237 = vmatprep.subr.bf16.mxu0 0
    %2238 = vmatpush2.bf16.xpose.msra.mxu0 0
    %2239 = vmatprep.subr.bf16.mxu0 0
    %2240 = vmatpush2.bf16.xpose.msra.mxu0 0
    %2241 = vmatprep.subr.bf16.mxu0 0
    %2242 = vmatpush2.bf16.xpose.msra.mxu0 0
    %2243 = vmatprep.subr.bf16.mxu0 0
    %2244 = vmatpush2.bf16.xpose.msra.mxu0 0
    %2245 = vmatprep.subr.bf16.mxu0 0
    %2246 = vmatpush2.bf16.xpose.msra.mxu0 0
    %2247 = vmatprep.mubr.bf16.mxu0 0
    %2248 = vmatmul.mubr.bf16.gmra.mxu0 %v2210
    %v2249 = vpop.f32.mrf.mxu0
    %v2250 = vadd.f32 0.0, %v2249
    %v2251 = vpop.f32.mrf.mxu0
    %v2252 = vpop.f32.mrf.mxu0
    %v2253 = vpop.f32.mrf.mxu0
    %2254 = vdwg.mxu0
    %2255 = vrot.lane.b32.xlu0 %v231, 96
    %v2256 = vpop.permute.xlu0 %2255
    %2257 = vrot.lane.b32.xlu0 %v231, 32
    %v2258 = vpop.permute.xlu0 %2257
    %v2260 = vsel %vm245, %v2256, 0
    %v2263 = vsel %vm245, %v2258, 0
    %2265 = vmatprep.subr.bf16.mxu0 0
    %2266 = vmatpush1.bf16.xpose.msra.mxu0 0
    %2267 = vmatprep.subr.bf16.mxu0 0
    %2268 = vmatpush1.bf16.xpose.msra.mxu0 0
    %2269 = vmatprep.subr.bf16.mxu0 0
    %2270 = vmatpush1.bf16.xpose.msra.mxu0 0
    %2271 = vmatprep.subr.bf16.mxu0 0
    %2272 = vmatpush1.bf16.xpose.msra.mxu0 0
    %2273 = vmatprep.subr.bf16.mxu0 0
    %2274 = vmatpush1.bf16.xpose.msra.mxu0 0
    %2275 = vmatprep.subr.bf16.mxu0 0
    %2276 = vmatpush1.bf16.xpose.msra.mxu0 0
    %2277 = vmatprep.subr.bf16.mxu0 0
    %2278 = vmatpush1.bf16.xpose.msra.mxu0 0
    %2279 = vmatprep.subr.bf16.mxu0 0
    %2280 = vmatpush1.bf16.xpose.msra.mxu0 %v2263
    %2281 = vmatprep.subr.bf16.mxu0 0
    %2282 = vmatpush2.bf16.xpose.msra.mxu0 0
    %2283 = vmatprep.subr.bf16.mxu0 0
    %2284 = vmatpush2.bf16.xpose.msra.mxu0 0
    %2285 = vmatprep.subr.bf16.mxu0 0
    %2286 = vmatpush2.bf16.xpose.msra.mxu0 0
    %2287 = vmatprep.subr.bf16.mxu0 0
    %2288 = vmatpush2.bf16.xpose.msra.mxu0 0
    %2289 = vmatprep.subr.bf16.mxu0 0
    %2290 = vmatpush2.bf16.xpose.msra.mxu0 0
    %2291 = vmatprep.subr.bf16.mxu0 0
    %2292 = vmatpush2.bf16.xpose.msra.mxu0 0
    %2293 = vmatprep.subr.bf16.mxu0 0
    %2294 = vmatpush2.bf16.xpose.msra.mxu0 0
    %2295 = vmatprep.subr.bf16.mxu0 0
    %2296 = vmatpush2.bf16.xpose.msra.mxu0 0
    %2297 = vmatprep.mubr.bf16.mxu0 0
    %2298 = vmatmul.mubr.bf16.gmra.mxu0 %v2260
    %v2299 = vpop.f32.mrf.mxu0
    %v2300 = vadd.f32 0.0, %v2299
    %v2301 = vpop.f32.mrf.mxu0
    %v2302 = vpop.f32.mrf.mxu0
    %v2303 = vpop.f32.mrf.mxu0
    %2304 = vdwg.mxu0
    %2305 = vrot.lane.b32.xlu0 %v232, 96
    %v2306 = vpop.permute.xlu0 %2305
    %2307 = vrot.lane.b32.xlu0 %v232, 32
    %v2308 = vpop.permute.xlu0 %2307
    %v2310 = vsel %vm245, %v2306, 0
    %v2313 = vsel %vm245, %v2308, 0
    %2315 = vmatprep.subr.bf16.mxu0 0
    %2316 = vmatpush1.bf16.xpose.msra.mxu0 0
    %2317 = vmatprep.subr.bf16.mxu0 0
    %2318 = vmatpush1.bf16.xpose.msra.mxu0 0
    %2319 = vmatprep.subr.bf16.mxu0 0
    %2320 = vmatpush1.bf16.xpose.msra.mxu0 0
    %2321 = vmatprep.subr.bf16.mxu0 0
    %2322 = vmatpush1.bf16.xpose.msra.mxu0 0
    %2323 = vmatprep.subr.bf16.mxu0 0
    %2324 = vmatpush1.bf16.xpose.msra.mxu0 0
    %2325 = vmatprep.subr.bf16.mxu0 0
    %2326 = vmatpush1.bf16.xpose.msra.mxu0 0
    %2327 = vmatprep.subr.bf16.mxu0 0
    %2328 = vmatpush1.bf16.xpose.msra.mxu0 0
    %2329 = vmatprep.subr.bf16.mxu0 0
    %2330 = vmatpush1.bf16.xpose.msra.mxu0 %v2313
    %2331 = vmatprep.subr.bf16.mxu0 0
    %2332 = vmatpush2.bf16.xpose.msra.mxu0 0
    %2333 = vmatprep.subr.bf16.mxu0 0
    %2334 = vmatpush2.bf16.xpose.msra.mxu0 0
    %2335 = vmatprep.subr.bf16.mxu0 0
    %2336 = vmatpush2.bf16.xpose.msra.mxu0 0
    %2337 = vmatprep.subr.bf16.mxu0 0
    %2338 = vmatpush2.bf16.xpose.msra.mxu0 0
    %2339 = vmatprep.subr.bf16.mxu0 0
    %2340 = vmatpush2.bf16.xpose.msra.mxu0 0
    %2341 = vmatprep.subr.bf16.mxu0 0
    %2342 = vmatpush2.bf16.xpose.msra.mxu0 0
    %2343 = vmatprep.subr.bf16.mxu0 0
    %2344 = vmatpush2.bf16.xpose.msra.mxu0 0
    %2345 = vmatprep.subr.bf16.mxu0 0
    %2346 = vmatpush2.bf16.xpose.msra.mxu0 0
    %2347 = vmatprep.mubr.bf16.mxu0 0
    %2348 = vmatmul.mubr.bf16.gmra.mxu0 %v2310
    %v2349 = vpop.f32.mrf.mxu0
    %v2350 = vadd.f32 0.0, %v2349
    %v2351 = vpop.f32.mrf.mxu0
    %v2352 = vpop.f32.mrf.mxu0
    %v2353 = vpop.f32.mrf.mxu0
    %2354 = vdwg.mxu0
    %2355 = vrot.lane.b32.xlu0 %v233, 96
    %v2356 = vpop.permute.xlu0 %2355
    %2357 = vrot.lane.b32.xlu0 %v233, 32
    %v2358 = vpop.permute.xlu0 %2357
    %v2360 = vsel %vm245, %v2356, 0
    %v2363 = vsel %vm245, %v2358, 0
    %2365 = vmatprep.subr.bf16.mxu0 0
    %2366 = vmatpush1.bf16.xpose.msra.mxu0 0
    %2367 = vmatprep.subr.bf16.mxu0 0
    %2368 = vmatpush1.bf16.xpose.msra.mxu0 0
    %2369 = vmatprep.subr.bf16.mxu0 0
    %2370 = vmatpush1.bf16.xpose.msra.mxu0 0
    %2371 = vmatprep.subr.bf16.mxu0 0
    %2372 = vmatpush1.bf16.xpose.msra.mxu0 0
    %2373 = vmatprep.subr.bf16.mxu0 0
    %2374 = vmatpush1.bf16.xpose.msra.mxu0 0
    %2375 = vmatprep.subr.bf16.mxu0 0
    %2376 = vmatpush1.bf16.xpose.msra.mxu0 0
    %2377 = vmatprep.subr.bf16.mxu0 0
    %2378 = vmatpush1.bf16.xpose.msra.mxu0 0
    %2379 = vmatprep.subr.bf16.mxu0 0
    %2380 = vmatpush1.bf16.xpose.msra.mxu0 %v2363
    %2381 = vmatprep.subr.bf16.mxu0 0
    %2382 = vmatpush2.bf16.xpose.msra.mxu0 0
    %2383 = vmatprep.subr.bf16.mxu0 0
    %2384 = vmatpush2.bf16.xpose.msra.mxu0 0
    %2385 = vmatprep.subr.bf16.mxu0 0
    %2386 = vmatpush2.bf16.xpose.msra.mxu0 0
    %2387 = vmatprep.subr.bf16.mxu0 0
    %2388 = vmatpush2.bf16.xpose.msra.mxu0 0
    %2389 = vmatprep.subr.bf16.mxu0 0
    %2390 = vmatpush2.bf16.xpose.msra.mxu0 0
    %2391 = vmatprep.subr.bf16.mxu0 0
    %2392 = vmatpush2.bf16.xpose.msra.mxu0 0
    %2393 = vmatprep.subr.bf16.mxu0 0
    %2394 = vmatpush2.bf16.xpose.msra.mxu0 0
    %2395 = vmatprep.subr.bf16.mxu0 0
    %2396 = vmatpush2.bf16.xpose.msra.mxu0 0
    %2397 = vmatprep.mubr.bf16.mxu0 0
    %2398 = vmatmul.mubr.bf16.gmra.mxu0 %v2360
    %v2399 = vpop.f32.mrf.mxu0
    %v2400 = vadd.f32 0.0, %v2399
    %v2401 = vpop.f32.mrf.mxu0
    %v2402 = vpop.f32.mrf.mxu0
    %v2403 = vpop.f32.mrf.mxu0
    %2404 = vdwg.mxu0
    %v2405 = vsel %vm635, %v2050, -inf
    %2406 = vmax.xlane.f32.xlu0 %v2405
    %v2407 = vpop.xlane.xlu0 %2406
    %v2408 = vsel %vm635, %v2100, -inf
    %2409 = vmax.xlane.f32.xlu0 %v2408
    %v2410 = vpop.xlane.xlu0 %2409
    %v2411 = vsel %vm635, %v2150, -inf
    %2412 = vmax.xlane.f32.xlu0 %v2411
    %v2413 = vpop.xlane.xlu0 %2412
    %v2414 = vsel %vm635, %v2200, -inf
    %2415 = vmax.xlane.f32.xlu0 %v2414
    %v2416 = vpop.xlane.xlu0 %2415
    %v2417 = vsel %vm635, %v2250, -inf
    %2418 = vmax.xlane.f32.xlu0 %v2417
    %v2419 = vpop.xlane.xlu0 %2418
    %v2420 = vsel %vm635, %v2300, -inf
    %2421 = vmax.xlane.f32.xlu0 %v2420
    %v2422 = vpop.xlane.xlu0 %2421
    %v2423 = vsel %vm635, %v2350, -inf
    %2424 = vmax.xlane.f32.xlu0 %v2423
    %v2425 = vpop.xlane.xlu0 %2424
    %v2426 = vsel %vm635, %v2400, -inf
    %2427 = vmax.xlane.f32.xlu0 %v2426
    %v2428 = vpop.xlane.xlu0 %2427
    %v2429 = vsub.f32 %v2050, %v2407
    %v2430 = vsub.f32 %v2100, %v2410
    %v2431 = vsub.f32 %v2150, %v2413
    %v2432 = vsub.f32 %v2200, %v2416
    %v2433 = vsub.f32 %v2250, %v2419
    %v2434 = vsub.f32 %v2300, %v2422
    %v2435 = vsub.f32 %v2350, %v2425
    %v2436 = vsub.f32 %v2400, %v2428
    %v2437 = vmul.f32 %v2429, 1.442695
    %v2438 = vpow.pop %v2437
    %v2439 = vmul.f32 %v2430, 1.442695
    %v2440 = vpow.pop %v2439
    %v2441 = vmul.f32 %v2431, 1.442695
    %v2442 = vpow.pop %v2441
    %v2443 = vmul.f32 %v2432, 1.442695
    %v2444 = vpow.pop %v2443
    %v2445 = vmul.f32 %v2433, 1.442695
    %v2446 = vpow.pop %v2445
    %v2447 = vmul.f32 %v2434, 1.442695
    %v2448 = vpow.pop %v2447
    %v2449 = vmul.f32 %v2435, 1.442695
    %v2450 = vpow.pop %v2449
    %v2451 = vmul.f32 %v2436, 1.442695
    %v2452 = vpow.pop %v2451
    %v2453 = vsel %vm635, %v2438, 0.0
    %2454 = vadd.xlane.f32.xlu0 %v2453
    %v2455 = vpop.xlane.xlu0 %2454
    %v2456 = vsel %vm635, %v2440, 0.0
    %2457 = vadd.xlane.f32.xlu0 %v2456
    %v2458 = vpop.xlane.xlu0 %2457
    %v2459 = vsel %vm635, %v2442, 0.0
    %2460 = vadd.xlane.f32.xlu0 %v2459
    %v2461 = vpop.xlane.xlu0 %2460
    %v2462 = vsel %vm635, %v2444, 0.0
    %2463 = vadd.xlane.f32.xlu0 %v2462
    %v2464 = vpop.xlane.xlu0 %2463
    %v2465 = vsel %vm635, %v2446, 0.0
    %2466 = vadd.xlane.f32.xlu0 %v2465
    %v2467 = vpop.xlane.xlu0 %2466
    %v2468 = vsel %vm635, %v2448, 0.0
    %2469 = vadd.xlane.f32.xlu0 %v2468
    %v2470 = vpop.xlane.xlu0 %2469
    %v2471 = vsel %vm635, %v2450, 0.0
    %2472 = vadd.xlane.f32.xlu0 %v2471
    %v2473 = vpop.xlane.xlu0 %2472
    %v2474 = vsel %vm635, %v2452, 0.0
    %2475 = vadd.xlane.f32.xlu0 %v2474
    %v2476 = vpop.xlane.xlu0 %2475
    %v2477 = vrcp.pop %v2455
    %v2478 = vrcp.pop %v2458
    %v2479 = vrcp.pop %v2461
    %v2480 = vrcp.pop %v2464
    %v2481 = vrcp.pop %v2467
    %v2482 = vrcp.pop %v2470
    %v2483 = vrcp.pop %v2473
    %v2484 = vrcp.pop %v2476
    %v2485 = vmul.f32 %v2438, %v2477
    %v2486 = vmul.f32 %v2440, %v2478
    %v2487 = vmul.f32 %v2442, %v2479
    %v2488 = vmul.f32 %v2444, %v2480
    %v2489 = vmul.f32 %v2446, %v2481
    %v2490 = vmul.f32 %v2448, %v2482
    %v2491 = vmul.f32 %v2450, %v2483
    %v2492 = vmul.f32 %v2452, %v2484
    %v2493 = vpack.c.bf16 %v2485, %v2485
    %v2494 = vpack.c.bf16 %v2486, %v2486
    %v2495 = vpack.c.bf16 %v2487, %v2487
    %v2496 = vpack.c.bf16 %v2488, %v2488
    %v2497 = vpack.c.bf16 %v2489, %v2489
    %v2498 = vpack.c.bf16 %v2490, %v2490
    %v2499 = vpack.c.bf16 %v2491, %v2491
    %v2500 = vpack.c.bf16 %v2492, %v2492
    %2501 = vrot.lane.b32.xlu0 %v234, 96
    %v2502 = vpop.permute.xlu0 %2501
    %v2504 = vsel %vm635, %v2493, 0
    %v2507 = vsel %vm735, %v2502, 0
    %2509 = vmatprep.subr.bf16.mxu0 0
    %2510 = vmatpush1.bf16.msra.mxu0 0
    %2511 = vmatprep.subr.bf16.mxu0 0
    %2512 = vmatpush1.bf16.msra.mxu0 0
    %2513 = vmatprep.subr.bf16.mxu0 0
    %2514 = vmatpush1.bf16.msra.mxu0 0
    %2515 = vmatprep.subr.bf16.mxu0 0
    %2516 = vmatpush1.bf16.msra.mxu0 0
    %2517 = vmatprep.subr.bf16.mxu0 0
    %2518 = vmatpush1.bf16.msra.mxu0 0
    %2519 = vmatprep.subr.bf16.mxu0 0
    %2520 = vmatpush1.bf16.msra.mxu0 0
    %2521 = vmatprep.subr.bf16.mxu0 0
    %2522 = vmatpush1.bf16.msra.mxu0 0
    %2523 = vmatprep.subr.bf16.mxu0 0
    %2524 = vmatpush1.bf16.msra.mxu0 %v2507
    %2525 = vmatprep.subr.bf16.mxu0 0
    %2526 = vmatpush2.bf16.msra.mxu0 0
    %2527 = vmatprep.subr.bf16.mxu0 0
    %2528 = vmatpush2.bf16.msra.mxu0 0
    %2529 = vmatprep.subr.bf16.mxu0 0
    %2530 = vmatpush2.bf16.msra.mxu0 0
    %2531 = vmatprep.subr.bf16.mxu0 0
    %2532 = vmatpush2.bf16.msra.mxu0 0
    %2533 = vmatprep.subr.bf16.mxu0 0
    %2534 = vmatpush2.bf16.msra.mxu0 0
    %2535 = vmatprep.subr.bf16.mxu0 0
    %2536 = vmatpush2.bf16.msra.mxu0 0
    %2537 = vmatprep.subr.bf16.mxu0 0
    %2538 = vmatpush2.bf16.msra.mxu0 0
    %2539 = vmatprep.subr.bf16.mxu0 0
    %2540 = vmatpush2.bf16.msra.mxu0 0
    %2541 = vmatprep.mubr.bf16.mxu0 0
    %2542 = vmatmul.mubr.bf16.gmra.mxu0 %v2504
    %v2543 = vpop.f32.mrf.mxu0
    %v2544 = vadd.f32 0.0, %v2543
    %v2545 = vpop.f32.mrf.mxu0
    %v2546 = vpop.f32.mrf.mxu0
    %v2547 = vpop.f32.mrf.mxu0
    %2548 = vdwg.mxu0
    %2549 = vrot.lane.b32.xlu0 %v235, 96
    %v2550 = vpop.permute.xlu0 %2549
    %v2552 = vsel %vm635, %v2494, 0
    %v2555 = vsel %vm735, %v2550, 0
    %2557 = vmatprep.subr.bf16.mxu0 0
    %2558 = vmatpush1.bf16.msra.mxu0 0
    %2559 = vmatprep.subr.bf16.mxu0 0
    %2560 = vmatpush1.bf16.msra.mxu0 0
    %2561 = vmatprep.subr.bf16.mxu0 0
    %2562 = vmatpush1.bf16.msra.mxu0 0
    %2563 = vmatprep.subr.bf16.mxu0 0
    %2564 = vmatpush1.bf16.msra.mxu0 0
    %2565 = vmatprep.subr.bf16.mxu0 0
    %2566 = vmatpush1.bf16.msra.mxu0 0
    %2567 = vmatprep.subr.bf16.mxu0 0
    %2568 = vmatpush1.bf16.msra.mxu0 0
    %2569 = vmatprep.subr.bf16.mxu0 0
    %2570 = vmatpush1.bf16.msra.mxu0 0
    %2571 = vmatprep.subr.bf16.mxu0 0
    %2572 = vmatpush1.bf16.msra.mxu0 %v2555
    %2573 = vmatprep.subr.bf16.mxu0 0
    %2574 = vmatpush2.bf16.msra.mxu0 0
    %2575 = vmatprep.subr.bf16.mxu0 0
    %2576 = vmatpush2.bf16.msra.mxu0 0
    %2577 = vmatprep.subr.bf16.mxu0 0
    %2578 = vmatpush2.bf16.msra.mxu0 0
    %2579 = vmatprep.subr.bf16.mxu0 0
    %2580 = vmatpush2.bf16.msra.mxu0 0
    %2581 = vmatprep.subr.bf16.mxu0 0
    %2582 = vmatpush2.bf16.msra.mxu0 0
    %2583 = vmatprep.subr.bf16.mxu0 0
    %2584 = vmatpush2.bf16.msra.mxu0 0
    %2585 = vmatprep.subr.bf16.mxu0 0
    %2586 = vmatpush2.bf16.msra.mxu0 0
    %2587 = vmatprep.subr.bf16.mxu0 0
    %2588 = vmatpush2.bf16.msra.mxu0 0
    %2589 = vmatprep.mubr.bf16.mxu0 0
    %2590 = vmatmul.mubr.bf16.gmra.mxu0 %v2552
    %v2591 = vpop.f32.mrf.mxu0
    %v2592 = vadd.f32 0.0, %v2591
    %v2593 = vpop.f32.mrf.mxu0
    %v2594 = vpop.f32.mrf.mxu0
    %v2595 = vpop.f32.mrf.mxu0
    %2596 = vdwg.mxu0
    %2597 = vrot.lane.b32.xlu0 %v236, 96
    %v2598 = vpop.permute.xlu0 %2597
    %v2600 = vsel %vm635, %v2495, 0
    %v2603 = vsel %vm735, %v2598, 0
    %2605 = vmatprep.subr.bf16.mxu0 0
    %2606 = vmatpush1.bf16.msra.mxu0 0
    %2607 = vmatprep.subr.bf16.mxu0 0
    %2608 = vmatpush1.bf16.msra.mxu0 0
    %2609 = vmatprep.subr.bf16.mxu0 0
    %2610 = vmatpush1.bf16.msra.mxu0 0
    %2611 = vmatprep.subr.bf16.mxu0 0
    %2612 = vmatpush1.bf16.msra.mxu0 0
    %2613 = vmatprep.subr.bf16.mxu0 0
    %2614 = vmatpush1.bf16.msra.mxu0 0
    %2615 = vmatprep.subr.bf16.mxu0 0
    %2616 = vmatpush1.bf16.msra.mxu0 0
    %2617 = vmatprep.subr.bf16.mxu0 0
    %2618 = vmatpush1.bf16.msra.mxu0 0
    %2619 = vmatprep.subr.bf16.mxu0 0
    %2620 = vmatpush1.bf16.msra.mxu0 %v2603
    %2621 = vmatprep.subr.bf16.mxu0 0
    %2622 = vmatpush2.bf16.msra.mxu0 0
    %2623 = vmatprep.subr.bf16.mxu0 0
    %2624 = vmatpush2.bf16.msra.mxu0 0
    %2625 = vmatprep.subr.bf16.mxu0 0
    %2626 = vmatpush2.bf16.msra.mxu0 0
    %2627 = vmatprep.subr.bf16.mxu0 0
    %2628 = vmatpush2.bf16.msra.mxu0 0
    %2629 = vmatprep.subr.bf16.mxu0 0
    %2630 = vmatpush2.bf16.msra.mxu0 0
    %2631 = vmatprep.subr.bf16.mxu0 0
    %2632 = vmatpush2.bf16.msra.mxu0 0
    %2633 = vmatprep.subr.bf16.mxu0 0
    %2634 = vmatpush2.bf16.msra.mxu0 0
    %2635 = vmatprep.subr.bf16.mxu0 0
    %2636 = vmatpush2.bf16.msra.mxu0 0
    %2637 = vmatprep.mubr.bf16.mxu0 0
    %2638 = vmatmul.mubr.bf16.gmra.mxu0 %v2600
    %v2639 = vpop.f32.mrf.mxu0
    %v2640 = vadd.f32 0.0, %v2639
    %v2641 = vpop.f32.mrf.mxu0
    %v2642 = vpop.f32.mrf.mxu0
    %v2643 = vpop.f32.mrf.mxu0
    %2644 = vdwg.mxu0
    %2645 = vrot.lane.b32.xlu0 %v237, 96
    %v2646 = vpop.permute.xlu0 %2645
    %v2648 = vsel %vm635, %v2496, 0
    %v2651 = vsel %vm735, %v2646, 0
    %2653 = vmatprep.subr.bf16.mxu0 0
    %2654 = vmatpush1.bf16.msra.mxu0 0
    %2655 = vmatprep.subr.bf16.mxu0 0
    %2656 = vmatpush1.bf16.msra.mxu0 0
    %2657 = vmatprep.subr.bf16.mxu0 0
    %2658 = vmatpush1.bf16.msra.mxu0 0
    %2659 = vmatprep.subr.bf16.mxu0 0
    %2660 = vmatpush1.bf16.msra.mxu0 0
    %2661 = vmatprep.subr.bf16.mxu0 0
    %2662 = vmatpush1.bf16.msra.mxu0 0
    %2663 = vmatprep.subr.bf16.mxu0 0
    %2664 = vmatpush1.bf16.msra.mxu0 0
    %2665 = vmatprep.subr.bf16.mxu0 0
    %2666 = vmatpush1.bf16.msra.mxu0 0
    %2667 = vmatprep.subr.bf16.mxu0 0
    %2668 = vmatpush1.bf16.msra.mxu0 %v2651
    %2669 = vmatprep.subr.bf16.mxu0 0
    %2670 = vmatpush2.bf16.msra.mxu0 0
    %2671 = vmatprep.subr.bf16.mxu0 0
    %2672 = vmatpush2.bf16.msra.mxu0 0
    %2673 = vmatprep.subr.bf16.mxu0 0
    %2674 = vmatpush2.bf16.msra.mxu0 0
    %2675 = vmatprep.subr.bf16.mxu0 0
    %2676 = vmatpush2.bf16.msra.mxu0 0
    %2677 = vmatprep.subr.bf16.mxu0 0
    %2678 = vmatpush2.bf16.msra.mxu0 0
    %2679 = vmatprep.subr.bf16.mxu0 0
    %2680 = vmatpush2.bf16.msra.mxu0 0
    %2681 = vmatprep.subr.bf16.mxu0 0
    %2682 = vmatpush2.bf16.msra.mxu0 0
    %2683 = vmatprep.subr.bf16.mxu0 0
    %2684 = vmatpush2.bf16.msra.mxu0 0
    %2685 = vmatprep.mubr.bf16.mxu0 0
    %2686 = vmatmul.mubr.bf16.gmra.mxu0 %v2648
    %v2687 = vpop.f32.mrf.mxu0
    %v2688 = vadd.f32 0.0, %v2687
    %v2689 = vpop.f32.mrf.mxu0
    %v2690 = vpop.f32.mrf.mxu0
    %v2691 = vpop.f32.mrf.mxu0
    %2692 = vdwg.mxu0
    %2693 = vrot.lane.b32.xlu0 %v238, 96
    %v2694 = vpop.permute.xlu0 %2693
    %v2696 = vsel %vm635, %v2497, 0
    %v2699 = vsel %vm735, %v2694, 0
    %2701 = vmatprep.subr.bf16.mxu0 0
    %2702 = vmatpush1.bf16.msra.mxu0 0
    %2703 = vmatprep.subr.bf16.mxu0 0
    %2704 = vmatpush1.bf16.msra.mxu0 0
    %2705 = vmatprep.subr.bf16.mxu0 0
    %2706 = vmatpush1.bf16.msra.mxu0 0
    %2707 = vmatprep.subr.bf16.mxu0 0
    %2708 = vmatpush1.bf16.msra.mxu0 0
    %2709 = vmatprep.subr.bf16.mxu0 0
    %2710 = vmatpush1.bf16.msra.mxu0 0
    %2711 = vmatprep.subr.bf16.mxu0 0
    %2712 = vmatpush1.bf16.msra.mxu0 0
    %2713 = vmatprep.subr.bf16.mxu0 0
    %2714 = vmatpush1.bf16.msra.mxu0 0
    %2715 = vmatprep.subr.bf16.mxu0 0
    %2716 = vmatpush1.bf16.msra.mxu0 %v2699
    %2717 = vmatprep.subr.bf16.mxu0 0
    %2718 = vmatpush2.bf16.msra.mxu0 0
    %2719 = vmatprep.subr.bf16.mxu0 0
    %2720 = vmatpush2.bf16.msra.mxu0 0
    %2721 = vmatprep.subr.bf16.mxu0 0
    %2722 = vmatpush2.bf16.msra.mxu0 0
    %2723 = vmatprep.subr.bf16.mxu0 0
    %2724 = vmatpush2.bf16.msra.mxu0 0
    %2725 = vmatprep.subr.bf16.mxu0 0
    %2726 = vmatpush2.bf16.msra.mxu0 0
    %2727 = vmatprep.subr.bf16.mxu0 0
    %2728 = vmatpush2.bf16.msra.mxu0 0
    %2729 = vmatprep.subr.bf16.mxu0 0
    %2730 = vmatpush2.bf16.msra.mxu0 0
    %2731 = vmatprep.subr.bf16.mxu0 0
    %2732 = vmatpush2.bf16.msra.mxu0 0
    %2733 = vmatprep.mubr.bf16.mxu0 0
    %2734 = vmatmul.mubr.bf16.gmra.mxu0 %v2696
    %v2735 = vpop.f32.mrf.mxu0
    %v2736 = vadd.f32 0.0, %v2735
    %v2737 = vpop.f32.mrf.mxu0
    %v2738 = vpop.f32.mrf.mxu0
    %v2739 = vpop.f32.mrf.mxu0
    %2740 = vdwg.mxu0
    %2741 = vrot.lane.b32.xlu0 %v239, 96
    %v2742 = vpop.permute.xlu0 %2741
    %v2744 = vsel %vm635, %v2498, 0
    %v2747 = vsel %vm735, %v2742, 0
    %2749 = vmatprep.subr.bf16.mxu0 0
    %2750 = vmatpush1.bf16.msra.mxu0 0
    %2751 = vmatprep.subr.bf16.mxu0 0
    %2752 = vmatpush1.bf16.msra.mxu0 0
    %2753 = vmatprep.subr.bf16.mxu0 0
    %2754 = vmatpush1.bf16.msra.mxu0 0
    %2755 = vmatprep.subr.bf16.mxu0 0
    %2756 = vmatpush1.bf16.msra.mxu0 0
    %2757 = vmatprep.subr.bf16.mxu0 0
    %2758 = vmatpush1.bf16.msra.mxu0 0
    %2759 = vmatprep.subr.bf16.mxu0 0
    %2760 = vmatpush1.bf16.msra.mxu0 0
    %2761 = vmatprep.subr.bf16.mxu0 0
    %2762 = vmatpush1.bf16.msra.mxu0 0
    %2763 = vmatprep.subr.bf16.mxu0 0
    %2764 = vmatpush1.bf16.msra.mxu0 %v2747
    %2765 = vmatprep.subr.bf16.mxu0 0
    %2766 = vmatpush2.bf16.msra.mxu0 0
    %2767 = vmatprep.subr.bf16.mxu0 0
    %2768 = vmatpush2.bf16.msra.mxu0 0
    %2769 = vmatprep.subr.bf16.mxu0 0
    %2770 = vmatpush2.bf16.msra.mxu0 0
    %2771 = vmatprep.subr.bf16.mxu0 0
    %2772 = vmatpush2.bf16.msra.mxu0 0
    %2773 = vmatprep.subr.bf16.mxu0 0
    %2774 = vmatpush2.bf16.msra.mxu0 0
    %2775 = vmatprep.subr.bf16.mxu0 0
    %2776 = vmatpush2.bf16.msra.mxu0 0
    %2777 = vmatprep.subr.bf16.mxu0 0
    %2778 = vmatpush2.bf16.msra.mxu0 0
    %2779 = vmatprep.subr.bf16.mxu0 0
    %2780 = vmatpush2.bf16.msra.mxu0 0
    %2781 = vmatprep.mubr.bf16.mxu0 0
    %2782 = vmatmul.mubr.bf16.gmra.mxu0 %v2744
    %v2783 = vpop.f32.mrf.mxu0
    %v2784 = vadd.f32 0.0, %v2783
    %v2785 = vpop.f32.mrf.mxu0
    %v2786 = vpop.f32.mrf.mxu0
    %v2787 = vpop.f32.mrf.mxu0
    %2788 = vdwg.mxu0
    %2789 = vrot.lane.b32.xlu0 %v240, 96
    %v2790 = vpop.permute.xlu0 %2789
    %v2792 = vsel %vm635, %v2499, 0
    %v2795 = vsel %vm735, %v2790, 0
    %2797 = vmatprep.subr.bf16.mxu0 0
    %2798 = vmatpush1.bf16.msra.mxu0 0
    %2799 = vmatprep.subr.bf16.mxu0 0
    %2800 = vmatpush1.bf16.msra.mxu0 0
    %2801 = vmatprep.subr.bf16.mxu0 0
    %2802 = vmatpush1.bf16.msra.mxu0 0
    %2803 = vmatprep.subr.bf16.mxu0 0
    %2804 = vmatpush1.bf16.msra.mxu0 0
    %2805 = vmatprep.subr.bf16.mxu0 0
    %2806 = vmatpush1.bf16.msra.mxu0 0
    %2807 = vmatprep.subr.bf16.mxu0 0
    %2808 = vmatpush1.bf16.msra.mxu0 0
    %2809 = vmatprep.subr.bf16.mxu0 0
    %2810 = vmatpush1.bf16.msra.mxu0 0
    %2811 = vmatprep.subr.bf16.mxu0 0
    %2812 = vmatpush1.bf16.msra.mxu0 %v2795
    %2813 = vmatprep.subr.bf16.mxu0 0
    %2814 = vmatpush2.bf16.msra.mxu0 0
    %2815 = vmatprep.subr.bf16.mxu0 0
    %2816 = vmatpush2.bf16.msra.mxu0 0
    %2817 = vmatprep.subr.bf16.mxu0 0
    %2818 = vmatpush2.bf16.msra.mxu0 0
    %2819 = vmatprep.subr.bf16.mxu0 0
    %2820 = vmatpush2.bf16.msra.mxu0 0
    %2821 = vmatprep.subr.bf16.mxu0 0
    %2822 = vmatpush2.bf16.msra.mxu0 0
    %2823 = vmatprep.subr.bf16.mxu0 0
    %2824 = vmatpush2.bf16.msra.mxu0 0
    %2825 = vmatprep.subr.bf16.mxu0 0
    %2826 = vmatpush2.bf16.msra.mxu0 0
    %2827 = vmatprep.subr.bf16.mxu0 0
    %2828 = vmatpush2.bf16.msra.mxu0 0
    %2829 = vmatprep.mubr.bf16.mxu0 0
    %2830 = vmatmul.mubr.bf16.gmra.mxu0 %v2792
    %v2831 = vpop.f32.mrf.mxu0
    %v2832 = vadd.f32 0.0, %v2831
    %v2833 = vpop.f32.mrf.mxu0
    %v2834 = vpop.f32.mrf.mxu0
    %v2835 = vpop.f32.mrf.mxu0
    %2836 = vdwg.mxu0
    %2837 = vrot.lane.b32.xlu0 %v241, 96
    %v2838 = vpop.permute.xlu0 %2837
    %v2840 = vsel %vm635, %v2500, 0
    %v2843 = vsel %vm735, %v2838, 0
    %2845 = vmatprep.subr.bf16.mxu0 0
    %2846 = vmatpush1.bf16.msra.mxu0 0
    %2847 = vmatprep.subr.bf16.mxu0 0
    %2848 = vmatpush1.bf16.msra.mxu0 0
    %2849 = vmatprep.subr.bf16.mxu0 0
    %2850 = vmatpush1.bf16.msra.mxu0 0
    %2851 = vmatprep.subr.bf16.mxu0 0
    %2852 = vmatpush1.bf16.msra.mxu0 0
    %2853 = vmatprep.subr.bf16.mxu0 0
    %2854 = vmatpush1.bf16.msra.mxu0 0
    %2855 = vmatprep.subr.bf16.mxu0 0
    %2856 = vmatpush1.bf16.msra.mxu0 0
    %2857 = vmatprep.subr.bf16.mxu0 0
    %2858 = vmatpush1.bf16.msra.mxu0 0
    %2859 = vmatprep.subr.bf16.mxu0 0
    %2860 = vmatpush1.bf16.msra.mxu0 %v2843
    %2861 = vmatprep.subr.bf16.mxu0 0
    %2862 = vmatpush2.bf16.msra.mxu0 0
    %2863 = vmatprep.subr.bf16.mxu0 0
    %2864 = vmatpush2.bf16.msra.mxu0 0
    %2865 = vmatprep.subr.bf16.mxu0 0
    %2866 = vmatpush2.bf16.msra.mxu0 0
    %2867 = vmatprep.subr.bf16.mxu0 0
    %2868 = vmatpush2.bf16.msra.mxu0 0
    %2869 = vmatprep.subr.bf16.mxu0 0
    %2870 = vmatpush2.bf16.msra.mxu0 0
    %2871 = vmatprep.subr.bf16.mxu0 0
    %2872 = vmatpush2.bf16.msra.mxu0 0
    %2873 = vmatprep.subr.bf16.mxu0 0
    %2874 = vmatpush2.bf16.msra.mxu0 0
    %2875 = vmatprep.subr.bf16.mxu0 0
    %2876 = vmatpush2.bf16.msra.mxu0 0
    %2877 = vmatprep.mubr.bf16.mxu0 0
    %2878 = vmatmul.mubr.bf16.gmra.mxu0 %v2840
    %v2879 = vpop.f32.mrf.mxu0
    %v2880 = vadd.f32 0.0, %v2879
    %v2881 = vpop.f32.mrf.mxu0
    %v2882 = vpop.f32.mrf.mxu0
    %v2883 = vpop.f32.mrf.mxu0
    %2884 = vdwg.mxu0
    %v2885 = vpack.c.bf16 %v2544, %v2544
    %v2886 = vpack.c.bf16 %v2592, %v2592
    %v2887 = vpack.c.bf16 %v2640, %v2640
    %v2888 = vpack.c.bf16 %v2688, %v2688
    %v2889 = vpack.c.bf16 %v2736, %v2736
    %v2890 = vpack.c.bf16 %v2784, %v2784
    %v2891 = vpack.c.bf16 %v2832, %v2832
    %v2892 = vpack.c.bf16 %v2880, %v2880
    %2893 = vrot.lane.b32.xlu0 %v226, 80
    %v2894 = vpop.permute.xlu0 %2893
    %2895 = vrot.lane.b32.xlu0 %v226, 16
    %v2896 = vpop.permute.xlu0 %2895
    %v2898 = vsel %vm245, %v2894, 0
    %v2901 = vsel %vm245, %v2896, 0
    %2903 = vmatprep.subr.bf16.mxu0 0
    %2904 = vmatpush1.bf16.xpose.msra.mxu0 0
    %2905 = vmatprep.subr.bf16.mxu0 0
    %2906 = vmatpush1.bf16.xpose.msra.mxu0 0
    %2907 = vmatprep.subr.bf16.mxu0 0
    %2908 = vmatpush1.bf16.xpose.msra.mxu0 0
    %2909 = vmatprep.subr.bf16.mxu0 0
    %2910 = vmatpush1.bf16.xpose.msra.mxu0 0
    %2911 = vmatprep.subr.bf16.mxu0 0
    %2912 = vmatpush1.bf16.xpose.msra.mxu0 0
    %2913 = vmatprep.subr.bf16.mxu0 0
    %2914 = vmatpush1.bf16.xpose.msra.mxu0 0
    %2915 = vmatprep.subr.bf16.mxu0 0
    %2916 = vmatpush1.bf16.xpose.msra.mxu0 0
    %2917 = vmatprep.subr.bf16.mxu0 0
    %2918 = vmatpush1.bf16.xpose.msra.mxu0 %v2901
    %2919 = vmatprep.subr.bf16.mxu0 0
    %2920 = vmatpush2.bf16.xpose.msra.mxu0 0
    %2921 = vmatprep.subr.bf16.mxu0 0
    %2922 = vmatpush2.bf16.xpose.msra.mxu0 0
    %2923 = vmatprep.subr.bf16.mxu0 0
    %2924 = vmatpush2.bf16.xpose.msra.mxu0 0
    %2925 = vmatprep.subr.bf16.mxu0 0
    %2926 = vmatpush2.bf16.xpose.msra.mxu0 0
    %2927 = vmatprep.subr.bf16.mxu0 0
    %2928 = vmatpush2.bf16.xpose.msra.mxu0 0
    %2929 = vmatprep.subr.bf16.mxu0 0
    %2930 = vmatpush2.bf16.xpose.msra.mxu0 0
    %2931 = vmatprep.subr.bf16.mxu0 0
    %2932 = vmatpush2.bf16.xpose.msra.mxu0 0
    %2933 = vmatprep.subr.bf16.mxu0 0
    %2934 = vmatpush2.bf16.xpose.msra.mxu0 0
    %2935 = vmatprep.mubr.bf16.mxu0 0
    %2936 = vmatmul.mubr.bf16.gmra.mxu0 %v2898
    %v2937 = vpop.f32.mrf.mxu0
    %v2938 = vadd.f32 0.0, %v2937
    %v2939 = vpop.f32.mrf.mxu0
    %v2940 = vpop.f32.mrf.mxu0
    %v2941 = vpop.f32.mrf.mxu0
    %2942 = vdwg.mxu0
    %2943 = vrot.lane.b32.xlu0 %v227, 80
    %v2944 = vpop.permute.xlu0 %2943
    %2945 = vrot.lane.b32.xlu0 %v227, 16
    %v2946 = vpop.permute.xlu0 %2945
    %v2948 = vsel %vm245, %v2944, 0
    %v2951 = vsel %vm245, %v2946, 0
    %2953 = vmatprep.subr.bf16.mxu0 0
    %2954 = vmatpush1.bf16.xpose.msra.mxu0 0
    %2955 = vmatprep.subr.bf16.mxu0 0
    %2956 = vmatpush1.bf16.xpose.msra.mxu0 0
    %2957 = vmatprep.subr.bf16.mxu0 0
    %2958 = vmatpush1.bf16.xpose.msra.mxu0 0
    %2959 = vmatprep.subr.bf16.mxu0 0
    %2960 = vmatpush1.bf16.xpose.msra.mxu0 0
    %2961 = vmatprep.subr.bf16.mxu0 0
    %2962 = vmatpush1.bf16.xpose.msra.mxu0 0
    %2963 = vmatprep.subr.bf16.mxu0 0
    %2964 = vmatpush1.bf16.xpose.msra.mxu0 0
    %2965 = vmatprep.subr.bf16.mxu0 0
    %2966 = vmatpush1.bf16.xpose.msra.mxu0 0
    %2967 = vmatprep.subr.bf16.mxu0 0
    %2968 = vmatpush1.bf16.xpose.msra.mxu0 %v2951
    %2969 = vmatprep.subr.bf16.mxu0 0
    %2970 = vmatpush2.bf16.xpose.msra.mxu0 0
    %2971 = vmatprep.subr.bf16.mxu0 0
    %2972 = vmatpush2.bf16.xpose.msra.mxu0 0
    %2973 = vmatprep.subr.bf16.mxu0 0
    %2974 = vmatpush2.bf16.xpose.msra.mxu0 0
    %2975 = vmatprep.subr.bf16.mxu0 0
    %2976 = vmatpush2.bf16.xpose.msra.mxu0 0
    %2977 = vmatprep.subr.bf16.mxu0 0
    %2978 = vmatpush2.bf16.xpose.msra.mxu0 0
    %2979 = vmatprep.subr.bf16.mxu0 0
    %2980 = vmatpush2.bf16.xpose.msra.mxu0 0
    %2981 = vmatprep.subr.bf16.mxu0 0
    %2982 = vmatpush2.bf16.xpose.msra.mxu0 0
    %2983 = vmatprep.subr.bf16.mxu0 0
    %2984 = vmatpush2.bf16.xpose.msra.mxu0 0
    %2985 = vmatprep.mubr.bf16.mxu0 0
    %2986 = vmatmul.mubr.bf16.gmra.mxu0 %v2948
    %v2987 = vpop.f32.mrf.mxu0
    %v2988 = vadd.f32 0.0, %v2987
    %v2989 = vpop.f32.mrf.mxu0
    %v2990 = vpop.f32.mrf.mxu0
    %v2991 = vpop.f32.mrf.mxu0
    %2992 = vdwg.mxu0
    %2993 = vrot.lane.b32.xlu0 %v228, 80
    %v2994 = vpop.permute.xlu0 %2993
    %2995 = vrot.lane.b32.xlu0 %v228, 16
    %v2996 = vpop.permute.xlu0 %2995
    %v2998 = vsel %vm245, %v2994, 0
    %v3001 = vsel %vm245, %v2996, 0
    %3003 = vmatprep.subr.bf16.mxu0 0
    %3004 = vmatpush1.bf16.xpose.msra.mxu0 0
    %3005 = vmatprep.subr.bf16.mxu0 0
    %3006 = vmatpush1.bf16.xpose.msra.mxu0 0
    %3007 = vmatprep.subr.bf16.mxu0 0
    %3008 = vmatpush1.bf16.xpose.msra.mxu0 0
    %3009 = vmatprep.subr.bf16.mxu0 0
    %3010 = vmatpush1.bf16.xpose.msra.mxu0 0
    %3011 = vmatprep.subr.bf16.mxu0 0
    %3012 = vmatpush1.bf16.xpose.msra.mxu0 0
    %3013 = vmatprep.subr.bf16.mxu0 0
    %3014 = vmatpush1.bf16.xpose.msra.mxu0 0
    %3015 = vmatprep.subr.bf16.mxu0 0
    %3016 = vmatpush1.bf16.xpose.msra.mxu0 0
    %3017 = vmatprep.subr.bf16.mxu0 0
    %3018 = vmatpush1.bf16.xpose.msra.mxu0 %v3001
    %3019 = vmatprep.subr.bf16.mxu0 0
    %3020 = vmatpush2.bf16.xpose.msra.mxu0 0
    %3021 = vmatprep.subr.bf16.mxu0 0
    %3022 = vmatpush2.bf16.xpose.msra.mxu0 0
    %3023 = vmatprep.subr.bf16.mxu0 0
    %3024 = vmatpush2.bf16.xpose.msra.mxu0 0
    %3025 = vmatprep.subr.bf16.mxu0 0
    %3026 = vmatpush2.bf16.xpose.msra.mxu0 0
    %3027 = vmatprep.subr.bf16.mxu0 0
    %3028 = vmatpush2.bf16.xpose.msra.mxu0 0
    %3029 = vmatprep.subr.bf16.mxu0 0
    %3030 = vmatpush2.bf16.xpose.msra.mxu0 0
    %3031 = vmatprep.subr.bf16.mxu0 0
    %3032 = vmatpush2.bf16.xpose.msra.mxu0 0
    %3033 = vmatprep.subr.bf16.mxu0 0
    %3034 = vmatpush2.bf16.xpose.msra.mxu0 0
    %3035 = vmatprep.mubr.bf16.mxu0 0
    %3036 = vmatmul.mubr.bf16.gmra.mxu0 %v2998
    %v3037 = vpop.f32.mrf.mxu0
    %v3038 = vadd.f32 0.0, %v3037
    %v3039 = vpop.f32.mrf.mxu0
    %v3040 = vpop.f32.mrf.mxu0
    %v3041 = vpop.f32.mrf.mxu0
    %3042 = vdwg.mxu0
    %3043 = vrot.lane.b32.xlu0 %v229, 80
    %v3044 = vpop.permute.xlu0 %3043
    %3045 = vrot.lane.b32.xlu0 %v229, 16
    %v3046 = vpop.permute.xlu0 %3045
    %v3048 = vsel %vm245, %v3044, 0
    %v3051 = vsel %vm245, %v3046, 0
    %3053 = vmatprep.subr.bf16.mxu0 0
    %3054 = vmatpush1.bf16.xpose.msra.mxu0 0
    %3055 = vmatprep.subr.bf16.mxu0 0
    %3056 = vmatpush1.bf16.xpose.msra.mxu0 0
    %3057 = vmatprep.subr.bf16.mxu0 0
    %3058 = vmatpush1.bf16.xpose.msra.mxu0 0
    %3059 = vmatprep.subr.bf16.mxu0 0
    %3060 = vmatpush1.bf16.xpose.msra.mxu0 0
    %3061 = vmatprep.subr.bf16.mxu0 0
    %3062 = vmatpush1.bf16.xpose.msra.mxu0 0
    %3063 = vmatprep.subr.bf16.mxu0 0
    %3064 = vmatpush1.bf16.xpose.msra.mxu0 0
    %3065 = vmatprep.subr.bf16.mxu0 0
    %3066 = vmatpush1.bf16.xpose.msra.mxu0 0
    %3067 = vmatprep.subr.bf16.mxu0 0
    %3068 = vmatpush1.bf16.xpose.msra.mxu0 %v3051
    %3069 = vmatprep.subr.bf16.mxu0 0
    %3070 = vmatpush2.bf16.xpose.msra.mxu0 0
    %3071 = vmatprep.subr.bf16.mxu0 0
    %3072 = vmatpush2.bf16.xpose.msra.mxu0 0
    %3073 = vmatprep.subr.bf16.mxu0 0
    %3074 = vmatpush2.bf16.xpose.msra.mxu0 0
    %3075 = vmatprep.subr.bf16.mxu0 0
    %3076 = vmatpush2.bf16.xpose.msra.mxu0 0
    %3077 = vmatprep.subr.bf16.mxu0 0
    %3078 = vmatpush2.bf16.xpose.msra.mxu0 0
    %3079 = vmatprep.subr.bf16.mxu0 0
    %3080 = vmatpush2.bf16.xpose.msra.mxu0 0
    %3081 = vmatprep.subr.bf16.mxu0 0
    %3082 = vmatpush2.bf16.xpose.msra.mxu0 0
    %3083 = vmatprep.subr.bf16.mxu0 0
    %3084 = vmatpush2.bf16.xpose.msra.mxu0 0
    %3085 = vmatprep.mubr.bf16.mxu0 0
    %3086 = vmatmul.mubr.bf16.gmra.mxu0 %v3048
    %v3087 = vpop.f32.mrf.mxu0
    %v3088 = vadd.f32 0.0, %v3087
    %v3089 = vpop.f32.mrf.mxu0
    %v3090 = vpop.f32.mrf.mxu0
    %v3091 = vpop.f32.mrf.mxu0
    %3092 = vdwg.mxu0
    %3093 = vrot.lane.b32.xlu0 %v230, 80
    %v3094 = vpop.permute.xlu0 %3093
    %3095 = vrot.lane.b32.xlu0 %v230, 16
    %v3096 = vpop.permute.xlu0 %3095
    %v3098 = vsel %vm245, %v3094, 0
    %v3101 = vsel %vm245, %v3096, 0
    %3103 = vmatprep.subr.bf16.mxu0 0
    %3104 = vmatpush1.bf16.xpose.msra.mxu0 0
    %3105 = vmatprep.subr.bf16.mxu0 0
    %3106 = vmatpush1.bf16.xpose.msra.mxu0 0
    %3107 = vmatprep.subr.bf16.mxu0 0
    %3108 = vmatpush1.bf16.xpose.msra.mxu0 0
    %3109 = vmatprep.subr.bf16.mxu0 0
    %3110 = vmatpush1.bf16.xpose.msra.mxu0 0
    %3111 = vmatprep.subr.bf16.mxu0 0
    %3112 = vmatpush1.bf16.xpose.msra.mxu0 0
    %3113 = vmatprep.subr.bf16.mxu0 0
    %3114 = vmatpush1.bf16.xpose.msra.mxu0 0
    %3115 = vmatprep.subr.bf16.mxu0 0
    %3116 = vmatpush1.bf16.xpose.msra.mxu0 0
    %3117 = vmatprep.subr.bf16.mxu0 0
    %3118 = vmatpush1.bf16.xpose.msra.mxu0 %v3101
    %3119 = vmatprep.subr.bf16.mxu0 0
    %3120 = vmatpush2.bf16.xpose.msra.mxu0 0
    %3121 = vmatprep.subr.bf16.mxu0 0
    %3122 = vmatpush2.bf16.xpose.msra.mxu0 0
    %3123 = vmatprep.subr.bf16.mxu0 0
    %3124 = vmatpush2.bf16.xpose.msra.mxu0 0
    %3125 = vmatprep.subr.bf16.mxu0 0
    %3126 = vmatpush2.bf16.xpose.msra.mxu0 0
    %3127 = vmatprep.subr.bf16.mxu0 0
    %3128 = vmatpush2.bf16.xpose.msra.mxu0 0
    %3129 = vmatprep.subr.bf16.mxu0 0
    %3130 = vmatpush2.bf16.xpose.msra.mxu0 0
    %3131 = vmatprep.subr.bf16.mxu0 0
    %3132 = vmatpush2.bf16.xpose.msra.mxu0 0
    %3133 = vmatprep.subr.bf16.mxu0 0
    %3134 = vmatpush2.bf16.xpose.msra.mxu0 0
    %3135 = vmatprep.mubr.bf16.mxu0 0
    %3136 = vmatmul.mubr.bf16.gmra.mxu0 %v3098
    %v3137 = vpop.f32.mrf.mxu0
    %v3138 = vadd.f32 0.0, %v3137
    %v3139 = vpop.f32.mrf.mxu0
    %v3140 = vpop.f32.mrf.mxu0
    %v3141 = vpop.f32.mrf.mxu0
    %3142 = vdwg.mxu0
    %3143 = vrot.lane.b32.xlu0 %v231, 80
    %v3144 = vpop.permute.xlu0 %3143
    %3145 = vrot.lane.b32.xlu0 %v231, 16
    %v3146 = vpop.permute.xlu0 %3145
    %v3148 = vsel %vm245, %v3144, 0
    %v3151 = vsel %vm245, %v3146, 0
    %3153 = vmatprep.subr.bf16.mxu0 0
    %3154 = vmatpush1.bf16.xpose.msra.mxu0 0
    %3155 = vmatprep.subr.bf16.mxu0 0
    %3156 = vmatpush1.bf16.xpose.msra.mxu0 0
    %3157 = vmatprep.subr.bf16.mxu0 0
    %3158 = vmatpush1.bf16.xpose.msra.mxu0 0
    %3159 = vmatprep.subr.bf16.mxu0 0
    %3160 = vmatpush1.bf16.xpose.msra.mxu0 0
    %3161 = vmatprep.subr.bf16.mxu0 0
    %3162 = vmatpush1.bf16.xpose.msra.mxu0 0
    %3163 = vmatprep.subr.bf16.mxu0 0
    %3164 = vmatpush1.bf16.xpose.msra.mxu0 0
    %3165 = vmatprep.subr.bf16.mxu0 0
    %3166 = vmatpush1.bf16.xpose.msra.mxu0 0
    %3167 = vmatprep.subr.bf16.mxu0 0
    %3168 = vmatpush1.bf16.xpose.msra.mxu0 %v3151
    %3169 = vmatprep.subr.bf16.mxu0 0
    %3170 = vmatpush2.bf16.xpose.msra.mxu0 0
    %3171 = vmatprep.subr.bf16.mxu0 0
    %3172 = vmatpush2.bf16.xpose.msra.mxu0 0
    %3173 = vmatprep.subr.bf16.mxu0 0
    %3174 = vmatpush2.bf16.xpose.msra.mxu0 0
    %3175 = vmatprep.subr.bf16.mxu0 0
    %3176 = vmatpush2.bf16.xpose.msra.mxu0 0
    %3177 = vmatprep.subr.bf16.mxu0 0
    %3178 = vmatpush2.bf16.xpose.msra.mxu0 0
    %3179 = vmatprep.subr.bf16.mxu0 0
    %3180 = vmatpush2.bf16.xpose.msra.mxu0 0
    %3181 = vmatprep.subr.bf16.mxu0 0
    %3182 = vmatpush2.bf16.xpose.msra.mxu0 0
    %3183 = vmatprep.subr.bf16.mxu0 0
    %3184 = vmatpush2.bf16.xpose.msra.mxu0 0
    %3185 = vmatprep.mubr.bf16.mxu0 0
    %3186 = vmatmul.mubr.bf16.gmra.mxu0 %v3148
    %v3187 = vpop.f32.mrf.mxu0
    %v3188 = vadd.f32 0.0, %v3187
    %v3189 = vpop.f32.mrf.mxu0
    %v3190 = vpop.f32.mrf.mxu0
    %v3191 = vpop.f32.mrf.mxu0
    %3192 = vdwg.mxu0
    %3193 = vrot.lane.b32.xlu0 %v232, 80
    %v3194 = vpop.permute.xlu0 %3193
    %3195 = vrot.lane.b32.xlu0 %v232, 16
    %v3196 = vpop.permute.xlu0 %3195
    %v3198 = vsel %vm245, %v3194, 0
    %v3201 = vsel %vm245, %v3196, 0
    %3203 = vmatprep.subr.bf16.mxu0 0
    %3204 = vmatpush1.bf16.xpose.msra.mxu0 0
    %3205 = vmatprep.subr.bf16.mxu0 0
    %3206 = vmatpush1.bf16.xpose.msra.mxu0 0
    %3207 = vmatprep.subr.bf16.mxu0 0
    %3208 = vmatpush1.bf16.xpose.msra.mxu0 0
    %3209 = vmatprep.subr.bf16.mxu0 0
    %3210 = vmatpush1.bf16.xpose.msra.mxu0 0
    %3211 = vmatprep.subr.bf16.mxu0 0
    %3212 = vmatpush1.bf16.xpose.msra.mxu0 0
    %3213 = vmatprep.subr.bf16.mxu0 0
    %3214 = vmatpush1.bf16.xpose.msra.mxu0 0
    %3215 = vmatprep.subr.bf16.mxu0 0
    %3216 = vmatpush1.bf16.xpose.msra.mxu0 0
    %3217 = vmatprep.subr.bf16.mxu0 0
    %3218 = vmatpush1.bf16.xpose.msra.mxu0 %v3201
    %3219 = vmatprep.subr.bf16.mxu0 0
    %3220 = vmatpush2.bf16.xpose.msra.mxu0 0
    %3221 = vmatprep.subr.bf16.mxu0 0
    %3222 = vmatpush2.bf16.xpose.msra.mxu0 0
    %3223 = vmatprep.subr.bf16.mxu0 0
    %3224 = vmatpush2.bf16.xpose.msra.mxu0 0
    %3225 = vmatprep.subr.bf16.mxu0 0
    %3226 = vmatpush2.bf16.xpose.msra.mxu0 0
    %3227 = vmatprep.subr.bf16.mxu0 0
    %3228 = vmatpush2.bf16.xpose.msra.mxu0 0
    %3229 = vmatprep.subr.bf16.mxu0 0
    %3230 = vmatpush2.bf16.xpose.msra.mxu0 0
    %3231 = vmatprep.subr.bf16.mxu0 0
    %3232 = vmatpush2.bf16.xpose.msra.mxu0 0
    %3233 = vmatprep.subr.bf16.mxu0 0
    %3234 = vmatpush2.bf16.xpose.msra.mxu0 0
    %3235 = vmatprep.mubr.bf16.mxu0 0
    %3236 = vmatmul.mubr.bf16.gmra.mxu0 %v3198
    %v3237 = vpop.f32.mrf.mxu0
    %v3238 = vadd.f32 0.0, %v3237
    %v3239 = vpop.f32.mrf.mxu0
    %v3240 = vpop.f32.mrf.mxu0
    %v3241 = vpop.f32.mrf.mxu0
    %3242 = vdwg.mxu0
    %3243 = vrot.lane.b32.xlu0 %v233, 80
    %v3244 = vpop.permute.xlu0 %3243
    %3245 = vrot.lane.b32.xlu0 %v233, 16
    %v3246 = vpop.permute.xlu0 %3245
    %v3248 = vsel %vm245, %v3244, 0
    %v3251 = vsel %vm245, %v3246, 0
    %3253 = vmatprep.subr.bf16.mxu0 0
    %3254 = vmatpush1.bf16.xpose.msra.mxu0 0
    %3255 = vmatprep.subr.bf16.mxu0 0
    %3256 = vmatpush1.bf16.xpose.msra.mxu0 0
    %3257 = vmatprep.subr.bf16.mxu0 0
    %3258 = vmatpush1.bf16.xpose.msra.mxu0 0
    %3259 = vmatprep.subr.bf16.mxu0 0
    %3260 = vmatpush1.bf16.xpose.msra.mxu0 0
    %3261 = vmatprep.subr.bf16.mxu0 0
    %3262 = vmatpush1.bf16.xpose.msra.mxu0 0
    %3263 = vmatprep.subr.bf16.mxu0 0
    %3264 = vmatpush1.bf16.xpose.msra.mxu0 0
    %3265 = vmatprep.subr.bf16.mxu0 0
    %3266 = vmatpush1.bf16.xpose.msra.mxu0 0
    %3267 = vmatprep.subr.bf16.mxu0 0
    %3268 = vmatpush1.bf16.xpose.msra.mxu0 %v3251
    %3269 = vmatprep.subr.bf16.mxu0 0
    %3270 = vmatpush2.bf16.xpose.msra.mxu0 0
    %3271 = vmatprep.subr.bf16.mxu0 0
    %3272 = vmatpush2.bf16.xpose.msra.mxu0 0
    %3273 = vmatprep.subr.bf16.mxu0 0
    %3274 = vmatpush2.bf16.xpose.msra.mxu0 0
    %3275 = vmatprep.subr.bf16.mxu0 0
    %3276 = vmatpush2.bf16.xpose.msra.mxu0 0
    %3277 = vmatprep.subr.bf16.mxu0 0
    %3278 = vmatpush2.bf16.xpose.msra.mxu0 0
    %3279 = vmatprep.subr.bf16.mxu0 0
    %3280 = vmatpush2.bf16.xpose.msra.mxu0 0
    %3281 = vmatprep.subr.bf16.mxu0 0
    %3282 = vmatpush2.bf16.xpose.msra.mxu0 0
    %3283 = vmatprep.subr.bf16.mxu0 0
    %3284 = vmatpush2.bf16.xpose.msra.mxu0 0
    %3285 = vmatprep.mubr.bf16.mxu0 0
    %3286 = vmatmul.mubr.bf16.gmra.mxu0 %v3248
    %v3287 = vpop.f32.mrf.mxu0
    %v3288 = vadd.f32 0.0, %v3287
    %v3289 = vpop.f32.mrf.mxu0
    %v3290 = vpop.f32.mrf.mxu0
    %v3291 = vpop.f32.mrf.mxu0
    %3292 = vdwg.mxu0
    %v3293 = vsel %vm635, %v2938, -inf
    %3294 = vmax.xlane.f32.xlu0 %v3293
    %v3295 = vpop.xlane.xlu0 %3294
    %v3296 = vsel %vm635, %v2988, -inf
    %3297 = vmax.xlane.f32.xlu0 %v3296
    %v3298 = vpop.xlane.xlu0 %3297
    %v3299 = vsel %vm635, %v3038, -inf
    %3300 = vmax.xlane.f32.xlu0 %v3299
    %v3301 = vpop.xlane.xlu0 %3300
    %v3302 = vsel %vm635, %v3088, -inf
    %3303 = vmax.xlane.f32.xlu0 %v3302
    %v3304 = vpop.xlane.xlu0 %3303
    %v3305 = vsel %vm635, %v3138, -inf
    %3306 = vmax.xlane.f32.xlu0 %v3305
    %v3307 = vpop.xlane.xlu0 %3306
    %v3308 = vsel %vm635, %v3188, -inf
    %3309 = vmax.xlane.f32.xlu0 %v3308
    %v3310 = vpop.xlane.xlu0 %3309
    %v3311 = vsel %vm635, %v3238, -inf
    %3312 = vmax.xlane.f32.xlu0 %v3311
    %v3313 = vpop.xlane.xlu0 %3312
    %v3314 = vsel %vm635, %v3288, -inf
    %3315 = vmax.xlane.f32.xlu0 %v3314
    %v3316 = vpop.xlane.xlu0 %3315
    %v3317 = vsub.f32 %v2938, %v3295
    %v3318 = vsub.f32 %v2988, %v3298
    %v3319 = vsub.f32 %v3038, %v3301
    %v3320 = vsub.f32 %v3088, %v3304
    %v3321 = vsub.f32 %v3138, %v3307
    %v3322 = vsub.f32 %v3188, %v3310
    %v3323 = vsub.f32 %v3238, %v3313
    %v3324 = vsub.f32 %v3288, %v3316
    %v3325 = vmul.f32 %v3317, 1.442695
    %v3326 = vpow.pop %v3325
    %v3327 = vmul.f32 %v3318, 1.442695
    %v3328 = vpow.pop %v3327
    %v3329 = vmul.f32 %v3319, 1.442695
    %v3330 = vpow.pop %v3329
    %v3331 = vmul.f32 %v3320, 1.442695
    %v3332 = vpow.pop %v3331
    %v3333 = vmul.f32 %v3321, 1.442695
    %v3334 = vpow.pop %v3333
    %v3335 = vmul.f32 %v3322, 1.442695
    %v3336 = vpow.pop %v3335
    %v3337 = vmul.f32 %v3323, 1.442695
    %v3338 = vpow.pop %v3337
    %v3339 = vmul.f32 %v3324, 1.442695
    %v3340 = vpow.pop %v3339
    %v3341 = vsel %vm635, %v3326, 0.0
    %3342 = vadd.xlane.f32.xlu0 %v3341
    %v3343 = vpop.xlane.xlu0 %3342
    %v3344 = vsel %vm635, %v3328, 0.0
    %3345 = vadd.xlane.f32.xlu0 %v3344
    %v3346 = vpop.xlane.xlu0 %3345
    %v3347 = vsel %vm635, %v3330, 0.0
    %3348 = vadd.xlane.f32.xlu0 %v3347
    %v3349 = vpop.xlane.xlu0 %3348
    %v3350 = vsel %vm635, %v3332, 0.0
    %3351 = vadd.xlane.f32.xlu0 %v3350
    %v3352 = vpop.xlane.xlu0 %3351
    %v3353 = vsel %vm635, %v3334, 0.0
    %3354 = vadd.xlane.f32.xlu0 %v3353
    %v3355 = vpop.xlane.xlu0 %3354
    %v3356 = vsel %vm635, %v3336, 0.0
    %3357 = vadd.xlane.f32.xlu0 %v3356
    %v3358 = vpop.xlane.xlu0 %3357
    %v3359 = vsel %vm635, %v3338, 0.0
    %3360 = vadd.xlane.f32.xlu0 %v3359
    %v3361 = vpop.xlane.xlu0 %3360
    %v3362 = vsel %vm635, %v3340, 0.0
    %3363 = vadd.xlane.f32.xlu0 %v3362
    %v3364 = vpop.xlane.xlu0 %3363
    %v3365 = vrcp.pop %v3343
    %v3366 = vrcp.pop %v3346
    %v3367 = vrcp.pop %v3349
    %v3368 = vrcp.pop %v3352
    %v3369 = vrcp.pop %v3355
    %v3370 = vrcp.pop %v3358
    %v3371 = vrcp.pop %v3361
    %v3372 = vrcp.pop %v3364
    %v3373 = vmul.f32 %v3326, %v3365
    %v3374 = vmul.f32 %v3328, %v3366
    %v3375 = vmul.f32 %v3330, %v3367
    %v3376 = vmul.f32 %v3332, %v3368
    %v3377 = vmul.f32 %v3334, %v3369
    %v3378 = vmul.f32 %v3336, %v3370
    %v3379 = vmul.f32 %v3338, %v3371
    %v3380 = vmul.f32 %v3340, %v3372
    %v3381 = vpack.c.bf16 %v3373, %v3373
    %v3382 = vpack.c.bf16 %v3374, %v3374
    %v3383 = vpack.c.bf16 %v3375, %v3375
    %v3384 = vpack.c.bf16 %v3376, %v3376
    %v3385 = vpack.c.bf16 %v3377, %v3377
    %v3386 = vpack.c.bf16 %v3378, %v3378
    %v3387 = vpack.c.bf16 %v3379, %v3379
    %v3388 = vpack.c.bf16 %v3380, %v3380
    %3389 = vrot.lane.b32.xlu0 %v234, 80
    %v3390 = vpop.permute.xlu0 %3389
    %v3392 = vsel %vm635, %v3381, 0
    %v3395 = vsel %vm735, %v3390, 0
    %3397 = vmatprep.subr.bf16.mxu0 0
    %3398 = vmatpush1.bf16.msra.mxu0 0
    %3399 = vmatprep.subr.bf16.mxu0 0
    %3400 = vmatpush1.bf16.msra.mxu0 0
    %3401 = vmatprep.subr.bf16.mxu0 0
    %3402 = vmatpush1.bf16.msra.mxu0 0
    %3403 = vmatprep.subr.bf16.mxu0 0
    %3404 = vmatpush1.bf16.msra.mxu0 0
    %3405 = vmatprep.subr.bf16.mxu0 0
    %3406 = vmatpush1.bf16.msra.mxu0 0
    %3407 = vmatprep.subr.bf16.mxu0 0
    %3408 = vmatpush1.bf16.msra.mxu0 0
    %3409 = vmatprep.subr.bf16.mxu0 0
    %3410 = vmatpush1.bf16.msra.mxu0 0
    %3411 = vmatprep.subr.bf16.mxu0 0
    %3412 = vmatpush1.bf16.msra.mxu0 %v3395
    %3413 = vmatprep.subr.bf16.mxu0 0
    %3414 = vmatpush2.bf16.msra.mxu0 0
    %3415 = vmatprep.subr.bf16.mxu0 0
    %3416 = vmatpush2.bf16.msra.mxu0 0
    %3417 = vmatprep.subr.bf16.mxu0 0
    %3418 = vmatpush2.bf16.msra.mxu0 0
    %3419 = vmatprep.subr.bf16.mxu0 0
    %3420 = vmatpush2.bf16.msra.mxu0 0
    %3421 = vmatprep.subr.bf16.mxu0 0
    %3422 = vmatpush2.bf16.msra.mxu0 0
    %3423 = vmatprep.subr.bf16.mxu0 0
    %3424 = vmatpush2.bf16.msra.mxu0 0
    %3425 = vmatprep.subr.bf16.mxu0 0
    %3426 = vmatpush2.bf16.msra.mxu0 0
    %3427 = vmatprep.subr.bf16.mxu0 0
    %3428 = vmatpush2.bf16.msra.mxu0 0
    %3429 = vmatprep.mubr.bf16.mxu0 0
    %3430 = vmatmul.mubr.bf16.gmra.mxu0 %v3392
    %v3431 = vpop.f32.mrf.mxu0
    %v3432 = vadd.f32 0.0, %v3431
    %v3433 = vpop.f32.mrf.mxu0
    %v3434 = vpop.f32.mrf.mxu0
    %v3435 = vpop.f32.mrf.mxu0
    %3436 = vdwg.mxu0
    %3437 = vrot.lane.b32.xlu0 %v235, 80
    %v3438 = vpop.permute.xlu0 %3437
    %v3440 = vsel %vm635, %v3382, 0
    %v3443 = vsel %vm735, %v3438, 0
    %3445 = vmatprep.subr.bf16.mxu0 0
    %3446 = vmatpush1.bf16.msra.mxu0 0
    %3447 = vmatprep.subr.bf16.mxu0 0
    %3448 = vmatpush1.bf16.msra.mxu0 0
    %3449 = vmatprep.subr.bf16.mxu0 0
    %3450 = vmatpush1.bf16.msra.mxu0 0
    %3451 = vmatprep.subr.bf16.mxu0 0
    %3452 = vmatpush1.bf16.msra.mxu0 0
    %3453 = vmatprep.subr.bf16.mxu0 0
    %3454 = vmatpush1.bf16.msra.mxu0 0
    %3455 = vmatprep.subr.bf16.mxu0 0
    %3456 = vmatpush1.bf16.msra.mxu0 0
    %3457 = vmatprep.subr.bf16.mxu0 0
    %3458 = vmatpush1.bf16.msra.mxu0 0
    %3459 = vmatprep.subr.bf16.mxu0 0
    %3460 = vmatpush1.bf16.msra.mxu0 %v3443
    %3461 = vmatprep.subr.bf16.mxu0 0
    %3462 = vmatpush2.bf16.msra.mxu0 0
    %3463 = vmatprep.subr.bf16.mxu0 0
    %3464 = vmatpush2.bf16.msra.mxu0 0
    %3465 = vmatprep.subr.bf16.mxu0 0
    %3466 = vmatpush2.bf16.msra.mxu0 0
    %3467 = vmatprep.subr.bf16.mxu0 0
    %3468 = vmatpush2.bf16.msra.mxu0 0
    %3469 = vmatprep.subr.bf16.mxu0 0
    %3470 = vmatpush2.bf16.msra.mxu0 0
    %3471 = vmatprep.subr.bf16.mxu0 0
    %3472 = vmatpush2.bf16.msra.mxu0 0
    %3473 = vmatprep.subr.bf16.mxu0 0
    %3474 = vmatpush2.bf16.msra.mxu0 0
    %3475 = vmatprep.subr.bf16.mxu0 0
    %3476 = vmatpush2.bf16.msra.mxu0 0
    %3477 = vmatprep.mubr.bf16.mxu0 0
    %3478 = vmatmul.mubr.bf16.gmra.mxu0 %v3440
    %v3479 = vpop.f32.mrf.mxu0
    %v3480 = vadd.f32 0.0, %v3479
    %v3481 = vpop.f32.mrf.mxu0
    %v3482 = vpop.f32.mrf.mxu0
    %v3483 = vpop.f32.mrf.mxu0
    %3484 = vdwg.mxu0
    %3485 = vrot.lane.b32.xlu0 %v236, 80
    %v3486 = vpop.permute.xlu0 %3485
    %v3488 = vsel %vm635, %v3383, 0
    %v3491 = vsel %vm735, %v3486, 0
    %3493 = vmatprep.subr.bf16.mxu0 0
    %3494 = vmatpush1.bf16.msra.mxu0 0
    %3495 = vmatprep.subr.bf16.mxu0 0
    %3496 = vmatpush1.bf16.msra.mxu0 0
    %3497 = vmatprep.subr.bf16.mxu0 0
    %3498 = vmatpush1.bf16.msra.mxu0 0
    %3499 = vmatprep.subr.bf16.mxu0 0
    %3500 = vmatpush1.bf16.msra.mxu0 0
    %3501 = vmatprep.subr.bf16.mxu0 0
    %3502 = vmatpush1.bf16.msra.mxu0 0
    %3503 = vmatprep.subr.bf16.mxu0 0
    %3504 = vmatpush1.bf16.msra.mxu0 0
    %3505 = vmatprep.subr.bf16.mxu0 0
    %3506 = vmatpush1.bf16.msra.mxu0 0
    %3507 = vmatprep.subr.bf16.mxu0 0
    %3508 = vmatpush1.bf16.msra.mxu0 %v3491
    %3509 = vmatprep.subr.bf16.mxu0 0
    %3510 = vmatpush2.bf16.msra.mxu0 0
    %3511 = vmatprep.subr.bf16.mxu0 0
    %3512 = vmatpush2.bf16.msra.mxu0 0
    %3513 = vmatprep.subr.bf16.mxu0 0
    %3514 = vmatpush2.bf16.msra.mxu0 0
    %3515 = vmatprep.subr.bf16.mxu0 0
    %3516 = vmatpush2.bf16.msra.mxu0 0
    %3517 = vmatprep.subr.bf16.mxu0 0
    %3518 = vmatpush2.bf16.msra.mxu0 0
    %3519 = vmatprep.subr.bf16.mxu0 0
    %3520 = vmatpush2.bf16.msra.mxu0 0
    %3521 = vmatprep.subr.bf16.mxu0 0
    %3522 = vmatpush2.bf16.msra.mxu0 0
    %3523 = vmatprep.subr.bf16.mxu0 0
    %3524 = vmatpush2.bf16.msra.mxu0 0
    %3525 = vmatprep.mubr.bf16.mxu0 0
    %3526 = vmatmul.mubr.bf16.gmra.mxu0 %v3488
    %v3527 = vpop.f32.mrf.mxu0
    %v3528 = vadd.f32 0.0, %v3527
    %v3529 = vpop.f32.mrf.mxu0
    %v3530 = vpop.f32.mrf.mxu0
    %v3531 = vpop.f32.mrf.mxu0
    %3532 = vdwg.mxu0
    %3533 = vrot.lane.b32.xlu0 %v237, 80
    %v3534 = vpop.permute.xlu0 %3533
    %v3536 = vsel %vm635, %v3384, 0
    %v3539 = vsel %vm735, %v3534, 0
    %3541 = vmatprep.subr.bf16.mxu0 0
    %3542 = vmatpush1.bf16.msra.mxu0 0
    %3543 = vmatprep.subr.bf16.mxu0 0
    %3544 = vmatpush1.bf16.msra.mxu0 0
    %3545 = vmatprep.subr.bf16.mxu0 0
    %3546 = vmatpush1.bf16.msra.mxu0 0
    %3547 = vmatprep.subr.bf16.mxu0 0
    %3548 = vmatpush1.bf16.msra.mxu0 0
    %3549 = vmatprep.subr.bf16.mxu0 0
    %3550 = vmatpush1.bf16.msra.mxu0 0
    %3551 = vmatprep.subr.bf16.mxu0 0
    %3552 = vmatpush1.bf16.msra.mxu0 0
    %3553 = vmatprep.subr.bf16.mxu0 0
    %3554 = vmatpush1.bf16.msra.mxu0 0
    %3555 = vmatprep.subr.bf16.mxu0 0
    %3556 = vmatpush1.bf16.msra.mxu0 %v3539
    %3557 = vmatprep.subr.bf16.mxu0 0
    %3558 = vmatpush2.bf16.msra.mxu0 0
    %3559 = vmatprep.subr.bf16.mxu0 0
    %3560 = vmatpush2.bf16.msra.mxu0 0
    %3561 = vmatprep.subr.bf16.mxu0 0
    %3562 = vmatpush2.bf16.msra.mxu0 0
    %3563 = vmatprep.subr.bf16.mxu0 0
    %3564 = vmatpush2.bf16.msra.mxu0 0
    %3565 = vmatprep.subr.bf16.mxu0 0
    %3566 = vmatpush2.bf16.msra.mxu0 0
    %3567 = vmatprep.subr.bf16.mxu0 0
    %3568 = vmatpush2.bf16.msra.mxu0 0
    %3569 = vmatprep.subr.bf16.mxu0 0
    %3570 = vmatpush2.bf16.msra.mxu0 0
    %3571 = vmatprep.subr.bf16.mxu0 0
    %3572 = vmatpush2.bf16.msra.mxu0 0
    %3573 = vmatprep.mubr.bf16.mxu0 0
    %3574 = vmatmul.mubr.bf16.gmra.mxu0 %v3536
    %v3575 = vpop.f32.mrf.mxu0
    %v3576 = vadd.f32 0.0, %v3575
    %v3577 = vpop.f32.mrf.mxu0
    %v3578 = vpop.f32.mrf.mxu0
    %v3579 = vpop.f32.mrf.mxu0
    %3580 = vdwg.mxu0
    %3581 = vrot.lane.b32.xlu0 %v238, 80
    %v3582 = vpop.permute.xlu0 %3581
    %v3584 = vsel %vm635, %v3385, 0
    %v3587 = vsel %vm735, %v3582, 0
    %3589 = vmatprep.subr.bf16.mxu0 0
    %3590 = vmatpush1.bf16.msra.mxu0 0
    %3591 = vmatprep.subr.bf16.mxu0 0
    %3592 = vmatpush1.bf16.msra.mxu0 0
    %3593 = vmatprep.subr.bf16.mxu0 0
    %3594 = vmatpush1.bf16.msra.mxu0 0
    %3595 = vmatprep.subr.bf16.mxu0 0
    %3596 = vmatpush1.bf16.msra.mxu0 0
    %3597 = vmatprep.subr.bf16.mxu0 0
    %3598 = vmatpush1.bf16.msra.mxu0 0
    %3599 = vmatprep.subr.bf16.mxu0 0
    %3600 = vmatpush1.bf16.msra.mxu0 0
    %3601 = vmatprep.subr.bf16.mxu0 0
    %3602 = vmatpush1.bf16.msra.mxu0 0
    %3603 = vmatprep.subr.bf16.mxu0 0
    %3604 = vmatpush1.bf16.msra.mxu0 %v3587
    %3605 = vmatprep.subr.bf16.mxu0 0
    %3606 = vmatpush2.bf16.msra.mxu0 0
    %3607 = vmatprep.subr.bf16.mxu0 0
    %3608 = vmatpush2.bf16.msra.mxu0 0
    %3609 = vmatprep.subr.bf16.mxu0 0
    %3610 = vmatpush2.bf16.msra.mxu0 0
    %3611 = vmatprep.subr.bf16.mxu0 0
    %3612 = vmatpush2.bf16.msra.mxu0 0
    %3613 = vmatprep.subr.bf16.mxu0 0
    %3614 = vmatpush2.bf16.msra.mxu0 0
    %3615 = vmatprep.subr.bf16.mxu0 0
    %3616 = vmatpush2.bf16.msra.mxu0 0
    %3617 = vmatprep.subr.bf16.mxu0 0
    %3618 = vmatpush2.bf16.msra.mxu0 0
    %3619 = vmatprep.subr.bf16.mxu0 0
    %3620 = vmatpush2.bf16.msra.mxu0 0
    %3621 = vmatprep.mubr.bf16.mxu0 0
    %3622 = vmatmul.mubr.bf16.gmra.mxu0 %v3584
    %v3623 = vpop.f32.mrf.mxu0
    %v3624 = vadd.f32 0.0, %v3623
    %v3625 = vpop.f32.mrf.mxu0
    %v3626 = vpop.f32.mrf.mxu0
    %v3627 = vpop.f32.mrf.mxu0
    %3628 = vdwg.mxu0
    %3629 = vrot.lane.b32.xlu0 %v239, 80
    %v3630 = vpop.permute.xlu0 %3629
    %v3632 = vsel %vm635, %v3386, 0
    %v3635 = vsel %vm735, %v3630, 0
    %3637 = vmatprep.subr.bf16.mxu0 0
    %3638 = vmatpush1.bf16.msra.mxu0 0
    %3639 = vmatprep.subr.bf16.mxu0 0
    %3640 = vmatpush1.bf16.msra.mxu0 0
    %3641 = vmatprep.subr.bf16.mxu0 0
    %3642 = vmatpush1.bf16.msra.mxu0 0
    %3643 = vmatprep.subr.bf16.mxu0 0
    %3644 = vmatpush1.bf16.msra.mxu0 0
    %3645 = vmatprep.subr.bf16.mxu0 0
    %3646 = vmatpush1.bf16.msra.mxu0 0
    %3647 = vmatprep.subr.bf16.mxu0 0
    %3648 = vmatpush1.bf16.msra.mxu0 0
    %3649 = vmatprep.subr.bf16.mxu0 0
    %3650 = vmatpush1.bf16.msra.mxu0 0
    %3651 = vmatprep.subr.bf16.mxu0 0
    %3652 = vmatpush1.bf16.msra.mxu0 %v3635
    %3653 = vmatprep.subr.bf16.mxu0 0
    %3654 = vmatpush2.bf16.msra.mxu0 0
    %3655 = vmatprep.subr.bf16.mxu0 0
    %3656 = vmatpush2.bf16.msra.mxu0 0
    %3657 = vmatprep.subr.bf16.mxu0 0
    %3658 = vmatpush2.bf16.msra.mxu0 0
    %3659 = vmatprep.subr.bf16.mxu0 0
    %3660 = vmatpush2.bf16.msra.mxu0 0
    %3661 = vmatprep.subr.bf16.mxu0 0
    %3662 = vmatpush2.bf16.msra.mxu0 0
    %3663 = vmatprep.subr.bf16.mxu0 0
    %3664 = vmatpush2.bf16.msra.mxu0 0
    %3665 = vmatprep.subr.bf16.mxu0 0
    %3666 = vmatpush2.bf16.msra.mxu0 0
    %3667 = vmatprep.subr.bf16.mxu0 0
    %3668 = vmatpush2.bf16.msra.mxu0 0
    %3669 = vmatprep.mubr.bf16.mxu0 0
    %3670 = vmatmul.mubr.bf16.gmra.mxu0 %v3632
    %v3671 = vpop.f32.mrf.mxu0
    %v3672 = vadd.f32 0.0, %v3671
    %v3673 = vpop.f32.mrf.mxu0
    %v3674 = vpop.f32.mrf.mxu0
    %v3675 = vpop.f32.mrf.mxu0
    %3676 = vdwg.mxu0
    %3677 = vrot.lane.b32.xlu0 %v240, 80
    %v3678 = vpop.permute.xlu0 %3677
    %v3680 = vsel %vm635, %v3387, 0
    %v3683 = vsel %vm735, %v3678, 0
    %3685 = vmatprep.subr.bf16.mxu0 0
    %3686 = vmatpush1.bf16.msra.mxu0 0
    %3687 = vmatprep.subr.bf16.mxu0 0
    %3688 = vmatpush1.bf16.msra.mxu0 0
    %3689 = vmatprep.subr.bf16.mxu0 0
    %3690 = vmatpush1.bf16.msra.mxu0 0
    %3691 = vmatprep.subr.bf16.mxu0 0
    %3692 = vmatpush1.bf16.msra.mxu0 0
    %3693 = vmatprep.subr.bf16.mxu0 0
    %3694 = vmatpush1.bf16.msra.mxu0 0
    %3695 = vmatprep.subr.bf16.mxu0 0
    %3696 = vmatpush1.bf16.msra.mxu0 0
    %3697 = vmatprep.subr.bf16.mxu0 0
    %3698 = vmatpush1.bf16.msra.mxu0 0
    %3699 = vmatprep.subr.bf16.mxu0 0
    %3700 = vmatpush1.bf16.msra.mxu0 %v3683
    %3701 = vmatprep.subr.bf16.mxu0 0
    %3702 = vmatpush2.bf16.msra.mxu0 0
    %3703 = vmatprep.subr.bf16.mxu0 0
    %3704 = vmatpush2.bf16.msra.mxu0 0
    %3705 = vmatprep.subr.bf16.mxu0 0
    %3706 = vmatpush2.bf16.msra.mxu0 0
    %3707 = vmatprep.subr.bf16.mxu0 0
    %3708 = vmatpush2.bf16.msra.mxu0 0
    %3709 = vmatprep.subr.bf16.mxu0 0
    %3710 = vmatpush2.bf16.msra.mxu0 0
    %3711 = vmatprep.subr.bf16.mxu0 0
    %3712 = vmatpush2.bf16.msra.mxu0 0
    %3713 = vmatprep.subr.bf16.mxu0 0
    %3714 = vmatpush2.bf16.msra.mxu0 0
    %3715 = vmatprep.subr.bf16.mxu0 0
    %3716 = vmatpush2.bf16.msra.mxu0 0
    %3717 = vmatprep.mubr.bf16.mxu0 0
    %3718 = vmatmul.mubr.bf16.gmra.mxu0 %v3680
    %v3719 = vpop.f32.mrf.mxu0
    %v3720 = vadd.f32 0.0, %v3719
    %v3721 = vpop.f32.mrf.mxu0
    %v3722 = vpop.f32.mrf.mxu0
    %v3723 = vpop.f32.mrf.mxu0
    %3724 = vdwg.mxu0
    %3725 = vrot.lane.b32.xlu0 %v241, 80
    %v3726 = vpop.permute.xlu0 %3725
    %v3728 = vsel %vm635, %v3388, 0
    %v3731 = vsel %vm735, %v3726, 0
    %3733 = vmatprep.subr.bf16.mxu0 0
    %3734 = vmatpush1.bf16.msra.mxu0 0
    %3735 = vmatprep.subr.bf16.mxu0 0
    %3736 = vmatpush1.bf16.msra.mxu0 0
    %3737 = vmatprep.subr.bf16.mxu0 0
    %3738 = vmatpush1.bf16.msra.mxu0 0
    %3739 = vmatprep.subr.bf16.mxu0 0
    %3740 = vmatpush1.bf16.msra.mxu0 0
    %3741 = vmatprep.subr.bf16.mxu0 0
    %3742 = vmatpush1.bf16.msra.mxu0 0
    %3743 = vmatprep.subr.bf16.mxu0 0
    %3744 = vmatpush1.bf16.msra.mxu0 0
    %3745 = vmatprep.subr.bf16.mxu0 0
    %3746 = vmatpush1.bf16.msra.mxu0 0
    %3747 = vmatprep.subr.bf16.mxu0 0
    %3748 = vmatpush1.bf16.msra.mxu0 %v3731
    %3749 = vmatprep.subr.bf16.mxu0 0
    %3750 = vmatpush2.bf16.msra.mxu0 0
    %3751 = vmatprep.subr.bf16.mxu0 0
    %3752 = vmatpush2.bf16.msra.mxu0 0
    %3753 = vmatprep.subr.bf16.mxu0 0
    %3754 = vmatpush2.bf16.msra.mxu0 0
    %3755 = vmatprep.subr.bf16.mxu0 0
    %3756 = vmatpush2.bf16.msra.mxu0 0
    %3757 = vmatprep.subr.bf16.mxu0 0
    %3758 = vmatpush2.bf16.msra.mxu0 0
    %3759 = vmatprep.subr.bf16.mxu0 0
    %3760 = vmatpush2.bf16.msra.mxu0 0
    %3761 = vmatprep.subr.bf16.mxu0 0
    %3762 = vmatpush2.bf16.msra.mxu0 0
    %3763 = vmatprep.subr.bf16.mxu0 0
    %3764 = vmatpush2.bf16.msra.mxu0 0
    %3765 = vmatprep.mubr.bf16.mxu0 0
    %3766 = vmatmul.mubr.bf16.gmra.mxu0 %v3728
    %v3767 = vpop.f32.mrf.mxu0
    %v3768 = vadd.f32 0.0, %v3767
    %v3769 = vpop.f32.mrf.mxu0
    %v3770 = vpop.f32.mrf.mxu0
    %v3771 = vpop.f32.mrf.mxu0
    %3772 = vdwg.mxu0
    %v3773 = vpack.c.bf16 %v3432, %v3432
    %v3774 = vpack.c.bf16 %v3480, %v3480
    %v3775 = vpack.c.bf16 %v3528, %v3528
    %v3776 = vpack.c.bf16 %v3576, %v3576
    %v3777 = vpack.c.bf16 %v3624, %v3624
    %v3778 = vpack.c.bf16 %v3672, %v3672
    %v3779 = vpack.c.bf16 %v3720, %v3720
    %v3780 = vpack.c.bf16 %v3768, %v3768
    %3789 = vrot.lane.b32.xlu0 %v1997, 16
    %v3790 = vpop.permute.xlu0 %3789
    %3791 = vrot.lane.b32.xlu0 %v1998, 16
    %v3792 = vpop.permute.xlu0 %3791
    %3793 = vrot.lane.b32.xlu0 %v1999, 16
    %v3794 = vpop.permute.xlu0 %3793
    %3795 = vrot.lane.b32.xlu0 %v2000, 16
    %v3796 = vpop.permute.xlu0 %3795
    %3797 = vrot.lane.b32.xlu0 %v2001, 16
    %v3798 = vpop.permute.xlu0 %3797
    %3799 = vrot.lane.b32.xlu0 %v2002, 16
    %v3800 = vpop.permute.xlu0 %3799
    %3801 = vrot.lane.b32.xlu0 %v2003, 16
    %v3802 = vpop.permute.xlu0 %3801
    %3803 = vrot.lane.b32.xlu0 %v2004, 16
    %v3804 = vpop.permute.xlu0 %3803
    %3813 = vrot.lane.b32.xlu0 %v2885, 32
    %v3814 = vpop.permute.xlu0 %3813
    %3815 = vrot.lane.b32.xlu0 %v2886, 32
    %v3816 = vpop.permute.xlu0 %3815
    %3817 = vrot.lane.b32.xlu0 %v2887, 32
    %v3818 = vpop.permute.xlu0 %3817
    %3819 = vrot.lane.b32.xlu0 %v2888, 32
    %v3820 = vpop.permute.xlu0 %3819
    %3821 = vrot.lane.b32.xlu0 %v2889, 32
    %v3822 = vpop.permute.xlu0 %3821
    %3823 = vrot.lane.b32.xlu0 %v2890, 32
    %v3824 = vpop.permute.xlu0 %3823
    %3825 = vrot.lane.b32.xlu0 %v2891, 32
    %v3826 = vpop.permute.xlu0 %3825
    %3827 = vrot.lane.b32.xlu0 %v2892, 32
    %v3828 = vpop.permute.xlu0 %3827
    %3837 = vrot.lane.b32.xlu0 %v3773, 48
    %v3838 = vpop.permute.xlu0 %3837
    %3839 = vrot.lane.b32.xlu0 %v3774, 48
    %v3840 = vpop.permute.xlu0 %3839
    %3841 = vrot.lane.b32.xlu0 %v3775, 48
    %v3842 = vpop.permute.xlu0 %3841
    %3843 = vrot.lane.b32.xlu0 %v3776, 48
    %v3844 = vpop.permute.xlu0 %3843
    %3845 = vrot.lane.b32.xlu0 %v3777, 48
    %v3846 = vpop.permute.xlu0 %3845
    %3847 = vrot.lane.b32.xlu0 %v3778, 48
    %v3848 = vpop.permute.xlu0 %3847
    %3849 = vrot.lane.b32.xlu0 %v3779, 48
    %v3850 = vpop.permute.xlu0 %3849
    %3851 = vrot.lane.b32.xlu0 %v3780, 48
    %v3852 = vpop.permute.xlu0 %3851
    %v3855 = vsel %vm245, %v1101, %v3790
    %v3858 = vsel %vm245, %v1102, %v3792
    %v3861 = vsel %vm245, %v1103, %v3794
    %v3864 = vsel %vm245, %v1104, %v3796
    %v3867 = vsel %vm245, %v1105, %v3798
    %v3870 = vsel %vm245, %v1106, %v3800
    %v3873 = vsel %vm245, %v1107, %v3802
    %v3876 = vsel %vm245, %v1108, %v3804
    %vm3877 = vcmask 261120
    %v3879 = vsel %vm3877, %v3855, %v3814
    %v3881 = vsel %vm3877, %v3858, %v3816
    %v3883 = vsel %vm3877, %v3861, %v3818
    %v3885 = vsel %vm3877, %v3864, %v3820
    %v3887 = vsel %vm3877, %v3867, %v3822
    %v3889 = vsel %vm3877, %v3870, %v3824
    %v3891 = vsel %vm3877, %v3873, %v3826
    %v3893 = vsel %vm3877, %v3876, %v3828
    %vm3894 = vcmask 392192
    %v3896 = vsel %vm3894, %v3879, %v3838
    %v3898 = vsel %vm3894, %v3881, %v3840
    %v3900 = vsel %vm3894, %v3883, %v3842
    %v3902 = vsel %vm3894, %v3885, %v3844
    %v3904 = vsel %vm3894, %v3887, %v3846
    %v3906 = vsel %vm3894, %v3889, %v3848
    %v3908 = vsel %vm3894, %v3891, %v3850
    %v3910 = vsel %vm3894, %v3893, %v3852
    %v3911 = vld [vmem:[%s3] sm:$0xf]
    %v3912 = vld [vmem:[%s3 + $0x4] sm:$0xf]
    %v3913 = vld [vmem:[%s3 + $0x8] sm:$0xf]
    %v3914 = vld [vmem:[%s3 + $0xc] sm:$0xf]
    %v3915 = vld [vmem:[%s3 + $0x10] sm:$0xf]
    %v3916 = vld [vmem:[%s3 + $0x14] sm:$0xf]
    %v3917 = vld [vmem:[%s3 + $0x18] sm:$0xf]
    %v3918 = vld [vmem:[%s3 + $0x1c] sm:$0xf]
    %v3919 = vld [vmem:[#allocation3] sm:$0x1]
    %v3921 = vlaneseq
    %v3922 = vshrl.u32 %v3921, 7
    %v3923 = vsub.s32 0, %v3922
    %v3924 = vrot.slane %v3919, %v3923
    %v3934 = vunpack.c.l.b16 %v3896
    %v3935 = vunpack.c.l.b16 %v3898
    %v3936 = vunpack.c.l.b16 %v3900
    %v3937 = vunpack.c.l.b16 %v3902
    %v3938 = vunpack.c.l.b16 %v3904
    %v3939 = vunpack.c.l.b16 %v3906
    %v3940 = vunpack.c.l.b16 %v3908
    %v3941 = vunpack.c.l.b16 %v3910
    %v3942 = vpack.c.b16 %v3935, %v3934
    %v3943 = vpack.c.b16 %v3937, %v3936
    %v3944 = vpack.c.b16 %v3939, %v3938
    %v3945 = vpack.c.b16 %v3941, %v3940
    %v3954 = vunpack.c.l.b16 %v3911
    %v3955 = vunpack.c.l.b16 %v3912
    %v3956 = vunpack.c.l.b16 %v3913
    %v3957 = vunpack.c.l.b16 %v3914
    %v3958 = vunpack.c.l.b16 %v3915
    %v3959 = vunpack.c.l.b16 %v3916
    %v3960 = vunpack.c.l.b16 %v3917
    %v3961 = vunpack.c.l.b16 %v3918
    %v3962 = vpack.c.b16 %v3955, %v3954
    %v3963 = vpack.c.b16 %v3957, %v3956
    %v3964 = vpack.c.b16 %v3959, %v3958
    %v3965 = vpack.c.b16 %v3961, %v3960
    %v3971 = vsel %vm140, %v3942, 0
    %v3974 = vsel %vm140, %v3943, 0
    %v3977 = vsel %vm140, %v3944, 0
    %v3980 = vsel %vm140, %v3945, 0
    %3982 = vmatprep.subr.bf16.mxu0 0
    %3983 = vmatpush1.bf16.msra.mxu0 0
    %3984 = vmatprep.subr.bf16.mxu0 0
    %3985 = vmatpush1.bf16.msra.mxu0 0
    %3986 = vmatprep.subr.bf16.mxu0 0
    %3987 = vmatpush1.bf16.msra.mxu0 0
    %3988 = vmatprep.subr.bf16.mxu0 0
    %3989 = vmatpush1.bf16.msra.mxu0 0
    %3990 = vmatprep.subr.bf16.mxu0 0
    %3991 = vmatpush1.bf16.msra.mxu0 %v3965
    %3992 = vmatprep.subr.bf16.mxu0 0
    %3993 = vmatpush1.bf16.msra.mxu0 %v3964
    %3994 = vmatprep.subr.bf16.mxu0 0
    %3995 = vmatpush1.bf16.msra.mxu0 %v3963
    %3996 = vmatprep.subr.bf16.mxu0 0
    %3997 = vmatpush1.bf16.msra.mxu0 %v3962
    %3998 = vmatprep.subr.bf16.mxu0 0
    %3999 = vmatpush2.bf16.msra.mxu0 0
    %4000 = vmatprep.subr.bf16.mxu0 0
    %4001 = vmatpush2.bf16.msra.mxu0 0
    %4002 = vmatprep.subr.bf16.mxu0 0
    %4003 = vmatpush2.bf16.msra.mxu0 0
    %4004 = vmatprep.subr.bf16.mxu0 0
    %4005 = vmatpush2.bf16.msra.mxu0 0
    %4006 = vmatprep.subr.bf16.mxu0 0
    %4007 = vmatpush2.bf16.msra.mxu0 0
    %4008 = vmatprep.subr.bf16.mxu0 0
    %4009 = vmatpush2.bf16.msra.mxu0 0
    %4010 = vmatprep.subr.bf16.mxu0 0
    %4011 = vmatpush2.bf16.msra.mxu0 0
    %4012 = vmatprep.subr.bf16.mxu0 0
    %4013 = vmatpush2.bf16.msra.mxu0 0
    %4014 = vmatprep.mubr.bf16.mxu0 0
    %4015 = vmatmul.mubr.bf16.gmra.mxu0 %v3971
    %v4016 = vpop.f32.mrf.mxu0
    %v4017 = vadd.f32 %v3924, %v4016
    %v4018 = vpop.f32.mrf.mxu0
    %v4019 = vpop.f32.mrf.mxu0
    %v4020 = vadd.f32 %v3924, %v4019
    %v4021 = vpop.f32.mrf.mxu0
    %4022 = vmatprep.mubr.bf16.mxu0 0
    %4023 = vmatmul.mubr.bf16.gmra.mxu0 %v3974
    %v4024 = vpop.f32.mrf.mxu0
    %v4025 = vadd.f32 %v3924, %v4024
    %v4026 = vpop.f32.mrf.mxu0
    %v4027 = vpop.f32.mrf.mxu0
    %v4028 = vadd.f32 %v3924, %v4027
    %v4029 = vpop.f32.mrf.mxu0
    %4030 = vmatprep.mubr.bf16.mxu0 0
    %4031 = vmatmul.mubr.bf16.gmra.mxu0 %v3977
    %v4032 = vpop.f32.mrf.mxu0
    %v4033 = vadd.f32 %v3924, %v4032
    %v4034 = vpop.f32.mrf.mxu0
    %v4035 = vpop.f32.mrf.mxu0
    %v4036 = vadd.f32 %v3924, %v4035
    %v4037 = vpop.f32.mrf.mxu0
    %4038 = vmatprep.mubr.bf16.mxu0 0
    %4039 = vmatmul.mubr.bf16.gmra.mxu0 %v3980
    %v4040 = vpop.f32.mrf.mxu0
    %v4041 = vadd.f32 %v3924, %v4040
    %v4042 = vpop.f32.mrf.mxu0
    %v4043 = vpop.f32.mrf.mxu0
    %v4044 = vadd.f32 %v3924, %v4043
    %v4045 = vpop.f32.mrf.mxu0
    %4046 = vdwg.mxu0
    %v4047 = vadd.f32 %v68, %v4017
    %v4048 = vadd.f32 %v69, %v4020
    %v4049 = vadd.f32 %v70, %v4025
    %v4050 = vadd.f32 %v71, %v4028
    %v4051 = vadd.f32 %v72, %v4033
    %v4052 = vadd.f32 %v73, %v4036
    %v4053 = vadd.f32 %v74, %v4041
    %v4054 = vadd.f32 %v75, %v4044
    %v4055 = vld [vmem:[%s9] sm:$0x1]
    %v4056 = vld [vmem:[%s10] sm:$0x1]
    %v4057 = vsel %vm140, %v4047, 0.0
    %4058 = vadd.xlane.f32.xlu0 %v4057
    %v4059 = vpop.xlane.xlu0 %4058
    %v4060 = vsel %vm140, %v4048, 0.0
    %4061 = vadd.xlane.f32.xlu0 %v4060
    %v4062 = vpop.xlane.xlu0 %4061
    %v4063 = vsel %vm140, %v4049, 0.0
    %4064 = vadd.xlane.f32.xlu0 %v4063
    %v4065 = vpop.xlane.xlu0 %4064
    %v4066 = vsel %vm140, %v4050, 0.0
    %4067 = vadd.xlane.f32.xlu0 %v4066
    %v4068 = vpop.xlane.xlu0 %4067
    %v4069 = vsel %vm140, %v4051, 0.0
    %4070 = vadd.xlane.f32.xlu0 %v4069
    %v4071 = vpop.xlane.xlu0 %4070
    %v4072 = vsel %vm140, %v4052, 0.0
    %4073 = vadd.xlane.f32.xlu0 %v4072
    %v4074 = vpop.xlane.xlu0 %4073
    %v4075 = vsel %vm140, %v4053, 0.0
    %4076 = vadd.xlane.f32.xlu0 %v4075
    %v4077 = vpop.xlane.xlu0 %4076
    %v4078 = vsel %vm140, %v4054, 0.0
    %4079 = vadd.xlane.f32.xlu0 %v4078
    %v4080 = vpop.xlane.xlu0 %4079
    %v4081 = vrcp.pop 64.0
    %v4082 = vmul.f32 %v4059, %v4081
    %v4083 = vmul.f32 %v4062, %v4081
    %v4084 = vmul.f32 %v4065, %v4081
    %v4085 = vmul.f32 %v4068, %v4081
    %v4086 = vmul.f32 %v4071, %v4081
    %v4087 = vmul.f32 %v4074, %v4081
    %v4088 = vmul.f32 %v4077, %v4081
    %v4089 = vmul.f32 %v4080, %v4081
    %v4090 = vsub.f32 %v4047, %v4082
    %v4091 = vsub.f32 %v4048, %v4083
    %v4092 = vsub.f32 %v4049, %v4084
    %v4093 = vsub.f32 %v4050, %v4085
    %v4094 = vsub.f32 %v4051, %v4086
    %v4095 = vsub.f32 %v4052, %v4087
    %v4096 = vsub.f32 %v4053, %v4088
    %v4097 = vsub.f32 %v4054, %v4089
    %v4098 = vmul.f32 %v4090, %v4090
    %v4099 = vmul.f32 %v4091, %v4091
    %v4100 = vmul.f32 %v4092, %v4092
    %v4101 = vmul.f32 %v4093, %v4093
    %v4102 = vmul.f32 %v4094, %v4094
    %v4103 = vmul.f32 %v4095, %v4095
    %v4104 = vmul.f32 %v4096, %v4096
    %v4105 = vmul.f32 %v4097, %v4097
    %v4106 = vsel %vm140, %v4098, 0.0
    %4107 = vadd.xlane.f32.xlu0 %v4106
    %v4108 = vpop.xlane.xlu0 %4107
    %v4109 = vsel %vm140, %v4099, 0.0
    %4110 = vadd.xlane.f32.xlu0 %v4109
    %v4111 = vpop.xlane.xlu0 %4110
    %v4112 = vsel %vm140, %v4100, 0.0
    %4113 = vadd.xlane.f32.xlu0 %v4112
    %v4114 = vpop.xlane.xlu0 %4113
    %v4115 = vsel %vm140, %v4101, 0.0
    %4116 = vadd.xlane.f32.xlu0 %v4115
    %v4117 = vpop.xlane.xlu0 %4116
    %v4118 = vsel %vm140, %v4102, 0.0
    %4119 = vadd.xlane.f32.xlu0 %v4118
    %v4120 = vpop.xlane.xlu0 %4119
    %v4121 = vsel %vm140, %v4103, 0.0
    %4122 = vadd.xlane.f32.xlu0 %v4121
    %v4123 = vpop.xlane.xlu0 %4122
    %v4124 = vsel %vm140, %v4104, 0.0
    %4125 = vadd.xlane.f32.xlu0 %v4124
    %v4126 = vpop.xlane.xlu0 %4125
    %v4127 = vsel %vm140, %v4105, 0.0
    %4128 = vadd.xlane.f32.xlu0 %v4127
    %v4129 = vpop.xlane.xlu0 %4128
    %v4130 = vmul.f32 %v4108, %v4081
    %v4131 = vmul.f32 %v4111, %v4081
    %v4132 = vmul.f32 %v4114, %v4081
    %v4133 = vmul.f32 %v4117, %v4081
    %v4134 = vmul.f32 %v4120, %v4081
    %v4135 = vmul.f32 %v4123, %v4081
    %v4136 = vmul.f32 %v4126, %v4081
    %v4137 = vmul.f32 %v4129, %v4081
    %v4138 = vadd.f32 %v4130, 1e-05
    %v4139 = vadd.f32 %v4131, 1e-05
    %v4140 = vadd.f32 %v4132, 1e-05
    %v4141 = vadd.f32 %v4133, 1e-05
    %v4142 = vadd.f32 %v4134, 1e-05
    %v4143 = vadd.f32 %v4135, 1e-05
    %v4144 = vadd.f32 %v4136, 1e-05
    %v4145 = vadd.f32 %v4137, 1e-05
    %v4146 = vrsqrt.pop %v4138
    %v4147 = vrsqrt.pop %v4139
    %v4148 = vrsqrt.pop %v4140
    %v4149 = vrsqrt.pop %v4141
    %v4150 = vrsqrt.pop %v4142
    %v4151 = vrsqrt.pop %v4143
    %v4152 = vrsqrt.pop %v4144
    %v4153 = vrsqrt.pop %v4145
    %v4154 = vmul.f32 %v4090, %v4146
    %v4155 = vmul.f32 %v4091, %v4147
    %v4156 = vmul.f32 %v4092, %v4148
    %v4157 = vmul.f32 %v4093, %v4149
    %v4158 = vmul.f32 %v4094, %v4150
    %v4159 = vmul.f32 %v4095, %v4151
    %v4160 = vmul.f32 %v4096, %v4152
    %v4161 = vmul.f32 %v4097, %v4153
    %v4163 = vlaneseq
    %v4164 = vshrl.u32 %v4163, 7
    %v4165 = vsub.s32 0, %v4164
    %v4166 = vrot.slane %v4055, %v4165
    %v4168 = vmul.f32 %v4154, %v4166
    %v4169 = vmul.f32 %v4155, %v4166
    %v4170 = vmul.f32 %v4156, %v4166
    %v4171 = vmul.f32 %v4157, %v4166
    %v4172 = vmul.f32 %v4158, %v4166
    %v4173 = vmul.f32 %v4159, %v4166
    %v4174 = vmul.f32 %v4160, %v4166
    %v4175 = vmul.f32 %v4161, %v4166
    %v4177 = vlaneseq
    %v4178 = vshrl.u32 %v4177, 7
    %v4179 = vsub.s32 0, %v4178
    %v4180 = vrot.slane %v4056, %v4179
    %v4182 = vadd.f32 %v4168, %v4180
    %v4183 = vadd.f32 %v4169, %v4180
    %v4184 = vadd.f32 %v4170, %v4180
    %v4185 = vadd.f32 %v4171, %v4180
    %v4186 = vadd.f32 %v4172, %v4180
    %v4187 = vadd.f32 %v4173, %v4180
    %v4188 = vadd.f32 %v4174, %v4180
    %v4189 = vadd.f32 %v4175, %v4180
    %v4190 = vpack.c.bf16 %v4183, %v4182
    %v4191 = vpack.c.bf16 %v4185, %v4184
    %v4192 = vpack.c.bf16 %v4187, %v4186
    %v4193 = vpack.c.bf16 %v4189, %v4188
    %v4194 = vld [vmem:[%s5] sm:$0xff]
    %v4195 = vld [vmem:[%s5 + $0x8] sm:$0xff]
    %v4196 = vld [vmem:[%s5 + $0x10] sm:$0xff]
    %v4197 = vld [vmem:[%s5 + $0x18] sm:$0xff]
    %v4198 = vld [vmem:[%s5 + $0x20] sm:$0xff]
    %v4199 = vld [vmem:[%s5 + $0x28] sm:$0xff]
    %v4200 = vld [vmem:[%s5 + $0x30] sm:$0xff]
    %v4201 = vld [vmem:[%s5 + $0x38] sm:$0xff]
    %v4202 = vld [vmem:[%s6] sm:$0x3]
    %v4204 = vlaneseq
    %v4205 = vshrl.u32 %v4204, 7
    %v4206 = vsub.s32 0, %v4205
    %v4207 = vrot.slane %v4202, %v4206
    %v4208 = vlaneseq
    %v4209 = vshrl.u32 %v4208, 7
    %v4210 = vsub.s32 1, %v4209
    %v4211 = vrot.slane %v4202, %v4210
    %v4222 = vunpack.c.l.b16 %v4194
    %v4223 = vunpack.c.h.b16 %v4194
    %v4224 = vunpack.c.l.b16 %v4195
    %v4225 = vunpack.c.h.b16 %v4195
    %v4226 = vunpack.c.l.b16 %v4196
    %v4227 = vunpack.c.h.b16 %v4196
    %v4228 = vunpack.c.l.b16 %v4197
    %v4229 = vunpack.c.h.b16 %v4197
    %v4230 = vunpack.c.l.b16 %v4198
    %v4231 = vunpack.c.h.b16 %v4198
    %v4232 = vunpack.c.l.b16 %v4199
    %v4233 = vunpack.c.h.b16 %v4199
    %v4234 = vunpack.c.l.b16 %v4200
    %v4235 = vunpack.c.h.b16 %v4200
    %v4236 = vunpack.c.l.b16 %v4201
    %v4237 = vunpack.c.h.b16 %v4201
    %v4238 = vpack.c.b16 %v4224, %v4222
    %v4239 = vpack.c.b16 %v4225, %v4223
    %v4240 = vpack.c.b16 %v4228, %v4226
    %v4241 = vpack.c.b16 %v4229, %v4227
    %v4242 = vpack.c.b16 %v4232, %v4230
    %v4243 = vpack.c.b16 %v4233, %v4231
    %v4244 = vpack.c.b16 %v4236, %v4234
    %v4245 = vpack.c.b16 %v4237, %v4235
    %v4255 = vsel %vm140, %v4190, 0
    %v4258 = vsel %vm140, %v4191, 0
    %v4261 = vsel %vm140, %v4192, 0
    %v4264 = vsel %vm140, %v4193, 0
    %4266 = vmatprep.subr.bf16.mxu0 0
    %4267 = vmatpush1.bf16.msra.mxu0 0
    %4268 = vmatprep.subr.bf16.mxu0 0
    %4269 = vmatpush1.bf16.msra.mxu0 0
    %4270 = vmatprep.subr.bf16.mxu0 0
    %4271 = vmatpush1.bf16.msra.mxu0 0
    %4272 = vmatprep.subr.bf16.mxu0 0
    %4273 = vmatpush1.bf16.msra.mxu0 0
    %4274 = vmatprep.subr.bf16.mxu0 %v4245
    %4275 = vmatpush1.bf16.msra.mxu0 %v4244
    %4276 = vmatprep.subr.bf16.mxu0 %v4243
    %4277 = vmatpush1.bf16.msra.mxu0 %v4242
    %4278 = vmatprep.subr.bf16.mxu0 %v4241
    %4279 = vmatpush1.bf16.msra.mxu0 %v4240
    %4280 = vmatprep.subr.bf16.mxu0 %v4239
    %4281 = vmatpush1.bf16.msra.mxu0 %v4238
    %4282 = vmatprep.subr.bf16.mxu0 0
    %4283 = vmatpush2.bf16.msra.mxu0 0
    %4284 = vmatprep.subr.bf16.mxu0 0
    %4285 = vmatpush2.bf16.msra.mxu0 0
    %4286 = vmatprep.subr.bf16.mxu0 0
    %4287 = vmatpush2.bf16.msra.mxu0 0
    %4288 = vmatprep.subr.bf16.mxu0 0
    %4289 = vmatpush2.bf16.msra.mxu0 0
    %4290 = vmatprep.subr.bf16.mxu0 0
    %4291 = vmatpush2.bf16.msra.mxu0 0
    %4292 = vmatprep.subr.bf16.mxu0 0
    %4293 = vmatpush2.bf16.msra.mxu0 0
    %4294 = vmatprep.subr.bf16.mxu0 0
    %4295 = vmatpush2.bf16.msra.mxu0 0
    %4296 = vmatprep.subr.bf16.mxu0 0
    %4297 = vmatpush2.bf16.msra.mxu0 0
    %4298 = vmatprep.mubr.bf16.mxu0 0
    %4299 = vmatmul.mubr.bf16.gmra.mxu0 %v4255
    %v4300 = vpop.f32.mrf.mxu0
    %v4301 = vadd.f32 %v4207, %v4300
    %v4302 = vpop.f32.mrf.mxu0
    %v4303 = vadd.f32 %v4211, %v4302
    %v4304 = vpop.f32.mrf.mxu0
    %v4305 = vadd.f32 %v4207, %v4304
    %v4306 = vpop.f32.mrf.mxu0
    %v4307 = vadd.f32 %v4211, %v4306
    %4308 = vmatprep.mubr.bf16.mxu0 0
    %4309 = vmatmul.mubr.bf16.gmra.mxu0 %v4258
    %v4310 = vpop.f32.mrf.mxu0
    %v4311 = vadd.f32 %v4207, %v4310
    %v4312 = vpop.f32.mrf.mxu0
    %v4313 = vadd.f32 %v4211, %v4312
    %v4314 = vpop.f32.mrf.mxu0
    %v4315 = vadd.f32 %v4207, %v4314
    %v4316 = vpop.f32.mrf.mxu0
    %v4317 = vadd.f32 %v4211, %v4316
    %4318 = vmatprep.mubr.bf16.mxu0 0
    %4319 = vmatmul.mubr.bf16.gmra.mxu0 %v4261
    %v4320 = vpop.f32.mrf.mxu0
    %v4321 = vadd.f32 %v4207, %v4320
    %v4322 = vpop.f32.mrf.mxu0
    %v4323 = vadd.f32 %v4211, %v4322
    %v4324 = vpop.f32.mrf.mxu0
    %v4325 = vadd.f32 %v4207, %v4324
    %v4326 = vpop.f32.mrf.mxu0
    %v4327 = vadd.f32 %v4211, %v4326
    %4328 = vmatprep.mubr.bf16.mxu0 0
    %4329 = vmatmul.mubr.bf16.gmra.mxu0 %v4264
    %v4330 = vpop.f32.mrf.mxu0
    %v4331 = vadd.f32 %v4207, %v4330
    %v4332 = vpop.f32.mrf.mxu0
    %v4333 = vadd.f32 %v4211, %v4332
    %v4334 = vpop.f32.mrf.mxu0
    %v4335 = vadd.f32 %v4207, %v4334
    %v4336 = vpop.f32.mrf.mxu0
    %v4337 = vadd.f32 %v4211, %v4336
    %4338 = vdwg.mxu0
    %v4339 = vmax.f32 %v4301, 0.0
    %v4340 = vmax.f32 %v4303, 0.0
    %v4341 = vmax.f32 %v4305, 0.0
    %v4342 = vmax.f32 %v4307, 0.0
    %v4343 = vmax.f32 %v4311, 0.0
    %v4344 = vmax.f32 %v4313, 0.0
    %v4345 = vmax.f32 %v4315, 0.0
    %v4346 = vmax.f32 %v4317, 0.0
    %v4347 = vmax.f32 %v4321, 0.0
    %v4348 = vmax.f32 %v4323, 0.0
    %v4349 = vmax.f32 %v4325, 0.0
    %v4350 = vmax.f32 %v4327, 0.0
    %v4351 = vmax.f32 %v4331, 0.0
    %v4352 = vmax.f32 %v4333, 0.0
    %v4353 = vmax.f32 %v4335, 0.0
    %v4354 = vmax.f32 %v4337, 0.0
    %v4355 = vpack.c.bf16 %v4341, %v4339
    %v4356 = vpack.c.bf16 %v4342, %v4340
    %v4357 = vpack.c.bf16 %v4345, %v4343
    %v4358 = vpack.c.bf16 %v4346, %v4344
    %v4359 = vpack.c.bf16 %v4349, %v4347
    %v4360 = vpack.c.bf16 %v4350, %v4348
    %v4361 = vpack.c.bf16 %v4353, %v4351
    %v4362 = vpack.c.bf16 %v4354, %v4352
    %v4363 = vld [vmem:[%s7] sm:$0xf]
    %v4364 = vld [vmem:[%s7 + $0x4] sm:$0xf]
    %v4365 = vld [vmem:[%s7 + $0x8] sm:$0xf]
    %v4366 = vld [vmem:[%s7 + $0xc] sm:$0xf]
    %v4367 = vld [vmem:[%s7 + $0x10] sm:$0xf]
    %v4368 = vld [vmem:[%s7 + $0x14] sm:$0xf]
    %v4369 = vld [vmem:[%s7 + $0x18] sm:$0xf]
    %v4370 = vld [vmem:[%s7 + $0x1c] sm:$0xf]
    %v4371 = vld [vmem:[%s7 + $0x20] sm:$0xf]
    %v4372 = vld [vmem:[%s7 + $0x24] sm:$0xf]
    %v4373 = vld [vmem:[%s7 + $0x28] sm:$0xf]
    %v4374 = vld [vmem:[%s7 + $0x2c] sm:$0xf]
    %v4375 = vld [vmem:[%s7 + $0x30] sm:$0xf]
    %v4376 = vld [vmem:[%s7 + $0x34] sm:$0xf]
    %v4377 = vld [vmem:[%s7 + $0x38] sm:$0xf]
    %v4378 = vld [vmem:[%s7 + $0x3c] sm:$0xf]
    %v4379 = vld [vmem:[%s7 + $0x40] sm:$0xf]
    %v4380 = vld [vmem:[%s7 + $0x44] sm:$0xf]
    %v4381 = vld [vmem:[%s7 + $0x48] sm:$0xf]
    %v4382 = vld [vmem:[%s7 + $0x4c] sm:$0xf]
    %v4383 = vld [vmem:[%s7 + $0x50] sm:$0xf]
    %v4384 = vld [vmem:[%s7 + $0x54] sm:$0xf]
    %v4385 = vld [vmem:[%s7 + $0x58] sm:$0xf]
    %v4386 = vld [vmem:[%s7 + $0x5c] sm:$0xf]
    %v4387 = vld [vmem:[%s7 + $0x60] sm:$0xf]
    %v4388 = vld [vmem:[%s7 + $0x64] sm:$0xf]
    %v4389 = vld [vmem:[%s7 + $0x68] sm:$0xf]
    %v4390 = vld [vmem:[%s7 + $0x6c] sm:$0xf]
    %v4391 = vld [vmem:[%s7 + $0x70] sm:$0xf]
    %v4392 = vld [vmem:[%s7 + $0x74] sm:$0xf]
    %v4393 = vld [vmem:[%s7 + $0x78] sm:$0xf]
    %v4394 = vld [vmem:[%s7 + $0x7c] sm:$0xf]
    %v4395 = vld [vmem:[%s8] sm:$0x1]
    %v4397 = vlaneseq
    %v4398 = vshrl.u32 %v4397, 7
    %v4399 = vsub.s32 0, %v4398
    %v4400 = vrot.slane %v4395, %v4399
    %v4434 = vunpack.c.l.b16 %v4363
    %v4435 = vunpack.c.l.b16 %v4364
    %v4436 = vunpack.c.l.b16 %v4365
    %v4437 = vunpack.c.l.b16 %v4366
    %v4438 = vunpack.c.l.b16 %v4367
    %v4439 = vunpack.c.l.b16 %v4368
    %v4440 = vunpack.c.l.b16 %v4369
    %v4441 = vunpack.c.l.b16 %v4370
    %v4442 = vunpack.c.l.b16 %v4371
    %v4443 = vunpack.c.l.b16 %v4372
    %v4444 = vunpack.c.l.b16 %v4373
    %v4445 = vunpack.c.l.b16 %v4374
    %v4446 = vunpack.c.l.b16 %v4375
    %v4447 = vunpack.c.l.b16 %v4376
    %v4448 = vunpack.c.l.b16 %v4377
    %v4449 = vunpack.c.l.b16 %v4378
    %v4450 = vunpack.c.l.b16 %v4379
    %v4451 = vunpack.c.l.b16 %v4380
    %v4452 = vunpack.c.l.b16 %v4381
    %v4453 = vunpack.c.l.b16 %v4382
    %v4454 = vunpack.c.l.b16 %v4383
    %v4455 = vunpack.c.l.b16 %v4384
    %v4456 = vunpack.c.l.b16 %v4385
    %v4457 = vunpack.c.l.b16 %v4386
    %v4458 = vunpack.c.l.b16 %v4387
    %v4459 = vunpack.c.l.b16 %v4388
    %v4460 = vunpack.c.l.b16 %v4389
    %v4461 = vunpack.c.l.b16 %v4390
    %v4462 = vunpack.c.l.b16 %v4391
    %v4463 = vunpack.c.l.b16 %v4392
    %v4464 = vunpack.c.l.b16 %v4393
    %v4465 = vunpack.c.l.b16 %v4394
    %v4466 = vpack.c.b16 %v4435, %v4434
    %v4467 = vpack.c.b16 %v4437, %v4436
    %v4468 = vpack.c.b16 %v4439, %v4438
    %v4469 = vpack.c.b16 %v4441, %v4440
    %v4470 = vpack.c.b16 %v4443, %v4442
    %v4471 = vpack.c.b16 %v4445, %v4444
    %v4472 = vpack.c.b16 %v4447, %v4446
    %v4473 = vpack.c.b16 %v4449, %v4448
    %v4474 = vpack.c.b16 %v4451, %v4450
    %v4475 = vpack.c.b16 %v4453, %v4452
    %v4476 = vpack.c.b16 %v4455, %v4454
    %v4477 = vpack.c.b16 %v4457, %v4456
    %v4478 = vpack.c.b16 %v4459, %v4458
    %v4479 = vpack.c.b16 %v4461, %v4460
    %v4480 = vpack.c.b16 %v4463, %v4462
    %v4481 = vpack.c.b16 %v4465, %v4464
    %4498 = vmatprep.subr.bf16.mxu0 0
    %4499 = vmatpush1.bf16.msra.mxu0 %v4473
    %4500 = vmatprep.subr.bf16.mxu0 0
    %4501 = vmatpush1.bf16.msra.mxu0 %v4472
    %4502 = vmatprep.subr.bf16.mxu0 0
    %4503 = vmatpush1.bf16.msra.mxu0 %v4471
    %4504 = vmatprep.subr.bf16.mxu0 0
    %4505 = vmatpush1.bf16.msra.mxu0 %v4470
    %4506 = vmatprep.subr.bf16.mxu0 0
    %4507 = vmatpush1.bf16.msra.mxu0 %v4469
    %4508 = vmatprep.subr.bf16.mxu0 0
    %4509 = vmatpush1.bf16.msra.mxu0 %v4468
    %4510 = vmatprep.subr.bf16.mxu0 0
    %4511 = vmatpush1.bf16.msra.mxu0 %v4467
    %4512 = vmatprep.subr.bf16.mxu0 0
    %4513 = vmatpush1.bf16.msra.mxu0 %v4466
    %4514 = vmatprep.subr.bf16.mxu0 0
    %4515 = vmatpush2.bf16.msra.mxu0 %v4481
    %4516 = vmatprep.subr.bf16.mxu0 0
    %4517 = vmatpush2.bf16.msra.mxu0 %v4480
    %4518 = vmatprep.subr.bf16.mxu0 0
    %4519 = vmatpush2.bf16.msra.mxu0 %v4479
    %4520 = vmatprep.subr.bf16.mxu0 0
    %4521 = vmatpush2.bf16.msra.mxu0 %v4478
    %4522 = vmatprep.subr.bf16.mxu0 0
    %4523 = vmatpush2.bf16.msra.mxu0 %v4477
    %4524 = vmatprep.subr.bf16.mxu0 0
    %4525 = vmatpush2.bf16.msra.mxu0 %v4476
    %4526 = vmatprep.subr.bf16.mxu0 0
    %4527 = vmatpush2.bf16.msra.mxu0 %v4475
    %4528 = vmatprep.subr.bf16.mxu0 0
    %4529 = vmatpush2.bf16.msra.mxu0 %v4474
    %4530 = vmatprep.mubr.bf16.mxu0 %v4356
    %4531 = vmatmul.mubr.bf16.gmra.mxu0 %v4355
    %v4532 = vpop.f32.mrf.mxu0
    %v4533 = vadd.f32 %v4400, %v4532
    %v4534 = vpop.f32.mrf.mxu0
    %v4535 = vpop.f32.mrf.mxu0
    %v4536 = vadd.f32 %v4400, %v4535
    %v4537 = vpop.f32.mrf.mxu0
    %4538 = vmatprep.mubr.bf16.mxu0 %v4358
    %4539 = vmatmul.mubr.bf16.gmra.mxu0 %v4357
    %v4540 = vpop.f32.mrf.mxu0
    %v4541 = vadd.f32 %v4400, %v4540
    %v4542 = vpop.f32.mrf.mxu0
    %v4543 = vpop.f32.mrf.mxu0
    %v4544 = vadd.f32 %v4400, %v4543
    %v4545 = vpop.f32.mrf.mxu0
    %4546 = vmatprep.mubr.bf16.mxu0 %v4360
    %4547 = vmatmul.mubr.bf16.gmra.mxu0 %v4359
    %v4548 = vpop.f32.mrf.mxu0
    %v4549 = vadd.f32 %v4400, %v4548
    %v4550 = vpop.f32.mrf.mxu0
    %v4551 = vpop.f32.mrf.mxu0
    %v4552 = vadd.f32 %v4400, %v4551
    %v4553 = vpop.f32.mrf.mxu0
    %4554 = vmatprep.mubr.bf16.mxu0 %v4362
    %4555 = vmatmul.mubr.bf16.gmra.mxu0 %v4361
    %v4556 = vpop.f32.mrf.mxu0
    %v4557 = vadd.f32 %v4400, %v4556
    %v4558 = vpop.f32.mrf.mxu0
    %v4559 = vpop.f32.mrf.mxu0
    %v4560 = vadd.f32 %v4400, %v4559
    %v4561 = vpop.f32.mrf.mxu0
    %4562 = vdwg.mxu0
    %v4563 = vadd.f32 %v4182, %v4533
    %v4564 = vadd.f32 %v4183, %v4536
    %v4565 = vadd.f32 %v4184, %v4541
    %v4566 = vadd.f32 %v4185, %v4544
    %v4567 = vadd.f32 %v4186, %v4549
    %v4568 = vadd.f32 %v4187, %v4552
    %v4569 = vadd.f32 %v4188, %v4557
    %v4570 = vadd.f32 %v4189, %v4560
    %v4571 = vld [vmem:[%s11] sm:$0x1]
    %v4572 = vld [vmem:[%s12] sm:$0x1]
    %v4573 = vsel %vm140, %v4563, 0.0
    %4574 = vadd.xlane.f32.xlu0 %v4573
    %v4575 = vpop.xlane.xlu0 %4574
    %v4576 = vsel %vm140, %v4564, 0.0
    %4577 = vadd.xlane.f32.xlu0 %v4576
    %v4578 = vpop.xlane.xlu0 %4577
    %v4579 = vsel %vm140, %v4565, 0.0
    %4580 = vadd.xlane.f32.xlu0 %v4579
    %v4581 = vpop.xlane.xlu0 %4580
    %v4582 = vsel %vm140, %v4566, 0.0
    %4583 = vadd.xlane.f32.xlu0 %v4582
    %v4584 = vpop.xlane.xlu0 %4583
    %v4585 = vsel %vm140, %v4567, 0.0
    %4586 = vadd.xlane.f32.xlu0 %v4585
    %v4587 = vpop.xlane.xlu0 %4586
    %v4588 = vsel %vm140, %v4568, 0.0
    %4589 = vadd.xlane.f32.xlu0 %v4588
    %v4590 = vpop.xlane.xlu0 %4589
    %v4591 = vsel %vm140, %v4569, 0.0
    %4592 = vadd.xlane.f32.xlu0 %v4591
    %v4593 = vpop.xlane.xlu0 %4592
    %v4594 = vsel %vm140, %v4570, 0.0
    %4595 = vadd.xlane.f32.xlu0 %v4594
    %v4596 = vpop.xlane.xlu0 %4595
    %v4597 = vmul.f32 %v4575, %v4081
    %v4598 = vmul.f32 %v4578, %v4081
    %v4599 = vmul.f32 %v4581, %v4081
    %v4600 = vmul.f32 %v4584, %v4081
    %v4601 = vmul.f32 %v4587, %v4081
    %v4602 = vmul.f32 %v4590, %v4081
    %v4603 = vmul.f32 %v4593, %v4081
    %v4604 = vmul.f32 %v4596, %v4081
    %v4605 = vsub.f32 %v4563, %v4597
    %v4606 = vsub.f32 %v4564, %v4598
    %v4607 = vsub.f32 %v4565, %v4599
    %v4608 = vsub.f32 %v4566, %v4600
    %v4609 = vsub.f32 %v4567, %v4601
    %v4610 = vsub.f32 %v4568, %v4602
    %v4611 = vsub.f32 %v4569, %v4603
    %v4612 = vsub.f32 %v4570, %v4604
    %v4613 = vmul.f32 %v4605, %v4605
    %v4614 = vmul.f32 %v4606, %v4606
    %v4615 = vmul.f32 %v4607, %v4607
    %v4616 = vmul.f32 %v4608, %v4608
    %v4617 = vmul.f32 %v4609, %v4609
    %v4618 = vmul.f32 %v4610, %v4610
    %v4619 = vmul.f32 %v4611, %v4611
    %v4620 = vmul.f32 %v4612, %v4612
    %v4621 = vsel %vm140, %v4613, 0.0
    %4622 = vadd.xlane.f32.xlu0 %v4621
    %v4623 = vpop.xlane.xlu0 %4622
    %v4624 = vsel %vm140, %v4614, 0.0
    %4625 = vadd.xlane.f32.xlu0 %v4624
    %v4626 = vpop.xlane.xlu0 %4625
    %v4627 = vsel %vm140, %v4615, 0.0
    %4628 = vadd.xlane.f32.xlu0 %v4627
    %v4629 = vpop.xlane.xlu0 %4628
    %v4630 = vsel %vm140, %v4616, 0.0
    %4631 = vadd.xlane.f32.xlu0 %v4630
    %v4632 = vpop.xlane.xlu0 %4631
    %v4633 = vsel %vm140, %v4617, 0.0
    %4634 = vadd.xlane.f32.xlu0 %v4633
    %v4635 = vpop.xlane.xlu0 %4634
    %v4636 = vsel %vm140, %v4618, 0.0
    %4637 = vadd.xlane.f32.xlu0 %v4636
    %v4638 = vpop.xlane.xlu0 %4637
    %v4639 = vsel %vm140, %v4619, 0.0
    %4640 = vadd.xlane.f32.xlu0 %v4639
    %v4641 = vpop.xlane.xlu0 %4640
    %v4642 = vsel %vm140, %v4620, 0.0
    %4643 = vadd.xlane.f32.xlu0 %v4642
    %v4644 = vpop.xlane.xlu0 %4643
    %v4645 = vmul.f32 %v4623, %v4081
    %v4646 = vmul.f32 %v4626, %v4081
    %v4647 = vmul.f32 %v4629, %v4081
    %v4648 = vmul.f32 %v4632, %v4081
    %v4649 = vmul.f32 %v4635, %v4081
    %v4650 = vmul.f32 %v4638, %v4081
    %v4651 = vmul.f32 %v4641, %v4081
    %v4652 = vmul.f32 %v4644, %v4081
    %v4653 = vadd.f32 %v4645, 1e-05
    %v4654 = vadd.f32 %v4646, 1e-05
    %v4655 = vadd.f32 %v4647, 1e-05
    %v4656 = vadd.f32 %v4648, 1e-05
    %v4657 = vadd.f32 %v4649, 1e-05
    %v4658 = vadd.f32 %v4650, 1e-05
    %v4659 = vadd.f32 %v4651, 1e-05
    %v4660 = vadd.f32 %v4652, 1e-05
    %v4661 = vrsqrt.pop %v4653
    %v4662 = vrsqrt.pop %v4654
    %v4663 = vrsqrt.pop %v4655
    %v4664 = vrsqrt.pop %v4656
    %v4665 = vrsqrt.pop %v4657
    %v4666 = vrsqrt.pop %v4658
    %v4667 = vrsqrt.pop %v4659
    %v4668 = vrsqrt.pop %v4660
    %v4669 = vmul.f32 %v4605, %v4661
    %v4670 = vmul.f32 %v4606, %v4662
    %v4671 = vmul.f32 %v4607, %v4663
    %v4672 = vmul.f32 %v4608, %v4664
    %v4673 = vmul.f32 %v4609, %v4665
    %v4674 = vmul.f32 %v4610, %v4666
    %v4675 = vmul.f32 %v4611, %v4667
    %v4676 = vmul.f32 %v4612, %v4668
    %v4678 = vlaneseq
    %v4679 = vshrl.u32 %v4678, 7
    %v4680 = vsub.s32 0, %v4679
    %v4681 = vrot.slane %v4571, %v4680
    %v4683 = vmul.f32 %v4669, %v4681
    %v4684 = vmul.f32 %v4670, %v4681
    %v4685 = vmul.f32 %v4671, %v4681
    %v4686 = vmul.f32 %v4672, %v4681
    %v4687 = vmul.f32 %v4673, %v4681
    %v4688 = vmul.f32 %v4674, %v4681
    %v4689 = vmul.f32 %v4675, %v4681
    %v4690 = vmul.f32 %v4676, %v4681
    %v4692 = vlaneseq
    %v4693 = vshrl.u32 %v4692, 7
    %v4694 = vsub.s32 0, %v4693
    %v4695 = vrot.slane %v4572, %v4694
    %v4697 = vadd.f32 %v4683, %v4695
    %v4698 = vadd.f32 %v4684, %v4695
    %v4699 = vadd.f32 %v4685, %v4695
    %v4700 = vadd.f32 %v4686, %v4695
    %v4701 = vadd.f32 %v4687, %v4695
    %v4702 = vadd.f32 %v4688, %v4695
    %v4703 = vadd.f32 %v4689, %v4695
    %v4704 = vadd.f32 %v4690, %v4695
    %v4705 = vpack.c.bf16 %v4698, %v4697
    %v4706 = vpack.c.bf16 %v4700, %v4699
    %v4707 = vpack.c.bf16 %v4702, %v4701
    %v4708 = vpack.c.bf16 %v4704, %v4703
    %s4709 = scalar_lea.vmem %s1, 64
    %v4710 = vld [vmem:[%s4709] sm:$0xff]
    %v4711 = vld [vmem:[%s4709 + $0x8] sm:$0xff]
    %v4712 = vld [vmem:[%s4709 + $0x10] sm:$0xff]
    %v4713 = vld [vmem:[%s4709 + $0x18] sm:$0xff]
    %v4714 = vld [vmem:[%s4709 + $0x20] sm:$0xff]
    %v4715 = vld [vmem:[%s4709 + $0x28] sm:$0xff]
    %v4716 = vld [vmem:[%s4709 + $0x30] sm:$0xff]
    %v4717 = vld [vmem:[%s4709 + $0x38] sm:$0xff]
    %s4718 = scalar_lea.vmem %s2, 2
    %v4719 = vld [vmem:[%s4718] sm:$0x3]
    %v4721 = vlaneseq
    %v4722 = vshrl.u32 %v4721, 7
    %v4723 = vsub.s32 0, %v4722
    %v4724 = vrot.slane %v4719, %v4723
    %v4725 = vlaneseq
    %v4726 = vshrl.u32 %v4725, 7
    %v4727 = vsub.s32 1, %v4726
    %v4728 = vrot.slane %v4719, %v4727
    %v4739 = vunpack.c.l.b16 %v4710
    %v4740 = vunpack.c.h.b16 %v4710
    %v4741 = vunpack.c.l.b16 %v4711
    %v4742 = vunpack.c.h.b16 %v4711
    %v4743 = vunpack.c.l.b16 %v4712
    %v4744 = vunpack.c.h.b16 %v4712
    %v4745 = vunpack.c.l.b16 %v4713
    %v4746 = vunpack.c.h.b16 %v4713
    %v4747 = vunpack.c.l.b16 %v4714
    %v4748 = vunpack.c.h.b16 %v4714
    %v4749 = vunpack.c.l.b16 %v4715
    %v4750 = vunpack.c.h.b16 %v4715
    %v4751 = vunpack.c.l.b16 %v4716
    %v4752 = vunpack.c.h.b16 %v4716
    %v4753 = vunpack.c.l.b16 %v4717
    %v4754 = vunpack.c.h.b16 %v4717
    %v4755 = vpack.c.b16 %v4741, %v4739
    %v4756 = vpack.c.b16 %v4742, %v4740
    %v4757 = vpack.c.b16 %v4745, %v4743
    %v4758 = vpack.c.b16 %v4746, %v4744
    %v4759 = vpack.c.b16 %v4749, %v4747
    %v4760 = vpack.c.b16 %v4750, %v4748
    %v4761 = vpack.c.b16 %v4753, %v4751
    %v4762 = vpack.c.b16 %v4754, %v4752
    %v4772 = vsel %vm140, %v4705, 0
    %v4775 = vsel %vm140, %v4706, 0
    %v4778 = vsel %vm140, %v4707, 0
    %v4781 = vsel %vm140, %v4708, 0
    %4783 = vmatprep.subr.bf16.mxu0 0
    %4784 = vmatpush1.bf16.msra.mxu0 0
    %4785 = vmatprep.subr.bf16.mxu0 0
    %4786 = vmatpush1.bf16.msra.mxu0 0
    %4787 = vmatprep.subr.bf16.mxu0 0
    %4788 = vmatpush1.bf16.msra.mxu0 0
    %4789 = vmatprep.subr.bf16.mxu0 0
    %4790 = vmatpush1.bf16.msra.mxu0 0
    %4791 = vmatprep.subr.bf16.mxu0 %v4762
    %4792 = vmatpush1.bf16.msra.mxu0 %v4761
    %4793 = vmatprep.subr.bf16.mxu0 %v4760
    %4794 = vmatpush1.bf16.msra.mxu0 %v4759
    %4795 = vmatprep.subr.bf16.mxu0 %v4758
    %4796 = vmatpush1.bf16.msra.mxu0 %v4757
    %4797 = vmatprep.subr.bf16.mxu0 %v4756
    %4798 = vmatpush1.bf16.msra.mxu0 %v4755
    %4799 = vmatprep.subr.bf16.mxu0 0
    %4800 = vmatpush2.bf16.msra.mxu0 0
    %4801 = vmatprep.subr.bf16.mxu0 0
    %4802 = vmatpush2.bf16.msra.mxu0 0
    %4803 = vmatprep.subr.bf16.mxu0 0
    %4804 = vmatpush2.bf16.msra.mxu0 0
    %4805 = vmatprep.subr.bf16.mxu0 0
    %4806 = vmatpush2.bf16.msra.mxu0 0
    %4807 = vmatprep.subr.bf16.mxu0 0
    %4808 = vmatpush2.bf16.msra.mxu0 0
    %4809 = vmatprep.subr.bf16.mxu0 0
    %4810 = vmatpush2.bf16.msra.mxu0 0
    %4811 = vmatprep.subr.bf16.mxu0 0
    %4812 = vmatpush2.bf16.msra.mxu0 0
    %4813 = vmatprep.subr.bf16.mxu0 0
    %4814 = vmatpush2.bf16.msra.mxu0 0
    %4815 = vmatprep.mubr.bf16.mxu0 0
    %4816 = vmatmul.mubr.bf16.gmra.mxu0 %v4772
    %v4817 = vpop.f32.mrf.mxu0
    %v4818 = vadd.f32 %v4724, %v4817
    %v4819 = vpop.f32.mrf.mxu0
    %v4820 = vadd.f32 %v4728, %v4819
    %v4821 = vpop.f32.mrf.mxu0
    %v4822 = vadd.f32 %v4724, %v4821
    %v4823 = vpop.f32.mrf.mxu0
    %v4824 = vadd.f32 %v4728, %v4823
    %4825 = vmatprep.mubr.bf16.mxu0 0
    %4826 = vmatmul.mubr.bf16.gmra.mxu0 %v4775
    %v4827 = vpop.f32.mrf.mxu0
    %v4828 = vadd.f32 %v4724, %v4827
    %v4829 = vpop.f32.mrf.mxu0
    %v4830 = vadd.f32 %v4728, %v4829
    %v4831 = vpop.f32.mrf.mxu0
    %v4832 = vadd.f32 %v4724, %v4831
    %v4833 = vpop.f32.mrf.mxu0
    %v4834 = vadd.f32 %v4728, %v4833
    %4835 = vmatprep.mubr.bf16.mxu0 0
    %4836 = vmatmul.mubr.bf16.gmra.mxu0 %v4778
    %v4837 = vpop.f32.mrf.mxu0
    %v4838 = vadd.f32 %v4724, %v4837
    %v4839 = vpop.f32.mrf.mxu0
    %v4840 = vadd.f32 %v4728, %v4839
    %v4841 = vpop.f32.mrf.mxu0
    %v4842 = vadd.f32 %v4724, %v4841
    %v4843 = vpop.f32.mrf.mxu0
    %v4844 = vadd.f32 %v4728, %v4843
    %4845 = vmatprep.mubr.bf16.mxu0 0
    %4846 = vmatmul.mubr.bf16.gmra.mxu0 %v4781
    %v4847 = vpop.f32.mrf.mxu0
    %v4848 = vadd.f32 %v4724, %v4847
    %v4849 = vpop.f32.mrf.mxu0
    %v4850 = vadd.f32 %v4728, %v4849
    %v4851 = vpop.f32.mrf.mxu0
    %v4852 = vadd.f32 %v4724, %v4851
    %v4853 = vpop.f32.mrf.mxu0
    %v4854 = vadd.f32 %v4728, %v4853
    %4855 = vdwg.mxu0
    %v4856 = vpack.c.bf16 %v4818, %v4818
    %v4857 = vpack.c.bf16 %v4822, %v4822
    %v4858 = vpack.c.bf16 %v4828, %v4828
    %v4859 = vpack.c.bf16 %v4832, %v4832
    %v4860 = vpack.c.bf16 %v4838, %v4838
    %v4861 = vpack.c.bf16 %v4842, %v4842
    %v4862 = vpack.c.bf16 %v4848, %v4848
    %v4863 = vpack.c.bf16 %v4852, %v4852
    %v4864 = vpack.c.bf16 %v4820, %v4820
    %v4865 = vpack.c.bf16 %v4824, %v4824
    %v4866 = vpack.c.bf16 %v4830, %v4830
    %v4867 = vpack.c.bf16 %v4834, %v4834
    %v4868 = vpack.c.bf16 %v4840, %v4840
    %v4869 = vpack.c.bf16 %v4844, %v4844
    %v4870 = vpack.c.bf16 %v4850, %v4850
    %v4871 = vpack.c.bf16 %v4854, %v4854
    %4873 = vrot.lane.b32.xlu0 %v4856, 64
    %v4874 = vpop.permute.xlu0 %4873
    %v4876 = vsel %vm245, %v4856, 0
    %v4879 = vsel %vm245, %v4874, 0
    %4881 = vmatprep.subr.bf16.mxu0 0
    %4882 = vmatpush1.bf16.xpose.msra.mxu0 0
    %4883 = vmatprep.subr.bf16.mxu0 0
    %4884 = vmatpush1.bf16.xpose.msra.mxu0 0
    %4885 = vmatprep.subr.bf16.mxu0 0
    %4886 = vmatpush1.bf16.xpose.msra.mxu0 0
    %4887 = vmatprep.subr.bf16.mxu0 0
    %4888 = vmatpush1.bf16.xpose.msra.mxu0 0
    %4889 = vmatprep.subr.bf16.mxu0 0
    %4890 = vmatpush1.bf16.xpose.msra.mxu0 0
    %4891 = vmatprep.subr.bf16.mxu0 0
    %4892 = vmatpush1.bf16.xpose.msra.mxu0 0
    %4893 = vmatprep.subr.bf16.mxu0 0
    %4894 = vmatpush1.bf16.xpose.msra.mxu0 0
    %4895 = vmatprep.subr.bf16.mxu0 0
    %4896 = vmatpush1.bf16.xpose.msra.mxu0 %v4879
    %4897 = vmatprep.subr.bf16.mxu0 0
    %4898 = vmatpush2.bf16.xpose.msra.mxu0 0
    %4899 = vmatprep.subr.bf16.mxu0 0
    %4900 = vmatpush2.bf16.xpose.msra.mxu0 0
    %4901 = vmatprep.subr.bf16.mxu0 0
    %4902 = vmatpush2.bf16.xpose.msra.mxu0 0
    %4903 = vmatprep.subr.bf16.mxu0 0
    %4904 = vmatpush2.bf16.xpose.msra.mxu0 0
    %4905 = vmatprep.subr.bf16.mxu0 0
    %4906 = vmatpush2.bf16.xpose.msra.mxu0 0
    %4907 = vmatprep.subr.bf16.mxu0 0
    %4908 = vmatpush2.bf16.xpose.msra.mxu0 0
    %4909 = vmatprep.subr.bf16.mxu0 0
    %4910 = vmatpush2.bf16.xpose.msra.mxu0 0
    %4911 = vmatprep.subr.bf16.mxu0 0
    %4912 = vmatpush2.bf16.xpose.msra.mxu0 0
    %4913 = vmatprep.mubr.bf16.mxu0 0
    %4914 = vmatmul.mubr.bf16.gmra.mxu0 %v4876
    %v4915 = vpop.f32.mrf.mxu0
    %v4916 = vadd.f32 0.0, %v4915
    %v4917 = vpop.f32.mrf.mxu0
    %v4918 = vpop.f32.mrf.mxu0
    %v4919 = vpop.f32.mrf.mxu0
    %4920 = vdwg.mxu0
    %4922 = vrot.lane.b32.xlu0 %v4857, 64
    %v4923 = vpop.permute.xlu0 %4922
    %v4925 = vsel %vm245, %v4857, 0
    %v4928 = vsel %vm245, %v4923, 0
    %4930 = vmatprep.subr.bf16.mxu0 0
    %4931 = vmatpush1.bf16.xpose.msra.mxu0 0
    %4932 = vmatprep.subr.bf16.mxu0 0
    %4933 = vmatpush1.bf16.xpose.msra.mxu0 0
    %4934 = vmatprep.subr.bf16.mxu0 0
    %4935 = vmatpush1.bf16.xpose.msra.mxu0 0
    %4936 = vmatprep.subr.bf16.mxu0 0
    %4937 = vmatpush1.bf16.xpose.msra.mxu0 0
    %4938 = vmatprep.subr.bf16.mxu0 0
    %4939 = vmatpush1.bf16.xpose.msra.mxu0 0
    %4940 = vmatprep.subr.bf16.mxu0 0
    %4941 = vmatpush1.bf16.xpose.msra.mxu0 0
    %4942 = vmatprep.subr.bf16.mxu0 0
    %4943 = vmatpush1.bf16.xpose.msra.mxu0 0
    %4944 = vmatprep.subr.bf16.mxu0 0
    %4945 = vmatpush1.bf16.xpose.msra.mxu0 %v4928
    %4946 = vmatprep.subr.bf16.mxu0 0
    %4947 = vmatpush2.bf16.xpose.msra.mxu0 0
    %4948 = vmatprep.subr.bf16.mxu0 0
    %4949 = vmatpush2.bf16.xpose.msra.mxu0 0
    %4950 = vmatprep.subr.bf16.mxu0 0
    %4951 = vmatpush2.bf16.xpose.msra.mxu0 0
    %4952 = vmatprep.subr.bf16.mxu0 0
    %4953 = vmatpush2.bf16.xpose.msra.mxu0 0
    %4954 = vmatprep.subr.bf16.mxu0 0
    %4955 = vmatpush2.bf16.xpose.msra.mxu0 0
    %4956 = vmatprep.subr.bf16.mxu0 0
    %4957 = vmatpush2.bf16.xpose.msra.mxu0 0
    %4958 = vmatprep.subr.bf16.mxu0 0
    %4959 = vmatpush2.bf16.xpose.msra.mxu0 0
    %4960 = vmatprep.subr.bf16.mxu0 0
    %4961 = vmatpush2.bf16.xpose.msra.mxu0 0
    %4962 = vmatprep.mubr.bf16.mxu0 0
    %4963 = vmatmul.mubr.bf16.gmra.mxu0 %v4925
    %v4964 = vpop.f32.mrf.mxu0
    %v4965 = vadd.f32 0.0, %v4964
    %v4966 = vpop.f32.mrf.mxu0
    %v4967 = vpop.f32.mrf.mxu0
    %v4968 = vpop.f32.mrf.mxu0
    %4969 = vdwg.mxu0
    %4971 = vrot.lane.b32.xlu0 %v4858, 64
    %v4972 = vpop.permute.xlu0 %4971
    %v4974 = vsel %vm245, %v4858, 0
    %v4977 = vsel %vm245, %v4972, 0
    %4979 = vmatprep.subr.bf16.mxu0 0
    %4980 = vmatpush1.bf16.xpose.msra.mxu0 0
    %4981 = vmatprep.subr.bf16.mxu0 0
    %4982 = vmatpush1.bf16.xpose.msra.mxu0 0
    %4983 = vmatprep.subr.bf16.mxu0 0
    %4984 = vmatpush1.bf16.xpose.msra.mxu0 0
    %4985 = vmatprep.subr.bf16.mxu0 0
    %4986 = vmatpush1.bf16.xpose.msra.mxu0 0
    %4987 = vmatprep.subr.bf16.mxu0 0
    %4988 = vmatpush1.bf16.xpose.msra.mxu0 0
    %4989 = vmatprep.subr.bf16.mxu0 0
    %4990 = vmatpush1.bf16.xpose.msra.mxu0 0
    %4991 = vmatprep.subr.bf16.mxu0 0
    %4992 = vmatpush1.bf16.xpose.msra.mxu0 0
    %4993 = vmatprep.subr.bf16.mxu0 0
    %4994 = vmatpush1.bf16.xpose.msra.mxu0 %v4977
    %4995 = vmatprep.subr.bf16.mxu0 0
    %4996 = vmatpush2.bf16.xpose.msra.mxu0 0
    %4997 = vmatprep.subr.bf16.mxu0 0
    %4998 = vmatpush2.bf16.xpose.msra.mxu0 0
    %4999 = vmatprep.subr.bf16.mxu0 0
    %5000 = vmatpush2.bf16.xpose.msra.mxu0 0
    %5001 = vmatprep.subr.bf16.mxu0 0
    %5002 = vmatpush2.bf16.xpose.msra.mxu0 0
    %5003 = vmatprep.subr.bf16.mxu0 0
    %5004 = vmatpush2.bf16.xpose.msra.mxu0 0
    %5005 = vmatprep.subr.bf16.mxu0 0
    %5006 = vmatpush2.bf16.xpose.msra.mxu0 0
    %5007 = vmatprep.subr.bf16.mxu0 0
    %5008 = vmatpush2.bf16.xpose.msra.mxu0 0
    %5009 = vmatprep.subr.bf16.mxu0 0
    %5010 = vmatpush2.bf16.xpose.msra.mxu0 0
    %5011 = vmatprep.mubr.bf16.mxu0 0
    %5012 = vmatmul.mubr.bf16.gmra.mxu0 %v4974
    %v5013 = vpop.f32.mrf.mxu0
    %v5014 = vadd.f32 0.0, %v5013
    %v5015 = vpop.f32.mrf.mxu0
    %v5016 = vpop.f32.mrf.mxu0
    %v5017 = vpop.f32.mrf.mxu0
    %5018 = vdwg.mxu0
    %5020 = vrot.lane.b32.xlu0 %v4859, 64
    %v5021 = vpop.permute.xlu0 %5020
    %v5023 = vsel %vm245, %v4859, 0
    %v5026 = vsel %vm245, %v5021, 0
    %5028 = vmatprep.subr.bf16.mxu0 0
    %5029 = vmatpush1.bf16.xpose.msra.mxu0 0
    %5030 = vmatprep.subr.bf16.mxu0 0
    %5031 = vmatpush1.bf16.xpose.msra.mxu0 0
    %5032 = vmatprep.subr.bf16.mxu0 0
    %5033 = vmatpush1.bf16.xpose.msra.mxu0 0
    %5034 = vmatprep.subr.bf16.mxu0 0
    %5035 = vmatpush1.bf16.xpose.msra.mxu0 0
    %5036 = vmatprep.subr.bf16.mxu0 0
    %5037 = vmatpush1.bf16.xpose.msra.mxu0 0
    %5038 = vmatprep.subr.bf16.mxu0 0
    %5039 = vmatpush1.bf16.xpose.msra.mxu0 0
    %5040 = vmatprep.subr.bf16.mxu0 0
    %5041 = vmatpush1.bf16.xpose.msra.mxu0 0
    %5042 = vmatprep.subr.bf16.mxu0 0
    %5043 = vmatpush1.bf16.xpose.msra.mxu0 %v5026
    %5044 = vmatprep.subr.bf16.mxu0 0
    %5045 = vmatpush2.bf16.xpose.msra.mxu0 0
    %5046 = vmatprep.subr.bf16.mxu0 0
    %5047 = vmatpush2.bf16.xpose.msra.mxu0 0
    %5048 = vmatprep.subr.bf16.mxu0 0
    %5049 = vmatpush2.bf16.xpose.msra.mxu0 0
    %5050 = vmatprep.subr.bf16.mxu0 0
    %5051 = vmatpush2.bf16.xpose.msra.mxu0 0
    %5052 = vmatprep.subr.bf16.mxu0 0
    %5053 = vmatpush2.bf16.xpose.msra.mxu0 0
    %5054 = vmatprep.subr.bf16.mxu0 0
    %5055 = vmatpush2.bf16.xpose.msra.mxu0 0
    %5056 = vmatprep.subr.bf16.mxu0 0
    %5057 = vmatpush2.bf16.xpose.msra.mxu0 0
    %5058 = vmatprep.subr.bf16.mxu0 0
    %5059 = vmatpush2.bf16.xpose.msra.mxu0 0
    %5060 = vmatprep.mubr.bf16.mxu0 0
    %5061 = vmatmul.mubr.bf16.gmra.mxu0 %v5023
    %v5062 = vpop.f32.mrf.mxu0
    %v5063 = vadd.f32 0.0, %v5062
    %v5064 = vpop.f32.mrf.mxu0
    %v5065 = vpop.f32.mrf.mxu0
    %v5066 = vpop.f32.mrf.mxu0
    %5067 = vdwg.mxu0
    %5069 = vrot.lane.b32.xlu0 %v4860, 64
    %v5070 = vpop.permute.xlu0 %5069
    %v5072 = vsel %vm245, %v4860, 0
    %v5075 = vsel %vm245, %v5070, 0
    %5077 = vmatprep.subr.bf16.mxu0 0
    %5078 = vmatpush1.bf16.xpose.msra.mxu0 0
    %5079 = vmatprep.subr.bf16.mxu0 0
    %5080 = vmatpush1.bf16.xpose.msra.mxu0 0
    %5081 = vmatprep.subr.bf16.mxu0 0
    %5082 = vmatpush1.bf16.xpose.msra.mxu0 0
    %5083 = vmatprep.subr.bf16.mxu0 0
    %5084 = vmatpush1.bf16.xpose.msra.mxu0 0
    %5085 = vmatprep.subr.bf16.mxu0 0
    %5086 = vmatpush1.bf16.xpose.msra.mxu0 0
    %5087 = vmatprep.subr.bf16.mxu0 0
    %5088 = vmatpush1.bf16.xpose.msra.mxu0 0
    %5089 = vmatprep.subr.bf16.mxu0 0
    %5090 = vmatpush1.bf16.xpose.msra.mxu0 0
    %5091 = vmatprep.subr.bf16.mxu0 0
    %5092 = vmatpush1.bf16.xpose.msra.mxu0 %v5075
    %5093 = vmatprep.subr.bf16.mxu0 0
    %5094 = vmatpush2.bf16.xpose.msra.mxu0 0
    %5095 = vmatprep.subr.bf16.mxu0 0
    %5096 = vmatpush2.bf16.xpose.msra.mxu0 0
    %5097 = vmatprep.subr.bf16.mxu0 0
    %5098 = vmatpush2.bf16.xpose.msra.mxu0 0
    %5099 = vmatprep.subr.bf16.mxu0 0
    %5100 = vmatpush2.bf16.xpose.msra.mxu0 0
    %5101 = vmatprep.subr.bf16.mxu0 0
    %5102 = vmatpush2.bf16.xpose.msra.mxu0 0
    %5103 = vmatprep.subr.bf16.mxu0 0
    %5104 = vmatpush2.bf16.xpose.msra.mxu0 0
    %5105 = vmatprep.subr.bf16.mxu0 0
    %5106 = vmatpush2.bf16.xpose.msra.mxu0 0
    %5107 = vmatprep.subr.bf16.mxu0 0
    %5108 = vmatpush2.bf16.xpose.msra.mxu0 0
    %5109 = vmatprep.mubr.bf16.mxu0 0
    %5110 = vmatmul.mubr.bf16.gmra.mxu0 %v5072
    %v5111 = vpop.f32.mrf.mxu0
    %v5112 = vadd.f32 0.0, %v5111
    %v5113 = vpop.f32.mrf.mxu0
    %v5114 = vpop.f32.mrf.mxu0
    %v5115 = vpop.f32.mrf.mxu0
    %5116 = vdwg.mxu0
    %5118 = vrot.lane.b32.xlu0 %v4861, 64
    %v5119 = vpop.permute.xlu0 %5118
    %v5121 = vsel %vm245, %v4861, 0
    %v5124 = vsel %vm245, %v5119, 0
    %5126 = vmatprep.subr.bf16.mxu0 0
    %5127 = vmatpush1.bf16.xpose.msra.mxu0 0
    %5128 = vmatprep.subr.bf16.mxu0 0
    %5129 = vmatpush1.bf16.xpose.msra.mxu0 0
    %5130 = vmatprep.subr.bf16.mxu0 0
    %5131 = vmatpush1.bf16.xpose.msra.mxu0 0
    %5132 = vmatprep.subr.bf16.mxu0 0
    %5133 = vmatpush1.bf16.xpose.msra.mxu0 0
    %5134 = vmatprep.subr.bf16.mxu0 0
    %5135 = vmatpush1.bf16.xpose.msra.mxu0 0
    %5136 = vmatprep.subr.bf16.mxu0 0
    %5137 = vmatpush1.bf16.xpose.msra.mxu0 0
    %5138 = vmatprep.subr.bf16.mxu0 0
    %5139 = vmatpush1.bf16.xpose.msra.mxu0 0
    %5140 = vmatprep.subr.bf16.mxu0 0
    %5141 = vmatpush1.bf16.xpose.msra.mxu0 %v5124
    %5142 = vmatprep.subr.bf16.mxu0 0
    %5143 = vmatpush2.bf16.xpose.msra.mxu0 0
    %5144 = vmatprep.subr.bf16.mxu0 0
    %5145 = vmatpush2.bf16.xpose.msra.mxu0 0
    %5146 = vmatprep.subr.bf16.mxu0 0
    %5147 = vmatpush2.bf16.xpose.msra.mxu0 0
    %5148 = vmatprep.subr.bf16.mxu0 0
    %5149 = vmatpush2.bf16.xpose.msra.mxu0 0
    %5150 = vmatprep.subr.bf16.mxu0 0
    %5151 = vmatpush2.bf16.xpose.msra.mxu0 0
    %5152 = vmatprep.subr.bf16.mxu0 0
    %5153 = vmatpush2.bf16.xpose.msra.mxu0 0
    %5154 = vmatprep.subr.bf16.mxu0 0
    %5155 = vmatpush2.bf16.xpose.msra.mxu0 0
    %5156 = vmatprep.subr.bf16.mxu0 0
    %5157 = vmatpush2.bf16.xpose.msra.mxu0 0
    %5158 = vmatprep.mubr.bf16.mxu0 0
    %5159 = vmatmul.mubr.bf16.gmra.mxu0 %v5121
    %v5160 = vpop.f32.mrf.mxu0
    %v5161 = vadd.f32 0.0, %v5160
    %v5162 = vpop.f32.mrf.mxu0
    %v5163 = vpop.f32.mrf.mxu0
    %v5164 = vpop.f32.mrf.mxu0
    %5165 = vdwg.mxu0
    %5167 = vrot.lane.b32.xlu0 %v4862, 64
    %v5168 = vpop.permute.xlu0 %5167
    %v5170 = vsel %vm245, %v4862, 0
    %v5173 = vsel %vm245, %v5168, 0
    %5175 = vmatprep.subr.bf16.mxu0 0
    %5176 = vmatpush1.bf16.xpose.msra.mxu0 0
    %5177 = vmatprep.subr.bf16.mxu0 0
    %5178 = vmatpush1.bf16.xpose.msra.mxu0 0
    %5179 = vmatprep.subr.bf16.mxu0 0
    %5180 = vmatpush1.bf16.xpose.msra.mxu0 0
    %5181 = vmatprep.subr.bf16.mxu0 0
    %5182 = vmatpush1.bf16.xpose.msra.mxu0 0
    %5183 = vmatprep.subr.bf16.mxu0 0
    %5184 = vmatpush1.bf16.xpose.msra.mxu0 0
    %5185 = vmatprep.subr.bf16.mxu0 0
    %5186 = vmatpush1.bf16.xpose.msra.mxu0 0
    %5187 = vmatprep.subr.bf16.mxu0 0
    %5188 = vmatpush1.bf16.xpose.msra.mxu0 0
    %5189 = vmatprep.subr.bf16.mxu0 0
    %5190 = vmatpush1.bf16.xpose.msra.mxu0 %v5173
    %5191 = vmatprep.subr.bf16.mxu0 0
    %5192 = vmatpush2.bf16.xpose.msra.mxu0 0
    %5193 = vmatprep.subr.bf16.mxu0 0
    %5194 = vmatpush2.bf16.xpose.msra.mxu0 0
    %5195 = vmatprep.subr.bf16.mxu0 0
    %5196 = vmatpush2.bf16.xpose.msra.mxu0 0
    %5197 = vmatprep.subr.bf16.mxu0 0
    %5198 = vmatpush2.bf16.xpose.msra.mxu0 0
    %5199 = vmatprep.subr.bf16.mxu0 0
    %5200 = vmatpush2.bf16.xpose.msra.mxu0 0
    %5201 = vmatprep.subr.bf16.mxu0 0
    %5202 = vmatpush2.bf16.xpose.msra.mxu0 0
    %5203 = vmatprep.subr.bf16.mxu0 0
    %5204 = vmatpush2.bf16.xpose.msra.mxu0 0
    %5205 = vmatprep.subr.bf16.mxu0 0
    %5206 = vmatpush2.bf16.xpose.msra.mxu0 0
    %5207 = vmatprep.mubr.bf16.mxu0 0
    %5208 = vmatmul.mubr.bf16.gmra.mxu0 %v5170
    %v5209 = vpop.f32.mrf.mxu0
    %v5210 = vadd.f32 0.0, %v5209
    %v5211 = vpop.f32.mrf.mxu0
    %v5212 = vpop.f32.mrf.mxu0
    %v5213 = vpop.f32.mrf.mxu0
    %5214 = vdwg.mxu0
    %5216 = vrot.lane.b32.xlu0 %v4863, 64
    %v5217 = vpop.permute.xlu0 %5216
    %v5219 = vsel %vm245, %v4863, 0
    %v5222 = vsel %vm245, %v5217, 0
    %5224 = vmatprep.subr.bf16.mxu0 0
    %5225 = vmatpush1.bf16.xpose.msra.mxu0 0
    %5226 = vmatprep.subr.bf16.mxu0 0
    %5227 = vmatpush1.bf16.xpose.msra.mxu0 0
    %5228 = vmatprep.subr.bf16.mxu0 0
    %5229 = vmatpush1.bf16.xpose.msra.mxu0 0
    %5230 = vmatprep.subr.bf16.mxu0 0
    %5231 = vmatpush1.bf16.xpose.msra.mxu0 0
    %5232 = vmatprep.subr.bf16.mxu0 0
    %5233 = vmatpush1.bf16.xpose.msra.mxu0 0
    %5234 = vmatprep.subr.bf16.mxu0 0
    %5235 = vmatpush1.bf16.xpose.msra.mxu0 0
    %5236 = vmatprep.subr.bf16.mxu0 0
    %5237 = vmatpush1.bf16.xpose.msra.mxu0 0
    %5238 = vmatprep.subr.bf16.mxu0 0
    %5239 = vmatpush1.bf16.xpose.msra.mxu0 %v5222
    %5240 = vmatprep.subr.bf16.mxu0 0
    %5241 = vmatpush2.bf16.xpose.msra.mxu0 0
    %5242 = vmatprep.subr.bf16.mxu0 0
    %5243 = vmatpush2.bf16.xpose.msra.mxu0 0
    %5244 = vmatprep.subr.bf16.mxu0 0
    %5245 = vmatpush2.bf16.xpose.msra.mxu0 0
    %5246 = vmatprep.subr.bf16.mxu0 0
    %5247 = vmatpush2.bf16.xpose.msra.mxu0 0
    %5248 = vmatprep.subr.bf16.mxu0 0
    %5249 = vmatpush2.bf16.xpose.msra.mxu0 0
    %5250 = vmatprep.subr.bf16.mxu0 0
    %5251 = vmatpush2.bf16.xpose.msra.mxu0 0
    %5252 = vmatprep.subr.bf16.mxu0 0
    %5253 = vmatpush2.bf16.xpose.msra.mxu0 0
    %5254 = vmatprep.subr.bf16.mxu0 0
    %5255 = vmatpush2.bf16.xpose.msra.mxu0 0
    %5256 = vmatprep.mubr.bf16.mxu0 0
    %5257 = vmatmul.mubr.bf16.gmra.mxu0 %v5219
    %v5258 = vpop.f32.mrf.mxu0
    %v5259 = vadd.f32 0.0, %v5258
    %v5260 = vpop.f32.mrf.mxu0
    %v5261 = vpop.f32.mrf.mxu0
    %v5262 = vpop.f32.mrf.mxu0
    %5263 = vdwg.mxu0
    %v5264 = vsel %vm635, %v4916, -inf
    %5265 = vmax.xlane.f32.xlu0 %v5264
    %v5266 = vpop.xlane.xlu0 %5265
    %v5267 = vsel %vm635, %v4965, -inf
    %5268 = vmax.xlane.f32.xlu0 %v5267
    %v5269 = vpop.xlane.xlu0 %5268
    %v5270 = vsel %vm635, %v5014, -inf
    %5271 = vmax.xlane.f32.xlu0 %v5270
    %v5272 = vpop.xlane.xlu0 %5271
    %v5273 = vsel %vm635, %v5063, -inf
    %5274 = vmax.xlane.f32.xlu0 %v5273
    %v5275 = vpop.xlane.xlu0 %5274
    %v5276 = vsel %vm635, %v5112, -inf
    %5277 = vmax.xlane.f32.xlu0 %v5276
    %v5278 = vpop.xlane.xlu0 %5277
    %v5279 = vsel %vm635, %v5161, -inf
    %5280 = vmax.xlane.f32.xlu0 %v5279
    %v5281 = vpop.xlane.xlu0 %5280
    %v5282 = vsel %vm635, %v5210, -inf
    %5283 = vmax.xlane.f32.xlu0 %v5282
    %v5284 = vpop.xlane.xlu0 %5283
    %v5285 = vsel %vm635, %v5259, -inf
    %5286 = vmax.xlane.f32.xlu0 %v5285
    %v5287 = vpop.xlane.xlu0 %5286
    %v5288 = vsub.f32 %v4916, %v5266
    %v5289 = vsub.f32 %v4965, %v5269
    %v5290 = vsub.f32 %v5014, %v5272
    %v5291 = vsub.f32 %v5063, %v5275
    %v5292 = vsub.f32 %v5112, %v5278
    %v5293 = vsub.f32 %v5161, %v5281
    %v5294 = vsub.f32 %v5210, %v5284
    %v5295 = vsub.f32 %v5259, %v5287
    %v5296 = vmul.f32 %v5288, 1.442695
    %v5297 = vpow.pop %v5296
    %v5298 = vmul.f32 %v5289, 1.442695
    %v5299 = vpow.pop %v5298
    %v5300 = vmul.f32 %v5290, 1.442695
    %v5301 = vpow.pop %v5300
    %v5302 = vmul.f32 %v5291, 1.442695
    %v5303 = vpow.pop %v5302
    %v5304 = vmul.f32 %v5292, 1.442695
    %v5305 = vpow.pop %v5304
    %v5306 = vmul.f32 %v5293, 1.442695
    %v5307 = vpow.pop %v5306
    %v5308 = vmul.f32 %v5294, 1.442695
    %v5309 = vpow.pop %v5308
    %v5310 = vmul.f32 %v5295, 1.442695
    %v5311 = vpow.pop %v5310
    %v5312 = vsel %vm635, %v5297, 0.0
    %5313 = vadd.xlane.f32.xlu0 %v5312
    %v5314 = vpop.xlane.xlu0 %5313
    %v5315 = vsel %vm635, %v5299, 0.0
    %5316 = vadd.xlane.f32.xlu0 %v5315
    %v5317 = vpop.xlane.xlu0 %5316
    %v5318 = vsel %vm635, %v5301, 0.0
    %5319 = vadd.xlane.f32.xlu0 %v5318
    %v5320 = vpop.xlane.xlu0 %5319
    %v5321 = vsel %vm635, %v5303, 0.0
    %5322 = vadd.xlane.f32.xlu0 %v5321
    %v5323 = vpop.xlane.xlu0 %5322
    %v5324 = vsel %vm635, %v5305, 0.0
    %5325 = vadd.xlane.f32.xlu0 %v5324
    %v5326 = vpop.xlane.xlu0 %5325
    %v5327 = vsel %vm635, %v5307, 0.0
    %5328 = vadd.xlane.f32.xlu0 %v5327
    %v5329 = vpop.xlane.xlu0 %5328
    %v5330 = vsel %vm635, %v5309, 0.0
    %5331 = vadd.xlane.f32.xlu0 %v5330
    %v5332 = vpop.xlane.xlu0 %5331
    %v5333 = vsel %vm635, %v5311, 0.0
    %5334 = vadd.xlane.f32.xlu0 %v5333
    %v5335 = vpop.xlane.xlu0 %5334
    %v5336 = vrcp.pop %v5314
    %v5337 = vrcp.pop %v5317
    %v5338 = vrcp.pop %v5320
    %v5339 = vrcp.pop %v5323
    %v5340 = vrcp.pop %v5326
    %v5341 = vrcp.pop %v5329
    %v5342 = vrcp.pop %v5332
    %v5343 = vrcp.pop %v5335
    %v5344 = vmul.f32 %v5297, %v5336
    %v5345 = vmul.f32 %v5299, %v5337
    %v5346 = vmul.f32 %v5301, %v5338
    %v5347 = vmul.f32 %v5303, %v5339
    %v5348 = vmul.f32 %v5305, %v5340
    %v5349 = vmul.f32 %v5307, %v5341
    %v5350 = vmul.f32 %v5309, %v5342
    %v5351 = vmul.f32 %v5311, %v5343
    %v5352 = vpack.c.bf16 %v5344, %v5344
    %v5353 = vpack.c.bf16 %v5345, %v5345
    %v5354 = vpack.c.bf16 %v5346, %v5346
    %v5355 = vpack.c.bf16 %v5347, %v5347
    %v5356 = vpack.c.bf16 %v5348, %v5348
    %v5357 = vpack.c.bf16 %v5349, %v5349
    %v5358 = vpack.c.bf16 %v5350, %v5350
    %v5359 = vpack.c.bf16 %v5351, %v5351
    %v5361 = vsel %vm635, %v5352, 0
    %v5364 = vsel %vm735, %v4864, 0
    %5366 = vmatprep.subr.bf16.mxu0 0
    %5367 = vmatpush1.bf16.msra.mxu0 0
    %5368 = vmatprep.subr.bf16.mxu0 0
    %5369 = vmatpush1.bf16.msra.mxu0 0
    %5370 = vmatprep.subr.bf16.mxu0 0
    %5371 = vmatpush1.bf16.msra.mxu0 0
    %5372 = vmatprep.subr.bf16.mxu0 0
    %5373 = vmatpush1.bf16.msra.mxu0 0
    %5374 = vmatprep.subr.bf16.mxu0 0
    %5375 = vmatpush1.bf16.msra.mxu0 0
    %5376 = vmatprep.subr.bf16.mxu0 0
    %5377 = vmatpush1.bf16.msra.mxu0 0
    %5378 = vmatprep.subr.bf16.mxu0 0
    %5379 = vmatpush1.bf16.msra.mxu0 0
    %5380 = vmatprep.subr.bf16.mxu0 0
    %5381 = vmatpush1.bf16.msra.mxu0 %v5364
    %5382 = vmatprep.subr.bf16.mxu0 0
    %5383 = vmatpush2.bf16.msra.mxu0 0
    %5384 = vmatprep.subr.bf16.mxu0 0
    %5385 = vmatpush2.bf16.msra.mxu0 0
    %5386 = vmatprep.subr.bf16.mxu0 0
    %5387 = vmatpush2.bf16.msra.mxu0 0
    %5388 = vmatprep.subr.bf16.mxu0 0
    %5389 = vmatpush2.bf16.msra.mxu0 0
    %5390 = vmatprep.subr.bf16.mxu0 0
    %5391 = vmatpush2.bf16.msra.mxu0 0
    %5392 = vmatprep.subr.bf16.mxu0 0
    %5393 = vmatpush2.bf16.msra.mxu0 0
    %5394 = vmatprep.subr.bf16.mxu0 0
    %5395 = vmatpush2.bf16.msra.mxu0 0
    %5396 = vmatprep.subr.bf16.mxu0 0
    %5397 = vmatpush2.bf16.msra.mxu0 0
    %5398 = vmatprep.mubr.bf16.mxu0 0
    %5399 = vmatmul.mubr.bf16.gmra.mxu0 %v5361
    %v5400 = vpop.f32.mrf.mxu0
    %v5401 = vadd.f32 0.0, %v5400
    %v5402 = vpop.f32.mrf.mxu0
    %v5403 = vpop.f32.mrf.mxu0
    %v5404 = vpop.f32.mrf.mxu0
    %5405 = vdwg.mxu0
    %v5407 = vsel %vm635, %v5353, 0
    %v5410 = vsel %vm735, %v4865, 0
    %5412 = vmatprep.subr.bf16.mxu0 0
    %5413 = vmatpush1.bf16.msra.mxu0 0
    %5414 = vmatprep.subr.bf16.mxu0 0
    %5415 = vmatpush1.bf16.msra.mxu0 0
    %5416 = vmatprep.subr.bf16.mxu0 0
    %5417 = vmatpush1.bf16.msra.mxu0 0
    %5418 = vmatprep.subr.bf16.mxu0 0
    %5419 = vmatpush1.bf16.msra.mxu0 0
    %5420 = vmatprep.subr.bf16.mxu0 0
    %5421 = vmatpush1.bf16.msra.mxu0 0
    %5422 = vmatprep.subr.bf16.mxu0 0
    %5423 = vmatpush1.bf16.msra.mxu0 0
    %5424 = vmatprep.subr.bf16.mxu0 0
    %5425 = vmatpush1.bf16.msra.mxu0 0
    %5426 = vmatprep.subr.bf16.mxu0 0
    %5427 = vmatpush1.bf16.msra.mxu0 %v5410
    %5428 = vmatprep.subr.bf16.mxu0 0
    %5429 = vmatpush2.bf16.msra.mxu0 0
    %5430 = vmatprep.subr.bf16.mxu0 0
    %5431 = vmatpush2.bf16.msra.mxu0 0
    %5432 = vmatprep.subr.bf16.mxu0 0
    %5433 = vmatpush2.bf16.msra.mxu0 0
    %5434 = vmatprep.subr.bf16.mxu0 0
    %5435 = vmatpush2.bf16.msra.mxu0 0
    %5436 = vmatprep.subr.bf16.mxu0 0
    %5437 = vmatpush2.bf16.msra.mxu0 0
    %5438 = vmatprep.subr.bf16.mxu0 0
    %5439 = vmatpush2.bf16.msra.mxu0 0
    %5440 = vmatprep.subr.bf16.mxu0 0
    %5441 = vmatpush2.bf16.msra.mxu0 0
    %5442 = vmatprep.subr.bf16.mxu0 0
    %5443 = vmatpush2.bf16.msra.mxu0 0
    %5444 = vmatprep.mubr.bf16.mxu0 0
    %5445 = vmatmul.mubr.bf16.gmra.mxu0 %v5407
    %v5446 = vpop.f32.mrf.mxu0
    %v5447 = vadd.f32 0.0, %v5446
    %v5448 = vpop.f32.mrf.mxu0
    %v5449 = vpop.f32.mrf.mxu0
    %v5450 = vpop.f32.mrf.mxu0
    %5451 = vdwg.mxu0
    %v5453 = vsel %vm635, %v5354, 0
    %v5456 = vsel %vm735, %v4866, 0
    %5458 = vmatprep.subr.bf16.mxu0 0
    %5459 = vmatpush1.bf16.msra.mxu0 0
    %5460 = vmatprep.subr.bf16.mxu0 0
    %5461 = vmatpush1.bf16.msra.mxu0 0
    %5462 = vmatprep.subr.bf16.mxu0 0
    %5463 = vmatpush1.bf16.msra.mxu0 0
    %5464 = vmatprep.subr.bf16.mxu0 0
    %5465 = vmatpush1.bf16.msra.mxu0 0
    %5466 = vmatprep.subr.bf16.mxu0 0
    %5467 = vmatpush1.bf16.msra.mxu0 0
    %5468 = vmatprep.subr.bf16.mxu0 0
    %5469 = vmatpush1.bf16.msra.mxu0 0
    %5470 = vmatprep.subr.bf16.mxu0 0
    %5471 = vmatpush1.bf16.msra.mxu0 0
    %5472 = vmatprep.subr.bf16.mxu0 0
    %5473 = vmatpush1.bf16.msra.mxu0 %v5456
    %5474 = vmatprep.subr.bf16.mxu0 0
    %5475 = vmatpush2.bf16.msra.mxu0 0
    %5476 = vmatprep.subr.bf16.mxu0 0
    %5477 = vmatpush2.bf16.msra.mxu0 0
    %5478 = vmatprep.subr.bf16.mxu0 0
    %5479 = vmatpush2.bf16.msra.mxu0 0
    %5480 = vmatprep.subr.bf16.mxu0 0
    %5481 = vmatpush2.bf16.msra.mxu0 0
    %5482 = vmatprep.subr.bf16.mxu0 0
    %5483 = vmatpush2.bf16.msra.mxu0 0
    %5484 = vmatprep.subr.bf16.mxu0 0
    %5485 = vmatpush2.bf16.msra.mxu0 0
    %5486 = vmatprep.subr.bf16.mxu0 0
    %5487 = vmatpush2.bf16.msra.mxu0 0
    %5488 = vmatprep.subr.bf16.mxu0 0
    %5489 = vmatpush2.bf16.msra.mxu0 0
    %5490 = vmatprep.mubr.bf16.mxu0 0
    %5491 = vmatmul.mubr.bf16.gmra.mxu0 %v5453
    %v5492 = vpop.f32.mrf.mxu0
    %v5493 = vadd.f32 0.0, %v5492
    %v5494 = vpop.f32.mrf.mxu0
    %v5495 = vpop.f32.mrf.mxu0
    %v5496 = vpop.f32.mrf.mxu0
    %5497 = vdwg.mxu0
    %v5499 = vsel %vm635, %v5355, 0
    %v5502 = vsel %vm735, %v4867, 0
    %5504 = vmatprep.subr.bf16.mxu0 0
    %5505 = vmatpush1.bf16.msra.mxu0 0
    %5506 = vmatprep.subr.bf16.mxu0 0
    %5507 = vmatpush1.bf16.msra.mxu0 0
    %5508 = vmatprep.subr.bf16.mxu0 0
    %5509 = vmatpush1.bf16.msra.mxu0 0
    %5510 = vmatprep.subr.bf16.mxu0 0
    %5511 = vmatpush1.bf16.msra.mxu0 0
    %5512 = vmatprep.subr.bf16.mxu0 0
    %5513 = vmatpush1.bf16.msra.mxu0 0
    %5514 = vmatprep.subr.bf16.mxu0 0
    %5515 = vmatpush1.bf16.msra.mxu0 0
    %5516 = vmatprep.subr.bf16.mxu0 0
    %5517 = vmatpush1.bf16.msra.mxu0 0
    %5518 = vmatprep.subr.bf16.mxu0 0
    %5519 = vmatpush1.bf16.msra.mxu0 %v5502
    %5520 = vmatprep.subr.bf16.mxu0 0
    %5521 = vmatpush2.bf16.msra.mxu0 0
    %5522 = vmatprep.subr.bf16.mxu0 0
    %5523 = vmatpush2.bf16.msra.mxu0 0
    %5524 = vmatprep.subr.bf16.mxu0 0
    %5525 = vmatpush2.bf16.msra.mxu0 0
    %5526 = vmatprep.subr.bf16.mxu0 0
    %5527 = vmatpush2.bf16.msra.mxu0 0
    %5528 = vmatprep.subr.bf16.mxu0 0
    %5529 = vmatpush2.bf16.msra.mxu0 0
    %5530 = vmatprep.subr.bf16.mxu0 0
    %5531 = vmatpush2.bf16.msra.mxu0 0
    %5532 = vmatprep.subr.bf16.mxu0 0
    %5533 = vmatpush2.bf16.msra.mxu0 0
    %5534 = vmatprep.subr.bf16.mxu0 0
    %5535 = vmatpush2.bf16.msra.mxu0 0
    %5536 = vmatprep.mubr.bf16.mxu0 0
    %5537 = vmatmul.mubr.bf16.gmra.mxu0 %v5499
    %v5538 = vpop.f32.mrf.mxu0
    %v5539 = vadd.f32 0.0, %v5538
    %v5540 = vpop.f32.mrf.mxu0
    %v5541 = vpop.f32.mrf.mxu0
    %v5542 = vpop.f32.mrf.mxu0
    %5543 = vdwg.mxu0
    %v5545 = vsel %vm635, %v5356, 0
    %v5548 = vsel %vm735, %v4868, 0
    %5550 = vmatprep.subr.bf16.mxu0 0
    %5551 = vmatpush1.bf16.msra.mxu0 0
    %5552 = vmatprep.subr.bf16.mxu0 0
    %5553 = vmatpush1.bf16.msra.mxu0 0
    %5554 = vmatprep.subr.bf16.mxu0 0
    %5555 = vmatpush1.bf16.msra.mxu0 0
    %5556 = vmatprep.subr.bf16.mxu0 0
    %5557 = vmatpush1.bf16.msra.mxu0 0
    %5558 = vmatprep.subr.bf16.mxu0 0
    %5559 = vmatpush1.bf16.msra.mxu0 0
    %5560 = vmatprep.subr.bf16.mxu0 0
    %5561 = vmatpush1.bf16.msra.mxu0 0
    %5562 = vmatprep.subr.bf16.mxu0 0
    %5563 = vmatpush1.bf16.msra.mxu0 0
    %5564 = vmatprep.subr.bf16.mxu0 0
    %5565 = vmatpush1.bf16.msra.mxu0 %v5548
    %5566 = vmatprep.subr.bf16.mxu0 0
    %5567 = vmatpush2.bf16.msra.mxu0 0
    %5568 = vmatprep.subr.bf16.mxu0 0
    %5569 = vmatpush2.bf16.msra.mxu0 0
    %5570 = vmatprep.subr.bf16.mxu0 0
    %5571 = vmatpush2.bf16.msra.mxu0 0
    %5572 = vmatprep.subr.bf16.mxu0 0
    %5573 = vmatpush2.bf16.msra.mxu0 0
    %5574 = vmatprep.subr.bf16.mxu0 0
    %5575 = vmatpush2.bf16.msra.mxu0 0
    %5576 = vmatprep.subr.bf16.mxu0 0
    %5577 = vmatpush2.bf16.msra.mxu0 0
    %5578 = vmatprep.subr.bf16.mxu0 0
    %5579 = vmatpush2.bf16.msra.mxu0 0
    %5580 = vmatprep.subr.bf16.mxu0 0
    %5581 = vmatpush2.bf16.msra.mxu0 0
    %5582 = vmatprep.mubr.bf16.mxu0 0
    %5583 = vmatmul.mubr.bf16.gmra.mxu0 %v5545
    %v5584 = vpop.f32.mrf.mxu0
    %v5585 = vadd.f32 0.0, %v5584
    %v5586 = vpop.f32.mrf.mxu0
    %v5587 = vpop.f32.mrf.mxu0
    %v5588 = vpop.f32.mrf.mxu0
    %5589 = vdwg.mxu0
    %v5591 = vsel %vm635, %v5357, 0
    %v5594 = vsel %vm735, %v4869, 0
    %5596 = vmatprep.subr.bf16.mxu0 0
    %5597 = vmatpush1.bf16.msra.mxu0 0
    %5598 = vmatprep.subr.bf16.mxu0 0
    %5599 = vmatpush1.bf16.msra.mxu0 0
    %5600 = vmatprep.subr.bf16.mxu0 0
    %5601 = vmatpush1.bf16.msra.mxu0 0
    %5602 = vmatprep.subr.bf16.mxu0 0
    %5603 = vmatpush1.bf16.msra.mxu0 0
    %5604 = vmatprep.subr.bf16.mxu0 0
    %5605 = vmatpush1.bf16.msra.mxu0 0
    %5606 = vmatprep.subr.bf16.mxu0 0
    %5607 = vmatpush1.bf16.msra.mxu0 0
    %5608 = vmatprep.subr.bf16.mxu0 0
    %5609 = vmatpush1.bf16.msra.mxu0 0
    %5610 = vmatprep.subr.bf16.mxu0 0
    %5611 = vmatpush1.bf16.msra.mxu0 %v5594
    %5612 = vmatprep.subr.bf16.mxu0 0
    %5613 = vmatpush2.bf16.msra.mxu0 0
    %5614 = vmatprep.subr.bf16.mxu0 0
    %5615 = vmatpush2.bf16.msra.mxu0 0
    %5616 = vmatprep.subr.bf16.mxu0 0
    %5617 = vmatpush2.bf16.msra.mxu0 0
    %5618 = vmatprep.subr.bf16.mxu0 0
    %5619 = vmatpush2.bf16.msra.mxu0 0
    %5620 = vmatprep.subr.bf16.mxu0 0
    %5621 = vmatpush2.bf16.msra.mxu0 0
    %5622 = vmatprep.subr.bf16.mxu0 0
    %5623 = vmatpush2.bf16.msra.mxu0 0
    %5624 = vmatprep.subr.bf16.mxu0 0
    %5625 = vmatpush2.bf16.msra.mxu0 0
    %5626 = vmatprep.subr.bf16.mxu0 0
    %5627 = vmatpush2.bf16.msra.mxu0 0
    %5628 = vmatprep.mubr.bf16.mxu0 0
    %5629 = vmatmul.mubr.bf16.gmra.mxu0 %v5591
    %v5630 = vpop.f32.mrf.mxu0
    %v5631 = vadd.f32 0.0, %v5630
    %v5632 = vpop.f32.mrf.mxu0
    %v5633 = vpop.f32.mrf.mxu0
    %v5634 = vpop.f32.mrf.mxu0
    %5635 = vdwg.mxu0
    %v5637 = vsel %vm635, %v5358, 0
    %v5640 = vsel %vm735, %v4870, 0
    %5642 = vmatprep.subr.bf16.mxu0 0
    %5643 = vmatpush1.bf16.msra.mxu0 0
    %5644 = vmatprep.subr.bf16.mxu0 0
    %5645 = vmatpush1.bf16.msra.mxu0 0
    %5646 = vmatprep.subr.bf16.mxu0 0
    %5647 = vmatpush1.bf16.msra.mxu0 0
    %5648 = vmatprep.subr.bf16.mxu0 0
    %5649 = vmatpush1.bf16.msra.mxu0 0
    %5650 = vmatprep.subr.bf16.mxu0 0
    %5651 = vmatpush1.bf16.msra.mxu0 0
    %5652 = vmatprep.subr.bf16.mxu0 0
    %5653 = vmatpush1.bf16.msra.mxu0 0
    %5654 = vmatprep.subr.bf16.mxu0 0
    %5655 = vmatpush1.bf16.msra.mxu0 0
    %5656 = vmatprep.subr.bf16.mxu0 0
    %5657 = vmatpush1.bf16.msra.mxu0 %v5640
    %5658 = vmatprep.subr.bf16.mxu0 0
    %5659 = vmatpush2.bf16.msra.mxu0 0
    %5660 = vmatprep.subr.bf16.mxu0 0
    %5661 = vmatpush2.bf16.msra.mxu0 0
    %5662 = vmatprep.subr.bf16.mxu0 0
    %5663 = vmatpush2.bf16.msra.mxu0 0
    %5664 = vmatprep.subr.bf16.mxu0 0
    %5665 = vmatpush2.bf16.msra.mxu0 0
    %5666 = vmatprep.subr.bf16.mxu0 0
    %5667 = vmatpush2.bf16.msra.mxu0 0
    %5668 = vmatprep.subr.bf16.mxu0 0
    %5669 = vmatpush2.bf16.msra.mxu0 0
    %5670 = vmatprep.subr.bf16.mxu0 0
    %5671 = vmatpush2.bf16.msra.mxu0 0
    %5672 = vmatprep.subr.bf16.mxu0 0
    %5673 = vmatpush2.bf16.msra.mxu0 0
    %5674 = vmatprep.mubr.bf16.mxu0 0
    %5675 = vmatmul.mubr.bf16.gmra.mxu0 %v5637
    %v5676 = vpop.f32.mrf.mxu0
    %v5677 = vadd.f32 0.0, %v5676
    %v5678 = vpop.f32.mrf.mxu0
    %v5679 = vpop.f32.mrf.mxu0
    %v5680 = vpop.f32.mrf.mxu0
    %5681 = vdwg.mxu0
    %v5683 = vsel %vm635, %v5359, 0
    %v5686 = vsel %vm735, %v4871, 0
    %5688 = vmatprep.subr.bf16.mxu0 0
    %5689 = vmatpush1.bf16.msra.mxu0 0
    %5690 = vmatprep.subr.bf16.mxu0 0
    %5691 = vmatpush1.bf16.msra.mxu0 0
    %5692 = vmatprep.subr.bf16.mxu0 0
    %5693 = vmatpush1.bf16.msra.mxu0 0
    %5694 = vmatprep.subr.bf16.mxu0 0
    %5695 = vmatpush1.bf16.msra.mxu0 0
    %5696 = vmatprep.subr.bf16.mxu0 0
    %5697 = vmatpush1.bf16.msra.mxu0 0
    %5698 = vmatprep.subr.bf16.mxu0 0
    %5699 = vmatpush1.bf16.msra.mxu0 0
    %5700 = vmatprep.subr.bf16.mxu0 0
    %5701 = vmatpush1.bf16.msra.mxu0 0
    %5702 = vmatprep.subr.bf16.mxu0 0
    %5703 = vmatpush1.bf16.msra.mxu0 %v5686
    %5704 = vmatprep.subr.bf16.mxu0 0
    %5705 = vmatpush2.bf16.msra.mxu0 0
    %5706 = vmatprep.subr.bf16.mxu0 0
    %5707 = vmatpush2.bf16.msra.mxu0 0
    %5708 = vmatprep.subr.bf16.mxu0 0
    %5709 = vmatpush2.bf16.msra.mxu0 0
    %5710 = vmatprep.subr.bf16.mxu0 0
    %5711 = vmatpush2.bf16.msra.mxu0 0
    %5712 = vmatprep.subr.bf16.mxu0 0
    %5713 = vmatpush2.bf16.msra.mxu0 0
    %5714 = vmatprep.subr.bf16.mxu0 0
    %5715 = vmatpush2.bf16.msra.mxu0 0
    %5716 = vmatprep.subr.bf16.mxu0 0
    %5717 = vmatpush2.bf16.msra.mxu0 0
    %5718 = vmatprep.subr.bf16.mxu0 0
    %5719 = vmatpush2.bf16.msra.mxu0 0
    %5720 = vmatprep.mubr.bf16.mxu0 0
    %5721 = vmatmul.mubr.bf16.gmra.mxu0 %v5683
    %v5722 = vpop.f32.mrf.mxu0
    %v5723 = vadd.f32 0.0, %v5722
    %v5724 = vpop.f32.mrf.mxu0
    %v5725 = vpop.f32.mrf.mxu0
    %v5726 = vpop.f32.mrf.mxu0
    %5727 = vdwg.mxu0
    %v5728 = vpack.c.bf16 %v5401, %v5401
    %v5729 = vpack.c.bf16 %v5447, %v5447
    %v5730 = vpack.c.bf16 %v5493, %v5493
    %v5731 = vpack.c.bf16 %v5539, %v5539
    %v5732 = vpack.c.bf16 %v5585, %v5585
    %v5733 = vpack.c.bf16 %v5631, %v5631
    %v5734 = vpack.c.bf16 %v5677, %v5677
    %v5735 = vpack.c.bf16 %v5723, %v5723
    %5736 = vrot.lane.b32.xlu0 %v4856, 112
    %v5737 = vpop.permute.xlu0 %5736
    %5738 = vrot.lane.b32.xlu0 %v4856, 48
    %v5739 = vpop.permute.xlu0 %5738
    %v5741 = vsel %vm245, %v5737, 0
    %v5744 = vsel %vm245, %v5739, 0
    %5746 = vmatprep.subr.bf16.mxu0 0
    %5747 = vmatpush1.bf16.xpose.msra.mxu0 0
    %5748 = vmatprep.subr.bf16.mxu0 0
    %5749 = vmatpush1.bf16.xpose.msra.mxu0 0
    %5750 = vmatprep.subr.bf16.mxu0 0
    %5751 = vmatpush1.bf16.xpose.msra.mxu0 0
    %5752 = vmatprep.subr.bf16.mxu0 0
    %5753 = vmatpush1.bf16.xpose.msra.mxu0 0
    %5754 = vmatprep.subr.bf16.mxu0 0
    %5755 = vmatpush1.bf16.xpose.msra.mxu0 0
    %5756 = vmatprep.subr.bf16.mxu0 0
    %5757 = vmatpush1.bf16.xpose.msra.mxu0 0
    %5758 = vmatprep.subr.bf16.mxu0 0
    %5759 = vmatpush1.bf16.xpose.msra.mxu0 0
    %5760 = vmatprep.subr.bf16.mxu0 0
    %5761 = vmatpush1.bf16.xpose.msra.mxu0 %v5744
    %5762 = vmatprep.subr.bf16.mxu0 0
    %5763 = vmatpush2.bf16.xpose.msra.mxu0 0
    %5764 = vmatprep.subr.bf16.mxu0 0
    %5765 = vmatpush2.bf16.xpose.msra.mxu0 0
    %5766 = vmatprep.subr.bf16.mxu0 0
    %5767 = vmatpush2.bf16.xpose.msra.mxu0 0
    %5768 = vmatprep.subr.bf16.mxu0 0
    %5769 = vmatpush2.bf16.xpose.msra.mxu0 0
    %5770 = vmatprep.subr.bf16.mxu0 0
    %5771 = vmatpush2.bf16.xpose.msra.mxu0 0
    %5772 = vmatprep.subr.bf16.mxu0 0
    %5773 = vmatpush2.bf16.xpose.msra.mxu0 0
    %5774 = vmatprep.subr.bf16.mxu0 0
    %5775 = vmatpush2.bf16.xpose.msra.mxu0 0
    %5776 = vmatprep.subr.bf16.mxu0 0
    %5777 = vmatpush2.bf16.xpose.msra.mxu0 0
    %5778 = vmatprep.mubr.bf16.mxu0 0
    %5779 = vmatmul.mubr.bf16.gmra.mxu0 %v5741
    %v5780 = vpop.f32.mrf.mxu0
    %v5781 = vadd.f32 0.0, %v5780
    %v5782 = vpop.f32.mrf.mxu0
    %v5783 = vpop.f32.mrf.mxu0
    %v5784 = vpop.f32.mrf.mxu0
    %5785 = vdwg.mxu0
    %5786 = vrot.lane.b32.xlu0 %v4857, 112
    %v5787 = vpop.permute.xlu0 %5786
    %5788 = vrot.lane.b32.xlu0 %v4857, 48
    %v5789 = vpop.permute.xlu0 %5788
    %v5791 = vsel %vm245, %v5787, 0
    %v5794 = vsel %vm245, %v5789, 0
    %5796 = vmatprep.subr.bf16.mxu0 0
    %5797 = vmatpush1.bf16.xpose.msra.mxu0 0
    %5798 = vmatprep.subr.bf16.mxu0 0
    %5799 = vmatpush1.bf16.xpose.msra.mxu0 0
    %5800 = vmatprep.subr.bf16.mxu0 0
    %5801 = vmatpush1.bf16.xpose.msra.mxu0 0
    %5802 = vmatprep.subr.bf16.mxu0 0
    %5803 = vmatpush1.bf16.xpose.msra.mxu0 0
    %5804 = vmatprep.subr.bf16.mxu0 0
    %5805 = vmatpush1.bf16.xpose.msra.mxu0 0
    %5806 = vmatprep.subr.bf16.mxu0 0
    %5807 = vmatpush1.bf16.xpose.msra.mxu0 0
    %5808 = vmatprep.subr.bf16.mxu0 0
    %5809 = vmatpush1.bf16.xpose.msra.mxu0 0
    %5810 = vmatprep.subr.bf16.mxu0 0
    %5811 = vmatpush1.bf16.xpose.msra.mxu0 %v5794
    %5812 = vmatprep.subr.bf16.mxu0 0
    %5813 = vmatpush2.bf16.xpose.msra.mxu0 0
    %5814 = vmatprep.subr.bf16.mxu0 0
    %5815 = vmatpush2.bf16.xpose.msra.mxu0 0
    %5816 = vmatprep.subr.bf16.mxu0 0
    %5817 = vmatpush2.bf16.xpose.msra.mxu0 0
    %5818 = vmatprep.subr.bf16.mxu0 0
    %5819 = vmatpush2.bf16.xpose.msra.mxu0 0
    %5820 = vmatprep.subr.bf16.mxu0 0
    %5821 = vmatpush2.bf16.xpose.msra.mxu0 0
    %5822 = vmatprep.subr.bf16.mxu0 0
    %5823 = vmatpush2.bf16.xpose.msra.mxu0 0
    %5824 = vmatprep.subr.bf16.mxu0 0
    %5825 = vmatpush2.bf16.xpose.msra.mxu0 0
    %5826 = vmatprep.subr.bf16.mxu0 0
    %5827 = vmatpush2.bf16.xpose.msra.mxu0 0
    %5828 = vmatprep.mubr.bf16.mxu0 0
    %5829 = vmatmul.mubr.bf16.gmra.mxu0 %v5791
    %v5830 = vpop.f32.mrf.mxu0
    %v5831 = vadd.f32 0.0, %v5830
    %v5832 = vpop.f32.mrf.mxu0
    %v5833 = vpop.f32.mrf.mxu0
    %v5834 = vpop.f32.mrf.mxu0
    %5835 = vdwg.mxu0
    %5836 = vrot.lane.b32.xlu0 %v4858, 112
    %v5837 = vpop.permute.xlu0 %5836
    %5838 = vrot.lane.b32.xlu0 %v4858, 48
    %v5839 = vpop.permute.xlu0 %5838
    %v5841 = vsel %vm245, %v5837, 0
    %v5844 = vsel %vm245, %v5839, 0
    %5846 = vmatprep.subr.bf16.mxu0 0
    %5847 = vmatpush1.bf16.xpose.msra.mxu0 0
    %5848 = vmatprep.subr.bf16.mxu0 0
    %5849 = vmatpush1.bf16.xpose.msra.mxu0 0
    %5850 = vmatprep.subr.bf16.mxu0 0
    %5851 = vmatpush1.bf16.xpose.msra.mxu0 0
    %5852 = vmatprep.subr.bf16.mxu0 0
    %5853 = vmatpush1.bf16.xpose.msra.mxu0 0
    %5854 = vmatprep.subr.bf16.mxu0 0
    %5855 = vmatpush1.bf16.xpose.msra.mxu0 0
    %5856 = vmatprep.subr.bf16.mxu0 0
    %5857 = vmatpush1.bf16.xpose.msra.mxu0 0
    %5858 = vmatprep.subr.bf16.mxu0 0
    %5859 = vmatpush1.bf16.xpose.msra.mxu0 0
    %5860 = vmatprep.subr.bf16.mxu0 0
    %5861 = vmatpush1.bf16.xpose.msra.mxu0 %v5844
    %5862 = vmatprep.subr.bf16.mxu0 0
    %5863 = vmatpush2.bf16.xpose.msra.mxu0 0
    %5864 = vmatprep.subr.bf16.mxu0 0
    %5865 = vmatpush2.bf16.xpose.msra.mxu0 0
    %5866 = vmatprep.subr.bf16.mxu0 0
    %5867 = vmatpush2.bf16.xpose.msra.mxu0 0
    %5868 = vmatprep.subr.bf16.mxu0 0
    %5869 = vmatpush2.bf16.xpose.msra.mxu0 0
    %5870 = vmatprep.subr.bf16.mxu0 0
    %5871 = vmatpush2.bf16.xpose.msra.mxu0 0
    %5872 = vmatprep.subr.bf16.mxu0 0
    %5873 = vmatpush2.bf16.xpose.msra.mxu0 0
    %5874 = vmatprep.subr.bf16.mxu0 0
    %5875 = vmatpush2.bf16.xpose.msra.mxu0 0
    %5876 = vmatprep.subr.bf16.mxu0 0
    %5877 = vmatpush2.bf16.xpose.msra.mxu0 0
    %5878 = vmatprep.mubr.bf16.mxu0 0
    %5879 = vmatmul.mubr.bf16.gmra.mxu0 %v5841
    %v5880 = vpop.f32.mrf.mxu0
    %v5881 = vadd.f32 0.0, %v5880
    %v5882 = vpop.f32.mrf.mxu0
    %v5883 = vpop.f32.mrf.mxu0
    %v5884 = vpop.f32.mrf.mxu0
    %5885 = vdwg.mxu0
    %5886 = vrot.lane.b32.xlu0 %v4859, 112
    %v5887 = vpop.permute.xlu0 %5886
    %5888 = vrot.lane.b32.xlu0 %v4859, 48
    %v5889 = vpop.permute.xlu0 %5888
    %v5891 = vsel %vm245, %v5887, 0
    %v5894 = vsel %vm245, %v5889, 0
    %5896 = vmatprep.subr.bf16.mxu0 0
    %5897 = vmatpush1.bf16.xpose.msra.mxu0 0
    %5898 = vmatprep.subr.bf16.mxu0 0
    %5899 = vmatpush1.bf16.xpose.msra.mxu0 0
    %5900 = vmatprep.subr.bf16.mxu0 0
    %5901 = vmatpush1.bf16.xpose.msra.mxu0 0
    %5902 = vmatprep.subr.bf16.mxu0 0
    %5903 = vmatpush1.bf16.xpose.msra.mxu0 0
    %5904 = vmatprep.subr.bf16.mxu0 0
    %5905 = vmatpush1.bf16.xpose.msra.mxu0 0
    %5906 = vmatprep.subr.bf16.mxu0 0
    %5907 = vmatpush1.bf16.xpose.msra.mxu0 0
    %5908 = vmatprep.subr.bf16.mxu0 0
    %5909 = vmatpush1.bf16.xpose.msra.mxu0 0
    %5910 = vmatprep.subr.bf16.mxu0 0
    %5911 = vmatpush1.bf16.xpose.msra.mxu0 %v5894
    %5912 = vmatprep.subr.bf16.mxu0 0
    %5913 = vmatpush2.bf16.xpose.msra.mxu0 0
    %5914 = vmatprep.subr.bf16.mxu0 0
    %5915 = vmatpush2.bf16.xpose.msra.mxu0 0
    %5916 = vmatprep.subr.bf16.mxu0 0
    %5917 = vmatpush2.bf16.xpose.msra.mxu0 0
    %5918 = vmatprep.subr.bf16.mxu0 0
    %5919 = vmatpush2.bf16.xpose.msra.mxu0 0
    %5920 = vmatprep.subr.bf16.mxu0 0
    %5921 = vmatpush2.bf16.xpose.msra.mxu0 0
    %5922 = vmatprep.subr.bf16.mxu0 0
    %5923 = vmatpush2.bf16.xpose.msra.mxu0 0
    %5924 = vmatprep.subr.bf16.mxu0 0
    %5925 = vmatpush2.bf16.xpose.msra.mxu0 0
    %5926 = vmatprep.subr.bf16.mxu0 0
    %5927 = vmatpush2.bf16.xpose.msra.mxu0 0
    %5928 = vmatprep.mubr.bf16.mxu0 0
    %5929 = vmatmul.mubr.bf16.gmra.mxu0 %v5891
    %v5930 = vpop.f32.mrf.mxu0
    %v5931 = vadd.f32 0.0, %v5930
    %v5932 = vpop.f32.mrf.mxu0
    %v5933 = vpop.f32.mrf.mxu0
    %v5934 = vpop.f32.mrf.mxu0
    %5935 = vdwg.mxu0
    %5936 = vrot.lane.b32.xlu0 %v4860, 112
    %v5937 = vpop.permute.xlu0 %5936
    %5938 = vrot.lane.b32.xlu0 %v4860, 48
    %v5939 = vpop.permute.xlu0 %5938
    %v5941 = vsel %vm245, %v5937, 0
    %v5944 = vsel %vm245, %v5939, 0
    %5946 = vmatprep.subr.bf16.mxu0 0
    %5947 = vmatpush1.bf16.xpose.msra.mxu0 0
    %5948 = vmatprep.subr.bf16.mxu0 0
    %5949 = vmatpush1.bf16.xpose.msra.mxu0 0
    %5950 = vmatprep.subr.bf16.mxu0 0
    %5951 = vmatpush1.bf16.xpose.msra.mxu0 0
    %5952 = vmatprep.subr.bf16.mxu0 0
    %5953 = vmatpush1.bf16.xpose.msra.mxu0 0
    %5954 = vmatprep.subr.bf16.mxu0 0
    %5955 = vmatpush1.bf16.xpose.msra.mxu0 0
    %5956 = vmatprep.subr.bf16.mxu0 0
    %5957 = vmatpush1.bf16.xpose.msra.mxu0 0
    %5958 = vmatprep.subr.bf16.mxu0 0
    %5959 = vmatpush1.bf16.xpose.msra.mxu0 0
    %5960 = vmatprep.subr.bf16.mxu0 0
    %5961 = vmatpush1.bf16.xpose.msra.mxu0 %v5944
    %5962 = vmatprep.subr.bf16.mxu0 0
    %5963 = vmatpush2.bf16.xpose.msra.mxu0 0
    %5964 = vmatprep.subr.bf16.mxu0 0
    %5965 = vmatpush2.bf16.xpose.msra.mxu0 0
    %5966 = vmatprep.subr.bf16.mxu0 0
    %5967 = vmatpush2.bf16.xpose.msra.mxu0 0
    %5968 = vmatprep.subr.bf16.mxu0 0
    %5969 = vmatpush2.bf16.xpose.msra.mxu0 0
    %5970 = vmatprep.subr.bf16.mxu0 0
    %5971 = vmatpush2.bf16.xpose.msra.mxu0 0
    %5972 = vmatprep.subr.bf16.mxu0 0
    %5973 = vmatpush2.bf16.xpose.msra.mxu0 0
    %5974 = vmatprep.subr.bf16.mxu0 0
    %5975 = vmatpush2.bf16.xpose.msra.mxu0 0
    %5976 = vmatprep.subr.bf16.mxu0 0
    %5977 = vmatpush2.bf16.xpose.msra.mxu0 0
    %5978 = vmatprep.mubr.bf16.mxu0 0
    %5979 = vmatmul.mubr.bf16.gmra.mxu0 %v5941
    %v5980 = vpop.f32.mrf.mxu0
    %v5981 = vadd.f32 0.0, %v5980
    %v5982 = vpop.f32.mrf.mxu0
    %v5983 = vpop.f32.mrf.mxu0
    %v5984 = vpop.f32.mrf.mxu0
    %5985 = vdwg.mxu0
    %5986 = vrot.lane.b32.xlu0 %v4861, 112
    %v5987 = vpop.permute.xlu0 %5986
    %5988 = vrot.lane.b32.xlu0 %v4861, 48
    %v5989 = vpop.permute.xlu0 %5988
    %v5991 = vsel %vm245, %v5987, 0
    %v5994 = vsel %vm245, %v5989, 0
    %5996 = vmatprep.subr.bf16.mxu0 0
    %5997 = vmatpush1.bf16.xpose.msra.mxu0 0
    %5998 = vmatprep.subr.bf16.mxu0 0
    %5999 = vmatpush1.bf16.xpose.msra.mxu0 0
    %6000 = vmatprep.subr.bf16.mxu0 0
    %6001 = vmatpush1.bf16.xpose.msra.mxu0 0
    %6002 = vmatprep.subr.bf16.mxu0 0
    %6003 = vmatpush1.bf16.xpose.msra.mxu0 0
    %6004 = vmatprep.subr.bf16.mxu0 0
    %6005 = vmatpush1.bf16.xpose.msra.mxu0 0
    %6006 = vmatprep.subr.bf16.mxu0 0
    %6007 = vmatpush1.bf16.xpose.msra.mxu0 0
    %6008 = vmatprep.subr.bf16.mxu0 0
    %6009 = vmatpush1.bf16.xpose.msra.mxu0 0
    %6010 = vmatprep.subr.bf16.mxu0 0
    %6011 = vmatpush1.bf16.xpose.msra.mxu0 %v5994
    %6012 = vmatprep.subr.bf16.mxu0 0
    %6013 = vmatpush2.bf16.xpose.msra.mxu0 0
    %6014 = vmatprep.subr.bf16.mxu0 0
    %6015 = vmatpush2.bf16.xpose.msra.mxu0 0
    %6016 = vmatprep.subr.bf16.mxu0 0
    %6017 = vmatpush2.bf16.xpose.msra.mxu0 0
    %6018 = vmatprep.subr.bf16.mxu0 0
    %6019 = vmatpush2.bf16.xpose.msra.mxu0 0
    %6020 = vmatprep.subr.bf16.mxu0 0
    %6021 = vmatpush2.bf16.xpose.msra.mxu0 0
    %6022 = vmatprep.subr.bf16.mxu0 0
    %6023 = vmatpush2.bf16.xpose.msra.mxu0 0
    %6024 = vmatprep.subr.bf16.mxu0 0
    %6025 = vmatpush2.bf16.xpose.msra.mxu0 0
    %6026 = vmatprep.subr.bf16.mxu0 0
    %6027 = vmatpush2.bf16.xpose.msra.mxu0 0
    %6028 = vmatprep.mubr.bf16.mxu0 0
    %6029 = vmatmul.mubr.bf16.gmra.mxu0 %v5991
    %v6030 = vpop.f32.mrf.mxu0
    %v6031 = vadd.f32 0.0, %v6030
    %v6032 = vpop.f32.mrf.mxu0
    %v6033 = vpop.f32.mrf.mxu0
    %v6034 = vpop.f32.mrf.mxu0
    %6035 = vdwg.mxu0
    %6036 = vrot.lane.b32.xlu0 %v4862, 112
    %v6037 = vpop.permute.xlu0 %6036
    %6038 = vrot.lane.b32.xlu0 %v4862, 48
    %v6039 = vpop.permute.xlu0 %6038
    %v6041 = vsel %vm245, %v6037, 0
    %v6044 = vsel %vm245, %v6039, 0
    %6046 = vmatprep.subr.bf16.mxu0 0
    %6047 = vmatpush1.bf16.xpose.msra.mxu0 0
    %6048 = vmatprep.subr.bf16.mxu0 0
    %6049 = vmatpush1.bf16.xpose.msra.mxu0 0
    %6050 = vmatprep.subr.bf16.mxu0 0
    %6051 = vmatpush1.bf16.xpose.msra.mxu0 0
    %6052 = vmatprep.subr.bf16.mxu0 0
    %6053 = vmatpush1.bf16.xpose.msra.mxu0 0
    %6054 = vmatprep.subr.bf16.mxu0 0
    %6055 = vmatpush1.bf16.xpose.msra.mxu0 0
    %6056 = vmatprep.subr.bf16.mxu0 0
    %6057 = vmatpush1.bf16.xpose.msra.mxu0 0
    %6058 = vmatprep.subr.bf16.mxu0 0
    %6059 = vmatpush1.bf16.xpose.msra.mxu0 0
    %6060 = vmatprep.subr.bf16.mxu0 0
    %6061 = vmatpush1.bf16.xpose.msra.mxu0 %v6044
    %6062 = vmatprep.subr.bf16.mxu0 0
    %6063 = vmatpush2.bf16.xpose.msra.mxu0 0
    %6064 = vmatprep.subr.bf16.mxu0 0
    %6065 = vmatpush2.bf16.xpose.msra.mxu0 0
    %6066 = vmatprep.subr.bf16.mxu0 0
    %6067 = vmatpush2.bf16.xpose.msra.mxu0 0
    %6068 = vmatprep.subr.bf16.mxu0 0
    %6069 = vmatpush2.bf16.xpose.msra.mxu0 0
    %6070 = vmatprep.subr.bf16.mxu0 0
    %6071 = vmatpush2.bf16.xpose.msra.mxu0 0
    %6072 = vmatprep.subr.bf16.mxu0 0
    %6073 = vmatpush2.bf16.xpose.msra.mxu0 0
    %6074 = vmatprep.subr.bf16.mxu0 0
    %6075 = vmatpush2.bf16.xpose.msra.mxu0 0
    %6076 = vmatprep.subr.bf16.mxu0 0
    %6077 = vmatpush2.bf16.xpose.msra.mxu0 0
    %6078 = vmatprep.mubr.bf16.mxu0 0
    %6079 = vmatmul.mubr.bf16.gmra.mxu0 %v6041
    %v6080 = vpop.f32.mrf.mxu0
    %v6081 = vadd.f32 0.0, %v6080
    %v6082 = vpop.f32.mrf.mxu0
    %v6083 = vpop.f32.mrf.mxu0
    %v6084 = vpop.f32.mrf.mxu0
    %6085 = vdwg.mxu0
    %6086 = vrot.lane.b32.xlu0 %v4863, 112
    %v6087 = vpop.permute.xlu0 %6086
    %6088 = vrot.lane.b32.xlu0 %v4863, 48
    %v6089 = vpop.permute.xlu0 %6088
    %v6091 = vsel %vm245, %v6087, 0
    %v6094 = vsel %vm245, %v6089, 0
    %6096 = vmatprep.subr.bf16.mxu0 0
    %6097 = vmatpush1.bf16.xpose.msra.mxu0 0
    %6098 = vmatprep.subr.bf16.mxu0 0
    %6099 = vmatpush1.bf16.xpose.msra.mxu0 0
    %6100 = vmatprep.subr.bf16.mxu0 0
    %6101 = vmatpush1.bf16.xpose.msra.mxu0 0
    %6102 = vmatprep.subr.bf16.mxu0 0
    %6103 = vmatpush1.bf16.xpose.msra.mxu0 0
    %6104 = vmatprep.subr.bf16.mxu0 0
    %6105 = vmatpush1.bf16.xpose.msra.mxu0 0
    %6106 = vmatprep.subr.bf16.mxu0 0
    %6107 = vmatpush1.bf16.xpose.msra.mxu0 0
    %6108 = vmatprep.subr.bf16.mxu0 0
    %6109 = vmatpush1.bf16.xpose.msra.mxu0 0
    %6110 = vmatprep.subr.bf16.mxu0 0
    %6111 = vmatpush1.bf16.xpose.msra.mxu0 %v6094
    %6112 = vmatprep.subr.bf16.mxu0 0
    %6113 = vmatpush2.bf16.xpose.msra.mxu0 0
    %6114 = vmatprep.subr.bf16.mxu0 0
    %6115 = vmatpush2.bf16.xpose.msra.mxu0 0
    %6116 = vmatprep.subr.bf16.mxu0 0
    %6117 = vmatpush2.bf16.xpose.msra.mxu0 0
    %6118 = vmatprep.subr.bf16.mxu0 0
    %6119 = vmatpush2.bf16.xpose.msra.mxu0 0
    %6120 = vmatprep.subr.bf16.mxu0 0
    %6121 = vmatpush2.bf16.xpose.msra.mxu0 0
    %6122 = vmatprep.subr.bf16.mxu0 0
    %6123 = vmatpush2.bf16.xpose.msra.mxu0 0
    %6124 = vmatprep.subr.bf16.mxu0 0
    %6125 = vmatpush2.bf16.xpose.msra.mxu0 0
    %6126 = vmatprep.subr.bf16.mxu0 0
    %6127 = vmatpush2.bf16.xpose.msra.mxu0 0
    %6128 = vmatprep.mubr.bf16.mxu0 0
    %6129 = vmatmul.mubr.bf16.gmra.mxu0 %v6091
    %v6130 = vpop.f32.mrf.mxu0
    %v6131 = vadd.f32 0.0, %v6130
    %v6132 = vpop.f32.mrf.mxu0
    %v6133 = vpop.f32.mrf.mxu0
    %v6134 = vpop.f32.mrf.mxu0
    %6135 = vdwg.mxu0
    %v6136 = vsel %vm635, %v5781, -inf
    %6137 = vmax.xlane.f32.xlu0 %v6136
    %v6138 = vpop.xlane.xlu0 %6137
    %v6139 = vsel %vm635, %v5831, -inf
    %6140 = vmax.xlane.f32.xlu0 %v6139
    %v6141 = vpop.xlane.xlu0 %6140
    %v6142 = vsel %vm635, %v5881, -inf
    %6143 = vmax.xlane.f32.xlu0 %v6142
    %v6144 = vpop.xlane.xlu0 %6143
    %v6145 = vsel %vm635, %v5931, -inf
    %6146 = vmax.xlane.f32.xlu0 %v6145
    %v6147 = vpop.xlane.xlu0 %6146
    %v6148 = vsel %vm635, %v5981, -inf
    %6149 = vmax.xlane.f32.xlu0 %v6148
    %v6150 = vpop.xlane.xlu0 %6149
    %v6151 = vsel %vm635, %v6031, -inf
    %6152 = vmax.xlane.f32.xlu0 %v6151
    %v6153 = vpop.xlane.xlu0 %6152
    %v6154 = vsel %vm635, %v6081, -inf
    %6155 = vmax.xlane.f32.xlu0 %v6154
    %v6156 = vpop.xlane.xlu0 %6155
    %v6157 = vsel %vm635, %v6131, -inf
    %6158 = vmax.xlane.f32.xlu0 %v6157
    %v6159 = vpop.xlane.xlu0 %6158
    %v6160 = vsub.f32 %v5781, %v6138
    %v6161 = vsub.f32 %v5831, %v6141
    %v6162 = vsub.f32 %v5881, %v6144
    %v6163 = vsub.f32 %v5931, %v6147
    %v6164 = vsub.f32 %v5981, %v6150
    %v6165 = vsub.f32 %v6031, %v6153
    %v6166 = vsub.f32 %v6081, %v6156
    %v6167 = vsub.f32 %v6131, %v6159
    %v6168 = vmul.f32 %v6160, 1.442695
    %v6169 = vpow.pop %v6168
    %v6170 = vmul.f32 %v6161, 1.442695
    %v6171 = vpow.pop %v6170
    %v6172 = vmul.f32 %v6162, 1.442695
    %v6173 = vpow.pop %v6172
    %v6174 = vmul.f32 %v6163, 1.442695
    %v6175 = vpow.pop %v6174
    %v6176 = vmul.f32 %v6164, 1.442695
    %v6177 = vpow.pop %v6176
    %v6178 = vmul.f32 %v6165, 1.442695
    %v6179 = vpow.pop %v6178
    %v6180 = vmul.f32 %v6166, 1.442695
    %v6181 = vpow.pop %v6180
    %v6182 = vmul.f32 %v6167, 1.442695
    %v6183 = vpow.pop %v6182
    %v6184 = vsel %vm635, %v6169, 0.0
    %6185 = vadd.xlane.f32.xlu0 %v6184
    %v6186 = vpop.xlane.xlu0 %6185
    %v6187 = vsel %vm635, %v6171, 0.0
    %6188 = vadd.xlane.f32.xlu0 %v6187
    %v6189 = vpop.xlane.xlu0 %6188
    %v6190 = vsel %vm635, %v6173, 0.0
    %6191 = vadd.xlane.f32.xlu0 %v6190
    %v6192 = vpop.xlane.xlu0 %6191
    %v6193 = vsel %vm635, %v6175, 0.0
    %6194 = vadd.xlane.f32.xlu0 %v6193
    %v6195 = vpop.xlane.xlu0 %6194
    %v6196 = vsel %vm635, %v6177, 0.0
    %6197 = vadd.xlane.f32.xlu0 %v6196
    %v6198 = vpop.xlane.xlu0 %6197
    %v6199 = vsel %vm635, %v6179, 0.0
    %6200 = vadd.xlane.f32.xlu0 %v6199
    %v6201 = vpop.xlane.xlu0 %6200
    %v6202 = vsel %vm635, %v6181, 0.0
    %6203 = vadd.xlane.f32.xlu0 %v6202
    %v6204 = vpop.xlane.xlu0 %6203
    %v6205 = vsel %vm635, %v6183, 0.0
    %6206 = vadd.xlane.f32.xlu0 %v6205
    %v6207 = vpop.xlane.xlu0 %6206
    %v6208 = vrcp.pop %v6186
    %v6209 = vrcp.pop %v6189
    %v6210 = vrcp.pop %v6192
    %v6211 = vrcp.pop %v6195
    %v6212 = vrcp.pop %v6198
    %v6213 = vrcp.pop %v6201
    %v6214 = vrcp.pop %v6204
    %v6215 = vrcp.pop %v6207
    %v6216 = vmul.f32 %v6169, %v6208
    %v6217 = vmul.f32 %v6171, %v6209
    %v6218 = vmul.f32 %v6173, %v6210
    %v6219 = vmul.f32 %v6175, %v6211
    %v6220 = vmul.f32 %v6177, %v6212
    %v6221 = vmul.f32 %v6179, %v6213
    %v6222 = vmul.f32 %v6181, %v6214
    %v6223 = vmul.f32 %v6183, %v6215
    %v6224 = vpack.c.bf16 %v6216, %v6216
    %v6225 = vpack.c.bf16 %v6217, %v6217
    %v6226 = vpack.c.bf16 %v6218, %v6218
    %v6227 = vpack.c.bf16 %v6219, %v6219
    %v6228 = vpack.c.bf16 %v6220, %v6220
    %v6229 = vpack.c.bf16 %v6221, %v6221
    %v6230 = vpack.c.bf16 %v6222, %v6222
    %v6231 = vpack.c.bf16 %v6223, %v6223
    %6233 = vrot.lane.b32.xlu0 %v4864, 112
    %v6234 = vpop.permute.xlu0 %6233
    %v6236 = vsel %vm635, %v6224, 0
    %v6239 = vsel %vm735, %v6234, 0
    %6241 = vmatprep.subr.bf16.mxu0 0
    %6242 = vmatpush1.bf16.msra.mxu0 0
    %6243 = vmatprep.subr.bf16.mxu0 0
    %6244 = vmatpush1.bf16.msra.mxu0 0
    %6245 = vmatprep.subr.bf16.mxu0 0
    %6246 = vmatpush1.bf16.msra.mxu0 0
    %6247 = vmatprep.subr.bf16.mxu0 0
    %6248 = vmatpush1.bf16.msra.mxu0 0
    %6249 = vmatprep.subr.bf16.mxu0 0
    %6250 = vmatpush1.bf16.msra.mxu0 0
    %6251 = vmatprep.subr.bf16.mxu0 0
    %6252 = vmatpush1.bf16.msra.mxu0 0
    %6253 = vmatprep.subr.bf16.mxu0 0
    %6254 = vmatpush1.bf16.msra.mxu0 0
    %6255 = vmatprep.subr.bf16.mxu0 0
    %6256 = vmatpush1.bf16.msra.mxu0 %v6239
    %6257 = vmatprep.subr.bf16.mxu0 0
    %6258 = vmatpush2.bf16.msra.mxu0 0
    %6259 = vmatprep.subr.bf16.mxu0 0
    %6260 = vmatpush2.bf16.msra.mxu0 0
    %6261 = vmatprep.subr.bf16.mxu0 0
    %6262 = vmatpush2.bf16.msra.mxu0 0
    %6263 = vmatprep.subr.bf16.mxu0 0
    %6264 = vmatpush2.bf16.msra.mxu0 0
    %6265 = vmatprep.subr.bf16.mxu0 0
    %6266 = vmatpush2.bf16.msra.mxu0 0
    %6267 = vmatprep.subr.bf16.mxu0 0
    %6268 = vmatpush2.bf16.msra.mxu0 0
    %6269 = vmatprep.subr.bf16.mxu0 0
    %6270 = vmatpush2.bf16.msra.mxu0 0
    %6271 = vmatprep.subr.bf16.mxu0 0
    %6272 = vmatpush2.bf16.msra.mxu0 0
    %6273 = vmatprep.mubr.bf16.mxu0 0
    %6274 = vmatmul.mubr.bf16.gmra.mxu0 %v6236
    %v6275 = vpop.f32.mrf.mxu0
    %v6276 = vadd.f32 0.0, %v6275
    %v6277 = vpop.f32.mrf.mxu0
    %v6278 = vpop.f32.mrf.mxu0
    %v6279 = vpop.f32.mrf.mxu0
    %6280 = vdwg.mxu0
    %6282 = vrot.lane.b32.xlu0 %v4865, 112
    %v6283 = vpop.permute.xlu0 %6282
    %v6285 = vsel %vm635, %v6225, 0
    %v6288 = vsel %vm735, %v6283, 0
    %6290 = vmatprep.subr.bf16.mxu0 0
    %6291 = vmatpush1.bf16.msra.mxu0 0
    %6292 = vmatprep.subr.bf16.mxu0 0
    %6293 = vmatpush1.bf16.msra.mxu0 0
    %6294 = vmatprep.subr.bf16.mxu0 0
    %6295 = vmatpush1.bf16.msra.mxu0 0
    %6296 = vmatprep.subr.bf16.mxu0 0
    %6297 = vmatpush1.bf16.msra.mxu0 0
    %6298 = vmatprep.subr.bf16.mxu0 0
    %6299 = vmatpush1.bf16.msra.mxu0 0
    %6300 = vmatprep.subr.bf16.mxu0 0
    %6301 = vmatpush1.bf16.msra.mxu0 0
    %6302 = vmatprep.subr.bf16.mxu0 0
    %6303 = vmatpush1.bf16.msra.mxu0 0
    %6304 = vmatprep.subr.bf16.mxu0 0
    %6305 = vmatpush1.bf16.msra.mxu0 %v6288
    %6306 = vmatprep.subr.bf16.mxu0 0
    %6307 = vmatpush2.bf16.msra.mxu0 0
    %6308 = vmatprep.subr.bf16.mxu0 0
    %6309 = vmatpush2.bf16.msra.mxu0 0
    %6310 = vmatprep.subr.bf16.mxu0 0
    %6311 = vmatpush2.bf16.msra.mxu0 0
    %6312 = vmatprep.subr.bf16.mxu0 0
    %6313 = vmatpush2.bf16.msra.mxu0 0
    %6314 = vmatprep.subr.bf16.mxu0 0
    %6315 = vmatpush2.bf16.msra.mxu0 0
    %6316 = vmatprep.subr.bf16.mxu0 0
    %6317 = vmatpush2.bf16.msra.mxu0 0
    %6318 = vmatprep.subr.bf16.mxu0 0
    %6319 = vmatpush2.bf16.msra.mxu0 0
    %6320 = vmatprep.subr.bf16.mxu0 0
    %6321 = vmatpush2.bf16.msra.mxu0 0
    %6322 = vmatprep.mubr.bf16.mxu0 0
    %6323 = vmatmul.mubr.bf16.gmra.mxu0 %v6285
    %v6324 = vpop.f32.mrf.mxu0
    %v6325 = vadd.f32 0.0, %v6324
    %v6326 = vpop.f32.mrf.mxu0
    %v6327 = vpop.f32.mrf.mxu0
    %v6328 = vpop.f32.mrf.mxu0
    %6329 = vdwg.mxu0
    %6331 = vrot.lane.b32.xlu0 %v4866, 112
    %v6332 = vpop.permute.xlu0 %6331
    %v6334 = vsel %vm635, %v6226, 0
    %v6337 = vsel %vm735, %v6332, 0
    %6339 = vmatprep.subr.bf16.mxu0 0
    %6340 = vmatpush1.bf16.msra.mxu0 0
    %6341 = vmatprep.subr.bf16.mxu0 0
    %6342 = vmatpush1.bf16.msra.mxu0 0
    %6343 = vmatprep.subr.bf16.mxu0 0
    %6344 = vmatpush1.bf16.msra.mxu0 0
    %6345 = vmatprep.subr.bf16.mxu0 0
    %6346 = vmatpush1.bf16.msra.mxu0 0
    %6347 = vmatprep.subr.bf16.mxu0 0
    %6348 = vmatpush1.bf16.msra.mxu0 0
    %6349 = vmatprep.subr.bf16.mxu0 0
    %6350 = vmatpush1.bf16.msra.mxu0 0
    %6351 = vmatprep.subr.bf16.mxu0 0
    %6352 = vmatpush1.bf16.msra.mxu0 0
    %6353 = vmatprep.subr.bf16.mxu0 0
    %6354 = vmatpush1.bf16.msra.mxu0 %v6337
    %6355 = vmatprep.subr.bf16.mxu0 0
    %6356 = vmatpush2.bf16.msra.mxu0 0
    %6357 = vmatprep.subr.bf16.mxu0 0
    %6358 = vmatpush2.bf16.msra.mxu0 0
    %6359 = vmatprep.subr.bf16.mxu0 0
    %6360 = vmatpush2.bf16.msra.mxu0 0
    %6361 = vmatprep.subr.bf16.mxu0 0
    %6362 = vmatpush2.bf16.msra.mxu0 0
    %6363 = vmatprep.subr.bf16.mxu0 0
    %6364 = vmatpush2.bf16.msra.mxu0 0
    %6365 = vmatprep.subr.bf16.mxu0 0
    %6366 = vmatpush2.bf16.msra.mxu0 0
    %6367 = vmatprep.subr.bf16.mxu0 0
    %6368 = vmatpush2.bf16.msra.mxu0 0
    %6369 = vmatprep.subr.bf16.mxu0 0
    %6370 = vmatpush2.bf16.msra.mxu0 0
    %6371 = vmatprep.mubr.bf16.mxu0 0
    %6372 = vmatmul.mubr.bf16.gmra.mxu0 %v6334
    %v6373 = vpop.f32.mrf.mxu0
    %v6374 = vadd.f32 0.0, %v6373
    %v6375 = vpop.f32.mrf.mxu0
    %v6376 = vpop.f32.mrf.mxu0
    %v6377 = vpop.f32.mrf.mxu0
    %6378 = vdwg.mxu0
    %6380 = vrot.lane.b32.xlu0 %v4867, 112
    %v6381 = vpop.permute.xlu0 %6380
    %v6383 = vsel %vm635, %v6227, 0
    %v6386 = vsel %vm735, %v6381, 0
    %6388 = vmatprep.subr.bf16.mxu0 0
    %6389 = vmatpush1.bf16.msra.mxu0 0
    %6390 = vmatprep.subr.bf16.mxu0 0
    %6391 = vmatpush1.bf16.msra.mxu0 0
    %6392 = vmatprep.subr.bf16.mxu0 0
    %6393 = vmatpush1.bf16.msra.mxu0 0
    %6394 = vmatprep.subr.bf16.mxu0 0
    %6395 = vmatpush1.bf16.msra.mxu0 0
    %6396 = vmatprep.subr.bf16.mxu0 0
    %6397 = vmatpush1.bf16.msra.mxu0 0
    %6398 = vmatprep.subr.bf16.mxu0 0
    %6399 = vmatpush1.bf16.msra.mxu0 0
    %6400 = vmatprep.subr.bf16.mxu0 0
    %6401 = vmatpush1.bf16.msra.mxu0 0
    %6402 = vmatprep.subr.bf16.mxu0 0
    %6403 = vmatpush1.bf16.msra.mxu0 %v6386
    %6404 = vmatprep.subr.bf16.mxu0 0
    %6405 = vmatpush2.bf16.msra.mxu0 0
    %6406 = vmatprep.subr.bf16.mxu0 0
    %6407 = vmatpush2.bf16.msra.mxu0 0
    %6408 = vmatprep.subr.bf16.mxu0 0
    %6409 = vmatpush2.bf16.msra.mxu0 0
    %6410 = vmatprep.subr.bf16.mxu0 0
    %6411 = vmatpush2.bf16.msra.mxu0 0
    %6412 = vmatprep.subr.bf16.mxu0 0
    %6413 = vmatpush2.bf16.msra.mxu0 0
    %6414 = vmatprep.subr.bf16.mxu0 0
    %6415 = vmatpush2.bf16.msra.mxu0 0
    %6416 = vmatprep.subr.bf16.mxu0 0
    %6417 = vmatpush2.bf16.msra.mxu0 0
    %6418 = vmatprep.subr.bf16.mxu0 0
    %6419 = vmatpush2.bf16.msra.mxu0 0
    %6420 = vmatprep.mubr.bf16.mxu0 0
    %6421 = vmatmul.mubr.bf16.gmra.mxu0 %v6383
    %v6422 = vpop.f32.mrf.mxu0
    %v6423 = vadd.f32 0.0, %v6422
    %v6424 = vpop.f32.mrf.mxu0
    %v6425 = vpop.f32.mrf.mxu0
    %v6426 = vpop.f32.mrf.mxu0
    %6427 = vdwg.mxu0
    %6429 = vrot.lane.b32.xlu0 %v4868, 112
    %v6430 = vpop.permute.xlu0 %6429
    %v6432 = vsel %vm635, %v6228, 0
    %v6435 = vsel %vm735, %v6430, 0
    %6437 = vmatprep.subr.bf16.mxu0 0
    %6438 = vmatpush1.bf16.msra.mxu0 0
    %6439 = vmatprep.subr.bf16.mxu0 0
    %6440 = vmatpush1.bf16.msra.mxu0 0
    %6441 = vmatprep.subr.bf16.mxu0 0
    %6442 = vmatpush1.bf16.msra.mxu0 0
    %6443 = vmatprep.subr.bf16.mxu0 0
    %6444 = vmatpush1.bf16.msra.mxu0 0
    %6445 = vmatprep.subr.bf16.mxu0 0
    %6446 = vmatpush1.bf16.msra.mxu0 0
    %6447 = vmatprep.subr.bf16.mxu0 0
    %6448 = vmatpush1.bf16.msra.mxu0 0
    %6449 = vmatprep.subr.bf16.mxu0 0
    %6450 = vmatpush1.bf16.msra.mxu0 0
    %6451 = vmatprep.subr.bf16.mxu0 0
    %6452 = vmatpush1.bf16.msra.mxu0 %v6435
    %6453 = vmatprep.subr.bf16.mxu0 0
    %6454 = vmatpush2.bf16.msra.mxu0 0
    %6455 = vmatprep.subr.bf16.mxu0 0
    %6456 = vmatpush2.bf16.msra.mxu0 0
    %6457 = vmatprep.subr.bf16.mxu0 0
    %6458 = vmatpush2.bf16.msra.mxu0 0
    %6459 = vmatprep.subr.bf16.mxu0 0
    %6460 = vmatpush2.bf16.msra.mxu0 0
    %6461 = vmatprep.subr.bf16.mxu0 0
    %6462 = vmatpush2.bf16.msra.mxu0 0
    %6463 = vmatprep.subr.bf16.mxu0 0
    %6464 = vmatpush2.bf16.msra.mxu0 0
    %6465 = vmatprep.subr.bf16.mxu0 0
    %6466 = vmatpush2.bf16.msra.mxu0 0
    %6467 = vmatprep.subr.bf16.mxu0 0
    %6468 = vmatpush2.bf16.msra.mxu0 0
    %6469 = vmatprep.mubr.bf16.mxu0 0
    %6470 = vmatmul.mubr.bf16.gmra.mxu0 %v6432
    %v6471 = vpop.f32.mrf.mxu0
    %v6472 = vadd.f32 0.0, %v6471
    %v6473 = vpop.f32.mrf.mxu0
    %v6474 = vpop.f32.mrf.mxu0
    %v6475 = vpop.f32.mrf.mxu0
    %6476 = vdwg.mxu0
    %6478 = vrot.lane.b32.xlu0 %v4869, 112
    %v6479 = vpop.permute.xlu0 %6478
    %v6481 = vsel %vm635, %v6229, 0
    %v6484 = vsel %vm735, %v6479, 0
    %6486 = vmatprep.subr.bf16.mxu0 0
    %6487 = vmatpush1.bf16.msra.mxu0 0
    %6488 = vmatprep.subr.bf16.mxu0 0
    %6489 = vmatpush1.bf16.msra.mxu0 0
    %6490 = vmatprep.subr.bf16.mxu0 0
    %6491 = vmatpush1.bf16.msra.mxu0 0
    %6492 = vmatprep.subr.bf16.mxu0 0
    %6493 = vmatpush1.bf16.msra.mxu0 0
    %6494 = vmatprep.subr.bf16.mxu0 0
    %6495 = vmatpush1.bf16.msra.mxu0 0
    %6496 = vmatprep.subr.bf16.mxu0 0
    %6497 = vmatpush1.bf16.msra.mxu0 0
    %6498 = vmatprep.subr.bf16.mxu0 0
    %6499 = vmatpush1.bf16.msra.mxu0 0
    %6500 = vmatprep.subr.bf16.mxu0 0
    %6501 = vmatpush1.bf16.msra.mxu0 %v6484
    %6502 = vmatprep.subr.bf16.mxu0 0
    %6503 = vmatpush2.bf16.msra.mxu0 0
    %6504 = vmatprep.subr.bf16.mxu0 0
    %6505 = vmatpush2.bf16.msra.mxu0 0
    %6506 = vmatprep.subr.bf16.mxu0 0
    %6507 = vmatpush2.bf16.msra.mxu0 0
    %6508 = vmatprep.subr.bf16.mxu0 0
    %6509 = vmatpush2.bf16.msra.mxu0 0
    %6510 = vmatprep.subr.bf16.mxu0 0
    %6511 = vmatpush2.bf16.msra.mxu0 0
    %6512 = vmatprep.subr.bf16.mxu0 0
    %6513 = vmatpush2.bf16.msra.mxu0 0
    %6514 = vmatprep.subr.bf16.mxu0 0
    %6515 = vmatpush2.bf16.msra.mxu0 0
    %6516 = vmatprep.subr.bf16.mxu0 0
    %6517 = vmatpush2.bf16.msra.mxu0 0
    %6518 = vmatprep.mubr.bf16.mxu0 0
    %6519 = vmatmul.mubr.bf16.gmra.mxu0 %v6481
    %v6520 = vpop.f32.mrf.mxu0
    %v6521 = vadd.f32 0.0, %v6520
    %v6522 = vpop.f32.mrf.mxu0
    %v6523 = vpop.f32.mrf.mxu0
    %v6524 = vpop.f32.mrf.mxu0
    %6525 = vdwg.mxu0
    %6527 = vrot.lane.b32.xlu0 %v4870, 112
    %v6528 = vpop.permute.xlu0 %6527
    %v6530 = vsel %vm635, %v6230, 0
    %v6533 = vsel %vm735, %v6528, 0
    %6535 = vmatprep.subr.bf16.mxu0 0
    %6536 = vmatpush1.bf16.msra.mxu0 0
    %6537 = vmatprep.subr.bf16.mxu0 0
    %6538 = vmatpush1.bf16.msra.mxu0 0
    %6539 = vmatprep.subr.bf16.mxu0 0
    %6540 = vmatpush1.bf16.msra.mxu0 0
    %6541 = vmatprep.subr.bf16.mxu0 0
    %6542 = vmatpush1.bf16.msra.mxu0 0
    %6543 = vmatprep.subr.bf16.mxu0 0
    %6544 = vmatpush1.bf16.msra.mxu0 0
    %6545 = vmatprep.subr.bf16.mxu0 0
    %6546 = vmatpush1.bf16.msra.mxu0 0
    %6547 = vmatprep.subr.bf16.mxu0 0
    %6548 = vmatpush1.bf16.msra.mxu0 0
    %6549 = vmatprep.subr.bf16.mxu0 0
    %6550 = vmatpush1.bf16.msra.mxu0 %v6533
    %6551 = vmatprep.subr.bf16.mxu0 0
    %6552 = vmatpush2.bf16.msra.mxu0 0
    %6553 = vmatprep.subr.bf16.mxu0 0
    %6554 = vmatpush2.bf16.msra.mxu0 0
    %6555 = vmatprep.subr.bf16.mxu0 0
    %6556 = vmatpush2.bf16.msra.mxu0 0
    %6557 = vmatprep.subr.bf16.mxu0 0
    %6558 = vmatpush2.bf16.msra.mxu0 0
    %6559 = vmatprep.subr.bf16.mxu0 0
    %6560 = vmatpush2.bf16.msra.mxu0 0
    %6561 = vmatprep.subr.bf16.mxu0 0
    %6562 = vmatpush2.bf16.msra.mxu0 0
    %6563 = vmatprep.subr.bf16.mxu0 0
    %6564 = vmatpush2.bf16.msra.mxu0 0
    %6565 = vmatprep.subr.bf16.mxu0 0
    %6566 = vmatpush2.bf16.msra.mxu0 0
    %6567 = vmatprep.mubr.bf16.mxu0 0
    %6568 = vmatmul.mubr.bf16.gmra.mxu0 %v6530
    %v6569 = vpop.f32.mrf.mxu0
    %v6570 = vadd.f32 0.0, %v6569
    %v6571 = vpop.f32.mrf.mxu0
    %v6572 = vpop.f32.mrf.mxu0
    %v6573 = vpop.f32.mrf.mxu0
    %6574 = vdwg.mxu0
    %6576 = vrot.lane.b32.xlu0 %v4871, 112
    %v6577 = vpop.permute.xlu0 %6576
    %v6579 = vsel %vm635, %v6231, 0
    %v6582 = vsel %vm735, %v6577, 0
    %6584 = vmatprep.subr.bf16.mxu0 0
    %6585 = vmatpush1.bf16.msra.mxu0 0
    %6586 = vmatprep.subr.bf16.mxu0 0
    %6587 = vmatpush1.bf16.msra.mxu0 0
    %6588 = vmatprep.subr.bf16.mxu0 0
    %6589 = vmatpush1.bf16.msra.mxu0 0
    %6590 = vmatprep.subr.bf16.mxu0 0
    %6591 = vmatpush1.bf16.msra.mxu0 0
    %6592 = vmatprep.subr.bf16.mxu0 0
    %6593 = vmatpush1.bf16.msra.mxu0 0
    %6594 = vmatprep.subr.bf16.mxu0 0
    %6595 = vmatpush1.bf16.msra.mxu0 0
    %6596 = vmatprep.subr.bf16.mxu0 0
    %6597 = vmatpush1.bf16.msra.mxu0 0
    %6598 = vmatprep.subr.bf16.mxu0 0
    %6599 = vmatpush1.bf16.msra.mxu0 %v6582
    %6600 = vmatprep.subr.bf16.mxu0 0
    %6601 = vmatpush2.bf16.msra.mxu0 0
    %6602 = vmatprep.subr.bf16.mxu0 0
    %6603 = vmatpush2.bf16.msra.mxu0 0
    %6604 = vmatprep.subr.bf16.mxu0 0
    %6605 = vmatpush2.bf16.msra.mxu0 0
    %6606 = vmatprep.subr.bf16.mxu0 0
    %6607 = vmatpush2.bf16.msra.mxu0 0
    %6608 = vmatprep.subr.bf16.mxu0 0
    %6609 = vmatpush2.bf16.msra.mxu0 0
    %6610 = vmatprep.subr.bf16.mxu0 0
    %6611 = vmatpush2.bf16.msra.mxu0 0
    %6612 = vmatprep.subr.bf16.mxu0 0
    %6613 = vmatpush2.bf16.msra.mxu0 0
    %6614 = vmatprep.subr.bf16.mxu0 0
    %6615 = vmatpush2.bf16.msra.mxu0 0
    %6616 = vmatprep.mubr.bf16.mxu0 0
    %6617 = vmatmul.mubr.bf16.gmra.mxu0 %v6579
    %v6618 = vpop.f32.mrf.mxu0
    %v6619 = vadd.f32 0.0, %v6618
    %v6620 = vpop.f32.mrf.mxu0
    %v6621 = vpop.f32.mrf.mxu0
    %v6622 = vpop.f32.mrf.mxu0
    %6623 = vdwg.mxu0
    %v6624 = vpack.c.bf16 %v6276, %v6276
    %v6625 = vpack.c.bf16 %v6325, %v6325
    %v6626 = vpack.c.bf16 %v6374, %v6374
    %v6627 = vpack.c.bf16 %v6423, %v6423
    %v6628 = vpack.c.bf16 %v6472, %v6472
    %v6629 = vpack.c.bf16 %v6521, %v6521
    %v6630 = vpack.c.bf16 %v6570, %v6570
    %v6631 = vpack.c.bf16 %v6619, %v6619
    %6632 = vrot.lane.b32.xlu0 %v4856, 96
    %v6633 = vpop.permute.xlu0 %6632
    %6634 = vrot.lane.b32.xlu0 %v4856, 32
    %v6635 = vpop.permute.xlu0 %6634
    %v6637 = vsel %vm245, %v6633, 0
    %v6640 = vsel %vm245, %v6635, 0
    %6642 = vmatprep.subr.bf16.mxu0 0
    %6643 = vmatpush1.bf16.xpose.msra.mxu0 0
    %6644 = vmatprep.subr.bf16.mxu0 0
    %6645 = vmatpush1.bf16.xpose.msra.mxu0 0
    %6646 = vmatprep.subr.bf16.mxu0 0
    %6647 = vmatpush1.bf16.xpose.msra.mxu0 0
    %6648 = vmatprep.subr.bf16.mxu0 0
    %6649 = vmatpush1.bf16.xpose.msra.mxu0 0
    %6650 = vmatprep.subr.bf16.mxu0 0
    %6651 = vmatpush1.bf16.xpose.msra.mxu0 0
    %6652 = vmatprep.subr.bf16.mxu0 0
    %6653 = vmatpush1.bf16.xpose.msra.mxu0 0
    %6654 = vmatprep.subr.bf16.mxu0 0
    %6655 = vmatpush1.bf16.xpose.msra.mxu0 0
    %6656 = vmatprep.subr.bf16.mxu0 0
    %6657 = vmatpush1.bf16.xpose.msra.mxu0 %v6640
    %6658 = vmatprep.subr.bf16.mxu0 0
    %6659 = vmatpush2.bf16.xpose.msra.mxu0 0
    %6660 = vmatprep.subr.bf16.mxu0 0
    %6661 = vmatpush2.bf16.xpose.msra.mxu0 0
    %6662 = vmatprep.subr.bf16.mxu0 0
    %6663 = vmatpush2.bf16.xpose.msra.mxu0 0
    %6664 = vmatprep.subr.bf16.mxu0 0
    %6665 = vmatpush2.bf16.xpose.msra.mxu0 0
    %6666 = vmatprep.subr.bf16.mxu0 0
    %6667 = vmatpush2.bf16.xpose.msra.mxu0 0
    %6668 = vmatprep.subr.bf16.mxu0 0
    %6669 = vmatpush2.bf16.xpose.msra.mxu0 0
    %6670 = vmatprep.subr.bf16.mxu0 0
    %6671 = vmatpush2.bf16.xpose.msra.mxu0 0
    %6672 = vmatprep.subr.bf16.mxu0 0
    %6673 = vmatpush2.bf16.xpose.msra.mxu0 0
    %6674 = vmatprep.mubr.bf16.mxu0 0
    %6675 = vmatmul.mubr.bf16.gmra.mxu0 %v6637
    %v6676 = vpop.f32.mrf.mxu0
    %v6677 = vadd.f32 0.0, %v6676
    %v6678 = vpop.f32.mrf.mxu0
    %v6679 = vpop.f32.mrf.mxu0
    %v6680 = vpop.f32.mrf.mxu0
    %6681 = vdwg.mxu0
    %6682 = vrot.lane.b32.xlu0 %v4857, 96
    %v6683 = vpop.permute.xlu0 %6682
    %6684 = vrot.lane.b32.xlu0 %v4857, 32
    %v6685 = vpop.permute.xlu0 %6684
    %v6687 = vsel %vm245, %v6683, 0
    %v6690 = vsel %vm245, %v6685, 0
    %6692 = vmatprep.subr.bf16.mxu0 0
    %6693 = vmatpush1.bf16.xpose.msra.mxu0 0
    %6694 = vmatprep.subr.bf16.mxu0 0
    %6695 = vmatpush1.bf16.xpose.msra.mxu0 0
    %6696 = vmatprep.subr.bf16.mxu0 0
    %6697 = vmatpush1.bf16.xpose.msra.mxu0 0
    %6698 = vmatprep.subr.bf16.mxu0 0
    %6699 = vmatpush1.bf16.xpose.msra.mxu0 0
    %6700 = vmatprep.subr.bf16.mxu0 0
    %6701 = vmatpush1.bf16.xpose.msra.mxu0 0
    %6702 = vmatprep.subr.bf16.mxu0 0
    %6703 = vmatpush1.bf16.xpose.msra.mxu0 0
    %6704 = vmatprep.subr.bf16.mxu0 0
    %6705 = vmatpush1.bf16.xpose.msra.mxu0 0
    %6706 = vmatprep.subr.bf16.mxu0 0
    %6707 = vmatpush1.bf16.xpose.msra.mxu0 %v6690
    %6708 = vmatprep.subr.bf16.mxu0 0
    %6709 = vmatpush2.bf16.xpose.msra.mxu0 0
    %6710 = vmatprep.subr.bf16.mxu0 0
    %6711 = vmatpush2.bf16.xpose.msra.mxu0 0
    %6712 = vmatprep.subr.bf16.mxu0 0
    %6713 = vmatpush2.bf16.xpose.msra.mxu0 0
    %6714 = vmatprep.subr.bf16.mxu0 0
    %6715 = vmatpush2.bf16.xpose.msra.mxu0 0
    %6716 = vmatprep.subr.bf16.mxu0 0
    %6717 = vmatpush2.bf16.xpose.msra.mxu0 0
    %6718 = vmatprep.subr.bf16.mxu0 0
    %6719 = vmatpush2.bf16.xpose.msra.mxu0 0
    %6720 = vmatprep.subr.bf16.mxu0 0
    %6721 = vmatpush2.bf16.xpose.msra.mxu0 0
    %6722 = vmatprep.subr.bf16.mxu0 0
    %6723 = vmatpush2.bf16.xpose.msra.mxu0 0
    %6724 = vmatprep.mubr.bf16.mxu0 0
    %6725 = vmatmul.mubr.bf16.gmra.mxu0 %v6687
    %v6726 = vpop.f32.mrf.mxu0
    %v6727 = vadd.f32 0.0, %v6726
    %v6728 = vpop.f32.mrf.mxu0
    %v6729 = vpop.f32.mrf.mxu0
    %v6730 = vpop.f32.mrf.mxu0
    %6731 = vdwg.mxu0
    %6732 = vrot.lane.b32.xlu0 %v4858, 96
    %v6733 = vpop.permute.xlu0 %6732
    %6734 = vrot.lane.b32.xlu0 %v4858, 32
    %v6735 = vpop.permute.xlu0 %6734
    %v6737 = vsel %vm245, %v6733, 0
    %v6740 = vsel %vm245, %v6735, 0
    %6742 = vmatprep.subr.bf16.mxu0 0
    %6743 = vmatpush1.bf16.xpose.msra.mxu0 0
    %6744 = vmatprep.subr.bf16.mxu0 0
    %6745 = vmatpush1.bf16.xpose.msra.mxu0 0
    %6746 = vmatprep.subr.bf16.mxu0 0
    %6747 = vmatpush1.bf16.xpose.msra.mxu0 0
    %6748 = vmatprep.subr.bf16.mxu0 0
    %6749 = vmatpush1.bf16.xpose.msra.mxu0 0
    %6750 = vmatprep.subr.bf16.mxu0 0
    %6751 = vmatpush1.bf16.xpose.msra.mxu0 0
    %6752 = vmatprep.subr.bf16.mxu0 0
    %6753 = vmatpush1.bf16.xpose.msra.mxu0 0
    %6754 = vmatprep.subr.bf16.mxu0 0
    %6755 = vmatpush1.bf16.xpose.msra.mxu0 0
    %6756 = vmatprep.subr.bf16.mxu0 0
    %6757 = vmatpush1.bf16.xpose.msra.mxu0 %v6740
    %6758 = vmatprep.subr.bf16.mxu0 0
    %6759 = vmatpush2.bf16.xpose.msra.mxu0 0
    %6760 = vmatprep.subr.bf16.mxu0 0
    %6761 = vmatpush2.bf16.xpose.msra.mxu0 0
    %6762 = vmatprep.subr.bf16.mxu0 0
    %6763 = vmatpush2.bf16.xpose.msra.mxu0 0
    %6764 = vmatprep.subr.bf16.mxu0 0
    %6765 = vmatpush2.bf16.xpose.msra.mxu0 0
    %6766 = vmatprep.subr.bf16.mxu0 0
    %6767 = vmatpush2.bf16.xpose.msra.mxu0 0
    %6768 = vmatprep.subr.bf16.mxu0 0
    %6769 = vmatpush2.bf16.xpose.msra.mxu0 0
    %6770 = vmatprep.subr.bf16.mxu0 0
    %6771 = vmatpush2.bf16.xpose.msra.mxu0 0
    %6772 = vmatprep.subr.bf16.mxu0 0
    %6773 = vmatpush2.bf16.xpose.msra.mxu0 0
    %6774 = vmatprep.mubr.bf16.mxu0 0
    %6775 = vmatmul.mubr.bf16.gmra.mxu0 %v6737
    %v6776 = vpop.f32.mrf.mxu0
    %v6777 = vadd.f32 0.0, %v6776
    %v6778 = vpop.f32.mrf.mxu0
    %v6779 = vpop.f32.mrf.mxu0
    %v6780 = vpop.f32.mrf.mxu0
    %6781 = vdwg.mxu0
    %6782 = vrot.lane.b32.xlu0 %v4859, 96
    %v6783 = vpop.permute.xlu0 %6782
    %6784 = vrot.lane.b32.xlu0 %v4859, 32
    %v6785 = vpop.permute.xlu0 %6784
    %v6787 = vsel %vm245, %v6783, 0
    %v6790 = vsel %vm245, %v6785, 0
    %6792 = vmatprep.subr.bf16.mxu0 0
    %6793 = vmatpush1.bf16.xpose.msra.mxu0 0
    %6794 = vmatprep.subr.bf16.mxu0 0
    %6795 = vmatpush1.bf16.xpose.msra.mxu0 0
    %6796 = vmatprep.subr.bf16.mxu0 0
    %6797 = vmatpush1.bf16.xpose.msra.mxu0 0
    %6798 = vmatprep.subr.bf16.mxu0 0
    %6799 = vmatpush1.bf16.xpose.msra.mxu0 0
    %6800 = vmatprep.subr.bf16.mxu0 0
    %6801 = vmatpush1.bf16.xpose.msra.mxu0 0
    %6802 = vmatprep.subr.bf16.mxu0 0
    %6803 = vmatpush1.bf16.xpose.msra.mxu0 0
    %6804 = vmatprep.subr.bf16.mxu0 0
    %6805 = vmatpush1.bf16.xpose.msra.mxu0 0
    %6806 = vmatprep.subr.bf16.mxu0 0
    %6807 = vmatpush1.bf16.xpose.msra.mxu0 %v6790
    %6808 = vmatprep.subr.bf16.mxu0 0
    %6809 = vmatpush2.bf16.xpose.msra.mxu0 0
    %6810 = vmatprep.subr.bf16.mxu0 0
    %6811 = vmatpush2.bf16.xpose.msra.mxu0 0
    %6812 = vmatprep.subr.bf16.mxu0 0
    %6813 = vmatpush2.bf16.xpose.msra.mxu0 0
    %6814 = vmatprep.subr.bf16.mxu0 0
    %6815 = vmatpush2.bf16.xpose.msra.mxu0 0
    %6816 = vmatprep.subr.bf16.mxu0 0
    %6817 = vmatpush2.bf16.xpose.msra.mxu0 0
    %6818 = vmatprep.subr.bf16.mxu0 0
    %6819 = vmatpush2.bf16.xpose.msra.mxu0 0
    %6820 = vmatprep.subr.bf16.mxu0 0
    %6821 = vmatpush2.bf16.xpose.msra.mxu0 0
    %6822 = vmatprep.subr.bf16.mxu0 0
    %6823 = vmatpush2.bf16.xpose.msra.mxu0 0
    %6824 = vmatprep.mubr.bf16.mxu0 0
    %6825 = vmatmul.mubr.bf16.gmra.mxu0 %v6787
    %v6826 = vpop.f32.mrf.mxu0
    %v6827 = vadd.f32 0.0, %v6826
    %v6828 = vpop.f32.mrf.mxu0
    %v6829 = vpop.f32.mrf.mxu0
    %v6830 = vpop.f32.mrf.mxu0
    %6831 = vdwg.mxu0
    %6832 = vrot.lane.b32.xlu0 %v4860, 96
    %v6833 = vpop.permute.xlu0 %6832
    %6834 = vrot.lane.b32.xlu0 %v4860, 32
    %v6835 = vpop.permute.xlu0 %6834
    %v6837 = vsel %vm245, %v6833, 0
    %v6840 = vsel %vm245, %v6835, 0
    %6842 = vmatprep.subr.bf16.mxu0 0
    %6843 = vmatpush1.bf16.xpose.msra.mxu0 0
    %6844 = vmatprep.subr.bf16.mxu0 0
    %6845 = vmatpush1.bf16.xpose.msra.mxu0 0
    %6846 = vmatprep.subr.bf16.mxu0 0
    %6847 = vmatpush1.bf16.xpose.msra.mxu0 0
    %6848 = vmatprep.subr.bf16.mxu0 0
    %6849 = vmatpush1.bf16.xpose.msra.mxu0 0
    %6850 = vmatprep.subr.bf16.mxu0 0
    %6851 = vmatpush1.bf16.xpose.msra.mxu0 0
    %6852 = vmatprep.subr.bf16.mxu0 0
    %6853 = vmatpush1.bf16.xpose.msra.mxu0 0
    %6854 = vmatprep.subr.bf16.mxu0 0
    %6855 = vmatpush1.bf16.xpose.msra.mxu0 0
    %6856 = vmatprep.subr.bf16.mxu0 0
    %6857 = vmatpush1.bf16.xpose.msra.mxu0 %v6840
    %6858 = vmatprep.subr.bf16.mxu0 0
    %6859 = vmatpush2.bf16.xpose.msra.mxu0 0
    %6860 = vmatprep.subr.bf16.mxu0 0
    %6861 = vmatpush2.bf16.xpose.msra.mxu0 0
    %6862 = vmatprep.subr.bf16.mxu0 0
    %6863 = vmatpush2.bf16.xpose.msra.mxu0 0
    %6864 = vmatprep.subr.bf16.mxu0 0
    %6865 = vmatpush2.bf16.xpose.msra.mxu0 0
    %6866 = vmatprep.subr.bf16.mxu0 0
    %6867 = vmatpush2.bf16.xpose.msra.mxu0 0
    %6868 = vmatprep.subr.bf16.mxu0 0
    %6869 = vmatpush2.bf16.xpose.msra.mxu0 0
    %6870 = vmatprep.subr.bf16.mxu0 0
    %6871 = vmatpush2.bf16.xpose.msra.mxu0 0
    %6872 = vmatprep.subr.bf16.mxu0 0
    %6873 = vmatpush2.bf16.xpose.msra.mxu0 0
    %6874 = vmatprep.mubr.bf16.mxu0 0
    %6875 = vmatmul.mubr.bf16.gmra.mxu0 %v6837
    %v6876 = vpop.f32.mrf.mxu0
    %v6877 = vadd.f32 0.0, %v6876
    %v6878 = vpop.f32.mrf.mxu0
    %v6879 = vpop.f32.mrf.mxu0
    %v6880 = vpop.f32.mrf.mxu0
    %6881 = vdwg.mxu0
    %6882 = vrot.lane.b32.xlu0 %v4861, 96
    %v6883 = vpop.permute.xlu0 %6882
    %6884 = vrot.lane.b32.xlu0 %v4861, 32
    %v6885 = vpop.permute.xlu0 %6884
    %v6887 = vsel %vm245, %v6883, 0
    %v6890 = vsel %vm245, %v6885, 0
    %6892 = vmatprep.subr.bf16.mxu0 0
    %6893 = vmatpush1.bf16.xpose.msra.mxu0 0
    %6894 = vmatprep.subr.bf16.mxu0 0
    %6895 = vmatpush1.bf16.xpose.msra.mxu0 0
    %6896 = vmatprep.subr.bf16.mxu0 0
    %6897 = vmatpush1.bf16.xpose.msra.mxu0 0
    %6898 = vmatprep.subr.bf16.mxu0 0
    %6899 = vmatpush1.bf16.xpose.msra.mxu0 0
    %6900 = vmatprep.subr.bf16.mxu0 0
    %6901 = vmatpush1.bf16.xpose.msra.mxu0 0
    %6902 = vmatprep.subr.bf16.mxu0 0
    %6903 = vmatpush1.bf16.xpose.msra.mxu0 0
    %6904 = vmatprep.subr.bf16.mxu0 0
    %6905 = vmatpush1.bf16.xpose.msra.mxu0 0
    %6906 = vmatprep.subr.bf16.mxu0 0
    %6907 = vmatpush1.bf16.xpose.msra.mxu0 %v6890
    %6908 = vmatprep.subr.bf16.mxu0 0
    %6909 = vmatpush2.bf16.xpose.msra.mxu0 0
    %6910 = vmatprep.subr.bf16.mxu0 0
    %6911 = vmatpush2.bf16.xpose.msra.mxu0 0
    %6912 = vmatprep.subr.bf16.mxu0 0
    %6913 = vmatpush2.bf16.xpose.msra.mxu0 0
    %6914 = vmatprep.subr.bf16.mxu0 0
    %6915 = vmatpush2.bf16.xpose.msra.mxu0 0
    %6916 = vmatprep.subr.bf16.mxu0 0
    %6917 = vmatpush2.bf16.xpose.msra.mxu0 0
    %6918 = vmatprep.subr.bf16.mxu0 0
    %6919 = vmatpush2.bf16.xpose.msra.mxu0 0
    %6920 = vmatprep.subr.bf16.mxu0 0
    %6921 = vmatpush2.bf16.xpose.msra.mxu0 0
    %6922 = vmatprep.subr.bf16.mxu0 0
    %6923 = vmatpush2.bf16.xpose.msra.mxu0 0
    %6924 = vmatprep.mubr.bf16.mxu0 0
    %6925 = vmatmul.mubr.bf16.gmra.mxu0 %v6887
    %v6926 = vpop.f32.mrf.mxu0
    %v6927 = vadd.f32 0.0, %v6926
    %v6928 = vpop.f32.mrf.mxu0
    %v6929 = vpop.f32.mrf.mxu0
    %v6930 = vpop.f32.mrf.mxu0
    %6931 = vdwg.mxu0
    %6932 = vrot.lane.b32.xlu0 %v4862, 96
    %v6933 = vpop.permute.xlu0 %6932
    %6934 = vrot.lane.b32.xlu0 %v4862, 32
    %v6935 = vpop.permute.xlu0 %6934
    %v6937 = vsel %vm245, %v6933, 0
    %v6940 = vsel %vm245, %v6935, 0
    %6942 = vmatprep.subr.bf16.mxu0 0
    %6943 = vmatpush1.bf16.xpose.msra.mxu0 0
    %6944 = vmatprep.subr.bf16.mxu0 0
    %6945 = vmatpush1.bf16.xpose.msra.mxu0 0
    %6946 = vmatprep.subr.bf16.mxu0 0
    %6947 = vmatpush1.bf16.xpose.msra.mxu0 0
    %6948 = vmatprep.subr.bf16.mxu0 0
    %6949 = vmatpush1.bf16.xpose.msra.mxu0 0
    %6950 = vmatprep.subr.bf16.mxu0 0
    %6951 = vmatpush1.bf16.xpose.msra.mxu0 0
    %6952 = vmatprep.subr.bf16.mxu0 0
    %6953 = vmatpush1.bf16.xpose.msra.mxu0 0
    %6954 = vmatprep.subr.bf16.mxu0 0
    %6955 = vmatpush1.bf16.xpose.msra.mxu0 0
    %6956 = vmatprep.subr.bf16.mxu0 0
    %6957 = vmatpush1.bf16.xpose.msra.mxu0 %v6940
    %6958 = vmatprep.subr.bf16.mxu0 0
    %6959 = vmatpush2.bf16.xpose.msra.mxu0 0
    %6960 = vmatprep.subr.bf16.mxu0 0
    %6961 = vmatpush2.bf16.xpose.msra.mxu0 0
    %6962 = vmatprep.subr.bf16.mxu0 0
    %6963 = vmatpush2.bf16.xpose.msra.mxu0 0
    %6964 = vmatprep.subr.bf16.mxu0 0
    %6965 = vmatpush2.bf16.xpose.msra.mxu0 0
    %6966 = vmatprep.subr.bf16.mxu0 0
    %6967 = vmatpush2.bf16.xpose.msra.mxu0 0
    %6968 = vmatprep.subr.bf16.mxu0 0
    %6969 = vmatpush2.bf16.xpose.msra.mxu0 0
    %6970 = vmatprep.subr.bf16.mxu0 0
    %6971 = vmatpush2.bf16.xpose.msra.mxu0 0
    %6972 = vmatprep.subr.bf16.mxu0 0
    %6973 = vmatpush2.bf16.xpose.msra.mxu0 0
    %6974 = vmatprep.mubr.bf16.mxu0 0
    %6975 = vmatmul.mubr.bf16.gmra.mxu0 %v6937
    %v6976 = vpop.f32.mrf.mxu0
    %v6977 = vadd.f32 0.0, %v6976
    %v6978 = vpop.f32.mrf.mxu0
    %v6979 = vpop.f32.mrf.mxu0
    %v6980 = vpop.f32.mrf.mxu0
    %6981 = vdwg.mxu0
    %6982 = vrot.lane.b32.xlu0 %v4863, 96
    %v6983 = vpop.permute.xlu0 %6982
    %6984 = vrot.lane.b32.xlu0 %v4863, 32
    %v6985 = vpop.permute.xlu0 %6984
    %v6987 = vsel %vm245, %v6983, 0
    %v6990 = vsel %vm245, %v6985, 0
    %6992 = vmatprep.subr.bf16.mxu0 0
    %6993 = vmatpush1.bf16.xpose.msra.mxu0 0
    %6994 = vmatprep.subr.bf16.mxu0 0
    %6995 = vmatpush1.bf16.xpose.msra.mxu0 0
    %6996 = vmatprep.subr.bf16.mxu0 0
    %6997 = vmatpush1.bf16.xpose.msra.mxu0 0
    %6998 = vmatprep.subr.bf16.mxu0 0
    %6999 = vmatpush1.bf16.xpose.msra.mxu0 0
    %7000 = vmatprep.subr.bf16.mxu0 0
    %7001 = vmatpush1.bf16.xpose.msra.mxu0 0
    %7002 = vmatprep.subr.bf16.mxu0 0
    %7003 = vmatpush1.bf16.xpose.msra.mxu0 0
    %7004 = vmatprep.subr.bf16.mxu0 0
    %7005 = vmatpush1.bf16.xpose.msra.mxu0 0
    %7006 = vmatprep.subr.bf16.mxu0 0
    %7007 = vmatpush1.bf16.xpose.msra.mxu0 %v6990
    %7008 = vmatprep.subr.bf16.mxu0 0
    %7009 = vmatpush2.bf16.xpose.msra.mxu0 0
    %7010 = vmatprep.subr.bf16.mxu0 0
    %7011 = vmatpush2.bf16.xpose.msra.mxu0 0
    %7012 = vmatprep.subr.bf16.mxu0 0
    %7013 = vmatpush2.bf16.xpose.msra.mxu0 0
    %7014 = vmatprep.subr.bf16.mxu0 0
    %7015 = vmatpush2.bf16.xpose.msra.mxu0 0
    %7016 = vmatprep.subr.bf16.mxu0 0
    %7017 = vmatpush2.bf16.xpose.msra.mxu0 0
    %7018 = vmatprep.subr.bf16.mxu0 0
    %7019 = vmatpush2.bf16.xpose.msra.mxu0 0
    %7020 = vmatprep.subr.bf16.mxu0 0
    %7021 = vmatpush2.bf16.xpose.msra.mxu0 0
    %7022 = vmatprep.subr.bf16.mxu0 0
    %7023 = vmatpush2.bf16.xpose.msra.mxu0 0
    %7024 = vmatprep.mubr.bf16.mxu0 0
    %7025 = vmatmul.mubr.bf16.gmra.mxu0 %v6987
    %v7026 = vpop.f32.mrf.mxu0
    %v7027 = vadd.f32 0.0, %v7026
    %v7028 = vpop.f32.mrf.mxu0
    %v7029 = vpop.f32.mrf.mxu0
    %v7030 = vpop.f32.mrf.mxu0
    %7031 = vdwg.mxu0
    %v7032 = vsel %vm635, %v6677, -inf
    %7033 = vmax.xlane.f32.xlu0 %v7032
    %v7034 = vpop.xlane.xlu0 %7033
    %v7035 = vsel %vm635, %v6727, -inf
    %7036 = vmax.xlane.f32.xlu0 %v7035
    %v7037 = vpop.xlane.xlu0 %7036
    %v7038 = vsel %vm635, %v6777, -inf
    %7039 = vmax.xlane.f32.xlu0 %v7038
    %v7040 = vpop.xlane.xlu0 %7039
    %v7041 = vsel %vm635, %v6827, -inf
    %7042 = vmax.xlane.f32.xlu0 %v7041
    %v7043 = vpop.xlane.xlu0 %7042
    %v7044 = vsel %vm635, %v6877, -inf
    %7045 = vmax.xlane.f32.xlu0 %v7044
    %v7046 = vpop.xlane.xlu0 %7045
    %v7047 = vsel %vm635, %v6927, -inf
    %7048 = vmax.xlane.f32.xlu0 %v7047
    %v7049 = vpop.xlane.xlu0 %7048
    %v7050 = vsel %vm635, %v6977, -inf
    %7051 = vmax.xlane.f32.xlu0 %v7050
    %v7052 = vpop.xlane.xlu0 %7051
    %v7053 = vsel %vm635, %v7027, -inf
    %7054 = vmax.xlane.f32.xlu0 %v7053
    %v7055 = vpop.xlane.xlu0 %7054
    %v7056 = vsub.f32 %v6677, %v7034
    %v7057 = vsub.f32 %v6727, %v7037
    %v7058 = vsub.f32 %v6777, %v7040
    %v7059 = vsub.f32 %v6827, %v7043
    %v7060 = vsub.f32 %v6877, %v7046
    %v7061 = vsub.f32 %v6927, %v7049
    %v7062 = vsub.f32 %v6977, %v7052
    %v7063 = vsub.f32 %v7027, %v7055
    %v7064 = vmul.f32 %v7056, 1.442695
    %v7065 = vpow.pop %v7064
    %v7066 = vmul.f32 %v7057, 1.442695
    %v7067 = vpow.pop %v7066
    %v7068 = vmul.f32 %v7058, 1.442695
    %v7069 = vpow.pop %v7068
    %v7070 = vmul.f32 %v7059, 1.442695
    %v7071 = vpow.pop %v7070
    %v7072 = vmul.f32 %v7060, 1.442695
    %v7073 = vpow.pop %v7072
    %v7074 = vmul.f32 %v7061, 1.442695
    %v7075 = vpow.pop %v7074
    %v7076 = vmul.f32 %v7062, 1.442695
    %v7077 = vpow.pop %v7076
    %v7078 = vmul.f32 %v7063, 1.442695
    %v7079 = vpow.pop %v7078
    %v7080 = vsel %vm635, %v7065, 0.0
    %7081 = vadd.xlane.f32.xlu0 %v7080
    %v7082 = vpop.xlane.xlu0 %7081
    %v7083 = vsel %vm635, %v7067, 0.0
    %7084 = vadd.xlane.f32.xlu0 %v7083
    %v7085 = vpop.xlane.xlu0 %7084
    %v7086 = vsel %vm635, %v7069, 0.0
    %7087 = vadd.xlane.f32.xlu0 %v7086
    %v7088 = vpop.xlane.xlu0 %7087
    %v7089 = vsel %vm635, %v7071, 0.0
    %7090 = vadd.xlane.f32.xlu0 %v7089
    %v7091 = vpop.xlane.xlu0 %7090
    %v7092 = vsel %vm635, %v7073, 0.0
    %7093 = vadd.xlane.f32.xlu0 %v7092
    %v7094 = vpop.xlane.xlu0 %7093
    %v7095 = vsel %vm635, %v7075, 0.0
    %7096 = vadd.xlane.f32.xlu0 %v7095
    %v7097 = vpop.xlane.xlu0 %7096
    %v7098 = vsel %vm635, %v7077, 0.0
    %7099 = vadd.xlane.f32.xlu0 %v7098
    %v7100 = vpop.xlane.xlu0 %7099
    %v7101 = vsel %vm635, %v7079, 0.0
    %7102 = vadd.xlane.f32.xlu0 %v7101
    %v7103 = vpop.xlane.xlu0 %7102
    %v7104 = vrcp.pop %v7082
    %v7105 = vrcp.pop %v7085
    %v7106 = vrcp.pop %v7088
    %v7107 = vrcp.pop %v7091
    %v7108 = vrcp.pop %v7094
    %v7109 = vrcp.pop %v7097
    %v7110 = vrcp.pop %v7100
    %v7111 = vrcp.pop %v7103
    %v7112 = vmul.f32 %v7065, %v7104
    %v7113 = vmul.f32 %v7067, %v7105
    %v7114 = vmul.f32 %v7069, %v7106
    %v7115 = vmul.f32 %v7071, %v7107
    %v7116 = vmul.f32 %v7073, %v7108
    %v7117 = vmul.f32 %v7075, %v7109
    %v7118 = vmul.f32 %v7077, %v7110
    %v7119 = vmul.f32 %v7079, %v7111
    %v7120 = vpack.c.bf16 %v7112, %v7112
    %v7121 = vpack.c.bf16 %v7113, %v7113
    %v7122 = vpack.c.bf16 %v7114, %v7114
    %v7123 = vpack.c.bf16 %v7115, %v7115
    %v7124 = vpack.c.bf16 %v7116, %v7116
    %v7125 = vpack.c.bf16 %v7117, %v7117
    %v7126 = vpack.c.bf16 %v7118, %v7118
    %v7127 = vpack.c.bf16 %v7119, %v7119
    %7128 = vrot.lane.b32.xlu0 %v4864, 96
    %v7129 = vpop.permute.xlu0 %7128
    %v7131 = vsel %vm635, %v7120, 0
    %v7134 = vsel %vm735, %v7129, 0
    %7136 = vmatprep.subr.bf16.mxu0 0
    %7137 = vmatpush1.bf16.msra.mxu0 0
    %7138 = vmatprep.subr.bf16.mxu0 0
    %7139 = vmatpush1.bf16.msra.mxu0 0
    %7140 = vmatprep.subr.bf16.mxu0 0
    %7141 = vmatpush1.bf16.msra.mxu0 0
    %7142 = vmatprep.subr.bf16.mxu0 0
    %7143 = vmatpush1.bf16.msra.mxu0 0
    %7144 = vmatprep.subr.bf16.mxu0 0
    %7145 = vmatpush1.bf16.msra.mxu0 0
    %7146 = vmatprep.subr.bf16.mxu0 0
    %7147 = vmatpush1.bf16.msra.mxu0 0
    %7148 = vmatprep.subr.bf16.mxu0 0
    %7149 = vmatpush1.bf16.msra.mxu0 0
    %7150 = vmatprep.subr.bf16.mxu0 0
    %7151 = vmatpush1.bf16.msra.mxu0 %v7134
    %7152 = vmatprep.subr.bf16.mxu0 0
    %7153 = vmatpush2.bf16.msra.mxu0 0
    %7154 = vmatprep.subr.bf16.mxu0 0
    %7155 = vmatpush2.bf16.msra.mxu0 0
    %7156 = vmatprep.subr.bf16.mxu0 0
    %7157 = vmatpush2.bf16.msra.mxu0 0
    %7158 = vmatprep.subr.bf16.mxu0 0
    %7159 = vmatpush2.bf16.msra.mxu0 0
    %7160 = vmatprep.subr.bf16.mxu0 0
    %7161 = vmatpush2.bf16.msra.mxu0 0
    %7162 = vmatprep.subr.bf16.mxu0 0
    %7163 = vmatpush2.bf16.msra.mxu0 0
    %7164 = vmatprep.subr.bf16.mxu0 0
    %7165 = vmatpush2.bf16.msra.mxu0 0
    %7166 = vmatprep.subr.bf16.mxu0 0
    %7167 = vmatpush2.bf16.msra.mxu0 0
    %7168 = vmatprep.mubr.bf16.mxu0 0
    %7169 = vmatmul.mubr.bf16.gmra.mxu0 %v7131
    %v7170 = vpop.f32.mrf.mxu0
    %v7171 = vadd.f32 0.0, %v7170
    %v7172 = vpop.f32.mrf.mxu0
    %v7173 = vpop.f32.mrf.mxu0
    %v7174 = vpop.f32.mrf.mxu0
    %7175 = vdwg.mxu0
    %7176 = vrot.lane.b32.xlu0 %v4865, 96
    %v7177 = vpop.permute.xlu0 %7176
    %v7179 = vsel %vm635, %v7121, 0
    %v7182 = vsel %vm735, %v7177, 0
    %7184 = vmatprep.subr.bf16.mxu0 0
    %7185 = vmatpush1.bf16.msra.mxu0 0
    %7186 = vmatprep.subr.bf16.mxu0 0
    %7187 = vmatpush1.bf16.msra.mxu0 0
    %7188 = vmatprep.subr.bf16.mxu0 0
    %7189 = vmatpush1.bf16.msra.mxu0 0
    %7190 = vmatprep.subr.bf16.mxu0 0
    %7191 = vmatpush1.bf16.msra.mxu0 0
    %7192 = vmatprep.subr.bf16.mxu0 0
    %7193 = vmatpush1.bf16.msra.mxu0 0
    %7194 = vmatprep.subr.bf16.mxu0 0
    %7195 = vmatpush1.bf16.msra.mxu0 0
    %7196 = vmatprep.subr.bf16.mxu0 0
    %7197 = vmatpush1.bf16.msra.mxu0 0
    %7198 = vmatprep.subr.bf16.mxu0 0
    %7199 = vmatpush1.bf16.msra.mxu0 %v7182
    %7200 = vmatprep.subr.bf16.mxu0 0
    %7201 = vmatpush2.bf16.msra.mxu0 0
    %7202 = vmatprep.subr.bf16.mxu0 0
    %7203 = vmatpush2.bf16.msra.mxu0 0
    %7204 = vmatprep.subr.bf16.mxu0 0
    %7205 = vmatpush2.bf16.msra.mxu0 0
    %7206 = vmatprep.subr.bf16.mxu0 0
    %7207 = vmatpush2.bf16.msra.mxu0 0
    %7208 = vmatprep.subr.bf16.mxu0 0
    %7209 = vmatpush2.bf16.msra.mxu0 0
    %7210 = vmatprep.subr.bf16.mxu0 0
    %7211 = vmatpush2.bf16.msra.mxu0 0
    %7212 = vmatprep.subr.bf16.mxu0 0
    %7213 = vmatpush2.bf16.msra.mxu0 0
    %7214 = vmatprep.subr.bf16.mxu0 0
    %7215 = vmatpush2.bf16.msra.mxu0 0
    %7216 = vmatprep.mubr.bf16.mxu0 0
    %7217 = vmatmul.mubr.bf16.gmra.mxu0 %v7179
    %v7218 = vpop.f32.mrf.mxu0
    %v7219 = vadd.f32 0.0, %v7218
    %v7220 = vpop.f32.mrf.mxu0
    %v7221 = vpop.f32.mrf.mxu0
    %v7222 = vpop.f32.mrf.mxu0
    %7223 = vdwg.mxu0
    %7224 = vrot.lane.b32.xlu0 %v4866, 96
    %v7225 = vpop.permute.xlu0 %7224
    %v7227 = vsel %vm635, %v7122, 0
    %v7230 = vsel %vm735, %v7225, 0
    %7232 = vmatprep.subr.bf16.mxu0 0
    %7233 = vmatpush1.bf16.msra.mxu0 0
    %7234 = vmatprep.subr.bf16.mxu0 0
    %7235 = vmatpush1.bf16.msra.mxu0 0
    %7236 = vmatprep.subr.bf16.mxu0 0
    %7237 = vmatpush1.bf16.msra.mxu0 0
    %7238 = vmatprep.subr.bf16.mxu0 0
    %7239 = vmatpush1.bf16.msra.mxu0 0
    %7240 = vmatprep.subr.bf16.mxu0 0
    %7241 = vmatpush1.bf16.msra.mxu0 0
    %7242 = vmatprep.subr.bf16.mxu0 0
    %7243 = vmatpush1.bf16.msra.mxu0 0
    %7244 = vmatprep.subr.bf16.mxu0 0
    %7245 = vmatpush1.bf16.msra.mxu0 0
    %7246 = vmatprep.subr.bf16.mxu0 0
    %7247 = vmatpush1.bf16.msra.mxu0 %v7230
    %7248 = vmatprep.subr.bf16.mxu0 0
    %7249 = vmatpush2.bf16.msra.mxu0 0
    %7250 = vmatprep.subr.bf16.mxu0 0
    %7251 = vmatpush2.bf16.msra.mxu0 0
    %7252 = vmatprep.subr.bf16.mxu0 0
    %7253 = vmatpush2.bf16.msra.mxu0 0
    %7254 = vmatprep.subr.bf16.mxu0 0
    %7255 = vmatpush2.bf16.msra.mxu0 0
    %7256 = vmatprep.subr.bf16.mxu0 0
    %7257 = vmatpush2.bf16.msra.mxu0 0
    %7258 = vmatprep.subr.bf16.mxu0 0
    %7259 = vmatpush2.bf16.msra.mxu0 0
    %7260 = vmatprep.subr.bf16.mxu0 0
    %7261 = vmatpush2.bf16.msra.mxu0 0
    %7262 = vmatprep.subr.bf16.mxu0 0
    %7263 = vmatpush2.bf16.msra.mxu0 0
    %7264 = vmatprep.mubr.bf16.mxu0 0
    %7265 = vmatmul.mubr.bf16.gmra.mxu0 %v7227
    %v7266 = vpop.f32.mrf.mxu0
    %v7267 = vadd.f32 0.0, %v7266
    %v7268 = vpop.f32.mrf.mxu0
    %v7269 = vpop.f32.mrf.mxu0
    %v7270 = vpop.f32.mrf.mxu0
    %7271 = vdwg.mxu0
    %7272 = vrot.lane.b32.xlu0 %v4867, 96
    %v7273 = vpop.permute.xlu0 %7272
    %v7275 = vsel %vm635, %v7123, 0
    %v7278 = vsel %vm735, %v7273, 0
    %7280 = vmatprep.subr.bf16.mxu0 0
    %7281 = vmatpush1.bf16.msra.mxu0 0
    %7282 = vmatprep.subr.bf16.mxu0 0
    %7283 = vmatpush1.bf16.msra.mxu0 0
    %7284 = vmatprep.subr.bf16.mxu0 0
    %7285 = vmatpush1.bf16.msra.mxu0 0
    %7286 = vmatprep.subr.bf16.mxu0 0
    %7287 = vmatpush1.bf16.msra.mxu0 0
    %7288 = vmatprep.subr.bf16.mxu0 0
    %7289 = vmatpush1.bf16.msra.mxu0 0
    %7290 = vmatprep.subr.bf16.mxu0 0
    %7291 = vmatpush1.bf16.msra.mxu0 0
    %7292 = vmatprep.subr.bf16.mxu0 0
    %7293 = vmatpush1.bf16.msra.mxu0 0
    %7294 = vmatprep.subr.bf16.mxu0 0
    %7295 = vmatpush1.bf16.msra.mxu0 %v7278
    %7296 = vmatprep.subr.bf16.mxu0 0
    %7297 = vmatpush2.bf16.msra.mxu0 0
    %7298 = vmatprep.subr.bf16.mxu0 0
    %7299 = vmatpush2.bf16.msra.mxu0 0
    %7300 = vmatprep.subr.bf16.mxu0 0
    %7301 = vmatpush2.bf16.msra.mxu0 0
    %7302 = vmatprep.subr.bf16.mxu0 0
    %7303 = vmatpush2.bf16.msra.mxu0 0
    %7304 = vmatprep.subr.bf16.mxu0 0
    %7305 = vmatpush2.bf16.msra.mxu0 0
    %7306 = vmatprep.subr.bf16.mxu0 0
    %7307 = vmatpush2.bf16.msra.mxu0 0
    %7308 = vmatprep.subr.bf16.mxu0 0
    %7309 = vmatpush2.bf16.msra.mxu0 0
    %7310 = vmatprep.subr.bf16.mxu0 0
    %7311 = vmatpush2.bf16.msra.mxu0 0
    %7312 = vmatprep.mubr.bf16.mxu0 0
    %7313 = vmatmul.mubr.bf16.gmra.mxu0 %v7275
    %v7314 = vpop.f32.mrf.mxu0
    %v7315 = vadd.f32 0.0, %v7314
    %v7316 = vpop.f32.mrf.mxu0
    %v7317 = vpop.f32.mrf.mxu0
    %v7318 = vpop.f32.mrf.mxu0
    %7319 = vdwg.mxu0
    %7320 = vrot.lane.b32.xlu0 %v4868, 96
    %v7321 = vpop.permute.xlu0 %7320
    %v7323 = vsel %vm635, %v7124, 0
    %v7326 = vsel %vm735, %v7321, 0
    %7328 = vmatprep.subr.bf16.mxu0 0
    %7329 = vmatpush1.bf16.msra.mxu0 0
    %7330 = vmatprep.subr.bf16.mxu0 0
    %7331 = vmatpush1.bf16.msra.mxu0 0
    %7332 = vmatprep.subr.bf16.mxu0 0
    %7333 = vmatpush1.bf16.msra.mxu0 0
    %7334 = vmatprep.subr.bf16.mxu0 0
    %7335 = vmatpush1.bf16.msra.mxu0 0
    %7336 = vmatprep.subr.bf16.mxu0 0
    %7337 = vmatpush1.bf16.msra.mxu0 0
    %7338 = vmatprep.subr.bf16.mxu0 0
    %7339 = vmatpush1.bf16.msra.mxu0 0
    %7340 = vmatprep.subr.bf16.mxu0 0
    %7341 = vmatpush1.bf16.msra.mxu0 0
    %7342 = vmatprep.subr.bf16.mxu0 0
    %7343 = vmatpush1.bf16.msra.mxu0 %v7326
    %7344 = vmatprep.subr.bf16.mxu0 0
    %7345 = vmatpush2.bf16.msra.mxu0 0
    %7346 = vmatprep.subr.bf16.mxu0 0
    %7347 = vmatpush2.bf16.msra.mxu0 0
    %7348 = vmatprep.subr.bf16.mxu0 0
    %7349 = vmatpush2.bf16.msra.mxu0 0
    %7350 = vmatprep.subr.bf16.mxu0 0
    %7351 = vmatpush2.bf16.msra.mxu0 0
    %7352 = vmatprep.subr.bf16.mxu0 0
    %7353 = vmatpush2.bf16.msra.mxu0 0
    %7354 = vmatprep.subr.bf16.mxu0 0
    %7355 = vmatpush2.bf16.msra.mxu0 0
    %7356 = vmatprep.subr.bf16.mxu0 0
    %7357 = vmatpush2.bf16.msra.mxu0 0
    %7358 = vmatprep.subr.bf16.mxu0 0
    %7359 = vmatpush2.bf16.msra.mxu0 0
    %7360 = vmatprep.mubr.bf16.mxu0 0
    %7361 = vmatmul.mubr.bf16.gmra.mxu0 %v7323
    %v7362 = vpop.f32.mrf.mxu0
    %v7363 = vadd.f32 0.0, %v7362
    %v7364 = vpop.f32.mrf.mxu0
    %v7365 = vpop.f32.mrf.mxu0
    %v7366 = vpop.f32.mrf.mxu0
    %7367 = vdwg.mxu0
    %7368 = vrot.lane.b32.xlu0 %v4869, 96
    %v7369 = vpop.permute.xlu0 %7368
    %v7371 = vsel %vm635, %v7125, 0
    %v7374 = vsel %vm735, %v7369, 0
    %7376 = vmatprep.subr.bf16.mxu0 0
    %7377 = vmatpush1.bf16.msra.mxu0 0
    %7378 = vmatprep.subr.bf16.mxu0 0
    %7379 = vmatpush1.bf16.msra.mxu0 0
    %7380 = vmatprep.subr.bf16.mxu0 0
    %7381 = vmatpush1.bf16.msra.mxu0 0
    %7382 = vmatprep.subr.bf16.mxu0 0
    %7383 = vmatpush1.bf16.msra.mxu0 0
    %7384 = vmatprep.subr.bf16.mxu0 0
    %7385 = vmatpush1.bf16.msra.mxu0 0
    %7386 = vmatprep.subr.bf16.mxu0 0
    %7387 = vmatpush1.bf16.msra.mxu0 0
    %7388 = vmatprep.subr.bf16.mxu0 0
    %7389 = vmatpush1.bf16.msra.mxu0 0
    %7390 = vmatprep.subr.bf16.mxu0 0
    %7391 = vmatpush1.bf16.msra.mxu0 %v7374
    %7392 = vmatprep.subr.bf16.mxu0 0
    %7393 = vmatpush2.bf16.msra.mxu0 0
    %7394 = vmatprep.subr.bf16.mxu0 0
    %7395 = vmatpush2.bf16.msra.mxu0 0
    %7396 = vmatprep.subr.bf16.mxu0 0
    %7397 = vmatpush2.bf16.msra.mxu0 0
    %7398 = vmatprep.subr.bf16.mxu0 0
    %7399 = vmatpush2.bf16.msra.mxu0 0
    %7400 = vmatprep.subr.bf16.mxu0 0
    %7401 = vmatpush2.bf16.msra.mxu0 0
    %7402 = vmatprep.subr.bf16.mxu0 0
    %7403 = vmatpush2.bf16.msra.mxu0 0
    %7404 = vmatprep.subr.bf16.mxu0 0
    %7405 = vmatpush2.bf16.msra.mxu0 0
    %7406 = vmatprep.subr.bf16.mxu0 0
    %7407 = vmatpush2.bf16.msra.mxu0 0
    %7408 = vmatprep.mubr.bf16.mxu0 0
    %7409 = vmatmul.mubr.bf16.gmra.mxu0 %v7371
    %v7410 = vpop.f32.mrf.mxu0
    %v7411 = vadd.f32 0.0, %v7410
    %v7412 = vpop.f32.mrf.mxu0
    %v7413 = vpop.f32.mrf.mxu0
    %v7414 = vpop.f32.mrf.mxu0
    %7415 = vdwg.mxu0
    %7416 = vrot.lane.b32.xlu0 %v4870, 96
    %v7417 = vpop.permute.xlu0 %7416
    %v7419 = vsel %vm635, %v7126, 0
    %v7422 = vsel %vm735, %v7417, 0
    %7424 = vmatprep.subr.bf16.mxu0 0
    %7425 = vmatpush1.bf16.msra.mxu0 0
    %7426 = vmatprep.subr.bf16.mxu0 0
    %7427 = vmatpush1.bf16.msra.mxu0 0
    %7428 = vmatprep.subr.bf16.mxu0 0
    %7429 = vmatpush1.bf16.msra.mxu0 0
    %7430 = vmatprep.subr.bf16.mxu0 0
    %7431 = vmatpush1.bf16.msra.mxu0 0
    %7432 = vmatprep.subr.bf16.mxu0 0
    %7433 = vmatpush1.bf16.msra.mxu0 0
    %7434 = vmatprep.subr.bf16.mxu0 0
    %7435 = vmatpush1.bf16.msra.mxu0 0
    %7436 = vmatprep.subr.bf16.mxu0 0
    %7437 = vmatpush1.bf16.msra.mxu0 0
    %7438 = vmatprep.subr.bf16.mxu0 0
    %7439 = vmatpush1.bf16.msra.mxu0 %v7422
    %7440 = vmatprep.subr.bf16.mxu0 0
    %7441 = vmatpush2.bf16.msra.mxu0 0
    %7442 = vmatprep.subr.bf16.mxu0 0
    %7443 = vmatpush2.bf16.msra.mxu0 0
    %7444 = vmatprep.subr.bf16.mxu0 0
    %7445 = vmatpush2.bf16.msra.mxu0 0
    %7446 = vmatprep.subr.bf16.mxu0 0
    %7447 = vmatpush2.bf16.msra.mxu0 0
    %7448 = vmatprep.subr.bf16.mxu0 0
    %7449 = vmatpush2.bf16.msra.mxu0 0
    %7450 = vmatprep.subr.bf16.mxu0 0
    %7451 = vmatpush2.bf16.msra.mxu0 0
    %7452 = vmatprep.subr.bf16.mxu0 0
    %7453 = vmatpush2.bf16.msra.mxu0 0
    %7454 = vmatprep.subr.bf16.mxu0 0
    %7455 = vmatpush2.bf16.msra.mxu0 0
    %7456 = vmatprep.mubr.bf16.mxu0 0
    %7457 = vmatmul.mubr.bf16.gmra.mxu0 %v7419
    %v7458 = vpop.f32.mrf.mxu0
    %v7459 = vadd.f32 0.0, %v7458
    %v7460 = vpop.f32.mrf.mxu0
    %v7461 = vpop.f32.mrf.mxu0
    %v7462 = vpop.f32.mrf.mxu0
    %7463 = vdwg.mxu0
    %7464 = vrot.lane.b32.xlu0 %v4871, 96
    %v7465 = vpop.permute.xlu0 %7464
    %v7467 = vsel %vm635, %v7127, 0
    %v7470 = vsel %vm735, %v7465, 0
    %7472 = vmatprep.subr.bf16.mxu0 0
    %7473 = vmatpush1.bf16.msra.mxu0 0
    %7474 = vmatprep.subr.bf16.mxu0 0
    %7475 = vmatpush1.bf16.msra.mxu0 0
    %7476 = vmatprep.subr.bf16.mxu0 0
    %7477 = vmatpush1.bf16.msra.mxu0 0
    %7478 = vmatprep.subr.bf16.mxu0 0
    %7479 = vmatpush1.bf16.msra.mxu0 0
    %7480 = vmatprep.subr.bf16.mxu0 0
    %7481 = vmatpush1.bf16.msra.mxu0 0
    %7482 = vmatprep.subr.bf16.mxu0 0
    %7483 = vmatpush1.bf16.msra.mxu0 0
    %7484 = vmatprep.subr.bf16.mxu0 0
    %7485 = vmatpush1.bf16.msra.mxu0 0
    %7486 = vmatprep.subr.bf16.mxu0 0
    %7487 = vmatpush1.bf16.msra.mxu0 %v7470
    %7488 = vmatprep.subr.bf16.mxu0 0
    %7489 = vmatpush2.bf16.msra.mxu0 0
    %7490 = vmatprep.subr.bf16.mxu0 0
    %7491 = vmatpush2.bf16.msra.mxu0 0
    %7492 = vmatprep.subr.bf16.mxu0 0
    %7493 = vmatpush2.bf16.msra.mxu0 0
    %7494 = vmatprep.subr.bf16.mxu0 0
    %7495 = vmatpush2.bf16.msra.mxu0 0
    %7496 = vmatprep.subr.bf16.mxu0 0
    %7497 = vmatpush2.bf16.msra.mxu0 0
    %7498 = vmatprep.subr.bf16.mxu0 0
    %7499 = vmatpush2.bf16.msra.mxu0 0
    %7500 = vmatprep.subr.bf16.mxu0 0
    %7501 = vmatpush2.bf16.msra.mxu0 0
    %7502 = vmatprep.subr.bf16.mxu0 0
    %7503 = vmatpush2.bf16.msra.mxu0 0
    %7504 = vmatprep.mubr.bf16.mxu0 0
    %7505 = vmatmul.mubr.bf16.gmra.mxu0 %v7467
    %v7506 = vpop.f32.mrf.mxu0
    %v7507 = vadd.f32 0.0, %v7506
    %v7508 = vpop.f32.mrf.mxu0
    %v7509 = vpop.f32.mrf.mxu0
    %v7510 = vpop.f32.mrf.mxu0
    %7511 = vdwg.mxu0
    %v7512 = vpack.c.bf16 %v7171, %v7171
    %v7513 = vpack.c.bf16 %v7219, %v7219
    %v7514 = vpack.c.bf16 %v7267, %v7267
    %v7515 = vpack.c.bf16 %v7315, %v7315
    %v7516 = vpack.c.bf16 %v7363, %v7363
    %v7517 = vpack.c.bf16 %v7411, %v7411
    %v7518 = vpack.c.bf16 %v7459, %v7459
    %v7519 = vpack.c.bf16 %v7507, %v7507
    %7520 = vrot.lane.b32.xlu0 %v4856, 80
    %v7521 = vpop.permute.xlu0 %7520
    %7522 = vrot.lane.b32.xlu0 %v4856, 16
    %v7523 = vpop.permute.xlu0 %7522
    %v7525 = vsel %vm245, %v7521, 0
    %v7528 = vsel %vm245, %v7523, 0
    %7530 = vmatprep.subr.bf16.mxu0 0
    %7531 = vmatpush1.bf16.xpose.msra.mxu0 0
    %7532 = vmatprep.subr.bf16.mxu0 0
    %7533 = vmatpush1.bf16.xpose.msra.mxu0 0
    %7534 = vmatprep.subr.bf16.mxu0 0
    %7535 = vmatpush1.bf16.xpose.msra.mxu0 0
    %7536 = vmatprep.subr.bf16.mxu0 0
    %7537 = vmatpush1.bf16.xpose.msra.mxu0 0
    %7538 = vmatprep.subr.bf16.mxu0 0
    %7539 = vmatpush1.bf16.xpose.msra.mxu0 0
    %7540 = vmatprep.subr.bf16.mxu0 0
    %7541 = vmatpush1.bf16.xpose.msra.mxu0 0
    %7542 = vmatprep.subr.bf16.mxu0 0
    %7543 = vmatpush1.bf16.xpose.msra.mxu0 0
    %7544 = vmatprep.subr.bf16.mxu0 0
    %7545 = vmatpush1.bf16.xpose.msra.mxu0 %v7528
    %7546 = vmatprep.subr.bf16.mxu0 0
    %7547 = vmatpush2.bf16.xpose.msra.mxu0 0
    %7548 = vmatprep.subr.bf16.mxu0 0
    %7549 = vmatpush2.bf16.xpose.msra.mxu0 0
    %7550 = vmatprep.subr.bf16.mxu0 0
    %7551 = vmatpush2.bf16.xpose.msra.mxu0 0
    %7552 = vmatprep.subr.bf16.mxu0 0
    %7553 = vmatpush2.bf16.xpose.msra.mxu0 0
    %7554 = vmatprep.subr.bf16.mxu0 0
    %7555 = vmatpush2.bf16.xpose.msra.mxu0 0
    %7556 = vmatprep.subr.bf16.mxu0 0
    %7557 = vmatpush2.bf16.xpose.msra.mxu0 0
    %7558 = vmatprep.subr.bf16.mxu0 0
    %7559 = vmatpush2.bf16.xpose.msra.mxu0 0
    %7560 = vmatprep.subr.bf16.mxu0 0
    %7561 = vmatpush2.bf16.xpose.msra.mxu0 0
    %7562 = vmatprep.mubr.bf16.mxu0 0
    %7563 = vmatmul.mubr.bf16.gmra.mxu0 %v7525
    %v7564 = vpop.f32.mrf.mxu0
    %v7565 = vadd.f32 0.0, %v7564
    %v7566 = vpop.f32.mrf.mxu0
    %v7567 = vpop.f32.mrf.mxu0
    %v7568 = vpop.f32.mrf.mxu0
    %7569 = vdwg.mxu0
    %7570 = vrot.lane.b32.xlu0 %v4857, 80
    %v7571 = vpop.permute.xlu0 %7570
    %7572 = vrot.lane.b32.xlu0 %v4857, 16
    %v7573 = vpop.permute.xlu0 %7572
    %v7575 = vsel %vm245, %v7571, 0
    %v7578 = vsel %vm245, %v7573, 0
    %7580 = vmatprep.subr.bf16.mxu0 0
    %7581 = vmatpush1.bf16.xpose.msra.mxu0 0
    %7582 = vmatprep.subr.bf16.mxu0 0
    %7583 = vmatpush1.bf16.xpose.msra.mxu0 0
    %7584 = vmatprep.subr.bf16.mxu0 0
    %7585 = vmatpush1.bf16.xpose.msra.mxu0 0
    %7586 = vmatprep.subr.bf16.mxu0 0
    %7587 = vmatpush1.bf16.xpose.msra.mxu0 0
    %7588 = vmatprep.subr.bf16.mxu0 0
    %7589 = vmatpush1.bf16.xpose.msra.mxu0 0
    %7590 = vmatprep.subr.bf16.mxu0 0
    %7591 = vmatpush1.bf16.xpose.msra.mxu0 0
    %7592 = vmatprep.subr.bf16.mxu0 0
    %7593 = vmatpush1.bf16.xpose.msra.mxu0 0
    %7594 = vmatprep.subr.bf16.mxu0 0
    %7595 = vmatpush1.bf16.xpose.msra.mxu0 %v7578
    %7596 = vmatprep.subr.bf16.mxu0 0
    %7597 = vmatpush2.bf16.xpose.msra.mxu0 0
    %7598 = vmatprep.subr.bf16.mxu0 0
    %7599 = vmatpush2.bf16.xpose.msra.mxu0 0
    %7600 = vmatprep.subr.bf16.mxu0 0
    %7601 = vmatpush2.bf16.xpose.msra.mxu0 0
    %7602 = vmatprep.subr.bf16.mxu0 0
    %7603 = vmatpush2.bf16.xpose.msra.mxu0 0
    %7604 = vmatprep.subr.bf16.mxu0 0
    %7605 = vmatpush2.bf16.xpose.msra.mxu0 0
    %7606 = vmatprep.subr.bf16.mxu0 0
    %7607 = vmatpush2.bf16.xpose.msra.mxu0 0
    %7608 = vmatprep.subr.bf16.mxu0 0
    %7609 = vmatpush2.bf16.xpose.msra.mxu0 0
    %7610 = vmatprep.subr.bf16.mxu0 0
    %7611 = vmatpush2.bf16.xpose.msra.mxu0 0
    %7612 = vmatprep.mubr.bf16.mxu0 0
    %7613 = vmatmul.mubr.bf16.gmra.mxu0 %v7575
    %v7614 = vpop.f32.mrf.mxu0
    %v7615 = vadd.f32 0.0, %v7614
    %v7616 = vpop.f32.mrf.mxu0
    %v7617 = vpop.f32.mrf.mxu0
    %v7618 = vpop.f32.mrf.mxu0
    %7619 = vdwg.mxu0
    %7620 = vrot.lane.b32.xlu0 %v4858, 80
    %v7621 = vpop.permute.xlu0 %7620
    %7622 = vrot.lane.b32.xlu0 %v4858, 16
    %v7623 = vpop.permute.xlu0 %7622
    %v7625 = vsel %vm245, %v7621, 0
    %v7628 = vsel %vm245, %v7623, 0
    %7630 = vmatprep.subr.bf16.mxu0 0
    %7631 = vmatpush1.bf16.xpose.msra.mxu0 0
    %7632 = vmatprep.subr.bf16.mxu0 0
    %7633 = vmatpush1.bf16.xpose.msra.mxu0 0
    %7634 = vmatprep.subr.bf16.mxu0 0
    %7635 = vmatpush1.bf16.xpose.msra.mxu0 0
    %7636 = vmatprep.subr.bf16.mxu0 0
    %7637 = vmatpush1.bf16.xpose.msra.mxu0 0
    %7638 = vmatprep.subr.bf16.mxu0 0
    %7639 = vmatpush1.bf16.xpose.msra.mxu0 0
    %7640 = vmatprep.subr.bf16.mxu0 0
    %7641 = vmatpush1.bf16.xpose.msra.mxu0 0
    %7642 = vmatprep.subr.bf16.mxu0 0
    %7643 = vmatpush1.bf16.xpose.msra.mxu0 0
    %7644 = vmatprep.subr.bf16.mxu0 0
    %7645 = vmatpush1.bf16.xpose.msra.mxu0 %v7628
    %7646 = vmatprep.subr.bf16.mxu0 0
    %7647 = vmatpush2.bf16.xpose.msra.mxu0 0
    %7648 = vmatprep.subr.bf16.mxu0 0
    %7649 = vmatpush2.bf16.xpose.msra.mxu0 0
    %7650 = vmatprep.subr.bf16.mxu0 0
    %7651 = vmatpush2.bf16.xpose.msra.mxu0 0
    %7652 = vmatprep.subr.bf16.mxu0 0
    %7653 = vmatpush2.bf16.xpose.msra.mxu0 0
    %7654 = vmatprep.subr.bf16.mxu0 0
    %7655 = vmatpush2.bf16.xpose.msra.mxu0 0
    %7656 = vmatprep.subr.bf16.mxu0 0
    %7657 = vmatpush2.bf16.xpose.msra.mxu0 0
    %7658 = vmatprep.subr.bf16.mxu0 0
    %7659 = vmatpush2.bf16.xpose.msra.mxu0 0
    %7660 = vmatprep.subr.bf16.mxu0 0
    %7661 = vmatpush2.bf16.xpose.msra.mxu0 0
    %7662 = vmatprep.mubr.bf16.mxu0 0
    %7663 = vmatmul.mubr.bf16.gmra.mxu0 %v7625
    %v7664 = vpop.f32.mrf.mxu0
    %v7665 = vadd.f32 0.0, %v7664
    %v7666 = vpop.f32.mrf.mxu0
    %v7667 = vpop.f32.mrf.mxu0
    %v7668 = vpop.f32.mrf.mxu0
    %7669 = vdwg.mxu0
    %7670 = vrot.lane.b32.xlu0 %v4859, 80
    %v7671 = vpop.permute.xlu0 %7670
    %7672 = vrot.lane.b32.xlu0 %v4859, 16
    %v7673 = vpop.permute.xlu0 %7672
    %v7675 = vsel %vm245, %v7671, 0
    %v7678 = vsel %vm245, %v7673, 0
    %7680 = vmatprep.subr.bf16.mxu0 0
    %7681 = vmatpush1.bf16.xpose.msra.mxu0 0
    %7682 = vmatprep.subr.bf16.mxu0 0
    %7683 = vmatpush1.bf16.xpose.msra.mxu0 0
    %7684 = vmatprep.subr.bf16.mxu0 0
    %7685 = vmatpush1.bf16.xpose.msra.mxu0 0
    %7686 = vmatprep.subr.bf16.mxu0 0
    %7687 = vmatpush1.bf16.xpose.msra.mxu0 0
    %7688 = vmatprep.subr.bf16.mxu0 0
    %7689 = vmatpush1.bf16.xpose.msra.mxu0 0
    %7690 = vmatprep.subr.bf16.mxu0 0
    %7691 = vmatpush1.bf16.xpose.msra.mxu0 0
    %7692 = vmatprep.subr.bf16.mxu0 0
    %7693 = vmatpush1.bf16.xpose.msra.mxu0 0
    %7694 = vmatprep.subr.bf16.mxu0 0
    %7695 = vmatpush1.bf16.xpose.msra.mxu0 %v7678
    %7696 = vmatprep.subr.bf16.mxu0 0
    %7697 = vmatpush2.bf16.xpose.msra.mxu0 0
    %7698 = vmatprep.subr.bf16.mxu0 0
    %7699 = vmatpush2.bf16.xpose.msra.mxu0 0
    %7700 = vmatprep.subr.bf16.mxu0 0
    %7701 = vmatpush2.bf16.xpose.msra.mxu0 0
    %7702 = vmatprep.subr.bf16.mxu0 0
    %7703 = vmatpush2.bf16.xpose.msra.mxu0 0
    %7704 = vmatprep.subr.bf16.mxu0 0
    %7705 = vmatpush2.bf16.xpose.msra.mxu0 0
    %7706 = vmatprep.subr.bf16.mxu0 0
    %7707 = vmatpush2.bf16.xpose.msra.mxu0 0
    %7708 = vmatprep.subr.bf16.mxu0 0
    %7709 = vmatpush2.bf16.xpose.msra.mxu0 0
    %7710 = vmatprep.subr.bf16.mxu0 0
    %7711 = vmatpush2.bf16.xpose.msra.mxu0 0
    %7712 = vmatprep.mubr.bf16.mxu0 0
    %7713 = vmatmul.mubr.bf16.gmra.mxu0 %v7675
    %v7714 = vpop.f32.mrf.mxu0
    %v7715 = vadd.f32 0.0, %v7714
    %v7716 = vpop.f32.mrf.mxu0
    %v7717 = vpop.f32.mrf.mxu0
    %v7718 = vpop.f32.mrf.mxu0
    %7719 = vdwg.mxu0
    %7720 = vrot.lane.b32.xlu0 %v4860, 80
    %v7721 = vpop.permute.xlu0 %7720
    %7722 = vrot.lane.b32.xlu0 %v4860, 16
    %v7723 = vpop.permute.xlu0 %7722
    %v7725 = vsel %vm245, %v7721, 0
    %v7728 = vsel %vm245, %v7723, 0
    %7730 = vmatprep.subr.bf16.mxu0 0
    %7731 = vmatpush1.bf16.xpose.msra.mxu0 0
    %7732 = vmatprep.subr.bf16.mxu0 0
    %7733 = vmatpush1.bf16.xpose.msra.mxu0 0
    %7734 = vmatprep.subr.bf16.mxu0 0
    %7735 = vmatpush1.bf16.xpose.msra.mxu0 0
    %7736 = vmatprep.subr.bf16.mxu0 0
    %7737 = vmatpush1.bf16.xpose.msra.mxu0 0
    %7738 = vmatprep.subr.bf16.mxu0 0
    %7739 = vmatpush1.bf16.xpose.msra.mxu0 0
    %7740 = vmatprep.subr.bf16.mxu0 0
    %7741 = vmatpush1.bf16.xpose.msra.mxu0 0
    %7742 = vmatprep.subr.bf16.mxu0 0
    %7743 = vmatpush1.bf16.xpose.msra.mxu0 0
    %7744 = vmatprep.subr.bf16.mxu0 0
    %7745 = vmatpush1.bf16.xpose.msra.mxu0 %v7728
    %7746 = vmatprep.subr.bf16.mxu0 0
    %7747 = vmatpush2.bf16.xpose.msra.mxu0 0
    %7748 = vmatprep.subr.bf16.mxu0 0
    %7749 = vmatpush2.bf16.xpose.msra.mxu0 0
    %7750 = vmatprep.subr.bf16.mxu0 0
    %7751 = vmatpush2.bf16.xpose.msra.mxu0 0
    %7752 = vmatprep.subr.bf16.mxu0 0
    %7753 = vmatpush2.bf16.xpose.msra.mxu0 0
    %7754 = vmatprep.subr.bf16.mxu0 0
    %7755 = vmatpush2.bf16.xpose.msra.mxu0 0
    %7756 = vmatprep.subr.bf16.mxu0 0
    %7757 = vmatpush2.bf16.xpose.msra.mxu0 0
    %7758 = vmatprep.subr.bf16.mxu0 0
    %7759 = vmatpush2.bf16.xpose.msra.mxu0 0
    %7760 = vmatprep.subr.bf16.mxu0 0
    %7761 = vmatpush2.bf16.xpose.msra.mxu0 0
    %7762 = vmatprep.mubr.bf16.mxu0 0
    %7763 = vmatmul.mubr.bf16.gmra.mxu0 %v7725
    %v7764 = vpop.f32.mrf.mxu0
    %v7765 = vadd.f32 0.0, %v7764
    %v7766 = vpop.f32.mrf.mxu0
    %v7767 = vpop.f32.mrf.mxu0
    %v7768 = vpop.f32.mrf.mxu0
    %7769 = vdwg.mxu0
    %7770 = vrot.lane.b32.xlu0 %v4861, 80
    %v7771 = vpop.permute.xlu0 %7770
    %7772 = vrot.lane.b32.xlu0 %v4861, 16
    %v7773 = vpop.permute.xlu0 %7772
    %v7775 = vsel %vm245, %v7771, 0
    %v7778 = vsel %vm245, %v7773, 0
    %7780 = vmatprep.subr.bf16.mxu0 0
    %7781 = vmatpush1.bf16.xpose.msra.mxu0 0
    %7782 = vmatprep.subr.bf16.mxu0 0
    %7783 = vmatpush1.bf16.xpose.msra.mxu0 0
    %7784 = vmatprep.subr.bf16.mxu0 0
    %7785 = vmatpush1.bf16.xpose.msra.mxu0 0
    %7786 = vmatprep.subr.bf16.mxu0 0
    %7787 = vmatpush1.bf16.xpose.msra.mxu0 0
    %7788 = vmatprep.subr.bf16.mxu0 0
    %7789 = vmatpush1.bf16.xpose.msra.mxu0 0
    %7790 = vmatprep.subr.bf16.mxu0 0
    %7791 = vmatpush1.bf16.xpose.msra.mxu0 0
    %7792 = vmatprep.subr.bf16.mxu0 0
    %7793 = vmatpush1.bf16.xpose.msra.mxu0 0
    %7794 = vmatprep.subr.bf16.mxu0 0
    %7795 = vmatpush1.bf16.xpose.msra.mxu0 %v7778
    %7796 = vmatprep.subr.bf16.mxu0 0
    %7797 = vmatpush2.bf16.xpose.msra.mxu0 0
    %7798 = vmatprep.subr.bf16.mxu0 0
    %7799 = vmatpush2.bf16.xpose.msra.mxu0 0
    %7800 = vmatprep.subr.bf16.mxu0 0
    %7801 = vmatpush2.bf16.xpose.msra.mxu0 0
    %7802 = vmatprep.subr.bf16.mxu0 0
    %7803 = vmatpush2.bf16.xpose.msra.mxu0 0
    %7804 = vmatprep.subr.bf16.mxu0 0
    %7805 = vmatpush2.bf16.xpose.msra.mxu0 0
    %7806 = vmatprep.subr.bf16.mxu0 0
    %7807 = vmatpush2.bf16.xpose.msra.mxu0 0
    %7808 = vmatprep.subr.bf16.mxu0 0
    %7809 = vmatpush2.bf16.xpose.msra.mxu0 0
    %7810 = vmatprep.subr.bf16.mxu0 0
    %7811 = vmatpush2.bf16.xpose.msra.mxu0 0
    %7812 = vmatprep.mubr.bf16.mxu0 0
    %7813 = vmatmul.mubr.bf16.gmra.mxu0 %v7775
    %v7814 = vpop.f32.mrf.mxu0
    %v7815 = vadd.f32 0.0, %v7814
    %v7816 = vpop.f32.mrf.mxu0
    %v7817 = vpop.f32.mrf.mxu0
    %v7818 = vpop.f32.mrf.mxu0
    %7819 = vdwg.mxu0
    %7820 = vrot.lane.b32.xlu0 %v4862, 80
    %v7821 = vpop.permute.xlu0 %7820
    %7822 = vrot.lane.b32.xlu0 %v4862, 16
    %v7823 = vpop.permute.xlu0 %7822
    %v7825 = vsel %vm245, %v7821, 0
    %v7828 = vsel %vm245, %v7823, 0
    %7830 = vmatprep.subr.bf16.mxu0 0
    %7831 = vmatpush1.bf16.xpose.msra.mxu0 0
    %7832 = vmatprep.subr.bf16.mxu0 0
    %7833 = vmatpush1.bf16.xpose.msra.mxu0 0
    %7834 = vmatprep.subr.bf16.mxu0 0
    %7835 = vmatpush1.bf16.xpose.msra.mxu0 0
    %7836 = vmatprep.subr.bf16.mxu0 0
    %7837 = vmatpush1.bf16.xpose.msra.mxu0 0
    %7838 = vmatprep.subr.bf16.mxu0 0
    %7839 = vmatpush1.bf16.xpose.msra.mxu0 0
    %7840 = vmatprep.subr.bf16.mxu0 0
    %7841 = vmatpush1.bf16.xpose.msra.mxu0 0
    %7842 = vmatprep.subr.bf16.mxu0 0
    %7843 = vmatpush1.bf16.xpose.msra.mxu0 0
    %7844 = vmatprep.subr.bf16.mxu0 0
    %7845 = vmatpush1.bf16.xpose.msra.mxu0 %v7828
    %7846 = vmatprep.subr.bf16.mxu0 0
    %7847 = vmatpush2.bf16.xpose.msra.mxu0 0
    %7848 = vmatprep.subr.bf16.mxu0 0
    %7849 = vmatpush2.bf16.xpose.msra.mxu0 0
    %7850 = vmatprep.subr.bf16.mxu0 0
    %7851 = vmatpush2.bf16.xpose.msra.mxu0 0
    %7852 = vmatprep.subr.bf16.mxu0 0
    %7853 = vmatpush2.bf16.xpose.msra.mxu0 0
    %7854 = vmatprep.subr.bf16.mxu0 0
    %7855 = vmatpush2.bf16.xpose.msra.mxu0 0
    %7856 = vmatprep.subr.bf16.mxu0 0
    %7857 = vmatpush2.bf16.xpose.msra.mxu0 0
    %7858 = vmatprep.subr.bf16.mxu0 0
    %7859 = vmatpush2.bf16.xpose.msra.mxu0 0
    %7860 = vmatprep.subr.bf16.mxu0 0
    %7861 = vmatpush2.bf16.xpose.msra.mxu0 0
    %7862 = vmatprep.mubr.bf16.mxu0 0
    %7863 = vmatmul.mubr.bf16.gmra.mxu0 %v7825
    %v7864 = vpop.f32.mrf.mxu0
    %v7865 = vadd.f32 0.0, %v7864
    %v7866 = vpop.f32.mrf.mxu0
    %v7867 = vpop.f32.mrf.mxu0
    %v7868 = vpop.f32.mrf.mxu0
    %7869 = vdwg.mxu0
    %7870 = vrot.lane.b32.xlu0 %v4863, 80
    %v7871 = vpop.permute.xlu0 %7870
    %7872 = vrot.lane.b32.xlu0 %v4863, 16
    %v7873 = vpop.permute.xlu0 %7872
    %v7875 = vsel %vm245, %v7871, 0
    %v7878 = vsel %vm245, %v7873, 0
    %7880 = vmatprep.subr.bf16.mxu0 0
    %7881 = vmatpush1.bf16.xpose.msra.mxu0 0
    %7882 = vmatprep.subr.bf16.mxu0 0
    %7883 = vmatpush1.bf16.xpose.msra.mxu0 0
    %7884 = vmatprep.subr.bf16.mxu0 0
    %7885 = vmatpush1.bf16.xpose.msra.mxu0 0
    %7886 = vmatprep.subr.bf16.mxu0 0
    %7887 = vmatpush1.bf16.xpose.msra.mxu0 0
    %7888 = vmatprep.subr.bf16.mxu0 0
    %7889 = vmatpush1.bf16.xpose.msra.mxu0 0
    %7890 = vmatprep.subr.bf16.mxu0 0
    %7891 = vmatpush1.bf16.xpose.msra.mxu0 0
    %7892 = vmatprep.subr.bf16.mxu0 0
    %7893 = vmatpush1.bf16.xpose.msra.mxu0 0
    %7894 = vmatprep.subr.bf16.mxu0 0
    %7895 = vmatpush1.bf16.xpose.msra.mxu0 %v7878
    %7896 = vmatprep.subr.bf16.mxu0 0
    %7897 = vmatpush2.bf16.xpose.msra.mxu0 0
    %7898 = vmatprep.subr.bf16.mxu0 0
    %7899 = vmatpush2.bf16.xpose.msra.mxu0 0
    %7900 = vmatprep.subr.bf16.mxu0 0
    %7901 = vmatpush2.bf16.xpose.msra.mxu0 0
    %7902 = vmatprep.subr.bf16.mxu0 0
    %7903 = vmatpush2.bf16.xpose.msra.mxu0 0
    %7904 = vmatprep.subr.bf16.mxu0 0
    %7905 = vmatpush2.bf16.xpose.msra.mxu0 0
    %7906 = vmatprep.subr.bf16.mxu0 0
    %7907 = vmatpush2.bf16.xpose.msra.mxu0 0
    %7908 = vmatprep.subr.bf16.mxu0 0
    %7909 = vmatpush2.bf16.xpose.msra.mxu0 0
    %7910 = vmatprep.subr.bf16.mxu0 0
    %7911 = vmatpush2.bf16.xpose.msra.mxu0 0
    %7912 = vmatprep.mubr.bf16.mxu0 0
    %7913 = vmatmul.mubr.bf16.gmra.mxu0 %v7875
    %v7914 = vpop.f32.mrf.mxu0
    %v7915 = vadd.f32 0.0, %v7914
    %v7916 = vpop.f32.mrf.mxu0
    %v7917 = vpop.f32.mrf.mxu0
    %v7918 = vpop.f32.mrf.mxu0
    %7919 = vdwg.mxu0
    %v7920 = vsel %vm635, %v7565, -inf
    %7921 = vmax.xlane.f32.xlu0 %v7920
    %v7922 = vpop.xlane.xlu0 %7921
    %v7923 = vsel %vm635, %v7615, -inf
    %7924 = vmax.xlane.f32.xlu0 %v7923
    %v7925 = vpop.xlane.xlu0 %7924
    %v7926 = vsel %vm635, %v7665, -inf
    %7927 = vmax.xlane.f32.xlu0 %v7926
    %v7928 = vpop.xlane.xlu0 %7927
    %v7929 = vsel %vm635, %v7715, -inf
    %7930 = vmax.xlane.f32.xlu0 %v7929
    %v7931 = vpop.xlane.xlu0 %7930
    %v7932 = vsel %vm635, %v7765, -inf
    %7933 = vmax.xlane.f32.xlu0 %v7932
    %v7934 = vpop.xlane.xlu0 %7933
    %v7935 = vsel %vm635, %v7815, -inf
    %7936 = vmax.xlane.f32.xlu0 %v7935
    %v7937 = vpop.xlane.xlu0 %7936
    %v7938 = vsel %vm635, %v7865, -inf
    %7939 = vmax.xlane.f32.xlu0 %v7938
    %v7940 = vpop.xlane.xlu0 %7939
    %v7941 = vsel %vm635, %v7915, -inf
    %7942 = vmax.xlane.f32.xlu0 %v7941
    %v7943 = vpop.xlane.xlu0 %7942
    %v7944 = vsub.f32 %v7565, %v7922
    %v7945 = vsub.f32 %v7615, %v7925
    %v7946 = vsub.f32 %v7665, %v7928
    %v7947 = vsub.f32 %v7715, %v7931
    %v7948 = vsub.f32 %v7765, %v7934
    %v7949 = vsub.f32 %v7815, %v7937
    %v7950 = vsub.f32 %v7865, %v7940
    %v7951 = vsub.f32 %v7915, %v7943
    %v7952 = vmul.f32 %v7944, 1.442695
    %v7953 = vpow.pop %v7952
    %v7954 = vmul.f32 %v7945, 1.442695
    %v7955 = vpow.pop %v7954
    %v7956 = vmul.f32 %v7946, 1.442695
    %v7957 = vpow.pop %v7956
    %v7958 = vmul.f32 %v7947, 1.442695
    %v7959 = vpow.pop %v7958
    %v7960 = vmul.f32 %v7948, 1.442695
    %v7961 = vpow.pop %v7960
    %v7962 = vmul.f32 %v7949, 1.442695
    %v7963 = vpow.pop %v7962
    %v7964 = vmul.f32 %v7950, 1.442695
    %v7965 = vpow.pop %v7964
    %v7966 = vmul.f32 %v7951, 1.442695
    %v7967 = vpow.pop %v7966
    %v7968 = vsel %vm635, %v7953, 0.0
    %7969 = vadd.xlane.f32.xlu0 %v7968
    %v7970 = vpop.xlane.xlu0 %7969
    %v7971 = vsel %vm635, %v7955, 0.0
    %7972 = vadd.xlane.f32.xlu0 %v7971
    %v7973 = vpop.xlane.xlu0 %7972
    %v7974 = vsel %vm635, %v7957, 0.0
    %7975 = vadd.xlane.f32.xlu0 %v7974
    %v7976 = vpop.xlane.xlu0 %7975
    %v7977 = vsel %vm635, %v7959, 0.0
    %7978 = vadd.xlane.f32.xlu0 %v7977
    %v7979 = vpop.xlane.xlu0 %7978
    %v7980 = vsel %vm635, %v7961, 0.0
    %7981 = vadd.xlane.f32.xlu0 %v7980
    %v7982 = vpop.xlane.xlu0 %7981
    %v7983 = vsel %vm635, %v7963, 0.0
    %7984 = vadd.xlane.f32.xlu0 %v7983
    %v7985 = vpop.xlane.xlu0 %7984
    %v7986 = vsel %vm635, %v7965, 0.0
    %7987 = vadd.xlane.f32.xlu0 %v7986
    %v7988 = vpop.xlane.xlu0 %7987
    %v7989 = vsel %vm635, %v7967, 0.0
    %7990 = vadd.xlane.f32.xlu0 %v7989
    %v7991 = vpop.xlane.xlu0 %7990
    %v7992 = vrcp.pop %v7970
    %v7993 = vrcp.pop %v7973
    %v7994 = vrcp.pop %v7976
    %v7995 = vrcp.pop %v7979
    %v7996 = vrcp.pop %v7982
    %v7997 = vrcp.pop %v7985
    %v7998 = vrcp.pop %v7988
    %v7999 = vrcp.pop %v7991
    %v8000 = vmul.f32 %v7953, %v7992
    %v8001 = vmul.f32 %v7955, %v7993
    %v8002 = vmul.f32 %v7957, %v7994
    %v8003 = vmul.f32 %v7959, %v7995
    %v8004 = vmul.f32 %v7961, %v7996
    %v8005 = vmul.f32 %v7963, %v7997
    %v8006 = vmul.f32 %v7965, %v7998
    %v8007 = vmul.f32 %v7967, %v7999
    %v8008 = vpack.c.bf16 %v8000, %v8000
    %v8009 = vpack.c.bf16 %v8001, %v8001
    %v8010 = vpack.c.bf16 %v8002, %v8002
    %v8011 = vpack.c.bf16 %v8003, %v8003
    %v8012 = vpack.c.bf16 %v8004, %v8004
    %v8013 = vpack.c.bf16 %v8005, %v8005
    %v8014 = vpack.c.bf16 %v8006, %v8006
    %v8015 = vpack.c.bf16 %v8007, %v8007
    %8016 = vrot.lane.b32.xlu0 %v4864, 80
    %v8017 = vpop.permute.xlu0 %8016
    %v8019 = vsel %vm635, %v8008, 0
    %v8022 = vsel %vm735, %v8017, 0
    %8024 = vmatprep.subr.bf16.mxu0 0
    %8025 = vmatpush1.bf16.msra.mxu0 0
    %8026 = vmatprep.subr.bf16.mxu0 0
    %8027 = vmatpush1.bf16.msra.mxu0 0
    %8028 = vmatprep.subr.bf16.mxu0 0
    %8029 = vmatpush1.bf16.msra.mxu0 0
    %8030 = vmatprep.subr.bf16.mxu0 0
    %8031 = vmatpush1.bf16.msra.mxu0 0
    %8032 = vmatprep.subr.bf16.mxu0 0
    %8033 = vmatpush1.bf16.msra.mxu0 0
    %8034 = vmatprep.subr.bf16.mxu0 0
    %8035 = vmatpush1.bf16.msra.mxu0 0
    %8036 = vmatprep.subr.bf16.mxu0 0
    %8037 = vmatpush1.bf16.msra.mxu0 0
    %8038 = vmatprep.subr.bf16.mxu0 0
    %8039 = vmatpush1.bf16.msra.mxu0 %v8022
    %8040 = vmatprep.subr.bf16.mxu0 0
    %8041 = vmatpush2.bf16.msra.mxu0 0
    %8042 = vmatprep.subr.bf16.mxu0 0
    %8043 = vmatpush2.bf16.msra.mxu0 0
    %8044 = vmatprep.subr.bf16.mxu0 0
    %8045 = vmatpush2.bf16.msra.mxu0 0
    %8046 = vmatprep.subr.bf16.mxu0 0
    %8047 = vmatpush2.bf16.msra.mxu0 0
    %8048 = vmatprep.subr.bf16.mxu0 0
    %8049 = vmatpush2.bf16.msra.mxu0 0
    %8050 = vmatprep.subr.bf16.mxu0 0
    %8051 = vmatpush2.bf16.msra.mxu0 0
    %8052 = vmatprep.subr.bf16.mxu0 0
    %8053 = vmatpush2.bf16.msra.mxu0 0
    %8054 = vmatprep.subr.bf16.mxu0 0
    %8055 = vmatpush2.bf16.msra.mxu0 0
    %8056 = vmatprep.mubr.bf16.mxu0 0
    %8057 = vmatmul.mubr.bf16.gmra.mxu0 %v8019
    %v8058 = vpop.f32.mrf.mxu0
    %v8059 = vadd.f32 0.0, %v8058
    %v8060 = vpop.f32.mrf.mxu0
    %v8061 = vpop.f32.mrf.mxu0
    %v8062 = vpop.f32.mrf.mxu0
    %8063 = vdwg.mxu0
    %8064 = vrot.lane.b32.xlu0 %v4865, 80
    %v8065 = vpop.permute.xlu0 %8064
    %v8067 = vsel %vm635, %v8009, 0
    %v8070 = vsel %vm735, %v8065, 0
    %8072 = vmatprep.subr.bf16.mxu0 0
    %8073 = vmatpush1.bf16.msra.mxu0 0
    %8074 = vmatprep.subr.bf16.mxu0 0
    %8075 = vmatpush1.bf16.msra.mxu0 0
    %8076 = vmatprep.subr.bf16.mxu0 0
    %8077 = vmatpush1.bf16.msra.mxu0 0
    %8078 = vmatprep.subr.bf16.mxu0 0
    %8079 = vmatpush1.bf16.msra.mxu0 0
    %8080 = vmatprep.subr.bf16.mxu0 0
    %8081 = vmatpush1.bf16.msra.mxu0 0
    %8082 = vmatprep.subr.bf16.mxu0 0
    %8083 = vmatpush1.bf16.msra.mxu0 0
    %8084 = vmatprep.subr.bf16.mxu0 0
    %8085 = vmatpush1.bf16.msra.mxu0 0
    %8086 = vmatprep.subr.bf16.mxu0 0
    %8087 = vmatpush1.bf16.msra.mxu0 %v8070
    %8088 = vmatprep.subr.bf16.mxu0 0
    %8089 = vmatpush2.bf16.msra.mxu0 0
    %8090 = vmatprep.subr.bf16.mxu0 0
    %8091 = vmatpush2.bf16.msra.mxu0 0
    %8092 = vmatprep.subr.bf16.mxu0 0
    %8093 = vmatpush2.bf16.msra.mxu0 0
    %8094 = vmatprep.subr.bf16.mxu0 0
    %8095 = vmatpush2.bf16.msra.mxu0 0
    %8096 = vmatprep.subr.bf16.mxu0 0
    %8097 = vmatpush2.bf16.msra.mxu0 0
    %8098 = vmatprep.subr.bf16.mxu0 0
    %8099 = vmatpush2.bf16.msra.mxu0 0
    %8100 = vmatprep.subr.bf16.mxu0 0
    %8101 = vmatpush2.bf16.msra.mxu0 0
    %8102 = vmatprep.subr.bf16.mxu0 0
    %8103 = vmatpush2.bf16.msra.mxu0 0
    %8104 = vmatprep.mubr.bf16.mxu0 0
    %8105 = vmatmul.mubr.bf16.gmra.mxu0 %v8067
    %v8106 = vpop.f32.mrf.mxu0
    %v8107 = vadd.f32 0.0, %v8106
    %v8108 = vpop.f32.mrf.mxu0
    %v8109 = vpop.f32.mrf.mxu0
    %v8110 = vpop.f32.mrf.mxu0
    %8111 = vdwg.mxu0
    %8112 = vrot.lane.b32.xlu0 %v4866, 80
    %v8113 = vpop.permute.xlu0 %8112
    %v8115 = vsel %vm635, %v8010, 0
    %v8118 = vsel %vm735, %v8113, 0
    %8120 = vmatprep.subr.bf16.mxu0 0
    %8121 = vmatpush1.bf16.msra.mxu0 0
    %8122 = vmatprep.subr.bf16.mxu0 0
    %8123 = vmatpush1.bf16.msra.mxu0 0
    %8124 = vmatprep.subr.bf16.mxu0 0
    %8125 = vmatpush1.bf16.msra.mxu0 0
    %8126 = vmatprep.subr.bf16.mxu0 0
    %8127 = vmatpush1.bf16.msra.mxu0 0
    %8128 = vmatprep.subr.bf16.mxu0 0
    %8129 = vmatpush1.bf16.msra.mxu0 0
    %8130 = vmatprep.subr.bf16.mxu0 0
    %8131 = vmatpush1.bf16.msra.mxu0 0
    %8132 = vmatprep.subr.bf16.mxu0 0
    %8133 = vmatpush1.bf16.msra.mxu0 0
    %8134 = vmatprep.subr.bf16.mxu0 0
    %8135 = vmatpush1.bf16.msra.mxu0 %v8118
    %8136 = vmatprep.subr.bf16.mxu0 0
    %8137 = vmatpush2.bf16.msra.mxu0 0
    %8138 = vmatprep.subr.bf16.mxu0 0
    %8139 = vmatpush2.bf16.msra.mxu0 0
    %8140 = vmatprep.subr.bf16.mxu0 0
    %8141 = vmatpush2.bf16.msra.mxu0 0
    %8142 = vmatprep.subr.bf16.mxu0 0
    %8143 = vmatpush2.bf16.msra.mxu0 0
    %8144 = vmatprep.subr.bf16.mxu0 0
    %8145 = vmatpush2.bf16.msra.mxu0 0
    %8146 = vmatprep.subr.bf16.mxu0 0
    %8147 = vmatpush2.bf16.msra.mxu0 0
    %8148 = vmatprep.subr.bf16.mxu0 0
    %8149 = vmatpush2.bf16.msra.mxu0 0
    %8150 = vmatprep.subr.bf16.mxu0 0
    %8151 = vmatpush2.bf16.msra.mxu0 0
    %8152 = vmatprep.mubr.bf16.mxu0 0
    %8153 = vmatmul.mubr.bf16.gmra.mxu0 %v8115
    %v8154 = vpop.f32.mrf.mxu0
    %v8155 = vadd.f32 0.0, %v8154
    %v8156 = vpop.f32.mrf.mxu0
    %v8157 = vpop.f32.mrf.mxu0
    %v8158 = vpop.f32.mrf.mxu0
    %8159 = vdwg.mxu0
    %8160 = vrot.lane.b32.xlu0 %v4867, 80
    %v8161 = vpop.permute.xlu0 %8160
    %v8163 = vsel %vm635, %v8011, 0
    %v8166 = vsel %vm735, %v8161, 0
    %8168 = vmatprep.subr.bf16.mxu0 0
    %8169 = vmatpush1.bf16.msra.mxu0 0
    %8170 = vmatprep.subr.bf16.mxu0 0
    %8171 = vmatpush1.bf16.msra.mxu0 0
    %8172 = vmatprep.subr.bf16.mxu0 0
    %8173 = vmatpush1.bf16.msra.mxu0 0
    %8174 = vmatprep.subr.bf16.mxu0 0
    %8175 = vmatpush1.bf16.msra.mxu0 0
    %8176 = vmatprep.subr.bf16.mxu0 0
    %8177 = vmatpush1.bf16.msra.mxu0 0
    %8178 = vmatprep.subr.bf16.mxu0 0
    %8179 = vmatpush1.bf16.msra.mxu0 0
    %8180 = vmatprep.subr.bf16.mxu0 0
    %8181 = vmatpush1.bf16.msra.mxu0 0
    %8182 = vmatprep.subr.bf16.mxu0 0
    %8183 = vmatpush1.bf16.msra.mxu0 %v8166
    %8184 = vmatprep.subr.bf16.mxu0 0
    %8185 = vmatpush2.bf16.msra.mxu0 0
    %8186 = vmatprep.subr.bf16.mxu0 0
    %8187 = vmatpush2.bf16.msra.mxu0 0
    %8188 = vmatprep.subr.bf16.mxu0 0
    %8189 = vmatpush2.bf16.msra.mxu0 0
    %8190 = vmatprep.subr.bf16.mxu0 0
    %8191 = vmatpush2.bf16.msra.mxu0 0
    %8192 = vmatprep.subr.bf16.mxu0 0
    %8193 = vmatpush2.bf16.msra.mxu0 0
    %8194 = vmatprep.subr.bf16.mxu0 0
    %8195 = vmatpush2.bf16.msra.mxu0 0
    %8196 = vmatprep.subr.bf16.mxu0 0
    %8197 = vmatpush2.bf16.msra.mxu0 0
    %8198 = vmatprep.subr.bf16.mxu0 0
    %8199 = vmatpush2.bf16.msra.mxu0 0
    %8200 = vmatprep.mubr.bf16.mxu0 0
    %8201 = vmatmul.mubr.bf16.gmra.mxu0 %v8163
    %v8202 = vpop.f32.mrf.mxu0
    %v8203 = vadd.f32 0.0, %v8202
    %v8204 = vpop.f32.mrf.mxu0
    %v8205 = vpop.f32.mrf.mxu0
    %v8206 = vpop.f32.mrf.mxu0
    %8207 = vdwg.mxu0
    %8208 = vrot.lane.b32.xlu0 %v4868, 80
    %v8209 = vpop.permute.xlu0 %8208
    %v8211 = vsel %vm635, %v8012, 0
    %v8214 = vsel %vm735, %v8209, 0
    %8216 = vmatprep.subr.bf16.mxu0 0
    %8217 = vmatpush1.bf16.msra.mxu0 0
    %8218 = vmatprep.subr.bf16.mxu0 0
    %8219 = vmatpush1.bf16.msra.mxu0 0
    %8220 = vmatprep.subr.bf16.mxu0 0
    %8221 = vmatpush1.bf16.msra.mxu0 0
    %8222 = vmatprep.subr.bf16.mxu0 0
    %8223 = vmatpush1.bf16.msra.mxu0 0
    %8224 = vmatprep.subr.bf16.mxu0 0
    %8225 = vmatpush1.bf16.msra.mxu0 0
    %8226 = vmatprep.subr.bf16.mxu0 0
    %8227 = vmatpush1.bf16.msra.mxu0 0
    %8228 = vmatprep.subr.bf16.mxu0 0
    %8229 = vmatpush1.bf16.msra.mxu0 0
    %8230 = vmatprep.subr.bf16.mxu0 0
    %8231 = vmatpush1.bf16.msra.mxu0 %v8214
    %8232 = vmatprep.subr.bf16.mxu0 0
    %8233 = vmatpush2.bf16.msra.mxu0 0
    %8234 = vmatprep.subr.bf16.mxu0 0
    %8235 = vmatpush2.bf16.msra.mxu0 0
    %8236 = vmatprep.subr.bf16.mxu0 0
    %8237 = vmatpush2.bf16.msra.mxu0 0
    %8238 = vmatprep.subr.bf16.mxu0 0
    %8239 = vmatpush2.bf16.msra.mxu0 0
    %8240 = vmatprep.subr.bf16.mxu0 0
    %8241 = vmatpush2.bf16.msra.mxu0 0
    %8242 = vmatprep.subr.bf16.mxu0 0
    %8243 = vmatpush2.bf16.msra.mxu0 0
    %8244 = vmatprep.subr.bf16.mxu0 0
    %8245 = vmatpush2.bf16.msra.mxu0 0
    %8246 = vmatprep.subr.bf16.mxu0 0
    %8247 = vmatpush2.bf16.msra.mxu0 0
    %8248 = vmatprep.mubr.bf16.mxu0 0
    %8249 = vmatmul.mubr.bf16.gmra.mxu0 %v8211
    %v8250 = vpop.f32.mrf.mxu0
    %v8251 = vadd.f32 0.0, %v8250
    %v8252 = vpop.f32.mrf.mxu0
    %v8253 = vpop.f32.mrf.mxu0
    %v8254 = vpop.f32.mrf.mxu0
    %8255 = vdwg.mxu0
    %8256 = vrot.lane.b32.xlu0 %v4869, 80
    %v8257 = vpop.permute.xlu0 %8256
    %v8259 = vsel %vm635, %v8013, 0
    %v8262 = vsel %vm735, %v8257, 0
    %8264 = vmatprep.subr.bf16.mxu0 0
    %8265 = vmatpush1.bf16.msra.mxu0 0
    %8266 = vmatprep.subr.bf16.mxu0 0
    %8267 = vmatpush1.bf16.msra.mxu0 0
    %8268 = vmatprep.subr.bf16.mxu0 0
    %8269 = vmatpush1.bf16.msra.mxu0 0
    %8270 = vmatprep.subr.bf16.mxu0 0
    %8271 = vmatpush1.bf16.msra.mxu0 0
    %8272 = vmatprep.subr.bf16.mxu0 0
    %8273 = vmatpush1.bf16.msra.mxu0 0
    %8274 = vmatprep.subr.bf16.mxu0 0
    %8275 = vmatpush1.bf16.msra.mxu0 0
    %8276 = vmatprep.subr.bf16.mxu0 0
    %8277 = vmatpush1.bf16.msra.mxu0 0
    %8278 = vmatprep.subr.bf16.mxu0 0
    %8279 = vmatpush1.bf16.msra.mxu0 %v8262
    %8280 = vmatprep.subr.bf16.mxu0 0
    %8281 = vmatpush2.bf16.msra.mxu0 0
    %8282 = vmatprep.subr.bf16.mxu0 0
    %8283 = vmatpush2.bf16.msra.mxu0 0
    %8284 = vmatprep.subr.bf16.mxu0 0
    %8285 = vmatpush2.bf16.msra.mxu0 0
    %8286 = vmatprep.subr.bf16.mxu0 0
    %8287 = vmatpush2.bf16.msra.mxu0 0
    %8288 = vmatprep.subr.bf16.mxu0 0
    %8289 = vmatpush2.bf16.msra.mxu0 0
    %8290 = vmatprep.subr.bf16.mxu0 0
    %8291 = vmatpush2.bf16.msra.mxu0 0
    %8292 = vmatprep.subr.bf16.mxu0 0
    %8293 = vmatpush2.bf16.msra.mxu0 0
    %8294 = vmatprep.subr.bf16.mxu0 0
    %8295 = vmatpush2.bf16.msra.mxu0 0
    %8296 = vmatprep.mubr.bf16.mxu0 0
    %8297 = vmatmul.mubr.bf16.gmra.mxu0 %v8259
    %v8298 = vpop.f32.mrf.mxu0
    %v8299 = vadd.f32 0.0, %v8298
    %v8300 = vpop.f32.mrf.mxu0
    %v8301 = vpop.f32.mrf.mxu0
    %v8302 = vpop.f32.mrf.mxu0
    %8303 = vdwg.mxu0
    %8304 = vrot.lane.b32.xlu0 %v4870, 80
    %v8305 = vpop.permute.xlu0 %8304
    %v8307 = vsel %vm635, %v8014, 0
    %v8310 = vsel %vm735, %v8305, 0
    %8312 = vmatprep.subr.bf16.mxu0 0
    %8313 = vmatpush1.bf16.msra.mxu0 0
    %8314 = vmatprep.subr.bf16.mxu0 0
    %8315 = vmatpush1.bf16.msra.mxu0 0
    %8316 = vmatprep.subr.bf16.mxu0 0
    %8317 = vmatpush1.bf16.msra.mxu0 0
    %8318 = vmatprep.subr.bf16.mxu0 0
    %8319 = vmatpush1.bf16.msra.mxu0 0
    %8320 = vmatprep.subr.bf16.mxu0 0
    %8321 = vmatpush1.bf16.msra.mxu0 0
    %8322 = vmatprep.subr.bf16.mxu0 0
    %8323 = vmatpush1.bf16.msra.mxu0 0
    %8324 = vmatprep.subr.bf16.mxu0 0
    %8325 = vmatpush1.bf16.msra.mxu0 0
    %8326 = vmatprep.subr.bf16.mxu0 0
    %8327 = vmatpush1.bf16.msra.mxu0 %v8310
    %8328 = vmatprep.subr.bf16.mxu0 0
    %8329 = vmatpush2.bf16.msra.mxu0 0
    %8330 = vmatprep.subr.bf16.mxu0 0
    %8331 = vmatpush2.bf16.msra.mxu0 0
    %8332 = vmatprep.subr.bf16.mxu0 0
    %8333 = vmatpush2.bf16.msra.mxu0 0
    %8334 = vmatprep.subr.bf16.mxu0 0
    %8335 = vmatpush2.bf16.msra.mxu0 0
    %8336 = vmatprep.subr.bf16.mxu0 0
    %8337 = vmatpush2.bf16.msra.mxu0 0
    %8338 = vmatprep.subr.bf16.mxu0 0
    %8339 = vmatpush2.bf16.msra.mxu0 0
    %8340 = vmatprep.subr.bf16.mxu0 0
    %8341 = vmatpush2.bf16.msra.mxu0 0
    %8342 = vmatprep.subr.bf16.mxu0 0
    %8343 = vmatpush2.bf16.msra.mxu0 0
    %8344 = vmatprep.mubr.bf16.mxu0 0
    %8345 = vmatmul.mubr.bf16.gmra.mxu0 %v8307
    %v8346 = vpop.f32.mrf.mxu0
    %v8347 = vadd.f32 0.0, %v8346
    %v8348 = vpop.f32.mrf.mxu0
    %v8349 = vpop.f32.mrf.mxu0
    %v8350 = vpop.f32.mrf.mxu0
    %8351 = vdwg.mxu0
    %8352 = vrot.lane.b32.xlu0 %v4871, 80
    %v8353 = vpop.permute.xlu0 %8352
    %v8355 = vsel %vm635, %v8015, 0
    %v8358 = vsel %vm735, %v8353, 0
    %8360 = vmatprep.subr.bf16.mxu0 0
    %8361 = vmatpush1.bf16.msra.mxu0 0
    %8362 = vmatprep.subr.bf16.mxu0 0
    %8363 = vmatpush1.bf16.msra.mxu0 0
    %8364 = vmatprep.subr.bf16.mxu0 0
    %8365 = vmatpush1.bf16.msra.mxu0 0
    %8366 = vmatprep.subr.bf16.mxu0 0
    %8367 = vmatpush1.bf16.msra.mxu0 0
    %8368 = vmatprep.subr.bf16.mxu0 0
    %8369 = vmatpush1.bf16.msra.mxu0 0
    %8370 = vmatprep.subr.bf16.mxu0 0
    %8371 = vmatpush1.bf16.msra.mxu0 0
    %8372 = vmatprep.subr.bf16.mxu0 0
    %8373 = vmatpush1.bf16.msra.mxu0 0
    %8374 = vmatprep.subr.bf16.mxu0 0
    %8375 = vmatpush1.bf16.msra.mxu0 %v8358
    %8376 = vmatprep.subr.bf16.mxu0 0
    %8377 = vmatpush2.bf16.msra.mxu0 0
    %8378 = vmatprep.subr.bf16.mxu0 0
    %8379 = vmatpush2.bf16.msra.mxu0 0
    %8380 = vmatprep.subr.bf16.mxu0 0
    %8381 = vmatpush2.bf16.msra.mxu0 0
    %8382 = vmatprep.subr.bf16.mxu0 0
    %8383 = vmatpush2.bf16.msra.mxu0 0
    %8384 = vmatprep.subr.bf16.mxu0 0
    %8385 = vmatpush2.bf16.msra.mxu0 0
    %8386 = vmatprep.subr.bf16.mxu0 0
    %8387 = vmatpush2.bf16.msra.mxu0 0
    %8388 = vmatprep.subr.bf16.mxu0 0
    %8389 = vmatpush2.bf16.msra.mxu0 0
    %8390 = vmatprep.subr.bf16.mxu0 0
    %8391 = vmatpush2.bf16.msra.mxu0 0
    %8392 = vmatprep.mubr.bf16.mxu0 0
    %8393 = vmatmul.mubr.bf16.gmra.mxu0 %v8355
    %v8394 = vpop.f32.mrf.mxu0
    %v8395 = vadd.f32 0.0, %v8394
    %v8396 = vpop.f32.mrf.mxu0
    %v8397 = vpop.f32.mrf.mxu0
    %v8398 = vpop.f32.mrf.mxu0
    %8399 = vdwg.mxu0
    %v8400 = vpack.c.bf16 %v8059, %v8059
    %v8401 = vpack.c.bf16 %v8107, %v8107
    %v8402 = vpack.c.bf16 %v8155, %v8155
    %v8403 = vpack.c.bf16 %v8203, %v8203
    %v8404 = vpack.c.bf16 %v8251, %v8251
    %v8405 = vpack.c.bf16 %v8299, %v8299
    %v8406 = vpack.c.bf16 %v8347, %v8347
    %v8407 = vpack.c.bf16 %v8395, %v8395
    %8416 = vrot.lane.b32.xlu0 %v6624, 16
    %v8417 = vpop.permute.xlu0 %8416
    %8418 = vrot.lane.b32.xlu0 %v6625, 16
    %v8419 = vpop.permute.xlu0 %8418
    %8420 = vrot.lane.b32.xlu0 %v6626, 16
    %v8421 = vpop.permute.xlu0 %8420
    %8422 = vrot.lane.b32.xlu0 %v6627, 16
    %v8423 = vpop.permute.xlu0 %8422
    %8424 = vrot.lane.b32.xlu0 %v6628, 16
    %v8425 = vpop.permute.xlu0 %8424
    %8426 = vrot.lane.b32.xlu0 %v6629, 16
    %v8427 = vpop.permute.xlu0 %8426
    %8428 = vrot.lane.b32.xlu0 %v6630, 16
    %v8429 = vpop.permute.xlu0 %8428
    %8430 = vrot.lane.b32.xlu0 %v6631, 16
    %v8431 = vpop.permute.xlu0 %8430
    %8440 = vrot.lane.b32.xlu0 %v7512, 32
    %v8441 = vpop.permute.xlu0 %8440
    %8442 = vrot.lane.b32.xlu0 %v7513, 32
    %v8443 = vpop.permute.xlu0 %8442
    %8444 = vrot.lane.b32.xlu0 %v7514, 32
    %v8445 = vpop.permute.xlu0 %8444
    %8446 = vrot.lane.b32.xlu0 %v7515, 32
    %v8447 = vpop.permute.xlu0 %8446
    %8448 = vrot.lane.b32.xlu0 %v7516, 32
    %v8449 = vpop.permute.xlu0 %8448
    %8450 = vrot.lane.b32.xlu0 %v7517, 32
    %v8451 = vpop.permute.xlu0 %8450
    %8452 = vrot.lane.b32.xlu0 %v7518, 32
    %v8453 = vpop.permute.xlu0 %8452
    %8454 = vrot.lane.b32.xlu0 %v7519, 32
    %v8455 = vpop.permute.xlu0 %8454
    %8464 = vrot.lane.b32.xlu0 %v8400, 48
    %v8465 = vpop.permute.xlu0 %8464
    %8466 = vrot.lane.b32.xlu0 %v8401, 48
    %v8467 = vpop.permute.xlu0 %8466
    %8468 = vrot.lane.b32.xlu0 %v8402, 48
    %v8469 = vpop.permute.xlu0 %8468
    %8470 = vrot.lane.b32.xlu0 %v8403, 48
    %v8471 = vpop.permute.xlu0 %8470
    %8472 = vrot.lane.b32.xlu0 %v8404, 48
    %v8473 = vpop.permute.xlu0 %8472
    %8474 = vrot.lane.b32.xlu0 %v8405, 48
    %v8475 = vpop.permute.xlu0 %8474
    %8476 = vrot.lane.b32.xlu0 %v8406, 48
    %v8477 = vpop.permute.xlu0 %8476
    %8478 = vrot.lane.b32.xlu0 %v8407, 48
    %v8479 = vpop.permute.xlu0 %8478
    %v8482 = vsel %vm245, %v5728, %v8417
    %v8485 = vsel %vm245, %v5729, %v8419
    %v8488 = vsel %vm245, %v5730, %v8421
    %v8491 = vsel %vm245, %v5731, %v8423
    %v8494 = vsel %vm245, %v5732, %v8425
    %v8497 = vsel %vm245, %v5733, %v8427
    %v8500 = vsel %vm245, %v5734, %v8429
    %v8503 = vsel %vm245, %v5735, %v8431
    %v8505 = vsel %vm3877, %v8482, %v8441
    %v8507 = vsel %vm3877, %v8485, %v8443
    %v8509 = vsel %vm3877, %v8488, %v8445
    %v8511 = vsel %vm3877, %v8491, %v8447
    %v8513 = vsel %vm3877, %v8494, %v8449
    %v8515 = vsel %vm3877, %v8497, %v8451
    %v8517 = vsel %vm3877, %v8500, %v8453
    %v8519 = vsel %vm3877, %v8503, %v8455
    %v8521 = vsel %vm3894, %v8505, %v8465
    %v8523 = vsel %vm3894, %v8507, %v8467
    %v8525 = vsel %vm3894, %v8509, %v8469
    %v8527 = vsel %vm3894, %v8511, %v8471
    %v8529 = vsel %vm3894, %v8513, %v8473
    %v8531 = vsel %vm3894, %v8515, %v8475
    %v8533 = vsel %vm3894, %v8517, %v8477
    %v8535 = vsel %vm3894, %v8519, %v8479
    %s8536 = scalar_lea.vmem %s3, 32
    %v8537 = vld [vmem:[%s8536] sm:$0xf]
    %v8538 = vld [vmem:[%s8536 + $0x4] sm:$0xf]
    %v8539 = vld [vmem:[%s8536 + $0x8] sm:$0xf]
    %v8540 = vld [vmem:[%s8536 + $0xc] sm:$0xf]
    %v8541 = vld [vmem:[%s8536 + $0x10] sm:$0xf]
    %v8542 = vld [vmem:[%s8536 + $0x14] sm:$0xf]
    %v8543 = vld [vmem:[%s8536 + $0x18] sm:$0xf]
    %v8544 = vld [vmem:[%s8536 + $0x1c] sm:$0xf]
    %s8545 = scalar_lea.vmem [#allocation3], 1
    %v8546 = vld [vmem:[%s8545] sm:$0x1]
    %v8548 = vlaneseq
    %v8549 = vshrl.u32 %v8548, 7
    %v8550 = vsub.s32 0, %v8549
    %v8551 = vrot.slane %v8546, %v8550
    %v8561 = vunpack.c.l.b16 %v8521
    %v8562 = vunpack.c.l.b16 %v8523
    %v8563 = vunpack.c.l.b16 %v8525
    %v8564 = vunpack.c.l.b16 %v8527
    %v8565 = vunpack.c.l.b16 %v8529
    %v8566 = vunpack.c.l.b16 %v8531
    %v8567 = vunpack.c.l.b16 %v8533
    %v8568 = vunpack.c.l.b16 %v8535
    %v8569 = vpack.c.b16 %v8562, %v8561
    %v8570 = vpack.c.b16 %v8564, %v8563
    %v8571 = vpack.c.b16 %v8566, %v8565
    %v8572 = vpack.c.b16 %v8568, %v8567
    %v8581 = vunpack.c.l.b16 %v8537
    %v8582 = vunpack.c.l.b16 %v8538
    %v8583 = vunpack.c.l.b16 %v8539
    %v8584 = vunpack.c.l.b16 %v8540
    %v8585 = vunpack.c.l.b16 %v8541
    %v8586 = vunpack.c.l.b16 %v8542
    %v8587 = vunpack.c.l.b16 %v8543
    %v8588 = vunpack.c.l.b16 %v8544
    %v8589 = vpack.c.b16 %v8582, %v8581
    %v8590 = vpack.c.b16 %v8584, %v8583
    %v8591 = vpack.c.b16 %v8586, %v8585
    %v8592 = vpack.c.b16 %v8588, %v8587
    %v8598 = vsel %vm140, %v8569, 0
    %v8601 = vsel %vm140, %v8570, 0
    %v8604 = vsel %vm140, %v8571, 0
    %v8607 = vsel %vm140, %v8572, 0
    %8609 = vmatprep.subr.bf16.mxu0 0
    %8610 = vmatpush1.bf16.msra.mxu0 0
    %8611 = vmatprep.subr.bf16.mxu0 0
    %8612 = vmatpush1.bf16.msra.mxu0 0
    %8613 = vmatprep.subr.bf16.mxu0 0
    %8614 = vmatpush1.bf16.msra.mxu0 0
    %8615 = vmatprep.subr.bf16.mxu0 0
    %8616 = vmatpush1.bf16.msra.mxu0 0
    %8617 = vmatprep.subr.bf16.mxu0 0
    %8618 = vmatpush1.bf16.msra.mxu0 %v8592
    %8619 = vmatprep.subr.bf16.mxu0 0
    %8620 = vmatpush1.bf16.msra.mxu0 %v8591
    %8621 = vmatprep.subr.bf16.mxu0 0
    %8622 = vmatpush1.bf16.msra.mxu0 %v8590
    %8623 = vmatprep.subr.bf16.mxu0 0
    %8624 = vmatpush1.bf16.msra.mxu0 %v8589
    %8625 = vmatprep.subr.bf16.mxu0 0
    %8626 = vmatpush2.bf16.msra.mxu0 0
    %8627 = vmatprep.subr.bf16.mxu0 0
    %8628 = vmatpush2.bf16.msra.mxu0 0
    %8629 = vmatprep.subr.bf16.mxu0 0
    %8630 = vmatpush2.bf16.msra.mxu0 0
    %8631 = vmatprep.subr.bf16.mxu0 0
    %8632 = vmatpush2.bf16.msra.mxu0 0
    %8633 = vmatprep.subr.bf16.mxu0 0
    %8634 = vmatpush2.bf16.msra.mxu0 0
    %8635 = vmatprep.subr.bf16.mxu0 0
    %8636 = vmatpush2.bf16.msra.mxu0 0
    %8637 = vmatprep.subr.bf16.mxu0 0
    %8638 = vmatpush2.bf16.msra.mxu0 0
    %8639 = vmatprep.subr.bf16.mxu0 0
    %8640 = vmatpush2.bf16.msra.mxu0 0
    %8641 = vmatprep.mubr.bf16.mxu0 0
    %8642 = vmatmul.mubr.bf16.gmra.mxu0 %v8598
    %v8643 = vpop.f32.mrf.mxu0
    %v8644 = vadd.f32 %v8551, %v8643
    %v8645 = vpop.f32.mrf.mxu0
    %v8646 = vpop.f32.mrf.mxu0
    %v8647 = vadd.f32 %v8551, %v8646
    %v8648 = vpop.f32.mrf.mxu0
    %8649 = vmatprep.mubr.bf16.mxu0 0
    %8650 = vmatmul.mubr.bf16.gmra.mxu0 %v8601
    %v8651 = vpop.f32.mrf.mxu0
    %v8652 = vadd.f32 %v8551, %v8651
    %v8653 = vpop.f32.mrf.mxu0
    %v8654 = vpop.f32.mrf.mxu0
    %v8655 = vadd.f32 %v8551, %v8654
    %v8656 = vpop.f32.mrf.mxu0
    %8657 = vmatprep.mubr.bf16.mxu0 0
    %8658 = vmatmul.mubr.bf16.gmra.mxu0 %v8604
    %v8659 = vpop.f32.mrf.mxu0
    %v8660 = vadd.f32 %v8551, %v8659
    %v8661 = vpop.f32.mrf.mxu0
    %v8662 = vpop.f32.mrf.mxu0
    %v8663 = vadd.f32 %v8551, %v8662
    %v8664 = vpop.f32.mrf.mxu0
    %8665 = vmatprep.mubr.bf16.mxu0 0
    %8666 = vmatmul.mubr.bf16.gmra.mxu0 %v8607
    %v8667 = vpop.f32.mrf.mxu0
    %v8668 = vadd.f32 %v8551, %v8667
    %v8669 = vpop.f32.mrf.mxu0
    %v8670 = vpop.f32.mrf.mxu0
    %v8671 = vadd.f32 %v8551, %v8670
    %v8672 = vpop.f32.mrf.mxu0
    %8673 = vdwg.mxu0
    %v8674 = vadd.f32 %v4697, %v8644
    %v8675 = vadd.f32 %v4698, %v8647
    %v8676 = vadd.f32 %v4699, %v8652
    %v8677 = vadd.f32 %v4700, %v8655
    %v8678 = vadd.f32 %v4701, %v8660
    %v8679 = vadd.f32 %v4702, %v8663
    %v8680 = vadd.f32 %v4703, %v8668
    %v8681 = vadd.f32 %v4704, %v8671
    %s8682 = scalar_lea.vmem %s9, 1
    %v8683 = vld [vmem:[%s8682] sm:$0x1]
    %s8684 = scalar_lea.vmem %s10, 1
    %v8685 = vld [vmem:[%s8684] sm:$0x1]
    %v8686 = vsel %vm140, %v8674, 0.0
    %8687 = vadd.xlane.f32.xlu0 %v8686
    %v8688 = vpop.xlane.xlu0 %8687
    %v8689 = vsel %vm140, %v8675, 0.0
    %8690 = vadd.xlane.f32.xlu0 %v8689
    %v8691 = vpop.xlane.xlu0 %8690
    %v8692 = vsel %vm140, %v8676, 0.0
    %8693 = vadd.xlane.f32.xlu0 %v8692
    %v8694 = vpop.xlane.xlu0 %8693
    %v8695 = vsel %vm140, %v8677, 0.0
    %8696 = vadd.xlane.f32.xlu0 %v8695
    %v8697 = vpop.xlane.xlu0 %8696
    %v8698 = vsel %vm140, %v8678, 0.0
    %8699 = vadd.xlane.f32.xlu0 %v8698
    %v8700 = vpop.xlane.xlu0 %8699
    %v8701 = vsel %vm140, %v8679, 0.0
    %8702 = vadd.xlane.f32.xlu0 %v8701
    %v8703 = vpop.xlane.xlu0 %8702
    %v8704 = vsel %vm140, %v8680, 0.0
    %8705 = vadd.xlane.f32.xlu0 %v8704
    %v8706 = vpop.xlane.xlu0 %8705
    %v8707 = vsel %vm140, %v8681, 0.0
    %8708 = vadd.xlane.f32.xlu0 %v8707
    %v8709 = vpop.xlane.xlu0 %8708
    %v8710 = vmul.f32 %v8688, %v4081
    %v8711 = vmul.f32 %v8691, %v4081
    %v8712 = vmul.f32 %v8694, %v4081
    %v8713 = vmul.f32 %v8697, %v4081
    %v8714 = vmul.f32 %v8700, %v4081
    %v8715 = vmul.f32 %v8703, %v4081
    %v8716 = vmul.f32 %v8706, %v4081
    %v8717 = vmul.f32 %v8709, %v4081
    %v8718 = vsub.f32 %v8674, %v8710
    %v8719 = vsub.f32 %v8675, %v8711
    %v8720 = vsub.f32 %v8676, %v8712
    %v8721 = vsub.f32 %v8677, %v8713
    %v8722 = vsub.f32 %v8678, %v8714
    %v8723 = vsub.f32 %v8679, %v8715
    %v8724 = vsub.f32 %v8680, %v8716
    %v8725 = vsub.f32 %v8681, %v8717
    %v8726 = vmul.f32 %v8718, %v8718
    %v8727 = vmul.f32 %v8719, %v8719
    %v8728 = vmul.f32 %v8720, %v8720
    %v8729 = vmul.f32 %v8721, %v8721
    %v8730 = vmul.f32 %v8722, %v8722
    %v8731 = vmul.f32 %v8723, %v8723
    %v8732 = vmul.f32 %v8724, %v8724
    %v8733 = vmul.f32 %v8725, %v8725
    %v8734 = vsel %vm140, %v8726, 0.0
    %8735 = vadd.xlane.f32.xlu0 %v8734
    %v8736 = vpop.xlane.xlu0 %8735
    %v8737 = vsel %vm140, %v8727, 0.0
    %8738 = vadd.xlane.f32.xlu0 %v8737
    %v8739 = vpop.xlane.xlu0 %8738
    %v8740 = vsel %vm140, %v8728, 0.0
    %8741 = vadd.xlane.f32.xlu0 %v8740
    %v8742 = vpop.xlane.xlu0 %8741
    %v8743 = vsel %vm140, %v8729, 0.0
    %8744 = vadd.xlane.f32.xlu0 %v8743
    %v8745 = vpop.xlane.xlu0 %8744
    %v8746 = vsel %vm140, %v8730, 0.0
    %8747 = vadd.xlane.f32.xlu0 %v8746
    %v8748 = vpop.xlane.xlu0 %8747
    %v8749 = vsel %vm140, %v8731, 0.0
    %8750 = vadd.xlane.f32.xlu0 %v8749
    %v8751 = vpop.xlane.xlu0 %8750
    %v8752 = vsel %vm140, %v8732, 0.0
    %8753 = vadd.xlane.f32.xlu0 %v8752
    %v8754 = vpop.xlane.xlu0 %8753
    %v8755 = vsel %vm140, %v8733, 0.0
    %8756 = vadd.xlane.f32.xlu0 %v8755
    %v8757 = vpop.xlane.xlu0 %8756
    %v8758 = vmul.f32 %v8736, %v4081
    %v8759 = vmul.f32 %v8739, %v4081
    %v8760 = vmul.f32 %v8742, %v4081
    %v8761 = vmul.f32 %v8745, %v4081
    %v8762 = vmul.f32 %v8748, %v4081
    %v8763 = vmul.f32 %v8751, %v4081
    %v8764 = vmul.f32 %v8754, %v4081
    %v8765 = vmul.f32 %v8757, %v4081
    %v8766 = vadd.f32 %v8758, 1e-05
    %v8767 = vadd.f32 %v8759, 1e-05
    %v8768 = vadd.f32 %v8760, 1e-05
    %v8769 = vadd.f32 %v8761, 1e-05
    %v8770 = vadd.f32 %v8762, 1e-05
    %v8771 = vadd.f32 %v8763, 1e-05
    %v8772 = vadd.f32 %v8764, 1e-05
    %v8773 = vadd.f32 %v8765, 1e-05
    %v8774 = vrsqrt.pop %v8766
    %v8775 = vrsqrt.pop %v8767
    %v8776 = vrsqrt.pop %v8768
    %v8777 = vrsqrt.pop %v8769
    %v8778 = vrsqrt.pop %v8770
    %v8779 = vrsqrt.pop %v8771
    %v8780 = vrsqrt.pop %v8772
    %v8781 = vrsqrt.pop %v8773
    %v8782 = vmul.f32 %v8718, %v8774
    %v8783 = vmul.f32 %v8719, %v8775
    %v8784 = vmul.f32 %v8720, %v8776
    %v8785 = vmul.f32 %v8721, %v8777
    %v8786 = vmul.f32 %v8722, %v8778
    %v8787 = vmul.f32 %v8723, %v8779
    %v8788 = vmul.f32 %v8724, %v8780
    %v8789 = vmul.f32 %v8725, %v8781
    %v8791 = vlaneseq
    %v8792 = vshrl.u32 %v8791, 7
    %v8793 = vsub.s32 0, %v8792
    %v8794 = vrot.slane %v8683, %v8793
    %v8796 = vmul.f32 %v8782, %v8794
    %v8797 = vmul.f32 %v8783, %v8794
    %v8798 = vmul.f32 %v8784, %v8794
    %v8799 = vmul.f32 %v8785, %v8794
    %v8800 = vmul.f32 %v8786, %v8794
    %v8801 = vmul.f32 %v8787, %v8794
    %v8802 = vmul.f32 %v8788, %v8794
    %v8803 = vmul.f32 %v8789, %v8794
    %v8805 = vlaneseq
    %v8806 = vshrl.u32 %v8805, 7
    %v8807 = vsub.s32 0, %v8806
    %v8808 = vrot.slane %v8685, %v8807
    %v8810 = vadd.f32 %v8796, %v8808
    %v8811 = vadd.f32 %v8797, %v8808
    %v8812 = vadd.f32 %v8798, %v8808
    %v8813 = vadd.f32 %v8799, %v8808
    %v8814 = vadd.f32 %v8800, %v8808
    %v8815 = vadd.f32 %v8801, %v8808
    %v8816 = vadd.f32 %v8802, %v8808
    %v8817 = vadd.f32 %v8803, %v8808
    %v8818 = vpack.c.bf16 %v8811, %v8810
    %v8819 = vpack.c.bf16 %v8813, %v8812
    %v8820 = vpack.c.bf16 %v8815, %v8814
    %v8821 = vpack.c.bf16 %v8817, %v8816
    %s8822 = scalar_lea.vmem %s5, 64
    %v8823 = vld [vmem:[%s8822] sm:$0xff]
    %v8824 = vld [vmem:[%s8822 + $0x8] sm:$0xff]
    %v8825 = vld [vmem:[%s8822 + $0x10] sm:$0xff]
    %v8826 = vld [vmem:[%s8822 + $0x18] sm:$0xff]
    %v8827 = vld [vmem:[%s8822 + $0x20] sm:$0xff]
    %v8828 = vld [vmem:[%s8822 + $0x28] sm:$0xff]
    %v8829 = vld [vmem:[%s8822 + $0x30] sm:$0xff]
    %v8830 = vld [vmem:[%s8822 + $0x38] sm:$0xff]
    %s8831 = scalar_lea.vmem %s6, 2
    %v8832 = vld [vmem:[%s8831] sm:$0x3]
    %v8834 = vlaneseq
    %v8835 = vshrl.u32 %v8834, 7
    %v8836 = vsub.s32 0, %v8835
    %v8837 = vrot.slane %v8832, %v8836
    %v8838 = vlaneseq
    %v8839 = vshrl.u32 %v8838, 7
    %v8840 = vsub.s32 1, %v8839
    %v8841 = vrot.slane %v8832, %v8840
    %v8852 = vunpack.c.l.b16 %v8823
    %v8853 = vunpack.c.h.b16 %v8823
    %v8854 = vunpack.c.l.b16 %v8824
    %v8855 = vunpack.c.h.b16 %v8824
    %v8856 = vunpack.c.l.b16 %v8825
    %v8857 = vunpack.c.h.b16 %v8825
    %v8858 = vunpack.c.l.b16 %v8826
    %v8859 = vunpack.c.h.b16 %v8826
    %v8860 = vunpack.c.l.b16 %v8827
    %v8861 = vunpack.c.h.b16 %v8827
    %v8862 = vunpack.c.l.b16 %v8828
    %v8863 = vunpack.c.h.b16 %v8828
    %v8864 = vunpack.c.l.b16 %v8829
    %v8865 = vunpack.c.h.b16 %v8829
    %v8866 = vunpack.c.l.b16 %v8830
    %v8867 = vunpack.c.h.b16 %v8830
    %v8868 = vpack.c.b16 %v8854, %v8852
    %v8869 = vpack.c.b16 %v8855, %v8853
    %v8870 = vpack.c.b16 %v8858, %v8856
    %v8871 = vpack.c.b16 %v8859, %v8857
    %v8872 = vpack.c.b16 %v8862, %v8860
    %v8873 = vpack.c.b16 %v8863, %v8861
    %v8874 = vpack.c.b16 %v8866, %v8864
    %v8875 = vpack.c.b16 %v8867, %v8865
    %v8885 = vsel %vm140, %v8818, 0
    %v8888 = vsel %vm140, %v8819, 0
    %v8891 = vsel %vm140, %v8820, 0
    %v8894 = vsel %vm140, %v8821, 0
    %8896 = vmatprep.subr.bf16.mxu0 0
    %8897 = vmatpush1.bf16.msra.mxu0 0
    %8898 = vmatprep.subr.bf16.mxu0 0
    %8899 = vmatpush1.bf16.msra.mxu0 0
    %8900 = vmatprep.subr.bf16.mxu0 0
    %8901 = vmatpush1.bf16.msra.mxu0 0
    %8902 = vmatprep.subr.bf16.mxu0 0
    %8903 = vmatpush1.bf16.msra.mxu0 0
    %8904 = vmatprep.subr.bf16.mxu0 %v8875
    %8905 = vmatpush1.bf16.msra.mxu0 %v8874
    %8906 = vmatprep.subr.bf16.mxu0 %v8873
    %8907 = vmatpush1.bf16.msra.mxu0 %v8872
    %8908 = vmatprep.subr.bf16.mxu0 %v8871
    %8909 = vmatpush1.bf16.msra.mxu0 %v8870
    %8910 = vmatprep.subr.bf16.mxu0 %v8869
    %8911 = vmatpush1.bf16.msra.mxu0 %v8868
    %8912 = vmatprep.subr.bf16.mxu0 0
    %8913 = vmatpush2.bf16.msra.mxu0 0
    %8914 = vmatprep.subr.bf16.mxu0 0
    %8915 = vmatpush2.bf16.msra.mxu0 0
    %8916 = vmatprep.subr.bf16.mxu0 0
    %8917 = vmatpush2.bf16.msra.mxu0 0
    %8918 = vmatprep.subr.bf16.mxu0 0
    %8919 = vmatpush2.bf16.msra.mxu0 0
    %8920 = vmatprep.subr.bf16.mxu0 0
    %8921 = vmatpush2.bf16.msra.mxu0 0
    %8922 = vmatprep.subr.bf16.mxu0 0
    %8923 = vmatpush2.bf16.msra.mxu0 0
    %8924 = vmatprep.subr.bf16.mxu0 0
    %8925 = vmatpush2.bf16.msra.mxu0 0
    %8926 = vmatprep.subr.bf16.mxu0 0
    %8927 = vmatpush2.bf16.msra.mxu0 0
    %8928 = vmatprep.mubr.bf16.mxu0 0
    %8929 = vmatmul.mubr.bf16.gmra.mxu0 %v8885
    %v8930 = vpop.f32.mrf.mxu0
    %v8931 = vadd.f32 %v8837, %v8930
    %v8932 = vpop.f32.mrf.mxu0
    %v8933 = vadd.f32 %v8841, %v8932
    %v8934 = vpop.f32.mrf.mxu0
    %v8935 = vadd.f32 %v8837, %v8934
    %v8936 = vpop.f32.mrf.mxu0
    %v8937 = vadd.f32 %v8841, %v8936
    %8938 = vmatprep.mubr.bf16.mxu0 0
    %8939 = vmatmul.mubr.bf16.gmra.mxu0 %v8888
    %v8940 = vpop.f32.mrf.mxu0
    %v8941 = vadd.f32 %v8837, %v8940
    %v8942 = vpop.f32.mrf.mxu0
    %v8943 = vadd.f32 %v8841, %v8942
    %v8944 = vpop.f32.mrf.mxu0
    %v8945 = vadd.f32 %v8837, %v8944
    %v8946 = vpop.f32.mrf.mxu0
    %v8947 = vadd.f32 %v8841, %v8946
    %8948 = vmatprep.mubr.bf16.mxu0 0
    %8949 = vmatmul.mubr.bf16.gmra.mxu0 %v8891
    %v8950 = vpop.f32.mrf.mxu0
    %v8951 = vadd.f32 %v8837, %v8950
    %v8952 = vpop.f32.mrf.mxu0
    %v8953 = vadd.f32 %v8841, %v8952
    %v8954 = vpop.f32.mrf.mxu0
    %v8955 = vadd.f32 %v8837, %v8954
    %v8956 = vpop.f32.mrf.mxu0
    %v8957 = vadd.f32 %v8841, %v8956
    %8958 = vmatprep.mubr.bf16.mxu0 0
    %8959 = vmatmul.mubr.bf16.gmra.mxu0 %v8894
    %v8960 = vpop.f32.mrf.mxu0
    %v8961 = vadd.f32 %v8837, %v8960
    %v8962 = vpop.f32.mrf.mxu0
    %v8963 = vadd.f32 %v8841, %v8962
    %v8964 = vpop.f32.mrf.mxu0
    %v8965 = vadd.f32 %v8837, %v8964
    %v8966 = vpop.f32.mrf.mxu0
    %v8967 = vadd.f32 %v8841, %v8966
    %8968 = vdwg.mxu0
    %v8969 = vmax.f32 %v8931, 0.0
    %v8970 = vmax.f32 %v8933, 0.0
    %v8971 = vmax.f32 %v8935, 0.0
    %v8972 = vmax.f32 %v8937, 0.0
    %v8973 = vmax.f32 %v8941, 0.0
    %v8974 = vmax.f32 %v8943, 0.0
    %v8975 = vmax.f32 %v8945, 0.0
    %v8976 = vmax.f32 %v8947, 0.0
    %v8977 = vmax.f32 %v8951, 0.0
    %v8978 = vmax.f32 %v8953, 0.0
    %v8979 = vmax.f32 %v8955, 0.0
    %v8980 = vmax.f32 %v8957, 0.0
    %v8981 = vmax.f32 %v8961, 0.0
    %v8982 = vmax.f32 %v8963, 0.0
    %v8983 = vmax.f32 %v8965, 0.0
    %v8984 = vmax.f32 %v8967, 0.0
    %v8985 = vpack.c.bf16 %v8971, %v8969
    %v8986 = vpack.c.bf16 %v8972, %v8970
    %v8987 = vpack.c.bf16 %v8975, %v8973
    %v8988 = vpack.c.bf16 %v8976, %v8974
    %v8989 = vpack.c.bf16 %v8979, %v8977
    %v8990 = vpack.c.bf16 %v8980, %v8978
    %v8991 = vpack.c.bf16 %v8983, %v8981
    %v8992 = vpack.c.bf16 %v8984, %v8982
    %s8993 = scalar_lea.vmem %s7, 128
    %v8994 = vld [vmem:[%s8993] sm:$0xf]
    %v8995 = vld [vmem:[%s8993 + $0x4] sm:$0xf]
    %v8996 = vld [vmem:[%s8993 + $0x8] sm:$0xf]
    %v8997 = vld [vmem:[%s8993 + $0xc] sm:$0xf]
    %v8998 = vld [vmem:[%s8993 + $0x10] sm:$0xf]
    %v8999 = vld [vmem:[%s8993 + $0x14] sm:$0xf]
    %v9000 = vld [vmem:[%s8993 + $0x18] sm:$0xf]
    %v9001 = vld [vmem:[%s8993 + $0x1c] sm:$0xf]
    %v9002 = vld [vmem:[%s8993 + $0x20] sm:$0xf]
    %v9003 = vld [vmem:[%s8993 + $0x24] sm:$0xf]
    %v9004 = vld [vmem:[%s8993 + $0x28] sm:$0xf]
    %v9005 = vld [vmem:[%s8993 + $0x2c] sm:$0xf]
    %v9006 = vld [vmem:[%s8993 + $0x30] sm:$0xf]
    %v9007 = vld [vmem:[%s8993 + $0x34] sm:$0xf]
    %v9008 = vld [vmem:[%s8993 + $0x38] sm:$0xf]
    %v9009 = vld [vmem:[%s8993 + $0x3c] sm:$0xf]
    %v9010 = vld [vmem:[%s8993 + $0x40] sm:$0xf]
    %v9011 = vld [vmem:[%s8993 + $0x44] sm:$0xf]
    %v9012 = vld [vmem:[%s8993 + $0x48] sm:$0xf]
    %v9013 = vld [vmem:[%s8993 + $0x4c] sm:$0xf]
    %v9014 = vld [vmem:[%s8993 + $0x50] sm:$0xf]
    %v9015 = vld [vmem:[%s8993 + $0x54] sm:$0xf]
    %v9016 = vld [vmem:[%s8993 + $0x58] sm:$0xf]
    %v9017 = vld [vmem:[%s8993 + $0x5c] sm:$0xf]
    %v9018 = vld [vmem:[%s8993 + $0x60] sm:$0xf]
    %v9019 = vld [vmem:[%s8993 + $0x64] sm:$0xf]
    %v9020 = vld [vmem:[%s8993 + $0x68] sm:$0xf]
    %v9021 = vld [vmem:[%s8993 + $0x6c] sm:$0xf]
    %v9022 = vld [vmem:[%s8993 + $0x70] sm:$0xf]
    %v9023 = vld [vmem:[%s8993 + $0x74] sm:$0xf]
    %v9024 = vld [vmem:[%s8993 + $0x78] sm:$0xf]
    %v9025 = vld [vmem:[%s8993 + $0x7c] sm:$0xf]
    %s9026 = scalar_lea.vmem %s8, 1
    %v9027 = vld [vmem:[%s9026] sm:$0x1]
    %v9029 = vlaneseq
    %v9030 = vshrl.u32 %v9029, 7
    %v9031 = vsub.s32 0, %v9030
    %v9032 = vrot.slane %v9027, %v9031
    %v9066 = vunpack.c.l.b16 %v8994
    %v9067 = vunpack.c.l.b16 %v8995
    %v9068 = vunpack.c.l.b16 %v8996
    %v9069 = vunpack.c.l.b16 %v8997
    %v9070 = vunpack.c.l.b16 %v8998
    %v9071 = vunpack.c.l.b16 %v8999
    %v9072 = vunpack.c.l.b16 %v9000
    %v9073 = vunpack.c.l.b16 %v9001
    %v9074 = vunpack.c.l.b16 %v9002
    %v9075 = vunpack.c.l.b16 %v9003
    %v9076 = vunpack.c.l.b16 %v9004
    %v9077 = vunpack.c.l.b16 %v9005
    %v9078 = vunpack.c.l.b16 %v9006
    %v9079 = vunpack.c.l.b16 %v9007
    %v9080 = vunpack.c.l.b16 %v9008
    %v9081 = vunpack.c.l.b16 %v9009
    %v9082 = vunpack.c.l.b16 %v9010
    %v9083 = vunpack.c.l.b16 %v9011
    %v9084 = vunpack.c.l.b16 %v9012
    %v9085 = vunpack.c.l.b16 %v9013
    %v9086 = vunpack.c.l.b16 %v9014
    %v9087 = vunpack.c.l.b16 %v9015
    %v9088 = vunpack.c.l.b16 %v9016
    %v9089 = vunpack.c.l.b16 %v9017
    %v9090 = vunpack.c.l.b16 %v9018
    %v9091 = vunpack.c.l.b16 %v9019
    %v9092 = vunpack.c.l.b16 %v9020
    %v9093 = vunpack.c.l.b16 %v9021
    %v9094 = vunpack.c.l.b16 %v9022
    %v9095 = vunpack.c.l.b16 %v9023
    %v9096 = vunpack.c.l.b16 %v9024
    %v9097 = vunpack.c.l.b16 %v9025
    %v9098 = vpack.c.b16 %v9067, %v9066
    %v9099 = vpack.c.b16 %v9069, %v9068
    %v9100 = vpack.c.b16 %v9071, %v9070
    %v9101 = vpack.c.b16 %v9073, %v9072
    %v9102 = vpack.c.b16 %v9075, %v9074
    %v9103 = vpack.c.b16 %v9077, %v9076
    %v9104 = vpack.c.b16 %v9079, %v9078
    %v9105 = vpack.c.b16 %v9081, %v9080
    %v9106 = vpack.c.b16 %v9083, %v9082
    %v9107 = vpack.c.b16 %v9085, %v9084
    %v9108 = vpack.c.b16 %v9087, %v9086
    %v9109 = vpack.c.b16 %v9089, %v9088
    %v9110 = vpack.c.b16 %v9091, %v9090
    %v9111 = vpack.c.b16 %v9093, %v9092
    %v9112 = vpack.c.b16 %v9095, %v9094
    %v9113 = vpack.c.b16 %v9097, %v9096
    %9130 = vmatprep.subr.bf16.mxu0 0
    %9131 = vmatpush1.bf16.msra.mxu0 %v9105
    %9132 = vmatprep.subr.bf16.mxu0 0
    %9133 = vmatpush1.bf16.msra.mxu0 %v9104
    %9134 = vmatprep.subr.bf16.mxu0 0
    %9135 = vmatpush1.bf16.msra.mxu0 %v9103
    %9136 = vmatprep.subr.bf16.mxu0 0
    %9137 = vmatpush1.bf16.msra.mxu0 %v9102
    %9138 = vmatprep.subr.bf16.mxu0 0
    %9139 = vmatpush1.bf16.msra.mxu0 %v9101
    %9140 = vmatprep.subr.bf16.mxu0 0
    %9141 = vmatpush1.bf16.msra.mxu0 %v9100
    %9142 = vmatprep.subr.bf16.mxu0 0
    %9143 = vmatpush1.bf16.msra.mxu0 %v9099
    %9144 = vmatprep.subr.bf16.mxu0 0
    %9145 = vmatpush1.bf16.msra.mxu0 %v9098
    %9146 = vmatprep.subr.bf16.mxu0 0
    %9147 = vmatpush2.bf16.msra.mxu0 %v9113
    %9148 = vmatprep.subr.bf16.mxu0 0
    %9149 = vmatpush2.bf16.msra.mxu0 %v9112
    %9150 = vmatprep.subr.bf16.mxu0 0
    %9151 = vmatpush2.bf16.msra.mxu0 %v9111
    %9152 = vmatprep.subr.bf16.mxu0 0
    %9153 = vmatpush2.bf16.msra.mxu0 %v9110
    %9154 = vmatprep.subr.bf16.mxu0 0
    %9155 = vmatpush2.bf16.msra.mxu0 %v9109
    %9156 = vmatprep.subr.bf16.mxu0 0
    %9157 = vmatpush2.bf16.msra.mxu0 %v9108
    %9158 = vmatprep.subr.bf16.mxu0 0
    %9159 = vmatpush2.bf16.msra.mxu0 %v9107
    %9160 = vmatprep.subr.bf16.mxu0 0
    %9161 = vmatpush2.bf16.msra.mxu0 %v9106
    %9162 = vmatprep.mubr.bf16.mxu0 %v8986
    %9163 = vmatmul.mubr.bf16.gmra.mxu0 %v8985
    %v9164 = vpop.f32.mrf.mxu0
    %v9165 = vadd.f32 %v9032, %v9164
    %v9166 = vpop.f32.mrf.mxu0
    %v9167 = vpop.f32.mrf.mxu0
    %v9168 = vadd.f32 %v9032, %v9167
    %v9169 = vpop.f32.mrf.mxu0
    %9170 = vmatprep.mubr.bf16.mxu0 %v8988
    %9171 = vmatmul.mubr.bf16.gmra.mxu0 %v8987
    %v9172 = vpop.f32.mrf.mxu0
    %v9173 = vadd.f32 %v9032, %v9172
    %v9174 = vpop.f32.mrf.mxu0
    %v9175 = vpop.f32.mrf.mxu0
    %v9176 = vadd.f32 %v9032, %v9175
    %v9177 = vpop.f32.mrf.mxu0
    %9178 = vmatprep.mubr.bf16.mxu0 %v8990
    %9179 = vmatmul.mubr.bf16.gmra.mxu0 %v8989
    %v9180 = vpop.f32.mrf.mxu0
    %v9181 = vadd.f32 %v9032, %v9180
    %v9182 = vpop.f32.mrf.mxu0
    %v9183 = vpop.f32.mrf.mxu0
    %v9184 = vadd.f32 %v9032, %v9183
    %v9185 = vpop.f32.mrf.mxu0
    %9186 = vmatprep.mubr.bf16.mxu0 %v8992
    %9187 = vmatmul.mubr.bf16.gmra.mxu0 %v8991
    %v9188 = vpop.f32.mrf.mxu0
    %v9189 = vadd.f32 %v9032, %v9188
    %v9190 = vpop.f32.mrf.mxu0
    %v9191 = vpop.f32.mrf.mxu0
    %v9192 = vadd.f32 %v9032, %v9191
    %v9193 = vpop.f32.mrf.mxu0
    %9194 = vdwg.mxu0
    %v9195 = vadd.f32 %v8810, %v9165
    %v9196 = vadd.f32 %v8811, %v9168
    %v9197 = vadd.f32 %v8812, %v9173
    %v9198 = vadd.f32 %v8813, %v9176
    %v9199 = vadd.f32 %v8814, %v9181
    %v9200 = vadd.f32 %v8815, %v9184
    %v9201 = vadd.f32 %v8816, %v9189
    %v9202 = vadd.f32 %v8817, %v9192
    %s9203 = scalar_lea.vmem %s11, 1
    %v9204 = vld [vmem:[%s9203] sm:$0x1]
    %s9205 = scalar_lea.vmem %s12, 1
    %v9206 = vld [vmem:[%s9205] sm:$0x1]
    %v9207 = vsel %vm140, %v9195, 0.0
    %9208 = vadd.xlane.f32.xlu0 %v9207
    %v9209 = vpop.xlane.xlu0 %9208
    %v9210 = vsel %vm140, %v9196, 0.0
    %9211 = vadd.xlane.f32.xlu0 %v9210
    %v9212 = vpop.xlane.xlu0 %9211
    %v9213 = vsel %vm140, %v9197, 0.0
    %9214 = vadd.xlane.f32.xlu0 %v9213
    %v9215 = vpop.xlane.xlu0 %9214
    %v9216 = vsel %vm140, %v9198, 0.0
    %9217 = vadd.xlane.f32.xlu0 %v9216
    %v9218 = vpop.xlane.xlu0 %9217
    %v9219 = vsel %vm140, %v9199, 0.0
    %9220 = vadd.xlane.f32.xlu0 %v9219
    %v9221 = vpop.xlane.xlu0 %9220
    %v9222 = vsel %vm140, %v9200, 0.0
    %9223 = vadd.xlane.f32.xlu0 %v9222
    %v9224 = vpop.xlane.xlu0 %9223
    %v9225 = vsel %vm140, %v9201, 0.0
    %9226 = vadd.xlane.f32.xlu0 %v9225
    %v9227 = vpop.xlane.xlu0 %9226
    %v9228 = vsel %vm140, %v9202, 0.0
    %9229 = vadd.xlane.f32.xlu0 %v9228
    %v9230 = vpop.xlane.xlu0 %9229
    %v9231 = vmul.f32 %v9209, %v4081
    %v9232 = vmul.f32 %v9212, %v4081
    %v9233 = vmul.f32 %v9215, %v4081
    %v9234 = vmul.f32 %v9218, %v4081
    %v9235 = vmul.f32 %v9221, %v4081
    %v9236 = vmul.f32 %v9224, %v4081
    %v9237 = vmul.f32 %v9227, %v4081
    %v9238 = vmul.f32 %v9230, %v4081
    %v9239 = vsub.f32 %v9195, %v9231
    %v9240 = vsub.f32 %v9196, %v9232
    %v9241 = vsub.f32 %v9197, %v9233
    %v9242 = vsub.f32 %v9198, %v9234
    %v9243 = vsub.f32 %v9199, %v9235
    %v9244 = vsub.f32 %v9200, %v9236
    %v9245 = vsub.f32 %v9201, %v9237
    %v9246 = vsub.f32 %v9202, %v9238
    %v9247 = vmul.f32 %v9239, %v9239
    %v9248 = vmul.f32 %v9240, %v9240
    %v9249 = vmul.f32 %v9241, %v9241
    %v9250 = vmul.f32 %v9242, %v9242
    %v9251 = vmul.f32 %v9243, %v9243
    %v9252 = vmul.f32 %v9244, %v9244
    %v9253 = vmul.f32 %v9245, %v9245
    %v9254 = vmul.f32 %v9246, %v9246
    %v9255 = vsel %vm140, %v9247, 0.0
    %9256 = vadd.xlane.f32.xlu0 %v9255
    %v9257 = vpop.xlane.xlu0 %9256
    %v9258 = vsel %vm140, %v9248, 0.0
    %9259 = vadd.xlane.f32.xlu0 %v9258
    %v9260 = vpop.xlane.xlu0 %9259
    %v9261 = vsel %vm140, %v9249, 0.0
    %9262 = vadd.xlane.f32.xlu0 %v9261
    %v9263 = vpop.xlane.xlu0 %9262
    %v9264 = vsel %vm140, %v9250, 0.0
    %9265 = vadd.xlane.f32.xlu0 %v9264
    %v9266 = vpop.xlane.xlu0 %9265
    %v9267 = vsel %vm140, %v9251, 0.0
    %9268 = vadd.xlane.f32.xlu0 %v9267
    %v9269 = vpop.xlane.xlu0 %9268
    %v9270 = vsel %vm140, %v9252, 0.0
    %9271 = vadd.xlane.f32.xlu0 %v9270
    %v9272 = vpop.xlane.xlu0 %9271
    %v9273 = vsel %vm140, %v9253, 0.0
    %9274 = vadd.xlane.f32.xlu0 %v9273
    %v9275 = vpop.xlane.xlu0 %9274
    %v9276 = vsel %vm140, %v9254, 0.0
    %9277 = vadd.xlane.f32.xlu0 %v9276
    %v9278 = vpop.xlane.xlu0 %9277
    %v9279 = vmul.f32 %v9257, %v4081
    %v9280 = vmul.f32 %v9260, %v4081
    %v9281 = vmul.f32 %v9263, %v4081
    %v9282 = vmul.f32 %v9266, %v4081
    %v9283 = vmul.f32 %v9269, %v4081
    %v9284 = vmul.f32 %v9272, %v4081
    %v9285 = vmul.f32 %v9275, %v4081
    %v9286 = vmul.f32 %v9278, %v4081
    %v9287 = vadd.f32 %v9279, 1e-05
    %v9288 = vadd.f32 %v9280, 1e-05
    %v9289 = vadd.f32 %v9281, 1e-05
    %v9290 = vadd.f32 %v9282, 1e-05
    %v9291 = vadd.f32 %v9283, 1e-05
    %v9292 = vadd.f32 %v9284, 1e-05
    %v9293 = vadd.f32 %v9285, 1e-05
    %v9294 = vadd.f32 %v9286, 1e-05
    %v9295 = vrsqrt.pop %v9287
    %v9296 = vrsqrt.pop %v9288
    %v9297 = vrsqrt.pop %v9289
    %v9298 = vrsqrt.pop %v9290
    %v9299 = vrsqrt.pop %v9291
    %v9300 = vrsqrt.pop %v9292
    %v9301 = vrsqrt.pop %v9293
    %v9302 = vrsqrt.pop %v9294
    %v9303 = vmul.f32 %v9239, %v9295
    %v9304 = vmul.f32 %v9240, %v9296
    %v9305 = vmul.f32 %v9241, %v9297
    %v9306 = vmul.f32 %v9242, %v9298
    %v9307 = vmul.f32 %v9243, %v9299
    %v9308 = vmul.f32 %v9244, %v9300
    %v9309 = vmul.f32 %v9245, %v9301
    %v9310 = vmul.f32 %v9246, %v9302
    %v9312 = vlaneseq
    %v9313 = vshrl.u32 %v9312, 7
    %v9314 = vsub.s32 0, %v9313
    %v9315 = vrot.slane %v9204, %v9314
    %v9317 = vmul.f32 %v9303, %v9315
    %v9318 = vmul.f32 %v9304, %v9315
    %v9319 = vmul.f32 %v9305, %v9315
    %v9320 = vmul.f32 %v9306, %v9315
    %v9321 = vmul.f32 %v9307, %v9315
    %v9322 = vmul.f32 %v9308, %v9315
    %v9323 = vmul.f32 %v9309, %v9315
    %v9324 = vmul.f32 %v9310, %v9315
    %v9326 = vlaneseq
    %v9327 = vshrl.u32 %v9326, 7
    %v9328 = vsub.s32 0, %v9327
    %v9329 = vrot.slane %v9206, %v9328
    %v9331 = vadd.f32 %v9317, %v9329
    %v9332 = vadd.f32 %v9318, %v9329
    %v9333 = vadd.f32 %v9319, %v9329
    %v9334 = vadd.f32 %v9320, %v9329
    %v9335 = vadd.f32 %v9321, %v9329
    %v9336 = vadd.f32 %v9322, %v9329
    %v9337 = vadd.f32 %v9323, %v9329
    %v9338 = vadd.f32 %v9324, %v9329
    %v9339 = vsel %vm140, %v9331, 0.0
    %v9340 = vrot.slane %v9339, 4
    %v9341 = vadd.f32 %v9339, %v9340
    %v9342 = vrot.slane %v9341, 2
    %v9343 = vadd.f32 %v9341, %v9342
    %v9344 = vrot.slane %v9343, 1
    %v9345 = vadd.f32 %v9343, %v9344
    %v9346 = vsel %vm140, %v9332, 0.0
    %v9347 = vrot.slane %v9346, 4
    %v9348 = vadd.f32 %v9346, %v9347
    %v9349 = vrot.slane %v9348, 2
    %v9350 = vadd.f32 %v9348, %v9349
    %v9351 = vrot.slane %v9350, 1
    %v9352 = vadd.f32 %v9350, %v9351
    %v9353 = vsel %vm140, %v9333, 0.0
    %v9354 = vrot.slane %v9353, 4
    %v9355 = vadd.f32 %v9353, %v9354
    %v9356 = vrot.slane %v9355, 2
    %v9357 = vadd.f32 %v9355, %v9356
    %v9358 = vrot.slane %v9357, 1
    %v9359 = vadd.f32 %v9357, %v9358
    %v9360 = vsel %vm140, %v9334, 0.0
    %v9361 = vrot.slane %v9360, 4
    %v9362 = vadd.f32 %v9360, %v9361
    %v9363 = vrot.slane %v9362, 2
    %v9364 = vadd.f32 %v9362, %v9363
    %v9365 = vrot.slane %v9364, 1
    %v9366 = vadd.f32 %v9364, %v9365
    %v9367 = vsel %vm140, %v9335, 0.0
    %v9368 = vrot.slane %v9367, 4
    %v9369 = vadd.f32 %v9367, %v9368
    %v9370 = vrot.slane %v9369, 2
    %v9371 = vadd.f32 %v9369, %v9370
    %v9372 = vrot.slane %v9371, 1
    %v9373 = vadd.f32 %v9371, %v9372
    %v9374 = vsel %vm140, %v9336, 0.0
    %v9375 = vrot.slane %v9374, 4
    %v9376 = vadd.f32 %v9374, %v9375
    %v9377 = vrot.slane %v9376, 2
    %v9378 = vadd.f32 %v9376, %v9377
    %v9379 = vrot.slane %v9378, 1
    %v9380 = vadd.f32 %v9378, %v9379
    %v9381 = vsel %vm140, %v9337, 0.0
    %v9382 = vrot.slane %v9381, 4
    %v9383 = vadd.f32 %v9381, %v9382
    %v9384 = vrot.slane %v9383, 2
    %v9385 = vadd.f32 %v9383, %v9384
    %v9386 = vrot.slane %v9385, 1
    %v9387 = vadd.f32 %v9385, %v9386
    %v9388 = vsel %vm140, %v9338, 0.0
    %v9389 = vrot.slane %v9388, 4
    %v9390 = vadd.f32 %v9388, %v9389
    %v9391 = vrot.slane %v9390, 2
    %v9392 = vadd.f32 %v9390, %v9391
    %v9393 = vrot.slane %v9392, 1
    %v9394 = vadd.f32 %v9392, %v9393
    %v9395 = vrcp.pop 8.0
    %v9396 = vmul.f32 %v9345, %v9395
    %v9397 = vmul.f32 %v9352, %v9395
    %v9398 = vmul.f32 %v9359, %v9395
    %v9399 = vmul.f32 %v9366, %v9395
    %v9400 = vmul.f32 %v9373, %v9395
    %v9401 = vmul.f32 %v9380, %v9395
    %v9402 = vmul.f32 %v9387, %v9395
    %v9403 = vmul.f32 %v9394, %v9395
    %v9404 = vld [vmem:[%s13] sm:$0x1]
    %v9405 = vld [vmem:[#allocation2] sm:$0x1]
    %9407 = vset.pattern.permute.xlu0 0
    %9408 = vperm.xlu0 %9407, %v9405
    %v9409 = vpop.permute.xlu0 %9408
    %v9411 = vlaneseq
    %v9412 = vshrl.u32 %v9411, 7
    %v9413 = vsub.s32 0, %v9412
    %v9414 = vrot.slane %v9409, %v9413
    %vm9423 = vcmask 1041409
    %v9424 = vsel %vm9423, %v9397, %v9396
    %vm9425 = vcmask 1042434
    %v9426 = vsel %vm9425, %v9398, %v9424
    %vm9427 = vcmask 1043459
    %v9428 = vsel %vm9427, %v9399, %v9426
    %vm9429 = vcmask 1044484
    %v9430 = vsel %vm9429, %v9400, %v9428
    %vm9431 = vcmask 1045509
    %v9432 = vsel %vm9431, %v9401, %v9430
    %vm9433 = vcmask 1046534
    %v9434 = vsel %vm9433, %v9402, %v9432
    %vm9435 = vcmask 1047559
    %v9436 = vsel %vm9435, %v9403, %v9434
    %v9438 = vsel %vm140, %v9404, 0
    %v9440 = vsel %vm140, %v9436, 0
    %9442 = vmatprep.subr.mxu0 0.0
    %9443 = vmatpush1.xpose.msra.mxu0 0.0
    %9444 = vmatprep.subr.mxu0 0.0
    %9445 = vmatpush1.xpose.msra.mxu0 0.0
    %9446 = vmatprep.subr.mxu0 0.0
    %9447 = vmatpush1.xpose.msra.mxu0 0.0
    %9448 = vmatprep.subr.mxu0 0.0
    %9449 = vmatpush1.xpose.msra.mxu0 0.0
    %9450 = vmatprep.subr.mxu0 0.0
    %9451 = vmatpush1.xpose.msra.mxu0 0.0
    %9452 = vmatprep.subr.mxu0 0.0
    %9453 = vmatpush1.xpose.msra.mxu0 0.0
    %9454 = vmatprep.subr.mxu0 0.0
    %9455 = vmatpush1.xpose.msra.mxu0 0.0
    %9456 = vmatprep.subr.mxu0 0.0
    %9457 = vmatpush1.xpose.msra.mxu0 0.0
    %9458 = vmatprep.subr.mxu0 0.0
    %9459 = vmatpush1.xpose.msra.mxu0 0.0
    %9460 = vmatprep.subr.mxu0 0.0
    %9461 = vmatpush1.xpose.msra.mxu0 0.0
    %9462 = vmatprep.subr.mxu0 0.0
    %9463 = vmatpush1.xpose.msra.mxu0 0.0
    %9464 = vmatprep.subr.mxu0 0.0
    %9465 = vmatpush1.xpose.msra.mxu0 0.0
    %9466 = vmatprep.subr.mxu0 0.0
    %9467 = vmatpush1.xpose.msra.mxu0 0.0
    %9468 = vmatprep.subr.mxu0 0.0
    %9469 = vmatpush1.xpose.msra.mxu0 0.0
    %9470 = vmatprep.subr.mxu0 0.0
    %9471 = vmatpush1.xpose.msra.mxu0 0.0
    %9472 = vmatprep.subr.mxu0 0.0
    %9473 = vmatpush1.xpose.msra.mxu0 %v9440
    %9474 = vmatprep.subr.mxu0 0.0
    %9475 = vmatpush2.xpose.msra.mxu0 0.0
    %9476 = vmatprep.subr.mxu0 0.0
    %9477 = vmatpush2.xpose.msra.mxu0 0.0
    %9478 = vmatprep.subr.mxu0 0.0
    %9479 = vmatpush2.xpose.msra.mxu0 0.0
    %9480 = vmatprep.subr.mxu0 0.0
    %9481 = vmatpush2.xpose.msra.mxu0 0.0
    %9482 = vmatprep.subr.mxu0 0.0
    %9483 = vmatpush2.xpose.msra.mxu0 0.0
    %9484 = vmatprep.subr.mxu0 0.0
    %9485 = vmatpush2.xpose.msra.mxu0 0.0
    %9486 = vmatprep.subr.mxu0 0.0
    %9487 = vmatpush2.xpose.msra.mxu0 0.0
    %9488 = vmatprep.subr.mxu0 0.0
    %9489 = vmatpush2.xpose.msra.mxu0 0.0
    %9490 = vmatprep.subr.mxu0 0.0
    %9491 = vmatpush2.xpose.msra.mxu0 0.0
    %9492 = vmatprep.subr.mxu0 0.0
    %9493 = vmatpush2.xpose.msra.mxu0 0.0
    %9494 = vmatprep.subr.mxu0 0.0
    %9495 = vmatpush2.xpose.msra.mxu0 0.0
    %9496 = vmatprep.subr.mxu0 0.0
    %9497 = vmatpush2.xpose.msra.mxu0 0.0
    %9498 = vmatprep.subr.mxu0 0.0
    %9499 = vmatpush2.xpose.msra.mxu0 0.0
    %9500 = vmatprep.subr.mxu0 0.0
    %9501 = vmatpush2.xpose.msra.mxu0 0.0
    %9502 = vmatprep.subr.mxu0 0.0
    %9503 = vmatpush2.xpose.msra.mxu0 0.0
    %9504 = vmatprep.subr.mxu0 0.0
    %9505 = vmatpush2.xpose.msra.mxu0 0.0
    %9506 = vmatprep.mubr.f32.mxu0 0.0
    %9507 = vmatmul.mubr.f32.gmra.mxu0 %v9438
    %v9508 = vpop.f32.mrf.mxu0
    %v9509 = vadd.f32 %v9414, %v9508
    %v9510 = vpop.f32.mrf.mxu0
    %9511 = vdwg.mxu0
    %vm9512 = vcmask 57344
    %9513 = vst.msk [vmem:[#allocation6] sm:$0x1] %vm9512, %v9509
    // Predicated region
    $region66: #{tpu_custom_call.1} parent=1 // pred_check
      _
    $region67: #{tpu_custom_call.1} parent=1 // pred_check_branch
      %9515 = sbr.rel (0) target = $region69
    $region68: #{tpu_custom_call.1} parent=1 // pred_region
      %s9517 = ssub.s32 16, 16
      %9518 = vsyncadd [#allocation5], %s9517
      %s9520 = sshll.u32 [#allocation6], 4
      %s9521 = int_to_ptr.vmem [resolvable:$true] %s9520
      %9523 = dma.vmem_to_hbm [thread:$0]  %s9521, 16, %s15, [#allocation5]
    $region69: #{tpu_custom_call.1} parent=1 // pred_fallthru
      _
    // Predicated region
    $region70: #{tpu_custom_call.1} parent=1 // pred_check
      _
    $region71: #{tpu_custom_call.1} parent=1 // pred_check_branch
      %9525 = sbr.rel (0) target = $region73
    $region72: #{tpu_custom_call.1} parent=1 // pred_region
      %9526 = dma.done [#allocation5], 16
    $region73: #{tpu_custom_call.1} parent=1 // pred_fallthru
      _
    %9527 = vsyncpa [#allocation4], 1
    %9528 = vsyncpa [#allocation5], 1

</llo_original>
